<compile_context>
chip_gen: v7x
topology: tpu7x:2x2x1
jax: 0.10.0
libtpu: 0.0.40
codegen_flags: <defaults>
</compile_context>

<pallas_src>
import numpy as np
import jax
import jax.numpy as jnp
from jax.experimental import pallas as pl
from jax.experimental.pallas import tpu as pltpu


# ----------------------------------------------------------------------------
# Geometry of the halo-padded (C, Hp*Wp) layout
# ----------------------------------------------------------------------------
_H0, _W0 = 16, 16
_WP0, _HPWP0 = _W0 + 2, (_H0 + 2) * (_W0 + 2)          # 18, 324   (16x16 stage)
_WP1, _HPWP1 = 10, 100                                  #           ( 8x8  stage)
_WP2, _HPWP2 = 6, 36                                    #           ( 4x4  stage)

# Per-resolution padded conv fan-in (max concat Cin at that resolution).
# All conv weights at a resolution are zero-padded to this so every conv can
# reuse the same staging rows (stale rows hit zero weight rows).
_CR0, _CR1, _CR2 = 48, 96, 64
_LPAD = 128                       # left guard columns (>= Wp, lane-aligned base)
_S0_COLS = 512                    # >= _LPAD + _HPWP0 + _WP0 = 470
_S1_COLS = 256                    # >= _LPAD + _HPWP1 + _WP1 = 238
_S2_COLS = 256                    # >= _LPAD + _HPWP2 + _WP2 = 170
_OUT_C = 16


# ----------------------------------------------------------------------------
# In-kernel helpers (traced inside the single fused Pallas kernel)
# ----------------------------------------------------------------------------
def _conv3x3_relu(stage, cr, wp, hpwp, acts, w_ref, b_ref, mask):
    """3x3 conv (stride 1, zero pad 1) + bias + ReLU on halo-padded maps.

    acts  : list of f32 (Cin_i, hpwp) maps, channel-concatenated in order.
    w_ref : (3, Cout, 3*cr) bf16 ref; element [dx_idx, o, dy_idx*cr + c].
    b_ref : (Cout, 1) f32 ref.
    mask  : (1, hpwp) f32 interior mask (zeros the halo ring) or None.
    returns (Cout, hpwp) f32.
    """
    row = 0
    for act in acts:
        a16 = act.astype(jnp.bfloat16)              # cast once per staged input
        cin = a16.shape[0]
        for dyi, dy in enumerate((-1, 0, 1)):
            r0 = dyi * cr + row
            c0 = _LPAD - dy * wp                    # fixed window per (res, dy)
            stage[r0:r0 + cin, c0:c0 + hpwp] = a16
        row += cin

    acc = None
    for dxi, dx in enumerate((-1, 0, 1)):
        patch = stage[:, _LPAD + dx:_LPAD + dx + hpwp]       # (3*cr, hpwp) bf16
        part = jnp.dot(w_ref[dxi], patch, preferred_element_type=jnp.float32)
        acc = part if acc is None else acc + part

    out = jnp.maximum(acc + b_ref[...], 0.0)                 # f32 epilogue
    return out * mask if mask is not None else out


def _maxpool2x2(act, sel_ref):
    """2x2/stride-2 max pool via 4 host-precomputed one-hot gather matmuls."""
    a16 = act.astype(jnp.bfloat16)
    out = None
    for t in range(4):
        g = jnp.dot(a16, sel_ref[t], preferred_element_type=jnp.float32)
        out = g if out is None else jnp.maximum(out, g)
    return out


def _upsample2x(act, sel_ref):
    """Nearest-neighbor 2x upsample via one host-precomputed one-hot matmul."""
    return jnp.dot(act.astype(jnp.bfloat16), sel_ref[...],
                   preferred_element_type=jnp.float32)


# ----------------------------------------------------------------------------
# The fused kernel: full encoder + decoder for one batch element
# ----------------------------------------------------------------------------
def _unet_kernel(x_ref,
                 w_e1a, w_e1b, w_e2a, w_e2b, w_e3a, w_e3b,
                 w_d2a, w_d2b, w_d1a, w_d1b,
                 b_e1a, b_e1b, b_e2a, b_e2b, b_e3a, b_e3b,
                 b_d2a, b_d2b, b_d1a, b_d1b,
                 pool0, pool1, up21, up10,
                 m0_ref, m1_ref, m2_ref,
                 o_ref, s0, s1, s2):
    # Guard bands of the staging buffers must be zero; zero the buffers fully
    # once per grid step (cheap, and megacore-safe for "parallel" splitting).
    s0[...] = jnp.zeros_like(s0)
    s1[...] = jnp.zeros_like(s1)
    s2[...] = jnp.zeros_like(s2)

    m0, m1, m2 = m0_ref[...], m1_ref[...], m2_ref[...]
    x = x_ref[0]                                                     # (4, 324) f32

    # ---- encoder ----
    f1 = _conv3x3_relu(s0, _CR0, _WP0, _HPWP0, [x],  w_e1a, b_e1a, m0)
    f1 = _conv3x3_relu(s0, _CR0, _WP0, _HPWP0, [f1], w_e1b, b_e1b, m0)   # (16,324)
    p1 = _maxpool2x2(f1, pool0)                                           # (16,100)
    f2 = _conv3x3_relu(s1, _CR1, _WP1, _HPWP1, [p1], w_e2a, b_e2a, m1)
    f2 = _conv3x3_relu(s1, _CR1, _WP1, _HPWP1, [f2], w_e2b, b_e2b, m1)   # (32,100)
    p2 = _maxpool2x2(f2, pool1)                                           # (32, 36)
    f3 = _conv3x3_relu(s2, _CR2, _WP2, _HPWP2, [p2], w_e3a, b_e3a, m2)
    f3 = _conv3x3_relu(s2, _CR2, _WP2, _HPWP2, [f3], w_e3b, b_e3b, None)  # (64, 36)

    # ---- decoder (nearest 2x upsample + channel-concat skips) ----
    u2 = _upsample2x(f3, up21)                                            # (64,100)
    d2 = _conv3x3_relu(s1, _CR1, _WP1, _HPWP1, [u2, f2], w_d2a, b_d2a, m1)
    d2 = _conv3x3_relu(s1, _CR1, _WP1, _HPWP1, [d2], w_d2b, b_d2b, None)  # (32,100)
    u1 = _upsample2x(d2, up10)                                            # (32,324)
    d1 = _conv3x3_relu(s0, _CR0, _WP0, _HPWP0, [u1, f1], w_d1a, b_d1a, m0)
    d1 = _conv3x3_relu(s0, _CR0, _WP0, _HPWP0, [d1], w_d1b, b_d1b, None)  # (16,324)

    # lane-dense channel-major store (halo columns are sliced off by the caller)
    o_ref[0] = d1


# ----------------------------------------------------------------------------
# Host-side constant builders (one-hot selectors, masks, weight repacking)
# ----------------------------------------------------------------------------
def _pool_selectors(h, w):
    hp, wp = h + 2, w + 2
    ho, wo = h // 2, w // 2
    hop, wop = ho + 2, wo + 2
    sel = np.zeros((4, hp * wp, hop * wop), np.float32)
    for t, (a, b) in enumerate(((0, 0), (0, 1), (1, 0), (1, 1))):
        for y in range(ho):
            for x in range(wo):
                src = (2 * y + a + 1) * wp + (2 * x + b + 1)
                dst = (y + 1) * wop + (x + 1)
                sel[t, src, dst] = 1.0
    return jnp.asarray(sel, jnp.bfloat16)


def _upsample_selector(h, w):
    hp, wp = h + 2, w + 2
    ho, wo = 2 * h, 2 * w
    hop, wop = ho + 2, wo + 2
    sel = np.zeros((hp * wp, hop * wop), np.float32)
    for y in range(ho):
        for x in range(wo):
            src = (y // 2 + 1) * wp + (x // 2 + 1)
            dst = (y + 1) * wop + (x + 1)
            sel[src, dst] = 1.0
    return jnp.asarray(sel, jnp.bfloat16)


def _interior_mask(h, w):
    hp, wp = h + 2, w + 2
    m = np.zeros((1, hp * wp), np.float32)
    for y in range(h):
        for x in range(w):
            m[0, (y + 1) * wp + (x + 1)] = 1.0
    return jnp.asarray(m)


def _prep_w(w, cr):
    """(3,3,Cin,Cout) f32 -> (3, Cout, 3*cr) bf16, dx-major, dy-grouped rows,
    channel dim zero-padded Cin -> cr (padded rows hit stale staging rows)."""
    cin, cout = w.shape[2], w.shape[3]
    wp = jnp.pad(w, ((0, 0), (0, 0), (0, cr - cin), (0, 0)))     # (3,3,cr,Cout)
    return (jnp.transpose(wp, (1, 3, 0, 2))                      # (dx, o, dy, c)
            .reshape(3, cout, 3 * cr).astype(jnp.bfloat16))


def _prep_b(b):
    return b.reshape(-1, 1).astype(jnp.float32)                  # (Cout, 1)


# ----------------------------------------------------------------------------
# UnetHeadless wrapper
# ----------------------------------------------------------------------------
_LAYER_DIMS = [
    ("enc1a", 4, 16), ("enc1b", 16, 16),
    ("enc2a", 16, 32), ("enc2b", 32, 32),
    ("enc3a", 32, 64), ("enc3b", 64, 64),
    ("dec2a", 64 + 32, 32), ("dec2b", 32, 32),
    ("dec1a", 32 + 16, 16), ("dec1b", 16, 16),
]
_CONV_ORDER = ["enc1a", "enc1b", "enc2a", "enc2b", "enc3a", "enc3b",
               "dec2a", "dec2b", "dec1a", "dec1b"]
_CONV_CR = {"enc1a": _CR0, "enc1b": _CR0, "dec1a": _CR0, "dec1b": _CR0,
            "enc2a": _CR1, "enc2b": _CR1, "dec2a": _CR1, "dec2b": _CR1,
            "enc3a": _CR2, "enc3b": _CR2}


def init_params(key):
    params = {}
    keys = jax.random.split(key, len(_LAYER_DIMS))
    for k, (name, cin, cout) in zip(keys, _LAYER_DIMS):
        kw, kb = jax.random.split(k)
        scale = 1.0 / jnp.sqrt(jnp.float32(3 * 3 * cin))
        w = jax.random.normal(kw, (3, 3, cin, cout), jnp.float32) * scale
        b = jax.random.normal(kb, (cout,), jnp.float32) * 0.01
        params[name] = (w, b)
    return params


def unet_headless(params, x_nchw):
    n, cin, h, w = x_nchw.shape
    assert (h, w) == (_H0, _W0) and cin == 4

    # NCHW -> halo-padded flattened (N, C, Hp*Wp); the only input glue op.
    x_pad = jnp.pad(x_nchw, ((0, 0), (0, 0), (1, 1), (1, 1)))
    x_pad = x_pad.reshape(n, cin, _HPWP0).astype(jnp.float32)

    conv_ws = [_prep_w(params[k][0], _CONV_CR[k]) for k in _CONV_ORDER]
    conv_bs = [_prep_b(params[k][1]) for k in _CONV_ORDER]

    pool0 = _pool_selectors(16, 16)       # (4, 324, 100)
    pool1 = _pool_selectors(8, 8)         # (4, 100, 36)
    up21 = _upsample_selector(4, 4)       # (36, 100)
    up10 = _upsample_selector(8, 8)       # (100, 324)
    m0, m1, m2 = _interior_mask(16, 16), _interior_mask(8, 8), _interior_mask(4, 4)

    c3 = lambda i: (0, 0, 0)
    c2 = lambda i: (0, 0)

    in_specs = [pl.BlockSpec((1, cin, _HPWP0), lambda i: (i, 0, 0))]
    in_specs += [pl.BlockSpec(wm.shape, c3) for wm in conv_ws]
    in_specs += [pl.BlockSpec(bm.shape, c2) for bm in conv_bs]
    in_specs += [pl.BlockSpec(pool0.shape, c3), pl.BlockSpec(pool1.shape, c3),
                 pl.BlockSpec(up21.shape, c2), pl.BlockSpec(up10.shape, c2)]
    in_specs += [pl.BlockSpec(m0.shape, c2), pl.BlockSpec(m1.shape, c2),
                 pl.BlockSpec(m2.shape, c2)]

    out = pl.pallas_call(
        _unet_kernel,
        out_shape=jax.ShapeDtypeStruct((n, _OUT_C, _HPWP0), jnp.float32),
        grid=(n,),
        in_specs=in_specs,
        out_specs=pl.BlockSpec((1, _OUT_C, _HPWP0), lambda i: (i, 0, 0)),
        scratch_shapes=[pltpu.VMEM((3 * _CR0, _S0_COLS), jnp.bfloat16),
                        pltpu.VMEM((3 * _CR1, _S1_COLS), jnp.bfloat16),
                        pltpu.VMEM((3 * _CR2, _S2_COLS), jnp.bfloat16)],
        compiler_params=pltpu.CompilerParams(dimension_semantics=("parallel",)),
    )(x_pad, *conv_ws, *conv_bs, pool0, pool1, up21, up10, m0, m1, m2)

    # (N, C, Hp*Wp) -> NCHW by dropping the zero halo ring (cheap output slice).
    return out.reshape(n, _OUT_C, _H0 + 2, _W0 + 2)[:, :, 1:1 + _H0, 1:1 + _W0]


# ----------------------------------------------------------------------------
if __name__ == "__main__":
    key = jax.random.PRNGKey(0)
    k_x, k_p = jax.random.split(key)

    x = jax.random.normal(k_x, (2, 4, 16, 16), jnp.float32)   # NCHW input
    params = init_params(k_p)

    fwd = jax.jit(unet_headless)
    out = fwd(params, x)
    jax.block_until_ready(out)

    assert out.shape == (2, 16, 16, 16), out.shape
    assert out.dtype == jnp.float32
    assert bool(jnp.all(jnp.isfinite(out)))
    print("KERNEL_OK")
</pallas_src>

<mosaic_0001>
module attributes {stable_mosaic.version = 11 : i64} {
  func.func @_unet_kernel(%arg0: i32, %arg1: memref<1x4x324xf32, #tpu.memory_space<vmem>>, %arg2: memref<3x16x144xbf16, #tpu.memory_space<vmem>>, %arg3: memref<3x16x144xbf16, #tpu.memory_space<vmem>>, %arg4: memref<3x32x288xbf16, #tpu.memory_space<vmem>>, %arg5: memref<3x32x288xbf16, #tpu.memory_space<vmem>>, %arg6: memref<3x64x192xbf16, #tpu.memory_space<vmem>>, %arg7: memref<3x64x192xbf16, #tpu.memory_space<vmem>>, %arg8: memref<3x32x288xbf16, #tpu.memory_space<vmem>>, %arg9: memref<3x32x288xbf16, #tpu.memory_space<vmem>>, %arg10: memref<3x16x144xbf16, #tpu.memory_space<vmem>>, %arg11: memref<3x16x144xbf16, #tpu.memory_space<vmem>>, %arg12: memref<16x1xf32, #tpu.memory_space<vmem>>, %arg13: memref<16x1xf32, #tpu.memory_space<vmem>>, %arg14: memref<32x1xf32, #tpu.memory_space<vmem>>, %arg15: memref<32x1xf32, #tpu.memory_space<vmem>>, %arg16: memref<64x1xf32, #tpu.memory_space<vmem>>, %arg17: memref<64x1xf32, #tpu.memory_space<vmem>>, %arg18: memref<32x1xf32, #tpu.memory_space<vmem>>, %arg19: memref<32x1xf32, #tpu.memory_space<vmem>>, %arg20: memref<16x1xf32, #tpu.memory_space<vmem>>, %arg21: memref<16x1xf32, #tpu.memory_space<vmem>>, %arg22: memref<4x324x100xbf16, #tpu.memory_space<vmem>>, %arg23: memref<4x100x36xbf16, #tpu.memory_space<vmem>>, %arg24: memref<36x100xbf16, #tpu.memory_space<vmem>>, %arg25: memref<100x324xbf16, #tpu.memory_space<vmem>>, %arg26: memref<1x324xf32, #tpu.memory_space<vmem>>, %arg27: memref<1x100xf32, #tpu.memory_space<vmem>>, %arg28: memref<1x36xf32, #tpu.memory_space<vmem>>, %arg29: memref<1x16x324xf32, #tpu.memory_space<vmem>>, %arg30: memref<144x512xbf16, #tpu.memory_space<vmem>>, %arg31: memref<288x256xbf16, #tpu.memory_space<vmem>>, %arg32: memref<192x256xbf16, #tpu.memory_space<vmem>>) attributes {dimension_semantics = [#tpu.dimension_semantics<parallel>], iteration_bounds = array<i64: 2>, scalar_prefetch = 0 : i64, scratch_operands = 3 : i64, tpu.core_type = #tpu.core_type<tc>, window_params = [{transform_indices = @transform_0, window_bounds = array<i64: 1, 4, 324>}, {pipeline_mode = #tpu.pipeline_mode<synchronous>, transform_indices = @transform_1, window_bounds = array<i64: 3, 16, 144>}, {pipeline_mode = #tpu.pipeline_mode<synchronous>, transform_indices = @transform_2, window_bounds = array<i64: 3, 16, 144>}, {pipeline_mode = #tpu.pipeline_mode<synchronous>, transform_indices = @transform_3, window_bounds = array<i64: 3, 32, 288>}, {pipeline_mode = #tpu.pipeline_mode<synchronous>, transform_indices = @transform_4, window_bounds = array<i64: 3, 32, 288>}, {pipeline_mode = #tpu.pipeline_mode<synchronous>, transform_indices = @transform_5, window_bounds = array<i64: 3, 64, 192>}, {pipeline_mode = #tpu.pipeline_mode<synchronous>, transform_indices = @transform_6, window_bounds = array<i64: 3, 64, 192>}, {pipeline_mode = #tpu.pipeline_mode<synchronous>, transform_indices = @transform_7, window_bounds = array<i64: 3, 32, 288>}, {pipeline_mode = #tpu.pipeline_mode<synchronous>, transform_indices = @transform_8, window_bounds = array<i64: 3, 32, 288>}, {pipeline_mode = #tpu.pipeline_mode<synchronous>, transform_indices = @transform_9, window_bounds = array<i64: 3, 16, 144>}, {pipeline_mode = #tpu.pipeline_mode<synchronous>, transform_indices = @transform_10, window_bounds = array<i64: 3, 16, 144>}, {pipeline_mode = #tpu.pipeline_mode<synchronous>, transform_indices = @transform_11, window_bounds = array<i64: 16, 1>}, {pipeline_mode = #tpu.pipeline_mode<synchronous>, transform_indices = @transform_12, window_bounds = array<i64: 16, 1>}, {pipeline_mode = #tpu.pipeline_mode<synchronous>, transform_indices = @transform_13, window_bounds = array<i64: 32, 1>}, {pipeline_mode = #tpu.pipeline_mode<synchronous>, transform_indices = @transform_14, window_bounds = array<i64: 32, 1>}, {pipeline_mode = #tpu.pipeline_mode<synchronous>, transform_indices = @transform_15, window_bounds = array<i64: 64, 1>}, {pipeline_mode = #tpu.pipeline_mode<synchronous>, transform_indices = @transform_16, window_bounds = array<i64: 64, 1>}, {pipeline_mode = #tpu.pipeline_mode<synchronous>, transform_indices = @transform_17, window_bounds = array<i64: 32, 1>}, {pipeline_mode = #tpu.pipeline_mode<synchronous>, transform_indices = @transform_18, window_bounds = array<i64: 32, 1>}, {pipeline_mode = #tpu.pipeline_mode<synchronous>, transform_indices = @transform_19, window_bounds = array<i64: 16, 1>}, {pipeline_mode = #tpu.pipeline_mode<synchronous>, transform_indices = @transform_20, window_bounds = array<i64: 16, 1>}, {pipeline_mode = #tpu.pipeline_mode<synchronous>, transform_indices = @transform_21, window_bounds = array<i64: 4, 324, 100>}, {pipeline_mode = #tpu.pipeline_mode<synchronous>, transform_indices = @transform_22, window_bounds = array<i64: 4, 100, 36>}, {pipeline_mode = #tpu.pipeline_mode<synchronous>, transform_indices = @transform_23, window_bounds = array<i64: 36, 100>}, {pipeline_mode = #tpu.pipeline_mode<synchronous>, transform_indices = @transform_24, window_bounds = array<i64: 100, 324>}, {pipeline_mode = #tpu.pipeline_mode<synchronous>, transform_indices = @transform_25, window_bounds = array<i64: 1, 324>}, {pipeline_mode = #tpu.pipeline_mode<synchronous>, transform_indices = @transform_26, window_bounds = array<i64: 1, 100>}, {pipeline_mode = #tpu.pipeline_mode<synchronous>, transform_indices = @transform_27, window_bounds = array<i64: 1, 36>}, {transform_indices = @transform_28, window_bounds = array<i64: 1, 16, 324>}]} {
    %cst = arith.constant 0.000000e+00 : bf16
    %0 = vector.broadcast %cst : bf16 to vector<144x512xbf16>
    %c0 = arith.constant 0 : index
    %c0_0 = arith.constant 0 : index
    %1 = vector.load %arg30[%c0, %c0_0] : memref<144x512xbf16, #tpu.memory_space<vmem>>, vector<144x512xbf16>
    tpu.vector_store %arg30[%c0, %c0_0], %0 {strides = array<i32>} : memref<144x512xbf16, #tpu.memory_space<vmem>>, vector<144x512xbf16>,
    %cst_1 = arith.constant 0.000000e+00 : bf16
    %2 = vector.broadcast %cst_1 : bf16 to vector<288x256xbf16>
    %c0_2 = arith.constant 0 : index
    %c0_3 = arith.constant 0 : index
    %3 = vector.load %arg31[%c0_2, %c0_3] : memref<288x256xbf16, #tpu.memory_space<vmem>>, vector<288x256xbf16>
    tpu.vector_store %arg31[%c0_2, %c0_3], %2 {strides = array<i32>} : memref<288x256xbf16, #tpu.memory_space<vmem>>, vector<288x256xbf16>,
    %cst_4 = arith.constant 0.000000e+00 : bf16
    %4 = vector.broadcast %cst_4 : bf16 to vector<192x256xbf16>
    %c0_5 = arith.constant 0 : index
    %c0_6 = arith.constant 0 : index
    %5 = vector.load %arg32[%c0_5, %c0_6] : memref<192x256xbf16, #tpu.memory_space<vmem>>, vector<192x256xbf16>
    tpu.vector_store %arg32[%c0_5, %c0_6], %4 {strides = array<i32>} : memref<192x256xbf16, #tpu.memory_space<vmem>>, vector<192x256xbf16>,
    %c0_7 = arith.constant 0 : index
    %c0_8 = arith.constant 0 : index
    %6 = vector.load %arg26[%c0_7, %c0_8] : memref<1x324xf32, #tpu.memory_space<vmem>>, vector<1x324xf32>
    %c0_9 = arith.constant 0 : index
    %c0_10 = arith.constant 0 : index
    %7 = vector.load %arg27[%c0_9, %c0_10] : memref<1x100xf32, #tpu.memory_space<vmem>>, vector<1x100xf32>
    %c0_11 = arith.constant 0 : index
    %c0_12 = arith.constant 0 : index
    %8 = vector.load %arg28[%c0_11, %c0_12] : memref<1x36xf32, #tpu.memory_space<vmem>>, vector<1x36xf32>
    %c0_13 = arith.constant 0 : index
    %c0_14 = arith.constant 0 : index
    %c0_15 = arith.constant 0 : index
    %9 = vector.load %arg1[%c0_13, %c0_14, %c0_15] : memref<1x4x324xf32, #tpu.memory_space<vmem>>, vector<1x4x324xf32>
    %10 = vector.shape_cast %9 : vector<1x4x324xf32> to vector<4x324xf32>
    %11 = arith.truncf %10 : vector<4x324xf32> to vector<4x324xbf16>
    %c0_16 = arith.constant 0 : index
    %c146 = arith.constant 146 : index
    %12 = vector.load %arg30[%c0_16, %c146] : memref<144x512xbf16, #tpu.memory_space<vmem>>, vector<4x324xbf16>
    tpu.vector_store %arg30[%c0_16, %c146], %11 {strides = array<i32>} : memref<144x512xbf16, #tpu.memory_space<vmem>>, vector<4x324xbf16>,
    %c48 = arith.constant 48 : index
    %c128 = arith.constant 128 : index
    %13 = vector.load %arg30[%c48, %c128] : memref<144x512xbf16, #tpu.memory_space<vmem>>, vector<4x324xbf16>
    tpu.vector_store %arg30[%c48, %c128], %11 {strides = array<i32>} : memref<144x512xbf16, #tpu.memory_space<vmem>>, vector<4x324xbf16>,
    %c96 = arith.constant 96 : index
    %c110 = arith.constant 110 : index
    %14 = vector.load %arg30[%c96, %c110] : memref<144x512xbf16, #tpu.memory_space<vmem>>, vector<4x324xbf16>
    tpu.vector_store %arg30[%c96, %c110], %11 {strides = array<i32>} : memref<144x512xbf16, #tpu.memory_space<vmem>>, vector<4x324xbf16>,
    %c0_17 = arith.constant 0 : index
    %c127 = arith.constant 127 : index
    %15 = vector.load %arg30[%c0_17, %c127] : memref<144x512xbf16, #tpu.memory_space<vmem>>, vector<144x324xbf16>
    %c0_18 = arith.constant 0 : index
    %c0_19 = arith.constant 0 : index
    %c0_20 = arith.constant 0 : index
    %16 = vector.load %arg2[%c0_18, %c0_19, %c0_20] : memref<3x16x144xbf16, #tpu.memory_space<vmem>>, vector<1x16x144xbf16>
    %17 = vector.shape_cast %16 : vector<1x16x144xbf16> to vector<16x144xbf16>
    %cst_21 = arith.constant dense<0.000000e+00> : vector<16x324xf32>
    %18 = tpu.matmul %17, %15, %cst_21 {dimension_numbers = #tpu.dot_dimension_numbers<[1], [0], [0], [1], [0, 0, 1, 1], [], []>} : vector<16x144xbf16>, vector<144x324xbf16>, vector<16x324xf32> -> vector<16x324xf32>
    %c0_22 = arith.constant 0 : index
    %c128_23 = arith.constant 128 : index
    %19 = vector.load %arg30[%c0_22, %c128_23] : memref<144x512xbf16, #tpu.memory_space<vmem>>, vector<144x324xbf16>
    %c1 = arith.constant 1 : index
    %c0_24 = arith.constant 0 : index
    %c0_25 = arith.constant 0 : index
    %20 = vector.load %arg2[%c1, %c0_24, %c0_25] : memref<3x16x144xbf16, #tpu.memory_space<vmem>>, vector<1x16x144xbf16>
    %21 = vector.shape_cast %20 : vector<1x16x144xbf16> to vector<16x144xbf16>
    %cst_26 = arith.constant dense<0.000000e+00> : vector<16x324xf32>
    %22 = tpu.matmul %21, %19, %cst_26 {dimension_numbers = #tpu.dot_dimension_numbers<[1], [0], [0], [1], [0, 0, 1, 1], [], []>} : vector<16x144xbf16>, vector<144x324xbf16>, vector<16x324xf32> -> vector<16x324xf32>
    %23 = arith.addf %18, %22 : vector<16x324xf32>
    %c0_27 = arith.constant 0 : index
    %c129 = arith.constant 129 : index
    %24 = vector.load %arg30[%c0_27, %c129] : memref<144x512xbf16, #tpu.memory_space<vmem>>, vector<144x324xbf16>
    %c2 = arith.constant 2 : index
    %c0_28 = arith.constant 0 : index
    %c0_29 = arith.constant 0 : index
    %25 = vector.load %arg2[%c2, %c0_28, %c0_29] : memref<3x16x144xbf16, #tpu.memory_space<vmem>>, vector<1x16x144xbf16>
    %26 = vector.shape_cast %25 : vector<1x16x144xbf16> to vector<16x144xbf16>
    %cst_30 = arith.constant dense<0.000000e+00> : vector<16x324xf32>
    %27 = tpu.matmul %26, %24, %cst_30 {dimension_numbers = #tpu.dot_dimension_numbers<[1], [0], [0], [1], [0, 0, 1, 1], [], []>} : vector<16x144xbf16>, vector<144x324xbf16>, vector<16x324xf32> -> vector<16x324xf32>
    %28 = arith.addf %23, %27 : vector<16x324xf32>
    %c0_31 = arith.constant 0 : index
    %c0_32 = arith.constant 0 : index
    %29 = vector.load %arg12[%c0_31, %c0_32] : memref<16x1xf32, #tpu.memory_space<vmem>>, vector<16x1xf32>
    %30 = vector.broadcast %29 : vector<16x1xf32> to vector<16x324xf32>
    %31 = arith.addf %28, %30 : vector<16x324xf32>
    %cst_33 = arith.constant 0.000000e+00 : f32
    %32 = vector.broadcast %cst_33 : f32 to vector<16x324xf32>
    %33 = arith.maximumf %31, %32 : vector<16x324xf32>
    %34 = vector.broadcast %6 : vector<1x324xf32> to vector<16x324xf32>
    %35 = arith.mulf %33, %34 : vector<16x324xf32>
    %36 = arith.truncf %35 : vector<16x324xf32> to vector<16x324xbf16>
    %c0_34 = arith.constant 0 : index
    %c146_35 = arith.constant 146 : index
    %37 = vector.load %arg30[%c0_34, %c146_35] : memref<144x512xbf16, #tpu.memory_space<vmem>>, vector<16x324xbf16>
    tpu.vector_store %arg30[%c0_34, %c146_35], %36 {strides = array<i32>} : memref<144x512xbf16, #tpu.memory_space<vmem>>, vector<16x324xbf16>,
    %c48_36 = arith.constant 48 : index
    %c128_37 = arith.constant 128 : index
    %38 = vector.load %arg30[%c48_36, %c128_37] : memref<144x512xbf16, #tpu.memory_space<vmem>>, vector<16x324xbf16>
    tpu.vector_store %arg30[%c48_36, %c128_37], %36 {strides = array<i32>} : memref<144x512xbf16, #tpu.memory_space<vmem>>, vector<16x324xbf16>,
    %c96_38 = arith.constant 96 : index
    %c110_39 = arith.constant 110 : index
    %39 = vector.load %arg30[%c96_38, %c110_39] : memref<144x512xbf16, #tpu.memory_space<vmem>>, vector<16x324xbf16>
    tpu.vector_store %arg30[%c96_38, %c110_39], %36 {strides = array<i32>} : memref<144x512xbf16, #tpu.memory_space<vmem>>, vector<16x324xbf16>,
    %c0_40 = arith.constant 0 : index
    %c127_41 = arith.constant 127 : index
    %40 = vector.load %arg30[%c0_40, %c127_41] : memref<144x512xbf16, #tpu.memory_space<vmem>>, vector<144x324xbf16>
    %c0_42 = arith.constant 0 : index
    %c0_43 = arith.constant 0 : index
    %c0_44 = arith.constant 0 : index
    %41 = vector.load %arg3[%c0_42, %c0_43, %c0_44] : memref<3x16x144xbf16, #tpu.memory_space<vmem>>, vector<1x16x144xbf16>
    %42 = vector.shape_cast %41 : vector<1x16x144xbf16> to vector<16x144xbf16>
    %cst_45 = arith.constant dense<0.000000e+00> : vector<16x324xf32>
    %43 = tpu.matmul %42, %40, %cst_45 {dimension_numbers = #tpu.dot_dimension_numbers<[1], [0], [0], [1], [0, 0, 1, 1], [], []>} : vector<16x144xbf16>, vector<144x324xbf16>, vector<16x324xf32> -> vector<16x324xf32>
    %c0_46 = arith.constant 0 : index
    %c128_47 = arith.constant 128 : index
    %44 = vector.load %arg30[%c0_46, %c128_47] : memref<144x512xbf16, #tpu.memory_space<vmem>>, vector<144x324xbf16>
    %c1_48 = arith.constant 1 : index
    %c0_49 = arith.constant 0 : index
    %c0_50 = arith.constant 0 : index
    %45 = vector.load %arg3[%c1_48, %c0_49, %c0_50] : memref<3x16x144xbf16, #tpu.memory_space<vmem>>, vector<1x16x144xbf16>
    %46 = vector.shape_cast %45 : vector<1x16x144xbf16> to vector<16x144xbf16>
    %cst_51 = arith.constant dense<0.000000e+00> : vector<16x324xf32>
    %47 = tpu.matmul %46, %44, %cst_51 {dimension_numbers = #tpu.dot_dimension_numbers<[1], [0], [0], [1], [0, 0, 1, 1], [], []>} : vector<16x144xbf16>, vector<144x324xbf16>, vector<16x324xf32> -> vector<16x324xf32>
    %48 = arith.addf %43, %47 : vector<16x324xf32>
    %c0_52 = arith.constant 0 : index
    %c129_53 = arith.constant 129 : index
    %49 = vector.load %arg30[%c0_52, %c129_53] : memref<144x512xbf16, #tpu.memory_space<vmem>>, vector<144x324xbf16>
    %c2_54 = arith.constant 2 : index
    %c0_55 = arith.constant 0 : index
    %c0_56 = arith.constant 0 : index
    %50 = vector.load %arg3[%c2_54, %c0_55, %c0_56] : memref<3x16x144xbf16, #tpu.memory_space<vmem>>, vector<1x16x144xbf16>
    %51 = vector.shape_cast %50 : vector<1x16x144xbf16> to vector<16x144xbf16>
    %cst_57 = arith.constant dense<0.000000e+00> : vector<16x324xf32>
    %52 = tpu.matmul %51, %49, %cst_57 {dimension_numbers = #tpu.dot_dimension_numbers<[1], [0], [0], [1], [0, 0, 1, 1], [], []>} : vector<16x144xbf16>, vector<144x324xbf16>, vector<16x324xf32> -> vector<16x324xf32>
    %53 = arith.addf %48, %52 : vector<16x324xf32>
    %c0_58 = arith.constant 0 : index
    %c0_59 = arith.constant 0 : index
    %54 = vector.load %arg13[%c0_58, %c0_59] : memref<16x1xf32, #tpu.memory_space<vmem>>, vector<16x1xf32>
    %55 = vector.broadcast %54 : vector<16x1xf32> to vector<16x324xf32>
    %56 = arith.addf %53, %55 : vector<16x324xf32>
    %cst_60 = arith.constant 0.000000e+00 : f32
    %57 = vector.broadcast %cst_60 : f32 to vector<16x324xf32>
    %58 = arith.maximumf %56, %57 : vector<16x324xf32>
    %59 = vector.broadcast %6 : vector<1x324xf32> to vector<16x324xf32>
    %60 = arith.mulf %58, %59 : vector<16x324xf32>
    %61 = arith.truncf %60 : vector<16x324xf32> to vector<16x324xbf16>
    %c0_61 = arith.constant 0 : index
    %c0_62 = arith.constant 0 : index
    %c0_63 = arith.constant 0 : index
    %62 = vector.load %arg22[%c0_61, %c0_62, %c0_63] : memref<4x324x100xbf16, #tpu.memory_space<vmem>>, vector<1x324x100xbf16>
    %63 = vector.shape_cast %62 : vector<1x324x100xbf16> to vector<324x100xbf16>
    %cst_64 = arith.constant dense<0.000000e+00> : vector<16x100xf32>
    %64 = tpu.matmul %61, %63, %cst_64 {dimension_numbers = #tpu.dot_dimension_numbers<[1], [0], [0], [1], [0, 0, 1, 1], [], []>} : vector<16x324xbf16>, vector<324x100xbf16>, vector<16x100xf32> -> vector<16x100xf32>
    %c1_65 = arith.constant 1 : index
    %c0_66 = arith.constant 0 : index
    %c0_67 = arith.constant 0 : index
    %65 = vector.load %arg22[%c1_65, %c0_66, %c0_67] : memref<4x324x100xbf16, #tpu.memory_space<vmem>>, vector<1x324x100xbf16>
    %66 = vector.shape_cast %65 : vector<1x324x100xbf16> to vector<324x100xbf16>
    %cst_68 = arith.constant dense<0.000000e+00> : vector<16x100xf32>
    %67 = tpu.matmul %61, %66, %cst_68 {dimension_numbers = #tpu.dot_dimension_numbers<[1], [0], [0], [1], [0, 0, 1, 1], [], []>} : vector<16x324xbf16>, vector<324x100xbf16>, vector<16x100xf32> -> vector<16x100xf32>
    %68 = arith.maximumf %64, %67 : vector<16x100xf32>
    %c2_69 = arith.constant 2 : index
    %c0_70 = arith.constant 0 : index
    %c0_71 = arith.constant 0 : index
    %69 = vector.load %arg22[%c2_69, %c0_70, %c0_71] : memref<4x324x100xbf16, #tpu.memory_space<vmem>>, vector<1x324x100xbf16>
    %70 = vector.shape_cast %69 : vector<1x324x100xbf16> to vector<324x100xbf16>
    %cst_72 = arith.constant dense<0.000000e+00> : vector<16x100xf32>
    %71 = tpu.matmul %61, %70, %cst_72 {dimension_numbers = #tpu.dot_dimension_numbers<[1], [0], [0], [1], [0, 0, 1, 1], [], []>} : vector<16x324xbf16>, vector<324x100xbf16>, vector<16x100xf32> -> vector<16x100xf32>
    %72 = arith.maximumf %68, %71 : vector<16x100xf32>
    %c3 = arith.constant 3 : index
    %c0_73 = arith.constant 0 : index
    %c0_74 = arith.constant 0 : index
    %73 = vector.load %arg22[%c3, %c0_73, %c0_74] : memref<4x324x100xbf16, #tpu.memory_space<vmem>>, vector<1x324x100xbf16>
    %74 = vector.shape_cast %73 : vector<1x324x100xbf16> to vector<324x100xbf16>
    %cst_75 = arith.constant dense<0.000000e+00> : vector<16x100xf32>
    %75 = tpu.matmul %61, %74, %cst_75 {dimension_numbers = #tpu.dot_dimension_numbers<[1], [0], [0], [1], [0, 0, 1, 1], [], []>} : vector<16x324xbf16>, vector<324x100xbf16>, vector<16x100xf32> -> vector<16x100xf32>
    %76 = arith.maximumf %72, %75 : vector<16x100xf32>
    %77 = arith.truncf %76 : vector<16x100xf32> to vector<16x100xbf16>
    %c0_76 = arith.constant 0 : index
    %c138 = arith.constant 138 : index
    %78 = vector.load %arg31[%c0_76, %c138] : memref<288x256xbf16, #tpu.memory_space<vmem>>, vector<16x100xbf16>
    tpu.vector_store %arg31[%c0_76, %c138], %77 {strides = array<i32>} : memref<288x256xbf16, #tpu.memory_space<vmem>>, vector<16x100xbf16>,
    %c96_77 = arith.constant 96 : index
    %c128_78 = arith.constant 128 : index
    %79 = vector.load %arg31[%c96_77, %c128_78] : memref<288x256xbf16, #tpu.memory_space<vmem>>, vector<16x100xbf16>
    tpu.vector_store %arg31[%c96_77, %c128_78], %77 {strides = array<i32>} : memref<288x256xbf16, #tpu.memory_space<vmem>>, vector<16x100xbf16>,
    %c192 = arith.constant 192 : index
    %c118 = arith.constant 118 : index
    %80 = vector.load %arg31[%c192, %c118] : memref<288x256xbf16, #tpu.memory_space<vmem>>, vector<16x100xbf16>
    tpu.vector_store %arg31[%c192, %c118], %77 {strides = array<i32>} : memref<288x256xbf16, #tpu.memory_space<vmem>>, vector<16x100xbf16>,
    %c0_79 = arith.constant 0 : index
    %c127_80 = arith.constant 127 : index
    %81 = vector.load %arg31[%c0_79, %c127_80] : memref<288x256xbf16, #tpu.memory_space<vmem>>, vector<288x100xbf16>
    %c0_81 = arith.constant 0 : index
    %c0_82 = arith.constant 0 : index
    %c0_83 = arith.constant 0 : index
    %82 = vector.load %arg4[%c0_81, %c0_82, %c0_83] : memref<3x32x288xbf16, #tpu.memory_space<vmem>>, vector<1x32x288xbf16>
    %83 = vector.shape_cast %82 : vector<1x32x288xbf16> to vector<32x288xbf16>
    %cst_84 = arith.constant dense<0.000000e+00> : vector<32x100xf32>
    %84 = tpu.matmul %83, %81, %cst_84 {dimension_numbers = #tpu.dot_dimension_numbers<[1], [0], [0], [1], [0, 0, 1, 1], [], []>} : vector<32x288xbf16>, vector<288x100xbf16>, vector<32x100xf32> -> vector<32x100xf32>
    %c0_85 = arith.constant 0 : index
    %c128_86 = arith.constant 128 : index
    %85 = vector.load %arg31[%c0_85, %c128_86] : memref<288x256xbf16, #tpu.memory_space<vmem>>, vector<288x100xbf16>
    %c1_87 = arith.constant 1 : index
    %c0_88 = arith.constant 0 : index
    %c0_89 = arith.constant 0 : index
    %86 = vector.load %arg4[%c1_87, %c0_88, %c0_89] : memref<3x32x288xbf16, #tpu.memory_space<vmem>>, vector<1x32x288xbf16>
    %87 = vector.shape_cast %86 : vector<1x32x288xbf16> to vector<32x288xbf16>
    %cst_90 = arith.constant dense<0.000000e+00> : vector<32x100xf32>
    %88 = tpu.matmul %87, %85, %cst_90 {dimension_numbers = #tpu.dot_dimension_numbers<[1], [0], [0], [1], [0, 0, 1, 1], [], []>} : vector<32x288xbf16>, vector<288x100xbf16>, vector<32x100xf32> -> vector<32x100xf32>
    %89 = arith.addf %84, %88 : vector<32x100xf32>
    %c0_91 = arith.constant 0 : index
    %c129_92 = arith.constant 129 : index
    %90 = vector.load %arg31[%c0_91, %c129_92] : memref<288x256xbf16, #tpu.memory_space<vmem>>, vector<288x100xbf16>
    %c2_93 = arith.constant 2 : index
    %c0_94 = arith.constant 0 : index
    %c0_95 = arith.constant 0 : index
    %91 = vector.load %arg4[%c2_93, %c0_94, %c0_95] : memref<3x32x288xbf16, #tpu.memory_space<vmem>>, vector<1x32x288xbf16>
    %92 = vector.shape_cast %91 : vector<1x32x288xbf16> to vector<32x288xbf16>
    %cst_96 = arith.constant dense<0.000000e+00> : vector<32x100xf32>
    %93 = tpu.matmul %92, %90, %cst_96 {dimension_numbers = #tpu.dot_dimension_numbers<[1], [0], [0], [1], [0, 0, 1, 1], [], []>} : vector<32x288xbf16>, vector<288x100xbf16>, vector<32x100xf32> -> vector<32x100xf32>
    %94 = arith.addf %89, %93 : vector<32x100xf32>
    %c0_97 = arith.constant 0 : index
    %c0_98 = arith.constant 0 : index
    %95 = vector.load %arg14[%c0_97, %c0_98] : memref<32x1xf32, #tpu.memory_space<vmem>>, vector<32x1xf32>
    %96 = vector.broadcast %95 : vector<32x1xf32> to vector<32x100xf32>
    %97 = arith.addf %94, %96 : vector<32x100xf32>
    %cst_99 = arith.constant 0.000000e+00 : f32
    %98 = vector.broadcast %cst_99 : f32 to vector<32x100xf32>
    %99 = arith.maximumf %97, %98 : vector<32x100xf32>
    %100 = vector.broadcast %7 : vector<1x100xf32> to vector<32x100xf32>
    %101 = arith.mulf %99, %100 : vector<32x100xf32>
    %102 = arith.truncf %101 : vector<32x100xf32> to vector<32x100xbf16>
    %c0_100 = arith.constant 0 : index
    %c138_101 = arith.constant 138 : index
    %103 = vector.load %arg31[%c0_100, %c138_101] : memref<288x256xbf16, #tpu.memory_space<vmem>>, vector<32x100xbf16>
    tpu.vector_store %arg31[%c0_100, %c138_101], %102 {strides = array<i32>} : memref<288x256xbf16, #tpu.memory_space<vmem>>, vector<32x100xbf16>,
    %c96_102 = arith.constant 96 : index
    %c128_103 = arith.constant 128 : index
    %104 = vector.load %arg31[%c96_102, %c128_103] : memref<288x256xbf16, #tpu.memory_space<vmem>>, vector<32x100xbf16>
    tpu.vector_store %arg31[%c96_102, %c128_103], %102 {strides = array<i32>} : memref<288x256xbf16, #tpu.memory_space<vmem>>, vector<32x100xbf16>,
    %c192_104 = arith.constant 192 : index
    %c118_105 = arith.constant 118 : index
    %105 = vector.load %arg31[%c192_104, %c118_105] : memref<288x256xbf16, #tpu.memory_space<vmem>>, vector<32x100xbf16>
    tpu.vector_store %arg31[%c192_104, %c118_105], %102 {strides = array<i32>} : memref<288x256xbf16, #tpu.memory_space<vmem>>, vector<32x100xbf16>,
    %c0_106 = arith.constant 0 : index
    %c127_107 = arith.constant 127 : index
    %106 = vector.load %arg31[%c0_106, %c127_107] : memref<288x256xbf16, #tpu.memory_space<vmem>>, vector<288x100xbf16>
    %c0_108 = arith.constant 0 : index
    %c0_109 = arith.constant 0 : index
    %c0_110 = arith.constant 0 : index
    %107 = vector.load %arg5[%c0_108, %c0_109, %c0_110] : memref<3x32x288xbf16, #tpu.memory_space<vmem>>, vector<1x32x288xbf16>
    %108 = vector.shape_cast %107 : vector<1x32x288xbf16> to vector<32x288xbf16>
    %cst_111 = arith.constant dense<0.000000e+00> : vector<32x100xf32>
    %109 = tpu.matmul %108, %106, %cst_111 {dimension_numbers = #tpu.dot_dimension_numbers<[1], [0], [0], [1], [0, 0, 1, 1], [], []>} : vector<32x288xbf16>, vector<288x100xbf16>, vector<32x100xf32> -> vector<32x100xf32>
    %c0_112 = arith.constant 0 : index
    %c128_113 = arith.constant 128 : index
    %110 = vector.load %arg31[%c0_112, %c128_113] : memref<288x256xbf16, #tpu.memory_space<vmem>>, vector<288x100xbf16>
    %c1_114 = arith.constant 1 : index
    %c0_115 = arith.constant 0 : index
    %c0_116 = arith.constant 0 : index
    %111 = vector.load %arg5[%c1_114, %c0_115, %c0_116] : memref<3x32x288xbf16, #tpu.memory_space<vmem>>, vector<1x32x288xbf16>
    %112 = vector.shape_cast %111 : vector<1x32x288xbf16> to vector<32x288xbf16>
    %cst_117 = arith.constant dense<0.000000e+00> : vector<32x100xf32>
    %113 = tpu.matmul %112, %110, %cst_117 {dimension_numbers = #tpu.dot_dimension_numbers<[1], [0], [0], [1], [0, 0, 1, 1], [], []>} : vector<32x288xbf16>, vector<288x100xbf16>, vector<32x100xf32> -> vector<32x100xf32>
    %114 = arith.addf %109, %113 : vector<32x100xf32>
    %c0_118 = arith.constant 0 : index
    %c129_119 = arith.constant 129 : index
    %115 = vector.load %arg31[%c0_118, %c129_119] : memref<288x256xbf16, #tpu.memory_space<vmem>>, vector<288x100xbf16>
    %c2_120 = arith.constant 2 : index
    %c0_121 = arith.constant 0 : index
    %c0_122 = arith.constant 0 : index
    %116 = vector.load %arg5[%c2_120, %c0_121, %c0_122] : memref<3x32x288xbf16, #tpu.memory_space<vmem>>, vector<1x32x288xbf16>
    %117 = vector.shape_cast %116 : vector<1x32x288xbf16> to vector<32x288xbf16>
    %cst_123 = arith.constant dense<0.000000e+00> : vector<32x100xf32>
    %118 = tpu.matmul %117, %115, %cst_123 {dimension_numbers = #tpu.dot_dimension_numbers<[1], [0], [0], [1], [0, 0, 1, 1], [], []>} : vector<32x288xbf16>, vector<288x100xbf16>, vector<32x100xf32> -> vector<32x100xf32>
    %119 = arith.addf %114, %118 : vector<32x100xf32>
    %c0_124 = arith.constant 0 : index
    %c0_125 = arith.constant 0 : index
    %120 = vector.load %arg15[%c0_124, %c0_125] : memref<32x1xf32, #tpu.memory_space<vmem>>, vector<32x1xf32>
    %121 = vector.broadcast %120 : vector<32x1xf32> to vector<32x100xf32>
    %122 = arith.addf %119, %121 : vector<32x100xf32>
    %cst_126 = arith.constant 0.000000e+00 : f32
    %123 = vector.broadcast %cst_126 : f32 to vector<32x100xf32>
    %124 = arith.maximumf %122, %123 : vector<32x100xf32>
    %125 = vector.broadcast %7 : vector<1x100xf32> to vector<32x100xf32>
    %126 = arith.mulf %124, %125 : vector<32x100xf32>
    %127 = arith.truncf %126 : vector<32x100xf32> to vector<32x100xbf16>
    %c0_127 = arith.constant 0 : index
    %c0_128 = arith.constant 0 : index
    %c0_129 = arith.constant 0 : index
    %128 = vector.load %arg23[%c0_127, %c0_128, %c0_129] : memref<4x100x36xbf16, #tpu.memory_space<vmem>>, vector<1x100x36xbf16>
    %129 = vector.shape_cast %128 : vector<1x100x36xbf16> to vector<100x36xbf16>
    %cst_130 = arith.constant dense<0.000000e+00> : vector<32x36xf32>
    %130 = tpu.matmul %127, %129, %cst_130 {dimension_numbers = #tpu.dot_dimension_numbers<[1], [0], [0], [1], [0, 0, 1, 1], [], []>} : vector<32x100xbf16>, vector<100x36xbf16>, vector<32x36xf32> -> vector<32x36xf32>
    %c1_131 = arith.constant 1 : index
    %c0_132 = arith.constant 0 : index
    %c0_133 = arith.constant 0 : index
    %131 = vector.load %arg23[%c1_131, %c0_132, %c0_133] : memref<4x100x36xbf16, #tpu.memory_space<vmem>>, vector<1x100x36xbf16>
    %132 = vector.shape_cast %131 : vector<1x100x36xbf16> to vector<100x36xbf16>
    %cst_134 = arith.constant dense<0.000000e+00> : vector<32x36xf32>
    %133 = tpu.matmul %127, %132, %cst_134 {dimension_numbers = #tpu.dot_dimension_numbers<[1], [0], [0], [1], [0, 0, 1, 1], [], []>} : vector<32x100xbf16>, vector<100x36xbf16>, vector<32x36xf32> -> vector<32x36xf32>
    %134 = arith.maximumf %130, %133 : vector<32x36xf32>
    %c2_135 = arith.constant 2 : index
    %c0_136 = arith.constant 0 : index
    %c0_137 = arith.constant 0 : index
    %135 = vector.load %arg23[%c2_135, %c0_136, %c0_137] : memref<4x100x36xbf16, #tpu.memory_space<vmem>>, vector<1x100x36xbf16>
    %136 = vector.shape_cast %135 : vector<1x100x36xbf16> to vector<100x36xbf16>
    %cst_138 = arith.constant dense<0.000000e+00> : vector<32x36xf32>
    %137 = tpu.matmul %127, %136, %cst_138 {dimension_numbers = #tpu.dot_dimension_numbers<[1], [0], [0], [1], [0, 0, 1, 1], [], []>} : vector<32x100xbf16>, vector<100x36xbf16>, vector<32x36xf32> -> vector<32x36xf32>
    %138 = arith.maximumf %134, %137 : vector<32x36xf32>
    %c3_139 = arith.constant 3 : index
    %c0_140 = arith.constant 0 : index
    %c0_141 = arith.constant 0 : index
    %139 = vector.load %arg23[%c3_139, %c0_140, %c0_141] : memref<4x100x36xbf16, #tpu.memory_space<vmem>>, vector<1x100x36xbf16>
    %140 = vector.shape_cast %139 : vector<1x100x36xbf16> to vector<100x36xbf16>
    %cst_142 = arith.constant dense<0.000000e+00> : vector<32x36xf32>
    %141 = tpu.matmul %127, %140, %cst_142 {dimension_numbers = #tpu.dot_dimension_numbers<[1], [0], [0], [1], [0, 0, 1, 1], [], []>} : vector<32x100xbf16>, vector<100x36xbf16>, vector<32x36xf32> -> vector<32x36xf32>
    %142 = arith.maximumf %138, %141 : vector<32x36xf32>
    %143 = arith.truncf %142 : vector<32x36xf32> to vector<32x36xbf16>
    %c0_143 = arith.constant 0 : index
    %c134 = arith.constant 134 : index
    %144 = vector.load %arg32[%c0_143, %c134] : memref<192x256xbf16, #tpu.memory_space<vmem>>, vector<32x36xbf16>
    tpu.vector_store %arg32[%c0_143, %c134], %143 {strides = array<i32>} : memref<192x256xbf16, #tpu.memory_space<vmem>>, vector<32x36xbf16>,
    %c64 = arith.constant 64 : index
    %c128_144 = arith.constant 128 : index
    %145 = vector.load %arg32[%c64, %c128_144] : memref<192x256xbf16, #tpu.memory_space<vmem>>, vector<32x36xbf16>
    tpu.vector_store %arg32[%c64, %c128_144], %143 {strides = array<i32>} : memref<192x256xbf16, #tpu.memory_space<vmem>>, vector<32x36xbf16>,
    %c128_145 = arith.constant 128 : index
    %c122 = arith.constant 122 : index
    %146 = vector.load %arg32[%c128_145, %c122] : memref<192x256xbf16, #tpu.memory_space<vmem>>, vector<32x36xbf16>
    tpu.vector_store %arg32[%c128_145, %c122], %143 {strides = array<i32>} : memref<192x256xbf16, #tpu.memory_space<vmem>>, vector<32x36xbf16>,
    %c0_146 = arith.constant 0 : index
    %c127_147 = arith.constant 127 : index
    %147 = vector.load %arg32[%c0_146, %c127_147] : memref<192x256xbf16, #tpu.memory_space<vmem>>, vector<192x36xbf16>
    %c0_148 = arith.constant 0 : index
    %c0_149 = arith.constant 0 : index
    %c0_150 = arith.constant 0 : index
    %148 = vector.load %arg6[%c0_148, %c0_149, %c0_150] : memref<3x64x192xbf16, #tpu.memory_space<vmem>>, vector<1x64x192xbf16>
    %149 = vector.shape_cast %148 : vector<1x64x192xbf16> to vector<64x192xbf16>
    %cst_151 = arith.constant dense<0.000000e+00> : vector<64x36xf32>
    %150 = tpu.matmul %149, %147, %cst_151 {dimension_numbers = #tpu.dot_dimension_numbers<[1], [0], [0], [1], [0, 0, 1, 1], [], []>} : vector<64x192xbf16>, vector<192x36xbf16>, vector<64x36xf32> -> vector<64x36xf32>
    %c0_152 = arith.constant 0 : index
    %c128_153 = arith.constant 128 : index
    %151 = vector.load %arg32[%c0_152, %c128_153] : memref<192x256xbf16, #tpu.memory_space<vmem>>, vector<192x36xbf16>
    %c1_154 = arith.constant 1 : index
    %c0_155 = arith.constant 0 : index
    %c0_156 = arith.constant 0 : index
    %152 = vector.load %arg6[%c1_154, %c0_155, %c0_156] : memref<3x64x192xbf16, #tpu.memory_space<vmem>>, vector<1x64x192xbf16>
    %153 = vector.shape_cast %152 : vector<1x64x192xbf16> to vector<64x192xbf16>
    %cst_157 = arith.constant dense<0.000000e+00> : vector<64x36xf32>
    %154 = tpu.matmul %153, %151, %cst_157 {dimension_numbers = #tpu.dot_dimension_numbers<[1], [0], [0], [1], [0, 0, 1, 1], [], []>} : vector<64x192xbf16>, vector<192x36xbf16>, vector<64x36xf32> -> vector<64x36xf32>
    %155 = arith.addf %150, %154 : vector<64x36xf32>
    %c0_158 = arith.constant 0 : index
    %c129_159 = arith.constant 129 : index
    %156 = vector.load %arg32[%c0_158, %c129_159] : memref<192x256xbf16, #tpu.memory_space<vmem>>, vector<192x36xbf16>
    %c2_160 = arith.constant 2 : index
    %c0_161 = arith.constant 0 : index
    %c0_162 = arith.constant 0 : index
    %157 = vector.load %arg6[%c2_160, %c0_161, %c0_162] : memref<3x64x192xbf16, #tpu.memory_space<vmem>>, vector<1x64x192xbf16>
    %158 = vector.shape_cast %157 : vector<1x64x192xbf16> to vector<64x192xbf16>
    %cst_163 = arith.constant dense<0.000000e+00> : vector<64x36xf32>
    %159 = tpu.matmul %158, %156, %cst_163 {dimension_numbers = #tpu.dot_dimension_numbers<[1], [0], [0], [1], [0, 0, 1, 1], [], []>} : vector<64x192xbf16>, vector<192x36xbf16>, vector<64x36xf32> -> vector<64x36xf32>
    %160 = arith.addf %155, %159 : vector<64x36xf32>
    %c0_164 = arith.constant 0 : index
    %c0_165 = arith.constant 0 : index
    %161 = vector.load %arg16[%c0_164, %c0_165] : memref<64x1xf32, #tpu.memory_space<vmem>>, vector<64x1xf32>
    %162 = vector.broadcast %161 : vector<64x1xf32> to vector<64x36xf32>
    %163 = arith.addf %160, %162 : vector<64x36xf32>
    %cst_166 = arith.constant 0.000000e+00 : f32
    %164 = vector.broadcast %cst_166 : f32 to vector<64x36xf32>
    %165 = arith.maximumf %163, %164 : vector<64x36xf32>
    %166 = vector.broadcast %8 : vector<1x36xf32> to vector<64x36xf32>
    %167 = arith.mulf %165, %166 : vector<64x36xf32>
    %168 = arith.truncf %167 : vector<64x36xf32> to vector<64x36xbf16>
    %c0_167 = arith.constant 0 : index
    %c134_168 = arith.constant 134 : index
    %169 = vector.load %arg32[%c0_167, %c134_168] : memref<192x256xbf16, #tpu.memory_space<vmem>>, vector<64x36xbf16>
    tpu.vector_store %arg32[%c0_167, %c134_168], %168 {strides = array<i32>} : memref<192x256xbf16, #tpu.memory_space<vmem>>, vector<64x36xbf16>,
    %c64_169 = arith.constant 64 : index
    %c128_170 = arith.constant 128 : index
    %170 = vector.load %arg32[%c64_169, %c128_170] : memref<192x256xbf16, #tpu.memory_space<vmem>>, vector<64x36xbf16>
    tpu.vector_store %arg32[%c64_169, %c128_170], %168 {strides = array<i32>} : memref<192x256xbf16, #tpu.memory_space<vmem>>, vector<64x36xbf16>,
    %c128_171 = arith.constant 128 : index
    %c122_172 = arith.constant 122 : index
    %171 = vector.load %arg32[%c128_171, %c122_172] : memref<192x256xbf16, #tpu.memory_space<vmem>>, vector<64x36xbf16>
    tpu.vector_store %arg32[%c128_171, %c122_172], %168 {strides = array<i32>} : memref<192x256xbf16, #tpu.memory_space<vmem>>, vector<64x36xbf16>,
    %c0_173 = arith.constant 0 : index
    %c127_174 = arith.constant 127 : index
    %172 = vector.load %arg32[%c0_173, %c127_174] : memref<192x256xbf16, #tpu.memory_space<vmem>>, vector<192x36xbf16>
    %c0_175 = arith.constant 0 : index
    %c0_176 = arith.constant 0 : index
    %c0_177 = arith.constant 0 : index
    %173 = vector.load %arg7[%c0_175, %c0_176, %c0_177] : memref<3x64x192xbf16, #tpu.memory_space<vmem>>, vector<1x64x192xbf16>
    %174 = vector.shape_cast %173 : vector<1x64x192xbf16> to vector<64x192xbf16>
    %cst_178 = arith.constant dense<0.000000e+00> : vector<64x36xf32>
    %175 = tpu.matmul %174, %172, %cst_178 {dimension_numbers = #tpu.dot_dimension_numbers<[1], [0], [0], [1], [0, 0, 1, 1], [], []>} : vector<64x192xbf16>, vector<192x36xbf16>, vector<64x36xf32> -> vector<64x36xf32>
    %c0_179 = arith.constant 0 : index
    %c128_180 = arith.constant 128 : index
    %176 = vector.load %arg32[%c0_179, %c128_180] : memref<192x256xbf16, #tpu.memory_space<vmem>>, vector<192x36xbf16>
    %c1_181 = arith.constant 1 : index
    %c0_182 = arith.constant 0 : index
    %c0_183 = arith.constant 0 : index
    %177 = vector.load %arg7[%c1_181, %c0_182, %c0_183] : memref<3x64x192xbf16, #tpu.memory_space<vmem>>, vector<1x64x192xbf16>
    %178 = vector.shape_cast %177 : vector<1x64x192xbf16> to vector<64x192xbf16>
    %cst_184 = arith.constant dense<0.000000e+00> : vector<64x36xf32>
    %179 = tpu.matmul %178, %176, %cst_184 {dimension_numbers = #tpu.dot_dimension_numbers<[1], [0], [0], [1], [0, 0, 1, 1], [], []>} : vector<64x192xbf16>, vector<192x36xbf16>, vector<64x36xf32> -> vector<64x36xf32>
    %180 = arith.addf %175, %179 : vector<64x36xf32>
    %c0_185 = arith.constant 0 : index
    %c129_186 = arith.constant 129 : index
    %181 = vector.load %arg32[%c0_185, %c129_186] : memref<192x256xbf16, #tpu.memory_space<vmem>>, vector<192x36xbf16>
    %c2_187 = arith.constant 2 : index
    %c0_188 = arith.constant 0 : index
    %c0_189 = arith.constant 0 : index
    %182 = vector.load %arg7[%c2_187, %c0_188, %c0_189] : memref<3x64x192xbf16, #tpu.memory_space<vmem>>, vector<1x64x192xbf16>
    %183 = vector.shape_cast %182 : vector<1x64x192xbf16> to vector<64x192xbf16>
    %cst_190 = arith.constant dense<0.000000e+00> : vector<64x36xf32>
    %184 = tpu.matmul %183, %181, %cst_190 {dimension_numbers = #tpu.dot_dimension_numbers<[1], [0], [0], [1], [0, 0, 1, 1], [], []>} : vector<64x192xbf16>, vector<192x36xbf16>, vector<64x36xf32> -> vector<64x36xf32>
    %185 = arith.addf %180, %184 : vector<64x36xf32>
    %c0_191 = arith.constant 0 : index
    %c0_192 = arith.constant 0 : index
    %186 = vector.load %arg17[%c0_191, %c0_192] : memref<64x1xf32, #tpu.memory_space<vmem>>, vector<64x1xf32>
    %187 = vector.broadcast %186 : vector<64x1xf32> to vector<64x36xf32>
    %188 = arith.addf %185, %187 : vector<64x36xf32>
    %cst_193 = arith.constant 0.000000e+00 : f32
    %189 = vector.broadcast %cst_193 : f32 to vector<64x36xf32>
    %190 = arith.maximumf %188, %189 : vector<64x36xf32>
    %191 = arith.truncf %190 : vector<64x36xf32> to vector<64x36xbf16>
    %c0_194 = arith.constant 0 : index
    %c0_195 = arith.constant 0 : index
    %192 = vector.load %arg24[%c0_194, %c0_195] : memref<36x100xbf16, #tpu.memory_space<vmem>>, vector<36x100xbf16>
    %cst_196 = arith.constant dense<0.000000e+00> : vector<64x100xf32>
    %193 = tpu.matmul %191, %192, %cst_196 {dimension_numbers = #tpu.dot_dimension_numbers<[1], [0], [0], [1], [0, 0, 1, 1], [], []>} : vector<64x36xbf16>, vector<36x100xbf16>, vector<64x100xf32> -> vector<64x100xf32>
    %194 = arith.truncf %193 : vector<64x100xf32> to vector<64x100xbf16>
    %c0_197 = arith.constant 0 : index
    %c138_198 = arith.constant 138 : index
    %195 = vector.load %arg31[%c0_197, %c138_198] : memref<288x256xbf16, #tpu.memory_space<vmem>>, vector<64x100xbf16>
    tpu.vector_store %arg31[%c0_197, %c138_198], %194 {strides = array<i32>} : memref<288x256xbf16, #tpu.memory_space<vmem>>, vector<64x100xbf16>,
    %c96_199 = arith.constant 96 : index
    %c128_200 = arith.constant 128 : index
    %196 = vector.load %arg31[%c96_199, %c128_200] : memref<288x256xbf16, #tpu.memory_space<vmem>>, vector<64x100xbf16>
    tpu.vector_store %arg31[%c96_199, %c128_200], %194 {strides = array<i32>} : memref<288x256xbf16, #tpu.memory_space<vmem>>, vector<64x100xbf16>,
    %c192_201 = arith.constant 192 : index
    %c118_202 = arith.constant 118 : index
    %197 = vector.load %arg31[%c192_201, %c118_202] : memref<288x256xbf16, #tpu.memory_space<vmem>>, vector<64x100xbf16>
    tpu.vector_store %arg31[%c192_201, %c118_202], %194 {strides = array<i32>} : memref<288x256xbf16, #tpu.memory_space<vmem>>, vector<64x100xbf16>,
    %198 = arith.truncf %126 : vector<32x100xf32> to vector<32x100xbf16>
    %c64_203 = arith.constant 64 : index
    %c138_204 = arith.constant 138 : index
    %199 = vector.load %arg31[%c64_203, %c138_204] : memref<288x256xbf16, #tpu.memory_space<vmem>>, vector<32x100xbf16>
    tpu.vector_store %arg31[%c64_203, %c138_204], %198 {strides = array<i32>} : memref<288x256xbf16, #tpu.memory_space<vmem>>, vector<32x100xbf16>,
    %c160 = arith.constant 160 : index
    %c128_205 = arith.constant 128 : index
    %200 = vector.load %arg31[%c160, %c128_205] : memref<288x256xbf16, #tpu.memory_space<vmem>>, vector<32x100xbf16>
    tpu.vector_store %arg31[%c160, %c128_205], %198 {strides = array<i32>} : memref<288x256xbf16, #tpu.memory_space<vmem>>, vector<32x100xbf16>,
    %c256 = arith.constant 256 : index
    %c118_206 = arith.constant 118 : index
    %201 = vector.load %arg31[%c256, %c118_206] : memref<288x256xbf16, #tpu.memory_space<vmem>>, vector<32x100xbf16>
    tpu.vector_store %arg31[%c256, %c118_206], %198 {strides = array<i32>} : memref<288x256xbf16, #tpu.memory_space<vmem>>, vector<32x100xbf16>,
    %c0_207 = arith.constant 0 : index
    %c127_208 = arith.constant 127 : index
    %202 = vector.load %arg31[%c0_207, %c127_208] : memref<288x256xbf16, #tpu.memory_space<vmem>>, vector<288x100xbf16>
    %c0_209 = arith.constant 0 : index
    %c0_210 = arith.constant 0 : index
    %c0_211 = arith.constant 0 : index
    %203 = vector.load %arg8[%c0_209, %c0_210, %c0_211] : memref<3x32x288xbf16, #tpu.memory_space<vmem>>, vector<1x32x288xbf16>
    %204 = vector.shape_cast %203 : vector<1x32x288xbf16> to vector<32x288xbf16>
    %cst_212 = arith.constant dense<0.000000e+00> : vector<32x100xf32>
    %205 = tpu.matmul %204, %202, %cst_212 {dimension_numbers = #tpu.dot_dimension_numbers<[1], [0], [0], [1], [0, 0, 1, 1], [], []>} : vector<32x288xbf16>, vector<288x100xbf16>, vector<32x100xf32> -> vector<32x100xf32>
    %c0_213 = arith.constant 0 : index
    %c128_214 = arith.constant 128 : index
    %206 = vector.load %arg31[%c0_213, %c128_214] : memref<288x256xbf16, #tpu.memory_space<vmem>>, vector<288x100xbf16>
    %c1_215 = arith.constant 1 : index
    %c0_216 = arith.constant 0 : index
    %c0_217 = arith.constant 0 : index
    %207 = vector.load %arg8[%c1_215, %c0_216, %c0_217] : memref<3x32x288xbf16, #tpu.memory_space<vmem>>, vector<1x32x288xbf16>
    %208 = vector.shape_cast %207 : vector<1x32x288xbf16> to vector<32x288xbf16>
    %cst_218 = arith.constant dense<0.000000e+00> : vector<32x100xf32>
    %209 = tpu.matmul %208, %206, %cst_218 {dimension_numbers = #tpu.dot_dimension_numbers<[1], [0], [0], [1], [0, 0, 1, 1], [], []>} : vector<32x288xbf16>, vector<288x100xbf16>, vector<32x100xf32> -> vector<32x100xf32>
    %210 = arith.addf %205, %209 : vector<32x100xf32>
    %c0_219 = arith.constant 0 : index
    %c129_220 = arith.constant 129 : index
    %211 = vector.load %arg31[%c0_219, %c129_220] : memref<288x256xbf16, #tpu.memory_space<vmem>>, vector<288x100xbf16>
    %c2_221 = arith.constant 2 : index
    %c0_222 = arith.constant 0 : index
    %c0_223 = arith.constant 0 : index
    %212 = vector.load %arg8[%c2_221, %c0_222, %c0_223] : memref<3x32x288xbf16, #tpu.memory_space<vmem>>, vector<1x32x288xbf16>
    %213 = vector.shape_cast %212 : vector<1x32x288xbf16> to vector<32x288xbf16>
    %cst_224 = arith.constant dense<0.000000e+00> : vector<32x100xf32>
    %214 = tpu.matmul %213, %211, %cst_224 {dimension_numbers = #tpu.dot_dimension_numbers<[1], [0], [0], [1], [0, 0, 1, 1], [], []>} : vector<32x288xbf16>, vector<288x100xbf16>, vector<32x100xf32> -> vector<32x100xf32>
    %215 = arith.addf %210, %214 : vector<32x100xf32>
    %c0_225 = arith.constant 0 : index
    %c0_226 = arith.constant 0 : index
    %216 = vector.load %arg18[%c0_225, %c0_226] : memref<32x1xf32, #tpu.memory_space<vmem>>, vector<32x1xf32>
    %217 = vector.broadcast %216 : vector<32x1xf32> to vector<32x100xf32>
    %218 = arith.addf %215, %217 : vector<32x100xf32>
    %cst_227 = arith.constant 0.000000e+00 : f32
    %219 = vector.broadcast %cst_227 : f32 to vector<32x100xf32>
    %220 = arith.maximumf %218, %219 : vector<32x100xf32>
    %221 = vector.broadcast %7 : vector<1x100xf32> to vector<32x100xf32>
    %222 = arith.mulf %220, %221 : vector<32x100xf32>
    %223 = arith.truncf %222 : vector<32x100xf32> to vector<32x100xbf16>
    %c0_228 = arith.constant 0 : index
    %c138_229 = arith.constant 138 : index
    %224 = vector.load %arg31[%c0_228, %c138_229] : memref<288x256xbf16, #tpu.memory_space<vmem>>, vector<32x100xbf16>
    tpu.vector_store %arg31[%c0_228, %c138_229], %223 {strides = array<i32>} : memref<288x256xbf16, #tpu.memory_space<vmem>>, vector<32x100xbf16>,
    %c96_230 = arith.constant 96 : index
    %c128_231 = arith.constant 128 : index
    %225 = vector.load %arg31[%c96_230, %c128_231] : memref<288x256xbf16, #tpu.memory_space<vmem>>, vector<32x100xbf16>
    tpu.vector_store %arg31[%c96_230, %c128_231], %223 {strides = array<i32>} : memref<288x256xbf16, #tpu.memory_space<vmem>>, vector<32x100xbf16>,
    %c192_232 = arith.constant 192 : index
    %c118_233 = arith.constant 118 : index
    %226 = vector.load %arg31[%c192_232, %c118_233] : memref<288x256xbf16, #tpu.memory_space<vmem>>, vector<32x100xbf16>
    tpu.vector_store %arg31[%c192_232, %c118_233], %223 {strides = array<i32>} : memref<288x256xbf16, #tpu.memory_space<vmem>>, vector<32x100xbf16>,
    %c0_234 = arith.constant 0 : index
    %c127_235 = arith.constant 127 : index
    %227 = vector.load %arg31[%c0_234, %c127_235] : memref<288x256xbf16, #tpu.memory_space<vmem>>, vector<288x100xbf16>
    %c0_236 = arith.constant 0 : index
    %c0_237 = arith.constant 0 : index
    %c0_238 = arith.constant 0 : index
    %228 = vector.load %arg9[%c0_236, %c0_237, %c0_238] : memref<3x32x288xbf16, #tpu.memory_space<vmem>>, vector<1x32x288xbf16>
    %229 = vector.shape_cast %228 : vector<1x32x288xbf16> to vector<32x288xbf16>
    %cst_239 = arith.constant dense<0.000000e+00> : vector<32x100xf32>
    %230 = tpu.matmul %229, %227, %cst_239 {dimension_numbers = #tpu.dot_dimension_numbers<[1], [0], [0], [1], [0, 0, 1, 1], [], []>} : vector<32x288xbf16>, vector<288x100xbf16>, vector<32x100xf32> -> vector<32x100xf32>
    %c0_240 = arith.constant 0 : index
    %c128_241 = arith.constant 128 : index
    %231 = vector.load %arg31[%c0_240, %c128_241] : memref<288x256xbf16, #tpu.memory_space<vmem>>, vector<288x100xbf16>
    %c1_242 = arith.constant 1 : index
    %c0_243 = arith.constant 0 : index
    %c0_244 = arith.constant 0 : index
    %232 = vector.load %arg9[%c1_242, %c0_243, %c0_244] : memref<3x32x288xbf16, #tpu.memory_space<vmem>>, vector<1x32x288xbf16>
    %233 = vector.shape_cast %232 : vector<1x32x288xbf16> to vector<32x288xbf16>
    %cst_245 = arith.constant dense<0.000000e+00> : vector<32x100xf32>
    %234 = tpu.matmul %233, %231, %cst_245 {dimension_numbers = #tpu.dot_dimension_numbers<[1], [0], [0], [1], [0, 0, 1, 1], [], []>} : vector<32x288xbf16>, vector<288x100xbf16>, vector<32x100xf32> -> vector<32x100xf32>
    %235 = arith.addf %230, %234 : vector<32x100xf32>
    %c0_246 = arith.constant 0 : index
    %c129_247 = arith.constant 129 : index
    %236 = vector.load %arg31[%c0_246, %c129_247] : memref<288x256xbf16, #tpu.memory_space<vmem>>, vector<288x100xbf16>
    %c2_248 = arith.constant 2 : index
    %c0_249 = arith.constant 0 : index
    %c0_250 = arith.constant 0 : index
    %237 = vector.load %arg9[%c2_248, %c0_249, %c0_250] : memref<3x32x288xbf16, #tpu.memory_space<vmem>>, vector<1x32x288xbf16>
    %238 = vector.shape_cast %237 : vector<1x32x288xbf16> to vector<32x288xbf16>
    %cst_251 = arith.constant dense<0.000000e+00> : vector<32x100xf32>
    %239 = tpu.matmul %238, %236, %cst_251 {dimension_numbers = #tpu.dot_dimension_numbers<[1], [0], [0], [1], [0, 0, 1, 1], [], []>} : vector<32x288xbf16>, vector<288x100xbf16>, vector<32x100xf32> -> vector<32x100xf32>
    %240 = arith.addf %235, %239 : vector<32x100xf32>
    %c0_252 = arith.constant 0 : index
    %c0_253 = arith.constant 0 : index
    %241 = vector.load %arg19[%c0_252, %c0_253] : memref<32x1xf32, #tpu.memory_space<vmem>>, vector<32x1xf32>
    %242 = vector.broadcast %241 : vector<32x1xf32> to vector<32x100xf32>
    %243 = arith.addf %240, %242 : vector<32x100xf32>
    %cst_254 = arith.constant 0.000000e+00 : f32
    %244 = vector.broadcast %cst_254 : f32 to vector<32x100xf32>
    %245 = arith.maximumf %243, %244 : vector<32x100xf32>
    %246 = arith.truncf %245 : vector<32x100xf32> to vector<32x100xbf16>
    %c0_255 = arith.constant 0 : index
    %c0_256 = arith.constant 0 : index
    %247 = vector.load %arg25[%c0_255, %c0_256] : memref<100x324xbf16, #tpu.memory_space<vmem>>, vector<100x324xbf16>
    %cst_257 = arith.constant dense<0.000000e+00> : vector<32x324xf32>
    %248 = tpu.matmul %246, %247, %cst_257 {dimension_numbers = #tpu.dot_dimension_numbers<[1], [0], [0], [1], [0, 0, 1, 1], [], []>} : vector<32x100xbf16>, vector<100x324xbf16>, vector<32x324xf32> -> vector<32x324xf32>
    %249 = arith.truncf %248 : vector<32x324xf32> to vector<32x324xbf16>
    %c0_258 = arith.constant 0 : index
    %c146_259 = arith.constant 146 : index
    %250 = vector.load %arg30[%c0_258, %c146_259] : memref<144x512xbf16, #tpu.memory_space<vmem>>, vector<32x324xbf16>
    tpu.vector_store %arg30[%c0_258, %c146_259], %249 {strides = array<i32>} : memref<144x512xbf16, #tpu.memory_space<vmem>>, vector<32x324xbf16>,
    %c48_260 = arith.constant 48 : index
    %c128_261 = arith.constant 128 : index
    %251 = vector.load %arg30[%c48_260, %c128_261] : memref<144x512xbf16, #tpu.memory_space<vmem>>, vector<32x324xbf16>
    tpu.vector_store %arg30[%c48_260, %c128_261], %249 {strides = array<i32>} : memref<144x512xbf16, #tpu.memory_space<vmem>>, vector<32x324xbf16>,
    %c96_262 = arith.constant 96 : index
    %c110_263 = arith.constant 110 : index
    %252 = vector.load %arg30[%c96_262, %c110_263] : memref<144x512xbf16, #tpu.memory_space<vmem>>, vector<32x324xbf16>
    tpu.vector_store %arg30[%c96_262, %c110_263], %249 {strides = array<i32>} : memref<144x512xbf16, #tpu.memory_space<vmem>>, vector<32x324xbf16>,
    %253 = arith.truncf %60 : vector<16x324xf32> to vector<16x324xbf16>
    %c32 = arith.constant 32 : index
    %c146_264 = arith.constant 146 : index
    %254 = vector.load %arg30[%c32, %c146_264] : memref<144x512xbf16, #tpu.memory_space<vmem>>, vector<16x324xbf16>
    tpu.vector_store %arg30[%c32, %c146_264], %253 {strides = array<i32>} : memref<144x512xbf16, #tpu.memory_space<vmem>>, vector<16x324xbf16>,
    %c80 = arith.constant 80 : index
    %c128_265 = arith.constant 128 : index
    %255 = vector.load %arg30[%c80, %c128_265] : memref<144x512xbf16, #tpu.memory_space<vmem>>, vector<16x324xbf16>
    tpu.vector_store %arg30[%c80, %c128_265], %253 {strides = array<i32>} : memref<144x512xbf16, #tpu.memory_space<vmem>>, vector<16x324xbf16>,
    %c128_266 = arith.constant 128 : index
    %c110_267 = arith.constant 110 : index
    %256 = vector.load %arg30[%c128_266, %c110_267] : memref<144x512xbf16, #tpu.memory_space<vmem>>, vector<16x324xbf16>
    tpu.vector_store %arg30[%c128_266, %c110_267], %253 {strides = array<i32>} : memref<144x512xbf16, #tpu.memory_space<vmem>>, vector<16x324xbf16>,
    %c0_268 = arith.constant 0 : index
    %c127_269 = arith.constant 127 : index
    %257 = vector.load %arg30[%c0_268, %c127_269] : memref<144x512xbf16, #tpu.memory_space<vmem>>, vector<144x324xbf16>
    %c0_270 = arith.constant 0 : index
    %c0_271 = arith.constant 0 : index
    %c0_272 = arith.constant 0 : index
    %258 = vector.load %arg10[%c0_270, %c0_271, %c0_272] : memref<3x16x144xbf16, #tpu.memory_space<vmem>>, vector<1x16x144xbf16>
    %259 = vector.shape_cast %258 : vector<1x16x144xbf16> to vector<16x144xbf16>
    %cst_273 = arith.constant dense<0.000000e+00> : vector<16x324xf32>
    %260 = tpu.matmul %259, %257, %cst_273 {dimension_numbers = #tpu.dot_dimension_numbers<[1], [0], [0], [1], [0, 0, 1, 1], [], []>} : vector<16x144xbf16>, vector<144x324xbf16>, vector<16x324xf32> -> vector<16x324xf32>
    %c0_274 = arith.constant 0 : index
    %c128_275 = arith.constant 128 : index
    %261 = vector.load %arg30[%c0_274, %c128_275] : memref<144x512xbf16, #tpu.memory_space<vmem>>, vector<144x324xbf16>
    %c1_276 = arith.constant 1 : index
    %c0_277 = arith.constant 0 : index
    %c0_278 = arith.constant 0 : index
    %262 = vector.load %arg10[%c1_276, %c0_277, %c0_278] : memref<3x16x144xbf16, #tpu.memory_space<vmem>>, vector<1x16x144xbf16>
    %263 = vector.shape_cast %262 : vector<1x16x144xbf16> to vector<16x144xbf16>
    %cst_279 = arith.constant dense<0.000000e+00> : vector<16x324xf32>
    %264 = tpu.matmul %263, %261, %cst_279 {dimension_numbers = #tpu.dot_dimension_numbers<[1], [0], [0], [1], [0, 0, 1, 1], [], []>} : vector<16x144xbf16>, vector<144x324xbf16>, vector<16x324xf32> -> vector<16x324xf32>
    %265 = arith.addf %260, %264 : vector<16x324xf32>
    %c0_280 = arith.constant 0 : index
    %c129_281 = arith.constant 129 : index
    %266 = vector.load %arg30[%c0_280, %c129_281] : memref<144x512xbf16, #tpu.memory_space<vmem>>, vector<144x324xbf16>
    %c2_282 = arith.constant 2 : index
    %c0_283 = arith.constant 0 : index
    %c0_284 = arith.constant 0 : index
    %267 = vector.load %arg10[%c2_282, %c0_283, %c0_284] : memref<3x16x144xbf16, #tpu.memory_space<vmem>>, vector<1x16x144xbf16>
    %268 = vector.shape_cast %267 : vector<1x16x144xbf16> to vector<16x144xbf16>
    %cst_285 = arith.constant dense<0.000000e+00> : vector<16x324xf32>
    %269 = tpu.matmul %268, %266, %cst_285 {dimension_numbers = #tpu.dot_dimension_numbers<[1], [0], [0], [1], [0, 0, 1, 1], [], []>} : vector<16x144xbf16>, vector<144x324xbf16>, vector<16x324xf32> -> vector<16x324xf32>
    %270 = arith.addf %265, %269 : vector<16x324xf32>
    %c0_286 = arith.constant 0 : index
    %c0_287 = arith.constant 0 : index
    %271 = vector.load %arg20[%c0_286, %c0_287] : memref<16x1xf32, #tpu.memory_space<vmem>>, vector<16x1xf32>
    %272 = vector.broadcast %271 : vector<16x1xf32> to vector<16x324xf32>
    %273 = arith.addf %270, %272 : vector<16x324xf32>
    %cst_288 = arith.constant 0.000000e+00 : f32
    %274 = vector.broadcast %cst_288 : f32 to vector<16x324xf32>
    %275 = arith.maximumf %273, %274 : vector<16x324xf32>
    %276 = vector.broadcast %6 : vector<1x324xf32> to vector<16x324xf32>
    %277 = arith.mulf %275, %276 : vector<16x324xf32>
    %278 = arith.truncf %277 : vector<16x324xf32> to vector<16x324xbf16>
    %c0_289 = arith.constant 0 : index
    %c146_290 = arith.constant 146 : index
    %279 = vector.load %arg30[%c0_289, %c146_290] : memref<144x512xbf16, #tpu.memory_space<vmem>>, vector<16x324xbf16>
    tpu.vector_store %arg30[%c0_289, %c146_290], %278 {strides = array<i32>} : memref<144x512xbf16, #tpu.memory_space<vmem>>, vector<16x324xbf16>,
    %c48_291 = arith.constant 48 : index
    %c128_292 = arith.constant 128 : index
    %280 = vector.load %arg30[%c48_291, %c128_292] : memref<144x512xbf16, #tpu.memory_space<vmem>>, vector<16x324xbf16>
    tpu.vector_store %arg30[%c48_291, %c128_292], %278 {strides = array<i32>} : memref<144x512xbf16, #tpu.memory_space<vmem>>, vector<16x324xbf16>,
    %c96_293 = arith.constant 96 : index
    %c110_294 = arith.constant 110 : index
    %281 = vector.load %arg30[%c96_293, %c110_294] : memref<144x512xbf16, #tpu.memory_space<vmem>>, vector<16x324xbf16>
    tpu.vector_store %arg30[%c96_293, %c110_294], %278 {strides = array<i32>} : memref<144x512xbf16, #tpu.memory_space<vmem>>, vector<16x324xbf16>,
    %c0_295 = arith.constant 0 : index
    %c127_296 = arith.constant 127 : index
    %282 = vector.load %arg30[%c0_295, %c127_296] : memref<144x512xbf16, #tpu.memory_space<vmem>>, vector<144x324xbf16>
    %c0_297 = arith.constant 0 : index
    %c0_298 = arith.constant 0 : index
    %c0_299 = arith.constant 0 : index
    %283 = vector.load %arg11[%c0_297, %c0_298, %c0_299] : memref<3x16x144xbf16, #tpu.memory_space<vmem>>, vector<1x16x144xbf16>
    %284 = vector.shape_cast %283 : vector<1x16x144xbf16> to vector<16x144xbf16>
    %cst_300 = arith.constant dense<0.000000e+00> : vector<16x324xf32>
    %285 = tpu.matmul %284, %282, %cst_300 {dimension_numbers = #tpu.dot_dimension_numbers<[1], [0], [0], [1], [0, 0, 1, 1], [], []>} : vector<16x144xbf16>, vector<144x324xbf16>, vector<16x324xf32> -> vector<16x324xf32>
    %c0_301 = arith.constant 0 : index
    %c128_302 = arith.constant 128 : index
    %286 = vector.load %arg30[%c0_301, %c128_302] : memref<144x512xbf16, #tpu.memory_space<vmem>>, vector<144x324xbf16>
    %c1_303 = arith.constant 1 : index
    %c0_304 = arith.constant 0 : index
    %c0_305 = arith.constant 0 : index
    %287 = vector.load %arg11[%c1_303, %c0_304, %c0_305] : memref<3x16x144xbf16, #tpu.memory_space<vmem>>, vector<1x16x144xbf16>
    %288 = vector.shape_cast %287 : vector<1x16x144xbf16> to vector<16x144xbf16>
    %cst_306 = arith.constant dense<0.000000e+00> : vector<16x324xf32>
    %289 = tpu.matmul %288, %286, %cst_306 {dimension_numbers = #tpu.dot_dimension_numbers<[1], [0], [0], [1], [0, 0, 1, 1], [], []>} : vector<16x144xbf16>, vector<144x324xbf16>, vector<16x324xf32> -> vector<16x324xf32>
    %290 = arith.addf %285, %289 : vector<16x324xf32>
    %c0_307 = arith.constant 0 : index
    %c129_308 = arith.constant 129 : index
    %291 = vector.load %arg30[%c0_307, %c129_308] : memref<144x512xbf16, #tpu.memory_space<vmem>>, vector<144x324xbf16>
    %c2_309 = arith.constant 2 : index
    %c0_310 = arith.constant 0 : index
    %c0_311 = arith.constant 0 : index
    %292 = vector.load %arg11[%c2_309, %c0_310, %c0_311] : memref<3x16x144xbf16, #tpu.memory_space<vmem>>, vector<1x16x144xbf16>
    %293 = vector.shape_cast %292 : vector<1x16x144xbf16> to vector<16x144xbf16>
    %cst_312 = arith.constant dense<0.000000e+00> : vector<16x324xf32>
    %294 = tpu.matmul %293, %291, %cst_312 {dimension_numbers = #tpu.dot_dimension_numbers<[1], [0], [0], [1], [0, 0, 1, 1], [], []>} : vector<16x144xbf16>, vector<144x324xbf16>, vector<16x324xf32> -> vector<16x324xf32>
    %295 = arith.addf %290, %294 : vector<16x324xf32>
    %c0_313 = arith.constant 0 : index
    %c0_314 = arith.constant 0 : index
    %296 = vector.load %arg21[%c0_313, %c0_314] : memref<16x1xf32, #tpu.memory_space<vmem>>, vector<16x1xf32>
    %297 = vector.broadcast %296 : vector<16x1xf32> to vector<16x324xf32>
    %298 = arith.addf %295, %297 : vector<16x324xf32>
    %cst_315 = arith.constant 0.000000e+00 : f32
    %299 = vector.broadcast %cst_315 : f32 to vector<16x324xf32>
    %300 = arith.maximumf %298, %299 : vector<16x324xf32>
    %c0_316 = arith.constant 0 : index
    %c0_317 = arith.constant 0 : index
    %c0_318 = arith.constant 0 : index
    %301 = vector.load %arg29[%c0_316, %c0_317, %c0_318] : memref<1x16x324xf32, #tpu.memory_space<vmem>>, vector<1x16x324xf32>
    %302 = vector.shape_cast %301 : vector<1x16x324xf32> to vector<16x324xf32>
    %303 = vector.shape_cast %300 : vector<16x324xf32> to vector<1x16x324xf32>
    tpu.vector_store %arg29[%c0_316, %c0_317, %c0_318], %303 {strides = array<i32>} : memref<1x16x324xf32, #tpu.memory_space<vmem>>, vector<1x16x324xf32>,
    return
  }
  func.func @transform_0(%arg0: i32) -> (i32, i32, i32) {
    %c0_i32 = arith.constant 0 : i32
    %c0_i32_0 = arith.constant 0 : i32
    %c0_i32_1 = arith.constant 0 : i32
    return %arg0, %c0_i32, %c0_i32_0 : i32, i32, i32
  }
  func.func @transform_1(%arg0: i32) -> (i32, i32, i32) {
    %c0_i32 = arith.constant 0 : i32
    %c0_i32_0 = arith.constant 0 : i32
    %c0_i32_1 = arith.constant 0 : i32
    %c0_i32_2 = arith.constant 0 : i32
    return %c0_i32, %c0_i32_0, %c0_i32_1 : i32, i32, i32
  }
  func.func @transform_2(%arg0: i32) -> (i32, i32, i32) {
    %c0_i32 = arith.constant 0 : i32
    %c0_i32_0 = arith.constant 0 : i32
    %c0_i32_1 = arith.constant 0 : i32
    %c0_i32_2 = arith.constant 0 : i32
    return %c0_i32, %c0_i32_0, %c0_i32_1 : i32, i32, i32
  }
  func.func @transform_3(%arg0: i32) -> (i32, i32, i32) {
    %c0_i32 = arith.constant 0 : i32
    %c0_i32_0 = arith.constant 0 : i32
    %c0_i32_1 = arith.constant 0 : i32
    %c0_i32_2 = arith.constant 0 : i32
    return %c0_i32, %c0_i32_0, %c0_i32_1 : i32, i32, i32
  }
  func.func @transform_4(%arg0: i32) -> (i32, i32, i32) {
    %c0_i32 = arith.constant 0 : i32
    %c0_i32_0 = arith.constant 0 : i32
    %c0_i32_1 = arith.constant 0 : i32
    %c0_i32_2 = arith.constant 0 : i32
    return %c0_i32, %c0_i32_0, %c0_i32_1 : i32, i32, i32
  }
  func.func @transform_5(%arg0: i32) -> (i32, i32, i32) {
    %c0_i32 = arith.constant 0 : i32
    %c0_i32_0 = arith.constant 0 : i32
    %c0_i32_1 = arith.constant 0 : i32
    %c0_i32_2 = arith.constant 0 : i32
    return %c0_i32, %c0_i32_0, %c0_i32_1 : i32, i32, i32
  }
  func.func @transform_6(%arg0: i32) -> (i32, i32, i32) {
    %c0_i32 = arith.constant 0 : i32
    %c0_i32_0 = arith.constant 0 : i32
    %c0_i32_1 = arith.constant 0 : i32
    %c0_i32_2 = arith.constant 0 : i32
    return %c0_i32, %c0_i32_0, %c0_i32_1 : i32, i32, i32
  }
  func.func @transform_7(%arg0: i32) -> (i32, i32, i32) {
    %c0_i32 = arith.constant 0 : i32
    %c0_i32_0 = arith.constant 0 : i32
    %c0_i32_1 = arith.constant 0 : i32
    %c0_i32_2 = arith.constant 0 : i32
    return %c0_i32, %c0_i32_0, %c0_i32_1 : i32, i32, i32
  }
  func.func @transform_8(%arg0: i32) -> (i32, i32, i32) {
    %c0_i32 = arith.constant 0 : i32
    %c0_i32_0 = arith.constant 0 : i32
    %c0_i32_1 = arith.constant 0 : i32
    %c0_i32_2 = arith.constant 0 : i32
    return %c0_i32, %c0_i32_0, %c0_i32_1 : i32, i32, i32
  }
  func.func @transform_9(%arg0: i32) -> (i32, i32, i32) {
    %c0_i32 = arith.constant 0 : i32
    %c0_i32_0 = arith.constant 0 : i32
    %c0_i32_1 = arith.constant 0 : i32
    %c0_i32_2 = arith.constant 0 : i32
    return %c0_i32, %c0_i32_0, %c0_i32_1 : i32, i32, i32
  }
  func.func @transform_10(%arg0: i32) -> (i32, i32, i32) {
    %c0_i32 = arith.constant 0 : i32
    %c0_i32_0 = arith.constant 0 : i32
    %c0_i32_1 = arith.constant 0 : i32
    %c0_i32_2 = arith.constant 0 : i32
    return %c0_i32, %c0_i32_0, %c0_i32_1 : i32, i32, i32
  }
  func.func @transform_11(%arg0: i32) -> (i32, i32) {
    %c0_i32 = arith.constant 0 : i32
    %c0_i32_0 = arith.constant 0 : i32
    %c0_i32_1 = arith.constant 0 : i32
    return %c0_i32, %c0_i32_0 : i32, i32
  }
  func.func @transform_12(%arg0: i32) -> (i32, i32) {
    %c0_i32 = arith.constant 0 : i32
    %c0_i32_0 = arith.constant 0 : i32
    %c0_i32_1 = arith.constant 0 : i32
    return %c0_i32, %c0_i32_0 : i32, i32
  }
  func.func @transform_13(%arg0: i32) -> (i32, i32) {
    %c0_i32 = arith.constant 0 : i32
    %c0_i32_0 = arith.constant 0 : i32
    %c0_i32_1 = arith.constant 0 : i32
    return %c0_i32, %c0_i32_0 : i32, i32
  }
  func.func @transform_14(%arg0: i32) -> (i32, i32) {
    %c0_i32 = arith.constant 0 : i32
    %c0_i32_0 = arith.constant 0 : i32
    %c0_i32_1 = arith.constant 0 : i32
    return %c0_i32, %c0_i32_0 : i32, i32
  }
  func.func @transform_15(%arg0: i32) -> (i32, i32) {
    %c0_i32 = arith.constant 0 : i32
    %c0_i32_0 = arith.constant 0 : i32
    %c0_i32_1 = arith.constant 0 : i32
    return %c0_i32, %c0_i32_0 : i32, i32
  }
  func.func @transform_16(%arg0: i32) -> (i32, i32) {
    %c0_i32 = arith.constant 0 : i32
    %c0_i32_0 = arith.constant 0 : i32
    %c0_i32_1 = arith.constant 0 : i32
    return %c0_i32, %c0_i32_0 : i32, i32
  }
  func.func @transform_17(%arg0: i32) -> (i32, i32) {
    %c0_i32 = arith.constant 0 : i32
    %c0_i32_0 = arith.constant 0 : i32
    %c0_i32_1 = arith.constant 0 : i32
    return %c0_i32, %c0_i32_0 : i32, i32
  }
  func.func @transform_18(%arg0: i32) -> (i32, i32) {
    %c0_i32 = arith.constant 0 : i32
    %c0_i32_0 = arith.constant 0 : i32
    %c0_i32_1 = arith.constant 0 : i32
    return %c0_i32, %c0_i32_0 : i32, i32
  }
  func.func @transform_19(%arg0: i32) -> (i32, i32) {
    %c0_i32 = arith.constant 0 : i32
    %c0_i32_0 = arith.constant 0 : i32
    %c0_i32_1 = arith.constant 0 : i32
    return %c0_i32, %c0_i32_0 : i32, i32
  }
  func.func @transform_20(%arg0: i32) -> (i32, i32) {
    %c0_i32 = arith.constant 0 : i32
    %c0_i32_0 = arith.constant 0 : i32
    %c0_i32_1 = arith.constant 0 : i32
    return %c0_i32, %c0_i32_0 : i32, i32
  }
  func.func @transform_21(%arg0: i32) -> (i32, i32, i32) {
    %c0_i32 = arith.constant 0 : i32
    %c0_i32_0 = arith.constant 0 : i32
    %c0_i32_1 = arith.constant 0 : i32
    %c0_i32_2 = arith.constant 0 : i32
    return %c0_i32, %c0_i32_0, %c0_i32_1 : i32, i32, i32
  }
  func.func @transform_22(%arg0: i32) -> (i32, i32, i32) {
    %c0_i32 = arith.constant 0 : i32
    %c0_i32_0 = arith.constant 0 : i32
    %c0_i32_1 = arith.constant 0 : i32
    %c0_i32_2 = arith.constant 0 : i32
    return %c0_i32, %c0_i32_0, %c0_i32_1 : i32, i32, i32
  }
  func.func @transform_23(%arg0: i32) -> (i32, i32) {
    %c0_i32 = arith.constant 0 : i32
    %c0_i32_0 = arith.constant 0 : i32
    %c0_i32_1 = arith.constant 0 : i32
    return %c0_i32, %c0_i32_0 : i32, i32
  }
  func.func @transform_24(%arg0: i32) -> (i32, i32) {
    %c0_i32 = arith.constant 0 : i32
    %c0_i32_0 = arith.constant 0 : i32
    %c0_i32_1 = arith.constant 0 : i32
    return %c0_i32, %c0_i32_0 : i32, i32
  }
  func.func @transform_25(%arg0: i32) -> (i32, i32) {
    %c0_i32 = arith.constant 0 : i32
    %c0_i32_0 = arith.constant 0 : i32
    %c0_i32_1 = arith.constant 0 : i32
    return %c0_i32, %c0_i32_0 : i32, i32
  }
  func.func @transform_26(%arg0: i32) -> (i32, i32) {
    %c0_i32 = arith.constant 0 : i32
    %c0_i32_0 = arith.constant 0 : i32
    %c0_i32_1 = arith.constant 0 : i32
    return %c0_i32, %c0_i32_0 : i32, i32
  }
  func.func @transform_27(%arg0: i32) -> (i32, i32) {
    %c0_i32 = arith.constant 0 : i32
    %c0_i32_0 = arith.constant 0 : i32
    %c0_i32_1 = arith.constant 0 : i32
    return %c0_i32, %c0_i32_0 : i32, i32
  }
  func.func @transform_28(%arg0: i32) -> (i32, i32, i32) {
    %c0_i32 = arith.constant 0 : i32
    %c0_i32_0 = arith.constant 0 : i32
    %c0_i32_1 = arith.constant 0 : i32
    return %arg0, %c0_i32, %c0_i32_0 : i32, i32, i32
  }
}

</mosaic_0001>

<llo_original>
// kernel: unet_headless.1
$region0: #{unet_headless.1}
  #allocation0 [shape = 'u32[]', space=smem, size = 0x4, offset = 0x4, fixed_abs, tag = 'smem constant byte address 0x4 - core index']
  #allocation1 [shape = 'u32[144,128]{1,0:T(1,128)}', space=vmem, size = 0x12000, scoped, tag = 'internal scratch']
  #allocation2 [shape = 'bf16[144,512]{1,0:T(16,128)(2,1)}', space=vmem, size = 0x24000, scoped, tag = 'scratch operand']
  #allocation3 [shape = 'bf16[288,256]{1,0:T(16,128)(2,1)}', space=vmem, size = 0x24000, scoped, tag = 'scratch operand']
  #allocation4 [shape = 'bf16[192,256]{1,0:T(16,128)(2,1)}', space=vmem, size = 0x18000, scoped, tag = 'scratch operand']
  %s0 = inlined_call_operand.vmem [shape: f32[2,4,324], index: 0, kind: input, shape index: {}]
  %s1 = inlined_call_operand.vmem [shape: bf16[3,16,144], index: 1, kind: input, shape index: {}]
  %s2 = inlined_call_operand.vmem [shape: bf16[3,16,144], index: 2, kind: input, shape index: {}]
  %s3 = inlined_call_operand.vmem [shape: bf16[3,32,288], index: 3, kind: input, shape index: {}]
  %s4 = inlined_call_operand.vmem [shape: bf16[3,32,288], index: 4, kind: input, shape index: {}]
  %s5 = inlined_call_operand.vmem [shape: bf16[3,64,192], index: 5, kind: input, shape index: {}]
  %s6 = inlined_call_operand.vmem [shape: bf16[3,64,192], index: 6, kind: input, shape index: {}]
  %s7 = inlined_call_operand.vmem [shape: bf16[3,32,288], index: 7, kind: input, shape index: {}]
  %s8 = inlined_call_operand.vmem [shape: bf16[3,32,288], index: 8, kind: input, shape index: {}]
  %s9 = inlined_call_operand.vmem [shape: bf16[3,16,144], index: 9, kind: input, shape index: {}]
  %s10 = inlined_call_operand.vmem [shape: bf16[3,16,144], index: 10, kind: input, shape index: {}]
  %s11 = inlined_call_operand.vmem [shape: f32[16,1], index: 11, kind: input, shape index: {}]
  %s12 = inlined_call_operand.vmem [shape: f32[16,1], index: 12, kind: input, shape index: {}]
  %s13 = inlined_call_operand.vmem [shape: f32[32,1], index: 13, kind: input, shape index: {}]
  %s14 = inlined_call_operand.vmem [shape: f32[32,1], index: 14, kind: input, shape index: {}]
  %s15 = inlined_call_operand.vmem [shape: f32[64,1], index: 15, kind: input, shape index: {}]
  %s16 = inlined_call_operand.vmem [shape: f32[64,1], index: 16, kind: input, shape index: {}]
  %s17 = inlined_call_operand.vmem [shape: f32[32,1], index: 17, kind: input, shape index: {}]
  %s18 = inlined_call_operand.vmem [shape: f32[32,1], index: 18, kind: input, shape index: {}]
  %s19 = inlined_call_operand.vmem [shape: f32[16,1], index: 19, kind: input, shape index: {}]
  %s20 = inlined_call_operand.vmem [shape: f32[16,1], index: 20, kind: input, shape index: {}]
  %s21 = inlined_call_operand.vmem [shape: bf16[4,324,100], index: 21, kind: input, shape index: {}]
  %s22 = inlined_call_operand.vmem [shape: bf16[4,100,36], index: 22, kind: input, shape index: {}]
  %s23 = inlined_call_operand.vmem [shape: bf16[36,100], index: 23, kind: input, shape index: {}]
  %s24 = inlined_call_operand.vmem [shape: bf16[100,324], index: 24, kind: input, shape index: {}]
  %s25 = inlined_call_operand.vmem [shape: f32[1,324], index: 25, kind: input, shape index: {}]
  %s26 = inlined_call_operand.vmem [shape: f32[1,100], index: 26, kind: input, shape index: {}]
  %s27 = inlined_call_operand.vmem [shape: f32[1,36], index: 27, kind: input, shape index: {}]
  %s28 = inlined_call_operand.vmem [shape: f32[2,16,324], index: 28, kind: output, shape index: {}]
  %s29 = sld [smem:[#allocation0]]
  $region145: #{unet_headless.1} parent=0
    _
  %s31 = ssub.s32 1, %s29
  %s32 = scalar_select 0, %s31, %s29
  loop: start=0, step=1, limit=4
  $region2: #{unet_headless.1} parent=0 // loop_pre_header
    _
  $region3: #{unet_headless.1} parent=0 // loop_header
    %s34 = sphi 0, %s38
    %p35 = scmp.ge.s32.totalorder %s34, 4
    %s44 = sphi 0, %s46
    %s47 = sphi 0, %s44
    %s48 = sphi 0, %s47
    %s64 = sphi 0, %s48
    %s68 = sphi 0, %s68
    %s70 = sphi 0, %s68
    %s71 = sphi 0, %s70
    %s85 = sphi 0, %s71
    %s89 = sphi 0, %s89
    %s91 = sphi 0, %s89
    %s92 = sphi 0, %s91
    %s106 = sphi 0, %s92
    %s110 = sphi 0, %s110
    %s112 = sphi 0, %s110
    %s113 = sphi 0, %s112
    %s127 = sphi 0, %s113
    %s131 = sphi 0, %s131
    %s133 = sphi 0, %s131
    %s134 = sphi 0, %s133
    %s148 = sphi 0, %s134
    %s152 = sphi 0, %s152
    %s154 = sphi 0, %s152
    %s155 = sphi 0, %s154
    %s169 = sphi 0, %s155
    %s173 = sphi 0, %s173
    %s175 = sphi 0, %s173
    %s176 = sphi 0, %s175
    %s190 = sphi 0, %s176
    %s194 = sphi 0, %s194
    %s196 = sphi 0, %s194
    %s197 = sphi 0, %s196
    %s211 = sphi 0, %s197
    %s215 = sphi 0, %s215
    %s217 = sphi 0, %s215
    %s218 = sphi 0, %s217
    %s232 = sphi 0, %s218
    %s236 = sphi 0, %s236
    %s238 = sphi 0, %s236
    %s239 = sphi 0, %s238
    %s253 = sphi 0, %s239
    %s257 = sphi 0, %s257
    %s259 = sphi 0, %s257
    %s260 = sphi 0, %s259
    %s274 = sphi 0, %s260
    %s278 = sphi 0, %s278
    %s280 = sphi 0, %s278
    %s281 = sphi 0, %s280
    %s295 = sphi 0, %s281
    %s299 = sphi 0, %s299
    %s301 = sphi 0, %s299
    %s302 = sphi 0, %s301
    %s316 = sphi 0, %s302
    %s320 = sphi 0, %s320
    %s322 = sphi 0, %s320
    %s323 = sphi 0, %s322
    %s337 = sphi 0, %s323
    %s341 = sphi 0, %s341
    %s343 = sphi 0, %s341
    %s344 = sphi 0, %s343
    %s358 = sphi 0, %s344
    %s362 = sphi 0, %s362
    %s364 = sphi 0, %s362
    %s365 = sphi 0, %s364
    %s379 = sphi 0, %s365
    %s383 = sphi 0, %s383
    %s385 = sphi 0, %s383
    %s386 = sphi 0, %s385
    %s400 = sphi 0, %s386
    %s404 = sphi 0, %s404
    %s406 = sphi 0, %s404
    %s407 = sphi 0, %s406
    %s421 = sphi 0, %s407
    %s425 = sphi 0, %s425
    %s427 = sphi 0, %s425
    %s428 = sphi 0, %s427
    %s442 = sphi 0, %s428
    %s446 = sphi 0, %s446
    %s448 = sphi 0, %s446
    %s449 = sphi 0, %s448
    %s463 = sphi 0, %s449
    %s467 = sphi 0, %s467
    %s469 = sphi 0, %s467
    %s470 = sphi 0, %s469
    %s484 = sphi 0, %s470
    %s488 = sphi 0, %s488
    %s490 = sphi 0, %s488
    %s491 = sphi 0, %s490
    %s505 = sphi 0, %s491
    %s509 = sphi 0, %s509
    %s511 = sphi 0, %s509
    %s512 = sphi 0, %s511
    %s526 = sphi 0, %s512
    %s530 = sphi 0, %s530
    %s532 = sphi 0, %s530
    %s533 = sphi 0, %s532
    %s547 = sphi 0, %s533
    %s551 = sphi 0, %s551
    %s553 = sphi 0, %s551
    %s554 = sphi 0, %s553
    %s568 = sphi 0, %s554
    %s572 = sphi 0, %s572
    %s574 = sphi 0, %s572
    %s575 = sphi 0, %s574
    %s589 = sphi 0, %s575
    %s593 = sphi 0, %s593
    %s595 = sphi 0, %s593
    %s596 = sphi 0, %s595
    %s610 = sphi 0, %s596
    %s614 = sphi 0, %s614
    %s616 = sphi 0, %s614
    %s617 = sphi 0, %s616
    %s631 = sphi 0, %s617
    %s637 = sphi 0, %s639
    %s640 = sphi 0, %s637
    %s641 = sphi 0, %s640
    %s657 = sphi 0, %s641
  $region4: #{unet_headless.1} parent=0 // loop_header_branch
    %37 = sbr.rel (%p35) target = $region8
  $region5: #{unet_headless.1} parent=0 // loop_body
    %s39 = ssub.s32 %s34, 1
    %s40 = ssub.s32 %s34, 2
    %s41 = sadd.s32 %s34, 1
    %s42 = ssub.s32 %s34, %s41
    %p43 = scmp.eq.s32.totalorder %s42, 0
    %s45 = sadd.s32 %s44, 1
    %s46 = scalar_select %p43, %s44, %s45
    %p49 = pneg %p43
    %p50 = scmp.eq.s32.totalorder %s34, 1
    %p51 = por %p49, %p50
    %p52 = scmp.ne.s32.totalorder %s44, %s47
    %p53 = scmp.eq.s32.totalorder %s34, 0
    %p54 = por %p52, %p53
    %p55 = scmp.ne.s32.totalorder %s44, %s47
    %p56 = scmp.eq.s32.totalorder %s39, 1
    %p57 = por %p55, %p56
    %p58 = scmp.ne.s32.totalorder %s47, %s48
    %p59 = scmp.eq.s32.totalorder %s39, 0
    %p60 = por %p58, %p59
    %p61 = scmp.ne.s32.totalorder %s47, %s48
    %p62 = scmp.eq.s32.totalorder %s40, 1
    %p63 = por %p61, %p62
    %p65 = scmp.ne.s32.totalorder %s48, %s64
    %p66 = scmp.eq.s32.totalorder %s40, 0
    %p67 = por %p65, %p66
    %s69 = sadd.s32 %s68, 1
    %p72 = scmp.eq.s32.totalorder %s34, 1
    %p73 = scmp.ne.s32.totalorder %s68, %s70
    %p74 = scmp.eq.s32.totalorder %s34, 0
    %p75 = por %p73, %p74
    %p76 = scmp.ne.s32.totalorder %s68, %s70
    %p77 = scmp.eq.s32.totalorder %s39, 1
    %p78 = por %p76, %p77
    %p79 = scmp.ne.s32.totalorder %s70, %s71
    %p80 = scmp.eq.s32.totalorder %s39, 0
    %p81 = por %p79, %p80
    %p82 = scmp.ne.s32.totalorder %s70, %s71
    %p83 = scmp.eq.s32.totalorder %s40, 1
    %p84 = por %p82, %p83
    %p86 = scmp.ne.s32.totalorder %s71, %s85
    %p87 = scmp.eq.s32.totalorder %s40, 0
    %p88 = por %p86, %p87
    %s90 = sadd.s32 %s89, 1
    %p93 = scmp.eq.s32.totalorder %s34, 1
    %p94 = scmp.ne.s32.totalorder %s89, %s91
    %p95 = scmp.eq.s32.totalorder %s34, 0
    %p96 = por %p94, %p95
    %p97 = scmp.ne.s32.totalorder %s89, %s91
    %p98 = scmp.eq.s32.totalorder %s39, 1
    %p99 = por %p97, %p98
    %p100 = scmp.ne.s32.totalorder %s91, %s92
    %p101 = scmp.eq.s32.totalorder %s39, 0
    %p102 = por %p100, %p101
    %p103 = scmp.ne.s32.totalorder %s91, %s92
    %p104 = scmp.eq.s32.totalorder %s40, 1
    %p105 = por %p103, %p104
    %p107 = scmp.ne.s32.totalorder %s92, %s106
    %p108 = scmp.eq.s32.totalorder %s40, 0
    %p109 = por %p107, %p108
    %s111 = sadd.s32 %s110, 1
    %p114 = scmp.eq.s32.totalorder %s34, 1
    %p115 = scmp.ne.s32.totalorder %s110, %s112
    %p116 = scmp.eq.s32.totalorder %s34, 0
    %p117 = por %p115, %p116
    %p118 = scmp.ne.s32.totalorder %s110, %s112
    %p119 = scmp.eq.s32.totalorder %s39, 1
    %p120 = por %p118, %p119
    %p121 = scmp.ne.s32.totalorder %s112, %s113
    %p122 = scmp.eq.s32.totalorder %s39, 0
    %p123 = por %p121, %p122
    %p124 = scmp.ne.s32.totalorder %s112, %s113
    %p125 = scmp.eq.s32.totalorder %s40, 1
    %p126 = por %p124, %p125
    %p128 = scmp.ne.s32.totalorder %s113, %s127
    %p129 = scmp.eq.s32.totalorder %s40, 0
    %p130 = por %p128, %p129
    %s132 = sadd.s32 %s131, 1
    %p135 = scmp.eq.s32.totalorder %s34, 1
    %p136 = scmp.ne.s32.totalorder %s131, %s133
    %p137 = scmp.eq.s32.totalorder %s34, 0
    %p138 = por %p136, %p137
    %p139 = scmp.ne.s32.totalorder %s131, %s133
    %p140 = scmp.eq.s32.totalorder %s39, 1
    %p141 = por %p139, %p140
    %p142 = scmp.ne.s32.totalorder %s133, %s134
    %p143 = scmp.eq.s32.totalorder %s39, 0
    %p144 = por %p142, %p143
    %p145 = scmp.ne.s32.totalorder %s133, %s134
    %p146 = scmp.eq.s32.totalorder %s40, 1
    %p147 = por %p145, %p146
    %p149 = scmp.ne.s32.totalorder %s134, %s148
    %p150 = scmp.eq.s32.totalorder %s40, 0
    %p151 = por %p149, %p150
    %s153 = sadd.s32 %s152, 1
    %p156 = scmp.eq.s32.totalorder %s34, 1
    %p157 = scmp.ne.s32.totalorder %s152, %s154
    %p158 = scmp.eq.s32.totalorder %s34, 0
    %p159 = por %p157, %p158
    %p160 = scmp.ne.s32.totalorder %s152, %s154
    %p161 = scmp.eq.s32.totalorder %s39, 1
    %p162 = por %p160, %p161
    %p163 = scmp.ne.s32.totalorder %s154, %s155
    %p164 = scmp.eq.s32.totalorder %s39, 0
    %p165 = por %p163, %p164
    %p166 = scmp.ne.s32.totalorder %s154, %s155
    %p167 = scmp.eq.s32.totalorder %s40, 1
    %p168 = por %p166, %p167
    %p170 = scmp.ne.s32.totalorder %s155, %s169
    %p171 = scmp.eq.s32.totalorder %s40, 0
    %p172 = por %p170, %p171
    %s174 = sadd.s32 %s173, 1
    %p177 = scmp.eq.s32.totalorder %s34, 1
    %p178 = scmp.ne.s32.totalorder %s173, %s175
    %p179 = scmp.eq.s32.totalorder %s34, 0
    %p180 = por %p178, %p179
    %p181 = scmp.ne.s32.totalorder %s173, %s175
    %p182 = scmp.eq.s32.totalorder %s39, 1
    %p183 = por %p181, %p182
    %p184 = scmp.ne.s32.totalorder %s175, %s176
    %p185 = scmp.eq.s32.totalorder %s39, 0
    %p186 = por %p184, %p185
    %p187 = scmp.ne.s32.totalorder %s175, %s176
    %p188 = scmp.eq.s32.totalorder %s40, 1
    %p189 = por %p187, %p188
    %p191 = scmp.ne.s32.totalorder %s176, %s190
    %p192 = scmp.eq.s32.totalorder %s40, 0
    %p193 = por %p191, %p192
    %s195 = sadd.s32 %s194, 1
    %p198 = scmp.eq.s32.totalorder %s34, 1
    %p199 = scmp.ne.s32.totalorder %s194, %s196
    %p200 = scmp.eq.s32.totalorder %s34, 0
    %p201 = por %p199, %p200
    %p202 = scmp.ne.s32.totalorder %s194, %s196
    %p203 = scmp.eq.s32.totalorder %s39, 1
    %p204 = por %p202, %p203
    %p205 = scmp.ne.s32.totalorder %s196, %s197
    %p206 = scmp.eq.s32.totalorder %s39, 0
    %p207 = por %p205, %p206
    %p208 = scmp.ne.s32.totalorder %s196, %s197
    %p209 = scmp.eq.s32.totalorder %s40, 1
    %p210 = por %p208, %p209
    %p212 = scmp.ne.s32.totalorder %s197, %s211
    %p213 = scmp.eq.s32.totalorder %s40, 0
    %p214 = por %p212, %p213
    %s216 = sadd.s32 %s215, 1
    %p219 = scmp.eq.s32.totalorder %s34, 1
    %p220 = scmp.ne.s32.totalorder %s215, %s217
    %p221 = scmp.eq.s32.totalorder %s34, 0
    %p222 = por %p220, %p221
    %p223 = scmp.ne.s32.totalorder %s215, %s217
    %p224 = scmp.eq.s32.totalorder %s39, 1
    %p225 = por %p223, %p224
    %p226 = scmp.ne.s32.totalorder %s217, %s218
    %p227 = scmp.eq.s32.totalorder %s39, 0
    %p228 = por %p226, %p227
    %p229 = scmp.ne.s32.totalorder %s217, %s218
    %p230 = scmp.eq.s32.totalorder %s40, 1
    %p231 = por %p229, %p230
    %p233 = scmp.ne.s32.totalorder %s218, %s232
    %p234 = scmp.eq.s32.totalorder %s40, 0
    %p235 = por %p233, %p234
    %s237 = sadd.s32 %s236, 1
    %p240 = scmp.eq.s32.totalorder %s34, 1
    %p241 = scmp.ne.s32.totalorder %s236, %s238
    %p242 = scmp.eq.s32.totalorder %s34, 0
    %p243 = por %p241, %p242
    %p244 = scmp.ne.s32.totalorder %s236, %s238
    %p245 = scmp.eq.s32.totalorder %s39, 1
    %p246 = por %p244, %p245
    %p247 = scmp.ne.s32.totalorder %s238, %s239
    %p248 = scmp.eq.s32.totalorder %s39, 0
    %p249 = por %p247, %p248
    %p250 = scmp.ne.s32.totalorder %s238, %s239
    %p251 = scmp.eq.s32.totalorder %s40, 1
    %p252 = por %p250, %p251
    %p254 = scmp.ne.s32.totalorder %s239, %s253
    %p255 = scmp.eq.s32.totalorder %s40, 0
    %p256 = por %p254, %p255
    %s258 = sadd.s32 %s257, 1
    %p261 = scmp.eq.s32.totalorder %s34, 1
    %p262 = scmp.ne.s32.totalorder %s257, %s259
    %p263 = scmp.eq.s32.totalorder %s34, 0
    %p264 = por %p262, %p263
    %p265 = scmp.ne.s32.totalorder %s257, %s259
    %p266 = scmp.eq.s32.totalorder %s39, 1
    %p267 = por %p265, %p266
    %p268 = scmp.ne.s32.totalorder %s259, %s260
    %p269 = scmp.eq.s32.totalorder %s39, 0
    %p270 = por %p268, %p269
    %p271 = scmp.ne.s32.totalorder %s259, %s260
    %p272 = scmp.eq.s32.totalorder %s40, 1
    %p273 = por %p271, %p272
    %p275 = scmp.ne.s32.totalorder %s260, %s274
    %p276 = scmp.eq.s32.totalorder %s40, 0
    %p277 = por %p275, %p276
    %s279 = sadd.s32 %s278, 1
    %p282 = scmp.eq.s32.totalorder %s34, 1
    %p283 = scmp.ne.s32.totalorder %s278, %s280
    %p284 = scmp.eq.s32.totalorder %s34, 0
    %p285 = por %p283, %p284
    %p286 = scmp.ne.s32.totalorder %s278, %s280
    %p287 = scmp.eq.s32.totalorder %s39, 1
    %p288 = por %p286, %p287
    %p289 = scmp.ne.s32.totalorder %s280, %s281
    %p290 = scmp.eq.s32.totalorder %s39, 0
    %p291 = por %p289, %p290
    %p292 = scmp.ne.s32.totalorder %s280, %s281
    %p293 = scmp.eq.s32.totalorder %s40, 1
    %p294 = por %p292, %p293
    %p296 = scmp.ne.s32.totalorder %s281, %s295
    %p297 = scmp.eq.s32.totalorder %s40, 0
    %p298 = por %p296, %p297
    %s300 = sadd.s32 %s299, 1
    %p303 = scmp.eq.s32.totalorder %s34, 1
    %p304 = scmp.ne.s32.totalorder %s299, %s301
    %p305 = scmp.eq.s32.totalorder %s34, 0
    %p306 = por %p304, %p305
    %p307 = scmp.ne.s32.totalorder %s299, %s301
    %p308 = scmp.eq.s32.totalorder %s39, 1
    %p309 = por %p307, %p308
    %p310 = scmp.ne.s32.totalorder %s301, %s302
    %p311 = scmp.eq.s32.totalorder %s39, 0
    %p312 = por %p310, %p311
    %p313 = scmp.ne.s32.totalorder %s301, %s302
    %p314 = scmp.eq.s32.totalorder %s40, 1
    %p315 = por %p313, %p314
    %p317 = scmp.ne.s32.totalorder %s302, %s316
    %p318 = scmp.eq.s32.totalorder %s40, 0
    %p319 = por %p317, %p318
    %s321 = sadd.s32 %s320, 1
    %p324 = scmp.eq.s32.totalorder %s34, 1
    %p325 = scmp.ne.s32.totalorder %s320, %s322
    %p326 = scmp.eq.s32.totalorder %s34, 0
    %p327 = por %p325, %p326
    %p328 = scmp.ne.s32.totalorder %s320, %s322
    %p329 = scmp.eq.s32.totalorder %s39, 1
    %p330 = por %p328, %p329
    %p331 = scmp.ne.s32.totalorder %s322, %s323
    %p332 = scmp.eq.s32.totalorder %s39, 0
    %p333 = por %p331, %p332
    %p334 = scmp.ne.s32.totalorder %s322, %s323
    %p335 = scmp.eq.s32.totalorder %s40, 1
    %p336 = por %p334, %p335
    %p338 = scmp.ne.s32.totalorder %s323, %s337
    %p339 = scmp.eq.s32.totalorder %s40, 0
    %p340 = por %p338, %p339
    %s342 = sadd.s32 %s341, 1
    %p345 = scmp.eq.s32.totalorder %s34, 1
    %p346 = scmp.ne.s32.totalorder %s341, %s343
    %p347 = scmp.eq.s32.totalorder %s34, 0
    %p348 = por %p346, %p347
    %p349 = scmp.ne.s32.totalorder %s341, %s343
    %p350 = scmp.eq.s32.totalorder %s39, 1
    %p351 = por %p349, %p350
    %p352 = scmp.ne.s32.totalorder %s343, %s344
    %p353 = scmp.eq.s32.totalorder %s39, 0
    %p354 = por %p352, %p353
    %p355 = scmp.ne.s32.totalorder %s343, %s344
    %p356 = scmp.eq.s32.totalorder %s40, 1
    %p357 = por %p355, %p356
    %p359 = scmp.ne.s32.totalorder %s344, %s358
    %p360 = scmp.eq.s32.totalorder %s40, 0
    %p361 = por %p359, %p360
    %s363 = sadd.s32 %s362, 1
    %p366 = scmp.eq.s32.totalorder %s34, 1
    %p367 = scmp.ne.s32.totalorder %s362, %s364
    %p368 = scmp.eq.s32.totalorder %s34, 0
    %p369 = por %p367, %p368
    %p370 = scmp.ne.s32.totalorder %s362, %s364
    %p371 = scmp.eq.s32.totalorder %s39, 1
    %p372 = por %p370, %p371
    %p373 = scmp.ne.s32.totalorder %s364, %s365
    %p374 = scmp.eq.s32.totalorder %s39, 0
    %p375 = por %p373, %p374
    %p376 = scmp.ne.s32.totalorder %s364, %s365
    %p377 = scmp.eq.s32.totalorder %s40, 1
    %p378 = por %p376, %p377
    %p380 = scmp.ne.s32.totalorder %s365, %s379
    %p381 = scmp.eq.s32.totalorder %s40, 0
    %p382 = por %p380, %p381
    %s384 = sadd.s32 %s383, 1
    %p387 = scmp.eq.s32.totalorder %s34, 1
    %p388 = scmp.ne.s32.totalorder %s383, %s385
    %p389 = scmp.eq.s32.totalorder %s34, 0
    %p390 = por %p388, %p389
    %p391 = scmp.ne.s32.totalorder %s383, %s385
    %p392 = scmp.eq.s32.totalorder %s39, 1
    %p393 = por %p391, %p392
    %p394 = scmp.ne.s32.totalorder %s385, %s386
    %p395 = scmp.eq.s32.totalorder %s39, 0
    %p396 = por %p394, %p395
    %p397 = scmp.ne.s32.totalorder %s385, %s386
    %p398 = scmp.eq.s32.totalorder %s40, 1
    %p399 = por %p397, %p398
    %p401 = scmp.ne.s32.totalorder %s386, %s400
    %p402 = scmp.eq.s32.totalorder %s40, 0
    %p403 = por %p401, %p402
    %s405 = sadd.s32 %s404, 1
    %p408 = scmp.eq.s32.totalorder %s34, 1
    %p409 = scmp.ne.s32.totalorder %s404, %s406
    %p410 = scmp.eq.s32.totalorder %s34, 0
    %p411 = por %p409, %p410
    %p412 = scmp.ne.s32.totalorder %s404, %s406
    %p413 = scmp.eq.s32.totalorder %s39, 1
    %p414 = por %p412, %p413
    %p415 = scmp.ne.s32.totalorder %s406, %s407
    %p416 = scmp.eq.s32.totalorder %s39, 0
    %p417 = por %p415, %p416
    %p418 = scmp.ne.s32.totalorder %s406, %s407
    %p419 = scmp.eq.s32.totalorder %s40, 1
    %p420 = por %p418, %p419
    %p422 = scmp.ne.s32.totalorder %s407, %s421
    %p423 = scmp.eq.s32.totalorder %s40, 0
    %p424 = por %p422, %p423
    %s426 = sadd.s32 %s425, 1
    %p429 = scmp.eq.s32.totalorder %s34, 1
    %p430 = scmp.ne.s32.totalorder %s425, %s427
    %p431 = scmp.eq.s32.totalorder %s34, 0
    %p432 = por %p430, %p431
    %p433 = scmp.ne.s32.totalorder %s425, %s427
    %p434 = scmp.eq.s32.totalorder %s39, 1
    %p435 = por %p433, %p434
    %p436 = scmp.ne.s32.totalorder %s427, %s428
    %p437 = scmp.eq.s32.totalorder %s39, 0
    %p438 = por %p436, %p437
    %p439 = scmp.ne.s32.totalorder %s427, %s428
    %p440 = scmp.eq.s32.totalorder %s40, 1
    %p441 = por %p439, %p440
    %p443 = scmp.ne.s32.totalorder %s428, %s442
    %p444 = scmp.eq.s32.totalorder %s40, 0
    %p445 = por %p443, %p444
    %s447 = sadd.s32 %s446, 1
    %p450 = scmp.eq.s32.totalorder %s34, 1
    %p451 = scmp.ne.s32.totalorder %s446, %s448
    %p452 = scmp.eq.s32.totalorder %s34, 0
    %p453 = por %p451, %p452
    %p454 = scmp.ne.s32.totalorder %s446, %s448
    %p455 = scmp.eq.s32.totalorder %s39, 1
    %p456 = por %p454, %p455
    %p457 = scmp.ne.s32.totalorder %s448, %s449
    %p458 = scmp.eq.s32.totalorder %s39, 0
    %p459 = por %p457, %p458
    %p460 = scmp.ne.s32.totalorder %s448, %s449
    %p461 = scmp.eq.s32.totalorder %s40, 1
    %p462 = por %p460, %p461
    %p464 = scmp.ne.s32.totalorder %s449, %s463
    %p465 = scmp.eq.s32.totalorder %s40, 0
    %p466 = por %p464, %p465
    %s468 = sadd.s32 %s467, 1
    %p471 = scmp.eq.s32.totalorder %s34, 1
    %p472 = scmp.ne.s32.totalorder %s467, %s469
    %p473 = scmp.eq.s32.totalorder %s34, 0
    %p474 = por %p472, %p473
    %p475 = scmp.ne.s32.totalorder %s467, %s469
    %p476 = scmp.eq.s32.totalorder %s39, 1
    %p477 = por %p475, %p476
    %p478 = scmp.ne.s32.totalorder %s469, %s470
    %p479 = scmp.eq.s32.totalorder %s39, 0
    %p480 = por %p478, %p479
    %p481 = scmp.ne.s32.totalorder %s469, %s470
    %p482 = scmp.eq.s32.totalorder %s40, 1
    %p483 = por %p481, %p482
    %p485 = scmp.ne.s32.totalorder %s470, %s484
    %p486 = scmp.eq.s32.totalorder %s40, 0
    %p487 = por %p485, %p486
    %s489 = sadd.s32 %s488, 1
    %p492 = scmp.eq.s32.totalorder %s34, 1
    %p493 = scmp.ne.s32.totalorder %s488, %s490
    %p494 = scmp.eq.s32.totalorder %s34, 0
    %p495 = por %p493, %p494
    %p496 = scmp.ne.s32.totalorder %s488, %s490
    %p497 = scmp.eq.s32.totalorder %s39, 1
    %p498 = por %p496, %p497
    %p499 = scmp.ne.s32.totalorder %s490, %s491
    %p500 = scmp.eq.s32.totalorder %s39, 0
    %p501 = por %p499, %p500
    %p502 = scmp.ne.s32.totalorder %s490, %s491
    %p503 = scmp.eq.s32.totalorder %s40, 1
    %p504 = por %p502, %p503
    %p506 = scmp.ne.s32.totalorder %s491, %s505
    %p507 = scmp.eq.s32.totalorder %s40, 0
    %p508 = por %p506, %p507
    %s510 = sadd.s32 %s509, 1
    %p513 = scmp.eq.s32.totalorder %s34, 1
    %p514 = scmp.ne.s32.totalorder %s509, %s511
    %p515 = scmp.eq.s32.totalorder %s34, 0
    %p516 = por %p514, %p515
    %p517 = scmp.ne.s32.totalorder %s509, %s511
    %p518 = scmp.eq.s32.totalorder %s39, 1
    %p519 = por %p517, %p518
    %p520 = scmp.ne.s32.totalorder %s511, %s512
    %p521 = scmp.eq.s32.totalorder %s39, 0
    %p522 = por %p520, %p521
    %p523 = scmp.ne.s32.totalorder %s511, %s512
    %p524 = scmp.eq.s32.totalorder %s40, 1
    %p525 = por %p523, %p524
    %p527 = scmp.ne.s32.totalorder %s512, %s526
    %p528 = scmp.eq.s32.totalorder %s40, 0
    %p529 = por %p527, %p528
    %s531 = sadd.s32 %s530, 1
    %p534 = scmp.eq.s32.totalorder %s34, 1
    %p535 = scmp.ne.s32.totalorder %s530, %s532
    %p536 = scmp.eq.s32.totalorder %s34, 0
    %p537 = por %p535, %p536
    %p538 = scmp.ne.s32.totalorder %s530, %s532
    %p539 = scmp.eq.s32.totalorder %s39, 1
    %p540 = por %p538, %p539
    %p541 = scmp.ne.s32.totalorder %s532, %s533
    %p542 = scmp.eq.s32.totalorder %s39, 0
    %p543 = por %p541, %p542
    %p544 = scmp.ne.s32.totalorder %s532, %s533
    %p545 = scmp.eq.s32.totalorder %s40, 1
    %p546 = por %p544, %p545
    %p548 = scmp.ne.s32.totalorder %s533, %s547
    %p549 = scmp.eq.s32.totalorder %s40, 0
    %p550 = por %p548, %p549
    %s552 = sadd.s32 %s551, 1
    %p555 = scmp.eq.s32.totalorder %s34, 1
    %p556 = scmp.ne.s32.totalorder %s551, %s553
    %p557 = scmp.eq.s32.totalorder %s34, 0
    %p558 = por %p556, %p557
    %p559 = scmp.ne.s32.totalorder %s551, %s553
    %p560 = scmp.eq.s32.totalorder %s39, 1
    %p561 = por %p559, %p560
    %p562 = scmp.ne.s32.totalorder %s553, %s554
    %p563 = scmp.eq.s32.totalorder %s39, 0
    %p564 = por %p562, %p563
    %p565 = scmp.ne.s32.totalorder %s553, %s554
    %p566 = scmp.eq.s32.totalorder %s40, 1
    %p567 = por %p565, %p566
    %p569 = scmp.ne.s32.totalorder %s554, %s568
    %p570 = scmp.eq.s32.totalorder %s40, 0
    %p571 = por %p569, %p570
    %s573 = sadd.s32 %s572, 1
    %p576 = scmp.eq.s32.totalorder %s34, 1
    %p577 = scmp.ne.s32.totalorder %s572, %s574
    %p578 = scmp.eq.s32.totalorder %s34, 0
    %p579 = por %p577, %p578
    %p580 = scmp.ne.s32.totalorder %s572, %s574
    %p581 = scmp.eq.s32.totalorder %s39, 1
    %p582 = por %p580, %p581
    %p583 = scmp.ne.s32.totalorder %s574, %s575
    %p584 = scmp.eq.s32.totalorder %s39, 0
    %p585 = por %p583, %p584
    %p586 = scmp.ne.s32.totalorder %s574, %s575
    %p587 = scmp.eq.s32.totalorder %s40, 1
    %p588 = por %p586, %p587
    %p590 = scmp.ne.s32.totalorder %s575, %s589
    %p591 = scmp.eq.s32.totalorder %s40, 0
    %p592 = por %p590, %p591
    %s594 = sadd.s32 %s593, 1
    %p597 = scmp.eq.s32.totalorder %s34, 1
    %p598 = scmp.ne.s32.totalorder %s593, %s595
    %p599 = scmp.eq.s32.totalorder %s34, 0
    %p600 = por %p598, %p599
    %p601 = scmp.ne.s32.totalorder %s593, %s595
    %p602 = scmp.eq.s32.totalorder %s39, 1
    %p603 = por %p601, %p602
    %p604 = scmp.ne.s32.totalorder %s595, %s596
    %p605 = scmp.eq.s32.totalorder %s39, 0
    %p606 = por %p604, %p605
    %p607 = scmp.ne.s32.totalorder %s595, %s596
    %p608 = scmp.eq.s32.totalorder %s40, 1
    %p609 = por %p607, %p608
    %p611 = scmp.ne.s32.totalorder %s596, %s610
    %p612 = scmp.eq.s32.totalorder %s40, 0
    %p613 = por %p611, %p612
    %s615 = sadd.s32 %s614, 1
    %p618 = scmp.eq.s32.totalorder %s34, 1
    %p619 = scmp.ne.s32.totalorder %s614, %s616
    %p620 = scmp.eq.s32.totalorder %s34, 0
    %p621 = por %p619, %p620
    %p622 = scmp.ne.s32.totalorder %s614, %s616
    %p623 = scmp.eq.s32.totalorder %s39, 1
    %p624 = por %p622, %p623
    %p625 = scmp.ne.s32.totalorder %s616, %s617
    %p626 = scmp.eq.s32.totalorder %s39, 0
    %p627 = por %p625, %p626
    %p628 = scmp.ne.s32.totalorder %s616, %s617
    %p629 = scmp.eq.s32.totalorder %s40, 1
    %p630 = por %p628, %p629
    %p632 = scmp.ne.s32.totalorder %s617, %s631
    %p633 = scmp.eq.s32.totalorder %s40, 0
    %p634 = por %p632, %p633
    %s635 = ssub.s32 %s34, %s41
    %p636 = scmp.eq.s32.totalorder %s635, 0
    %s638 = sadd.s32 %s637, 1
    %s639 = scalar_select %p636, %s637, %s638
    %p642 = pneg %p636
    %p643 = scmp.eq.s32.totalorder %s34, 1
    %p644 = por %p642, %p643
    %p645 = scmp.ne.s32.totalorder %s637, %s640
    %p646 = scmp.eq.s32.totalorder %s34, 0
    %p647 = por %p645, %p646
    %p648 = scmp.ne.s32.totalorder %s637, %s640
    %p649 = scmp.eq.s32.totalorder %s39, 1
    %p650 = por %p648, %p649
    %p651 = scmp.ne.s32.totalorder %s640, %s641
    %p652 = scmp.eq.s32.totalorder %s39, 0
    %p653 = por %p651, %p652
    %p654 = scmp.ne.s32.totalorder %s640, %s641
    %p655 = scmp.eq.s32.totalorder %s40, 1
    %p656 = por %p654, %p655
    %p658 = scmp.ne.s32.totalorder %s641, %s657
    %p659 = scmp.eq.s32.totalorder %s40, 0
    %p660 = por %p658, %p659
    %p661 = scmp.le.s32.totalorder 1, %s34
    %p662 = scmp.lt.s32.totalorder %s34, 3
    %p663 = pnand %p661, %p662
    %p664 = pneg %p663
    // Predicated region
    $region9: #{unet_headless.1} parent=5 // pred_check
      _
    $region10: #{unet_headless.1} parent=5 // pred_check_branch
      %666 = sbr.rel (%p663) target = $region12
    $region11: #{unet_headless.1} parent=5 // pred_region
      %s667 = ssub.s32 %s34, 1
      // Predicated region
      $region13: #{unet_headless.1} parent=11 // pred_check
        %p668 = pneg %p81
      $region14: #{unet_headless.1} parent=11 // pred_check_branch
        %670 = sbr.rel (%p668) target = $region16
      $region15: #{unet_headless.1} parent=11 // pred_region
        _
      $region16: #{unet_headless.1} parent=11 // pred_fallthru
        _
      // Predicated region
      $region17: #{unet_headless.1} parent=11 // pred_check
        %p671 = pneg %p102
      $region18: #{unet_headless.1} parent=11 // pred_check_branch
        %673 = sbr.rel (%p671) target = $region20
      $region19: #{unet_headless.1} parent=11 // pred_region
        _
      $region20: #{unet_headless.1} parent=11 // pred_fallthru
        _
      // Predicated region
      $region21: #{unet_headless.1} parent=11 // pred_check
        %p674 = pneg %p123
      $region22: #{unet_headless.1} parent=11 // pred_check_branch
        %676 = sbr.rel (%p674) target = $region24
      $region23: #{unet_headless.1} parent=11 // pred_region
        _
      $region24: #{unet_headless.1} parent=11 // pred_fallthru
        _
      // Predicated region
      $region25: #{unet_headless.1} parent=11 // pred_check
        %p677 = pneg %p144
      $region26: #{unet_headless.1} parent=11 // pred_check_branch
        %679 = sbr.rel (%p677) target = $region28
      $region27: #{unet_headless.1} parent=11 // pred_region
        _
      $region28: #{unet_headless.1} parent=11 // pred_fallthru
        _
      // Predicated region
      $region29: #{unet_headless.1} parent=11 // pred_check
        %p680 = pneg %p165
      $region30: #{unet_headless.1} parent=11 // pred_check_branch
        %682 = sbr.rel (%p680) target = $region32
      $region31: #{unet_headless.1} parent=11 // pred_region
        _
      $region32: #{unet_headless.1} parent=11 // pred_fallthru
        _
      // Predicated region
      $region33: #{unet_headless.1} parent=11 // pred_check
        %p683 = pneg %p186
      $region34: #{unet_headless.1} parent=11 // pred_check_branch
        %685 = sbr.rel (%p683) target = $region36
      $region35: #{unet_headless.1} parent=11 // pred_region
        _
      $region36: #{unet_headless.1} parent=11 // pred_fallthru
        _
      // Predicated region
      $region37: #{unet_headless.1} parent=11 // pred_check
        %p686 = pneg %p207
      $region38: #{unet_headless.1} parent=11 // pred_check_branch
        %688 = sbr.rel (%p686) target = $region40
      $region39: #{unet_headless.1} parent=11 // pred_region
        _
      $region40: #{unet_headless.1} parent=11 // pred_fallthru
        _
      // Predicated region
      $region41: #{unet_headless.1} parent=11 // pred_check
        %p689 = pneg %p228
      $region42: #{unet_headless.1} parent=11 // pred_check_branch
        %691 = sbr.rel (%p689) target = $region44
      $region43: #{unet_headless.1} parent=11 // pred_region
        _
      $region44: #{unet_headless.1} parent=11 // pred_fallthru
        _
      // Predicated region
      $region45: #{unet_headless.1} parent=11 // pred_check
        %p692 = pneg %p249
      $region46: #{unet_headless.1} parent=11 // pred_check_branch
        %694 = sbr.rel (%p692) target = $region48
      $region47: #{unet_headless.1} parent=11 // pred_region
        _
      $region48: #{unet_headless.1} parent=11 // pred_fallthru
        _
      // Predicated region
      $region49: #{unet_headless.1} parent=11 // pred_check
        %p695 = pneg %p270
      $region50: #{unet_headless.1} parent=11 // pred_check_branch
        %697 = sbr.rel (%p695) target = $region52
      $region51: #{unet_headless.1} parent=11 // pred_region
        _
      $region52: #{unet_headless.1} parent=11 // pred_fallthru
        _
      // Predicated region
      $region53: #{unet_headless.1} parent=11 // pred_check
        %p698 = pneg %p291
      $region54: #{unet_headless.1} parent=11 // pred_check_branch
        %700 = sbr.rel (%p698) target = $region56
      $region55: #{unet_headless.1} parent=11 // pred_region
        _
      $region56: #{unet_headless.1} parent=11 // pred_fallthru
        _
      // Predicated region
      $region57: #{unet_headless.1} parent=11 // pred_check
        %p701 = pneg %p312
      $region58: #{unet_headless.1} parent=11 // pred_check_branch
        %703 = sbr.rel (%p701) target = $region60
      $region59: #{unet_headless.1} parent=11 // pred_region
        _
      $region60: #{unet_headless.1} parent=11 // pred_fallthru
        _
      // Predicated region
      $region61: #{unet_headless.1} parent=11 // pred_check
        %p704 = pneg %p333
      $region62: #{unet_headless.1} parent=11 // pred_check_branch
        %706 = sbr.rel (%p704) target = $region64
      $region63: #{unet_headless.1} parent=11 // pred_region
        _
      $region64: #{unet_headless.1} parent=11 // pred_fallthru
        _
      // Predicated region
      $region65: #{unet_headless.1} parent=11 // pred_check
        %p707 = pneg %p354
      $region66: #{unet_headless.1} parent=11 // pred_check_branch
        %709 = sbr.rel (%p707) target = $region68
      $region67: #{unet_headless.1} parent=11 // pred_region
        _
      $region68: #{unet_headless.1} parent=11 // pred_fallthru
        _
      // Predicated region
      $region69: #{unet_headless.1} parent=11 // pred_check
        %p710 = pneg %p375
      $region70: #{unet_headless.1} parent=11 // pred_check_branch
        %712 = sbr.rel (%p710) target = $region72
      $region71: #{unet_headless.1} parent=11 // pred_region
        _
      $region72: #{unet_headless.1} parent=11 // pred_fallthru
        _
      // Predicated region
      $region73: #{unet_headless.1} parent=11 // pred_check
        %p713 = pneg %p396
      $region74: #{unet_headless.1} parent=11 // pred_check_branch
        %715 = sbr.rel (%p713) target = $region76
      $region75: #{unet_headless.1} parent=11 // pred_region
        _
      $region76: #{unet_headless.1} parent=11 // pred_fallthru
        _
      // Predicated region
      $region77: #{unet_headless.1} parent=11 // pred_check
        %p716 = pneg %p417
      $region78: #{unet_headless.1} parent=11 // pred_check_branch
        %718 = sbr.rel (%p716) target = $region80
      $region79: #{unet_headless.1} parent=11 // pred_region
        _
      $region80: #{unet_headless.1} parent=11 // pred_fallthru
        _
      // Predicated region
      $region81: #{unet_headless.1} parent=11 // pred_check
        %p719 = pneg %p438
      $region82: #{unet_headless.1} parent=11 // pred_check_branch
        %721 = sbr.rel (%p719) target = $region84
      $region83: #{unet_headless.1} parent=11 // pred_region
        _
      $region84: #{unet_headless.1} parent=11 // pred_fallthru
        _
      // Predicated region
      $region85: #{unet_headless.1} parent=11 // pred_check
        %p722 = pneg %p459
      $region86: #{unet_headless.1} parent=11 // pred_check_branch
        %724 = sbr.rel (%p722) target = $region88
      $region87: #{unet_headless.1} parent=11 // pred_region
        _
      $region88: #{unet_headless.1} parent=11 // pred_fallthru
        _
      // Predicated region
      $region89: #{unet_headless.1} parent=11 // pred_check
        %p725 = pneg %p480
      $region90: #{unet_headless.1} parent=11 // pred_check_branch
        %727 = sbr.rel (%p725) target = $region92
      $region91: #{unet_headless.1} parent=11 // pred_region
        _
      $region92: #{unet_headless.1} parent=11 // pred_fallthru
        _
      // Predicated region
      $region93: #{unet_headless.1} parent=11 // pred_check
        %p728 = pneg %p501
      $region94: #{unet_headless.1} parent=11 // pred_check_branch
        %730 = sbr.rel (%p728) target = $region96
      $region95: #{unet_headless.1} parent=11 // pred_region
        _
      $region96: #{unet_headless.1} parent=11 // pred_fallthru
        _
      // Predicated region
      $region97: #{unet_headless.1} parent=11 // pred_check
        %p731 = pneg %p522
      $region98: #{unet_headless.1} parent=11 // pred_check_branch
        %733 = sbr.rel (%p731) target = $region100
      $region99: #{unet_headless.1} parent=11 // pred_region
        _
      $region100: #{unet_headless.1} parent=11 // pred_fallthru
        _
      // Predicated region
      $region101: #{unet_headless.1} parent=11 // pred_check
        %p734 = pneg %p543
      $region102: #{unet_headless.1} parent=11 // pred_check_branch
        %736 = sbr.rel (%p734) target = $region104
      $region103: #{unet_headless.1} parent=11 // pred_region
        _
      $region104: #{unet_headless.1} parent=11 // pred_fallthru
        _
      // Predicated region
      $region105: #{unet_headless.1} parent=11 // pred_check
        %p737 = pneg %p564
      $region106: #{unet_headless.1} parent=11 // pred_check_branch
        %739 = sbr.rel (%p737) target = $region108
      $region107: #{unet_headless.1} parent=11 // pred_region
        _
      $region108: #{unet_headless.1} parent=11 // pred_fallthru
        _
      // Predicated region
      $region109: #{unet_headless.1} parent=11 // pred_check
        %p740 = pneg %p585
      $region110: #{unet_headless.1} parent=11 // pred_check_branch
        %742 = sbr.rel (%p740) target = $region112
      $region111: #{unet_headless.1} parent=11 // pred_region
        _
      $region112: #{unet_headless.1} parent=11 // pred_fallthru
        _
      // Predicated region
      $region113: #{unet_headless.1} parent=11 // pred_check
        %p743 = pneg %p606
      $region114: #{unet_headless.1} parent=11 // pred_check_branch
        %745 = sbr.rel (%p743) target = $region116
      $region115: #{unet_headless.1} parent=11 // pred_region
        _
      $region116: #{unet_headless.1} parent=11 // pred_fallthru
        _
      // Predicated region
      $region117: #{unet_headless.1} parent=11 // pred_check
        %p746 = pneg %p627
      $region118: #{unet_headless.1} parent=11 // pred_check_branch
        %748 = sbr.rel (%p746) target = $region120
      $region119: #{unet_headless.1} parent=11 // pred_region
        _
      $region120: #{unet_headless.1} parent=11 // pred_fallthru
        _
    $region12: #{unet_headless.1} parent=5 // pred_fallthru
      _
    %p749 = scmp.lt.s32.totalorder %s34, 2
    // Predicated region
    $region121: #{unet_headless.1} parent=5 // pred_check
      %p750 = pneg %p749
    $region122: #{unet_headless.1} parent=5 // pred_check_branch
      %752 = sbr.rel (%p750) target = $region124
    $region123: #{unet_headless.1} parent=5 // pred_region
      // Predicated region
      $region125: #{unet_headless.1} parent=123 // pred_check
        %p753 = pneg %p54
      $region126: #{unet_headless.1} parent=123 // pred_check_branch
        %755 = sbr.rel (%p753) target = $region128
      $region127: #{unet_headless.1} parent=123 // pred_region
        %p756 = scmp.lt.s32.totalorder %s34, 1
        %s757 = scalar_select %p756, %s34, 1
        %s758 = smul.addr %s757, 3
        %s759 = smul.addr %s758, 4
        %s760 = scalar_lea.vmem %s0, %s759
      $region128: #{unet_headless.1} parent=123 // pred_fallthru
        _
    $region124: #{unet_headless.1} parent=5 // pred_fallthru
      _
    %p761 = scmp.le.s32.totalorder 1, %s34
    %p762 = scmp.lt.s32.totalorder %s34, 3
    %p763 = pnand %p761, %p762
    %p764 = pneg %p763
    // Predicated region
    $region129: #{unet_headless.1} parent=5 // pred_check
      _
    $region130: #{unet_headless.1} parent=5 // pred_check_branch
      %766 = sbr.rel (%p763) target = $region132
    $region131: #{unet_headless.1} parent=5 // pred_region
      %s767 = ssub.s32 %s34, 1
      %p768 = scmp.lt.s32.totalorder %s39, 1
      %s769 = scalar_select %p768, %s39, 1
      %s770 = smul.addr %s769, 3
      %s771 = smul.addr %s770, 4
      %s772 = scalar_lea.vmem %s0, %s771
      %p773 = pneg %p60
      %p774 = pneg %p57
      %p775 = pneg %p81
      %p776 = pneg %p78
      %p777 = pneg %p102
      %p778 = pneg %p99
      %p779 = pneg %p123
      %p780 = pneg %p120
      %p781 = pneg %p144
      %p782 = pneg %p141
      %p783 = pneg %p165
      %p784 = pneg %p162
      %p785 = pneg %p186
      %p786 = pneg %p183
      %p787 = pneg %p207
      %p788 = pneg %p204
      %p789 = pneg %p228
      %p790 = pneg %p225
      %p791 = pneg %p249
      %p792 = pneg %p246
      %p793 = pneg %p270
      %p794 = pneg %p267
      %p795 = pneg %p291
      %p796 = pneg %p288
      %p797 = pneg %p312
      %p798 = pneg %p309
      %p799 = pneg %p333
      %p800 = pneg %p330
      %p801 = pneg %p354
      %p802 = pneg %p351
      %p803 = pneg %p375
      %p804 = pneg %p372
      %p805 = pneg %p396
      %p806 = pneg %p393
      %p807 = pneg %p417
      %p808 = pneg %p414
      %p809 = pneg %p438
      %p810 = pneg %p435
      %p811 = pneg %p459
      %p812 = pneg %p456
      %p813 = pneg %p480
      %p814 = pneg %p477
      %p815 = pneg %p501
      %p816 = pneg %p498
      %p817 = pneg %p522
      %p818 = pneg %p519
      %p819 = pneg %p543
      %p820 = pneg %p540
      %p821 = pneg %p564
      %p822 = pneg %p561
      %p823 = pneg %p585
      %p824 = pneg %p582
      %p825 = pneg %p606
      %p826 = pneg %p603
      %p827 = pneg %p627
      %p828 = pneg %p624
      %p829 = pneg %p653
      %p830 = pneg %p650
      %p831 = scmp.lt.s32.totalorder %s39, 1
      %s832 = scalar_select %p831, %s39, 1
      %s833 = smul.addr %s832, 6
      %s834 = smul.addr %s833, 8
      %s835 = scalar_lea.vmem %s28, %s834
      %p836 = scmp.lt.s32.totalorder %s39, 1
      %s837 = scalar_select %p836, %s39, 1
      %s838 = smul.addr %s837, 3
      %s839 = smul.addr %s838, 4
      %s840 = scalar_lea.vmem %s0, %s839
      %p841 = scmp.lt.s32.totalorder %s39, 1
      %s842 = scalar_select %p841, %s39, 1
      %s843 = smul.addr %s842, 6
      %s844 = smul.addr %s843, 8
      %s845 = scalar_lea.vmem %s28, %s844
      %847 = vst [vmem:[#allocation2] sm:$0xff] 0
      %848 = vst [vmem:[#allocation2 + $0x8] sm:$0xff] 0
      %849 = vst [vmem:[#allocation2 + $0x10] sm:$0xff] 0
      %850 = vst [vmem:[#allocation2 + $0x18] sm:$0xff] 0
      %851 = vst [vmem:[#allocation2 + $0x20] sm:$0xff] 0
      %852 = vst [vmem:[#allocation2 + $0x28] sm:$0xff] 0
      %853 = vst [vmem:[#allocation2 + $0x30] sm:$0xff] 0
      %854 = vst [vmem:[#allocation2 + $0x38] sm:$0xff] 0
      %855 = vst [vmem:[#allocation2 + $0x40] sm:$0xff] 0
      %856 = vst [vmem:[#allocation2 + $0x48] sm:$0xff] 0
      %857 = vst [vmem:[#allocation2 + $0x50] sm:$0xff] 0
      %858 = vst [vmem:[#allocation2 + $0x58] sm:$0xff] 0
      %859 = vst [vmem:[#allocation2 + $0x60] sm:$0xff] 0
      %860 = vst [vmem:[#allocation2 + $0x68] sm:$0xff] 0
      %861 = vst [vmem:[#allocation2 + $0x70] sm:$0xff] 0
      %862 = vst [vmem:[#allocation2 + $0x78] sm:$0xff] 0
      %863 = vst [vmem:[#allocation2 + $0x80] sm:$0xff] 0
      %864 = vst [vmem:[#allocation2 + $0x88] sm:$0xff] 0
      %865 = vst [vmem:[#allocation2 + $0x90] sm:$0xff] 0
      %866 = vst [vmem:[#allocation2 + $0x98] sm:$0xff] 0
      %867 = vst [vmem:[#allocation2 + $0xa0] sm:$0xff] 0
      %868 = vst [vmem:[#allocation2 + $0xa8] sm:$0xff] 0
      %869 = vst [vmem:[#allocation2 + $0xb0] sm:$0xff] 0
      %870 = vst [vmem:[#allocation2 + $0xb8] sm:$0xff] 0
      %871 = vst [vmem:[#allocation2 + $0xc0] sm:$0xff] 0
      %872 = vst [vmem:[#allocation2 + $0xc8] sm:$0xff] 0
      %873 = vst [vmem:[#allocation2 + $0xd0] sm:$0xff] 0
      %874 = vst [vmem:[#allocation2 + $0xd8] sm:$0xff] 0
      %875 = vst [vmem:[#allocation2 + $0xe0] sm:$0xff] 0
      %876 = vst [vmem:[#allocation2 + $0xe8] sm:$0xff] 0
      %877 = vst [vmem:[#allocation2 + $0xf0] sm:$0xff] 0
      %878 = vst [vmem:[#allocation2 + $0xf8] sm:$0xff] 0
      %879 = vst [vmem:[#allocation2 + $0x100] sm:$0xff] 0
      %880 = vst [vmem:[#allocation2 + $0x108] sm:$0xff] 0
      %881 = vst [vmem:[#allocation2 + $0x110] sm:$0xff] 0
      %882 = vst [vmem:[#allocation2 + $0x118] sm:$0xff] 0
      %883 = vst [vmem:[#allocation3] sm:$0xff] 0
      %884 = vst [vmem:[#allocation3 + $0x8] sm:$0xff] 0
      %885 = vst [vmem:[#allocation3 + $0x10] sm:$0xff] 0
      %886 = vst [vmem:[#allocation3 + $0x18] sm:$0xff] 0
      %887 = vst [vmem:[#allocation3 + $0x20] sm:$0xff] 0
      %888 = vst [vmem:[#allocation3 + $0x28] sm:$0xff] 0
      %889 = vst [vmem:[#allocation3 + $0x30] sm:$0xff] 0
      %890 = vst [vmem:[#allocation3 + $0x38] sm:$0xff] 0
      %891 = vst [vmem:[#allocation3 + $0x40] sm:$0xff] 0
      %892 = vst [vmem:[#allocation3 + $0x48] sm:$0xff] 0
      %893 = vst [vmem:[#allocation3 + $0x50] sm:$0xff] 0
      %894 = vst [vmem:[#allocation3 + $0x58] sm:$0xff] 0
      %895 = vst [vmem:[#allocation3 + $0x60] sm:$0xff] 0
      %896 = vst [vmem:[#allocation3 + $0x68] sm:$0xff] 0
      %897 = vst [vmem:[#allocation3 + $0x70] sm:$0xff] 0
      %898 = vst [vmem:[#allocation3 + $0x78] sm:$0xff] 0
      %899 = vst [vmem:[#allocation3 + $0x80] sm:$0xff] 0
      %900 = vst [vmem:[#allocation3 + $0x88] sm:$0xff] 0
      %901 = vst [vmem:[#allocation3 + $0x90] sm:$0xff] 0
      %902 = vst [vmem:[#allocation3 + $0x98] sm:$0xff] 0
      %903 = vst [vmem:[#allocation3 + $0xa0] sm:$0xff] 0
      %904 = vst [vmem:[#allocation3 + $0xa8] sm:$0xff] 0
      %905 = vst [vmem:[#allocation3 + $0xb0] sm:$0xff] 0
      %906 = vst [vmem:[#allocation3 + $0xb8] sm:$0xff] 0
      %907 = vst [vmem:[#allocation3 + $0xc0] sm:$0xff] 0
      %908 = vst [vmem:[#allocation3 + $0xc8] sm:$0xff] 0
      %909 = vst [vmem:[#allocation3 + $0xd0] sm:$0xff] 0
      %910 = vst [vmem:[#allocation3 + $0xd8] sm:$0xff] 0
      %911 = vst [vmem:[#allocation3 + $0xe0] sm:$0xff] 0
      %912 = vst [vmem:[#allocation3 + $0xe8] sm:$0xff] 0
      %913 = vst [vmem:[#allocation3 + $0xf0] sm:$0xff] 0
      %914 = vst [vmem:[#allocation3 + $0xf8] sm:$0xff] 0
      %915 = vst [vmem:[#allocation3 + $0x100] sm:$0xff] 0
      %916 = vst [vmem:[#allocation3 + $0x108] sm:$0xff] 0
      %917 = vst [vmem:[#allocation3 + $0x110] sm:$0xff] 0
      %918 = vst [vmem:[#allocation3 + $0x118] sm:$0xff] 0
      %919 = vst [vmem:[#allocation4] sm:$0xff] 0
      %920 = vst [vmem:[#allocation4 + $0x8] sm:$0xff] 0
      %921 = vst [vmem:[#allocation4 + $0x10] sm:$0xff] 0
      %922 = vst [vmem:[#allocation4 + $0x18] sm:$0xff] 0
      %923 = vst [vmem:[#allocation4 + $0x20] sm:$0xff] 0
      %924 = vst [vmem:[#allocation4 + $0x28] sm:$0xff] 0
      %925 = vst [vmem:[#allocation4 + $0x30] sm:$0xff] 0
      %926 = vst [vmem:[#allocation4 + $0x38] sm:$0xff] 0
      %927 = vst [vmem:[#allocation4 + $0x40] sm:$0xff] 0
      %928 = vst [vmem:[#allocation4 + $0x48] sm:$0xff] 0
      %929 = vst [vmem:[#allocation4 + $0x50] sm:$0xff] 0
      %930 = vst [vmem:[#allocation4 + $0x58] sm:$0xff] 0
      %931 = vst [vmem:[#allocation4 + $0x60] sm:$0xff] 0
      %932 = vst [vmem:[#allocation4 + $0x68] sm:$0xff] 0
      %933 = vst [vmem:[#allocation4 + $0x70] sm:$0xff] 0
      %934 = vst [vmem:[#allocation4 + $0x78] sm:$0xff] 0
      %935 = vst [vmem:[#allocation4 + $0x80] sm:$0xff] 0
      %936 = vst [vmem:[#allocation4 + $0x88] sm:$0xff] 0
      %937 = vst [vmem:[#allocation4 + $0x90] sm:$0xff] 0
      %938 = vst [vmem:[#allocation4 + $0x98] sm:$0xff] 0
      %939 = vst [vmem:[#allocation4 + $0xa0] sm:$0xff] 0
      %940 = vst [vmem:[#allocation4 + $0xa8] sm:$0xff] 0
      %941 = vst [vmem:[#allocation4 + $0xb0] sm:$0xff] 0
      %942 = vst [vmem:[#allocation4 + $0xb8] sm:$0xff] 0
      %v943 = vld [vmem:[%s25] sm:$0x7]
      %v944 = vld [vmem:[%s26] sm:$0x1]
      %v945 = vld [vmem:[%s27] sm:$0x1]
      %v946 = vld [vmem:[%s840] sm:$0xff]
      %v947 = vld [vmem:[%s840 + $0x8] sm:$0xf]
      %v949 = vcombine.high %v946, %v946
      %v951 = vpack.c.bf16 %v946, %v946
      %v952 = vpack.c.bf16 %v949, %v949
      %v953 = vpack.c.bf16 %v947, %v947
      %957 = vrot.lane.b32.xlu0 %v951, 18
      %v958 = vpop.permute.xlu0 %957
      %959 = vrot.lane.b32.xlu0 %v952, 18
      %v960 = vpop.permute.xlu0 %959
      %961 = vrot.lane.b32.xlu0 %v953, 18
      %v962 = vpop.permute.xlu0 %961
      %vm963 = vcmask 146432
      %v964 = vsel %vm963, %v958, %v960
      %v965 = vsel %vm963, %v960, %v962
      %vm969 = vcmask 1041552
      %970 = vst.msk [vmem:[#allocation2 + $0x8] sm:$0x3] %vm969, %v958
      %971 = vst [vmem:[#allocation2 + $0x10] sm:$0x3] %v964
      %vm972 = vcmask 697344
      %973 = vst.msk [vmem:[#allocation2 + $0x18] sm:$0x3] %vm972, %v965
      %974 = vst [vmem:[#allocation2 + $0x68] sm:$0x3] %v951
      %975 = vst [vmem:[#allocation2 + $0x70] sm:$0x3] %v952
      %vm976 = vcmask 549888
      %977 = vst.msk [vmem:[#allocation2 + $0x78] sm:$0x3] %vm976, %v953
      %978 = vrot.lane.b32.xlu0 %v951, 110
      %v979 = vpop.permute.xlu0 %978
      %980 = vrot.lane.b32.xlu0 %v952, 110
      %v981 = vpop.permute.xlu0 %980
      %982 = vrot.lane.b32.xlu0 %v953, 110
      %v983 = vpop.permute.xlu0 %982
      %vm984 = vcmask 900096
      %v985 = vsel %vm984, %v979, %v981
      %v986 = vsel %vm984, %v981, %v983
      %vm991 = vcmask 1042288
      %992 = vst.msk [vmem:[#allocation2 + $0xc0] sm:$0x3] %vm991, %v979
      %993 = vst [vmem:[#allocation2 + $0xc8] sm:$0x3] %v985
      %994 = vst [vmem:[#allocation2 + $0xd0] sm:$0x3] %v986
      %vm995 = vcmask 402432
      %996 = vst.msk [vmem:[#allocation2 + $0xd8] sm:$0x3] %vm995, %v983
      %v997 = vld [vmem:[#allocation2] sm:$0xff]
      %v998 = vld [vmem:[#allocation2 + $0x8] sm:$0xff]
      %v999 = vld [vmem:[#allocation2 + $0x10] sm:$0xff]
      %v1000 = vld [vmem:[#allocation2 + $0x18] sm:$0xff]
      %v1001 = vld [vmem:[#allocation2 + $0x20] sm:$0xff]
      %v1002 = vld [vmem:[#allocation2 + $0x28] sm:$0xff]
      %v1003 = vld [vmem:[#allocation2 + $0x30] sm:$0xff]
      %v1004 = vld [vmem:[#allocation2 + $0x38] sm:$0xff]
      %v1005 = vld [vmem:[#allocation2 + $0x40] sm:$0xff]
      %v1006 = vld [vmem:[#allocation2 + $0x48] sm:$0xff]
      %v1007 = vld [vmem:[#allocation2 + $0x50] sm:$0xff]
      %v1008 = vld [vmem:[#allocation2 + $0x58] sm:$0xff]
      %v1009 = vld [vmem:[#allocation2 + $0x60] sm:$0xff]
      %v1010 = vld [vmem:[#allocation2 + $0x68] sm:$0xff]
      %v1011 = vld [vmem:[#allocation2 + $0x70] sm:$0xff]
      %v1012 = vld [vmem:[#allocation2 + $0x78] sm:$0xff]
      %v1013 = vld [vmem:[#allocation2 + $0x80] sm:$0xff]
      %v1014 = vld [vmem:[#allocation2 + $0x88] sm:$0xff]
      %v1015 = vld [vmem:[#allocation2 + $0x90] sm:$0xff]
      %v1016 = vld [vmem:[#allocation2 + $0x98] sm:$0xff]
      %v1017 = vld [vmem:[#allocation2 + $0xa0] sm:$0xff]
      %v1018 = vld [vmem:[#allocation2 + $0xa8] sm:$0xff]
      %v1019 = vld [vmem:[#allocation2 + $0xb0] sm:$0xff]
      %v1020 = vld [vmem:[#allocation2 + $0xb8] sm:$0xff]
      %v1021 = vld [vmem:[#allocation2 + $0xc0] sm:$0xff]
      %v1022 = vld [vmem:[#allocation2 + $0xc8] sm:$0xff]
      %v1023 = vld [vmem:[#allocation2 + $0xd0] sm:$0xff]
      %v1024 = vld [vmem:[#allocation2 + $0xd8] sm:$0xff]
      %v1025 = vld [vmem:[#allocation2 + $0xe0] sm:$0xff]
      %v1026 = vld [vmem:[#allocation2 + $0xe8] sm:$0xff]
      %v1027 = vld [vmem:[#allocation2 + $0xf0] sm:$0xff]
      %v1028 = vld [vmem:[#allocation2 + $0xf8] sm:$0xff]
      %v1029 = vld [vmem:[#allocation2 + $0x100] sm:$0xff]
      %v1030 = vld [vmem:[#allocation2 + $0x108] sm:$0xff]
      %v1031 = vld [vmem:[#allocation2 + $0x110] sm:$0xff]
      %v1032 = vld [vmem:[#allocation2 + $0x118] sm:$0xff]
      %v1033 = vld [vmem:[%s1] sm:$0xff]
      %v1034 = vld [vmem:[%s1 + $0x8] sm:$0xff]
      %s1035 = scalar_lea.vmem %s1, 16
      %v1036 = vld [vmem:[%s1035] sm:$0xff]
      %v1037 = vld [vmem:[%s1035 + $0x8] sm:$0xff]
      %v1040 = vunpack.c.l.b16 %v1036
      %v1041 = vunpack.c.h.b16 %v1036
      %v1042 = vunpack.c.l.b16 %v1037
      %v1043 = vunpack.c.h.b16 %v1037
      %v1044 = vpack.c.b16 %v1042, %v1040
      %v1045 = vpack.c.b16 %v1043, %v1041
      %vm1047 = vcmask 130048
      %v1049 = vsel %vm1047, %v1045, 0
      %1051 = vmatprep.subr.bf16.mxu0 %v999
      %1052 = vmatpush1.bf16.msra.mxu0 %v998
      %1053 = vmatprep.subr.bf16.mxu0 %v1003
      %1054 = vmatpush1.bf16.msra.mxu0 %v1002
      %1055 = vmatprep.subr.bf16.mxu0 %v1007
      %1056 = vmatpush1.bf16.msra.mxu0 %v1006
      %1057 = vmatprep.subr.bf16.mxu0 %v1011
      %1058 = vmatpush1.bf16.msra.mxu0 %v1010
      %1059 = vmatprep.subr.bf16.mxu0 %v1015
      %1060 = vmatpush1.bf16.msra.mxu0 %v1014
      %1061 = vmatprep.subr.bf16.mxu0 %v1019
      %1062 = vmatpush1.bf16.msra.mxu0 %v1018
      %1063 = vmatprep.subr.bf16.mxu0 %v1023
      %1064 = vmatpush1.bf16.msra.mxu0 %v1022
      %1065 = vmatprep.subr.bf16.mxu0 %v1027
      %1066 = vmatpush1.bf16.msra.mxu0 %v1026
      %1067 = vmatprep.subr.bf16.mxu0 %v1031
      %1068 = vmatpush1.bf16.msra.mxu0 %v1030
      %1069 = vmatprep.subr.bf16.mxu0 0
      %1070 = vmatpush1.bf16.msra.mxu0 0
      %1071 = vmatprep.subr.bf16.mxu0 0
      %1072 = vmatpush1.bf16.msra.mxu0 0
      %1073 = vmatprep.subr.bf16.mxu0 0
      %1074 = vmatpush1.bf16.msra.mxu0 0
      %1075 = vmatprep.subr.bf16.mxu0 0
      %1076 = vmatpush1.bf16.msra.mxu0 0
      %1077 = vmatprep.subr.bf16.mxu0 0
      %1078 = vmatpush1.bf16.msra.mxu0 0
      %1079 = vmatprep.subr.bf16.mxu0 0
      %1080 = vmatpush1.bf16.msra.mxu0 0
      %1081 = vmatprep.subr.bf16.mxu0 0
      %1082 = vmatpush1.bf16.msra.mxu0 0
      %1083 = vmatprep.mubr.bf16.mxu0 %v1049
      %1084 = vmatmul.mubr.bf16.gmra.mrb[0].mxu0 %v1044
      %v1085 = vpop.f32.mrb[0].mxu0
      %v1086 = vadd.f32 0.0, %v1085
      %v1087 = vpop.f32.mrb[0].mxu0
      %v1088 = vadd.f32 0.0, %v1087
      %v1089 = vpop.f32.mrb[0].mxu0
      %v1090 = vadd.f32 0.0, %v1089
      %v1091 = vpop.f32.mrb[0].mxu0
      %v1092 = vadd.f32 0.0, %v1091
      %1093 = vdwg.mxu0
      %1094 = vmatprep.subr.bf16.mxu0 0
      %1095 = vmatpush1.bf16.msra.mxu0 %v1000
      %1096 = vmatprep.subr.bf16.mxu0 0
      %1097 = vmatpush1.bf16.msra.mxu0 %v1004
      %1098 = vmatprep.subr.bf16.mxu0 0
      %1099 = vmatpush1.bf16.msra.mxu0 %v1008
      %1100 = vmatprep.subr.bf16.mxu0 0
      %1101 = vmatpush1.bf16.msra.mxu0 %v1012
      %1102 = vmatprep.subr.bf16.mxu0 0
      %1103 = vmatpush1.bf16.msra.mxu0 %v1016
      %1104 = vmatprep.subr.bf16.mxu0 0
      %1105 = vmatpush1.bf16.msra.mxu0 %v1020
      %1106 = vmatprep.subr.bf16.mxu0 0
      %1107 = vmatpush1.bf16.msra.mxu0 %v1024
      %1108 = vmatprep.subr.bf16.mxu0 0
      %1109 = vmatpush1.bf16.msra.mxu0 %v1028
      %1110 = vmatprep.subr.bf16.mxu0 0
      %1111 = vmatpush1.bf16.msra.mxu0 %v1032
      %1112 = vmatprep.subr.bf16.mxu0 0
      %1113 = vmatpush1.bf16.msra.mxu0 0
      %1114 = vmatprep.subr.bf16.mxu0 0
      %1115 = vmatpush1.bf16.msra.mxu0 0
      %1116 = vmatprep.subr.bf16.mxu0 0
      %1117 = vmatpush1.bf16.msra.mxu0 0
      %1118 = vmatprep.subr.bf16.mxu0 0
      %1119 = vmatpush1.bf16.msra.mxu0 0
      %1120 = vmatprep.subr.bf16.mxu0 0
      %1121 = vmatpush1.bf16.msra.mxu0 0
      %1122 = vmatprep.subr.bf16.mxu0 0
      %1123 = vmatpush1.bf16.msra.mxu0 0
      %1124 = vmatprep.subr.bf16.mxu0 0
      %1125 = vmatpush1.bf16.msra.mxu0 0
      %1126 = vmatprep.mubr.bf16.mxu0 %v1049
      %1127 = vmatmul.mubr.bf16.gmra.mrb[0].mxu0 %v1044
      %v1128 = vpop.f32.mrb[0].mxu0
      %v1129 = vadd.f32 0.0, %v1128
      %v1130 = vpop.f32.mrb[0].mxu0
      %v1131 = vpop.f32.mrb[0].mxu0
      %v1132 = vadd.f32 0.0, %v1131
      %v1133 = vpop.f32.mrb[0].mxu0
      %1134 = vdwg.mxu0
      %v1137 = vunpack.c.l.b16 %v1033
      %v1138 = vunpack.c.h.b16 %v1033
      %v1139 = vunpack.c.l.b16 %v1034
      %v1140 = vunpack.c.h.b16 %v1034
      %v1141 = vpack.c.b16 %v1139, %v1137
      %v1142 = vpack.c.b16 %v1140, %v1138
      %1180 = vrot.lane.b32.xlu0 %v997, 1
      %v1181 = vpop.permute.xlu0 %1180
      %1182 = vrot.lane.b32.xlu0 %v998, 1
      %v1183 = vpop.permute.xlu0 %1182
      %1184 = vrot.lane.b32.xlu0 %v999, 1
      %v1185 = vpop.permute.xlu0 %1184
      %1186 = vrot.lane.b32.xlu0 %v1000, 1
      %v1187 = vpop.permute.xlu0 %1186
      %1188 = vrot.lane.b32.xlu0 %v1001, 1
      %v1189 = vpop.permute.xlu0 %1188
      %1190 = vrot.lane.b32.xlu0 %v1002, 1
      %v1191 = vpop.permute.xlu0 %1190
      %1192 = vrot.lane.b32.xlu0 %v1003, 1
      %v1193 = vpop.permute.xlu0 %1192
      %1194 = vrot.lane.b32.xlu0 %v1004, 1
      %v1195 = vpop.permute.xlu0 %1194
      %1196 = vrot.lane.b32.xlu0 %v1005, 1
      %v1197 = vpop.permute.xlu0 %1196
      %1198 = vrot.lane.b32.xlu0 %v1006, 1
      %v1199 = vpop.permute.xlu0 %1198
      %1200 = vrot.lane.b32.xlu0 %v1007, 1
      %v1201 = vpop.permute.xlu0 %1200
      %1202 = vrot.lane.b32.xlu0 %v1008, 1
      %v1203 = vpop.permute.xlu0 %1202
      %1204 = vrot.lane.b32.xlu0 %v1009, 1
      %v1205 = vpop.permute.xlu0 %1204
      %1206 = vrot.lane.b32.xlu0 %v1010, 1
      %v1207 = vpop.permute.xlu0 %1206
      %1208 = vrot.lane.b32.xlu0 %v1011, 1
      %v1209 = vpop.permute.xlu0 %1208
      %1210 = vrot.lane.b32.xlu0 %v1012, 1
      %v1211 = vpop.permute.xlu0 %1210
      %1212 = vrot.lane.b32.xlu0 %v1013, 1
      %v1213 = vpop.permute.xlu0 %1212
      %1214 = vrot.lane.b32.xlu0 %v1014, 1
      %v1215 = vpop.permute.xlu0 %1214
      %1216 = vrot.lane.b32.xlu0 %v1015, 1
      %v1217 = vpop.permute.xlu0 %1216
      %1218 = vrot.lane.b32.xlu0 %v1016, 1
      %v1219 = vpop.permute.xlu0 %1218
      %1220 = vrot.lane.b32.xlu0 %v1017, 1
      %v1221 = vpop.permute.xlu0 %1220
      %1222 = vrot.lane.b32.xlu0 %v1018, 1
      %v1223 = vpop.permute.xlu0 %1222
      %1224 = vrot.lane.b32.xlu0 %v1019, 1
      %v1225 = vpop.permute.xlu0 %1224
      %1226 = vrot.lane.b32.xlu0 %v1020, 1
      %v1227 = vpop.permute.xlu0 %1226
      %1228 = vrot.lane.b32.xlu0 %v1021, 1
      %v1229 = vpop.permute.xlu0 %1228
      %1230 = vrot.lane.b32.xlu0 %v1022, 1
      %v1231 = vpop.permute.xlu0 %1230
      %1232 = vrot.lane.b32.xlu0 %v1023, 1
      %v1233 = vpop.permute.xlu0 %1232
      %1234 = vrot.lane.b32.xlu0 %v1024, 1
      %v1235 = vpop.permute.xlu0 %1234
      %1236 = vrot.lane.b32.xlu0 %v1025, 1
      %v1237 = vpop.permute.xlu0 %1236
      %1238 = vrot.lane.b32.xlu0 %v1026, 1
      %v1239 = vpop.permute.xlu0 %1238
      %1240 = vrot.lane.b32.xlu0 %v1027, 1
      %v1241 = vpop.permute.xlu0 %1240
      %1242 = vrot.lane.b32.xlu0 %v1028, 1
      %v1243 = vpop.permute.xlu0 %1242
      %1244 = vrot.lane.b32.xlu0 %v1029, 1
      %v1245 = vpop.permute.xlu0 %1244
      %1246 = vrot.lane.b32.xlu0 %v1030, 1
      %v1247 = vpop.permute.xlu0 %1246
      %1248 = vrot.lane.b32.xlu0 %v1031, 1
      %v1249 = vpop.permute.xlu0 %1248
      %1250 = vrot.lane.b32.xlu0 %v1032, 1
      %v1251 = vpop.permute.xlu0 %1250
      %vm1252 = vcmask 7168
      %v1253 = vsel %vm1252, %v1181, %v1183
      %v1254 = vsel %vm1252, %v1183, %v1185
      %v1255 = vsel %vm1252, %v1185, %v1187
      %v1256 = vsel %vm1252, %v1189, %v1191
      %v1257 = vsel %vm1252, %v1191, %v1193
      %v1258 = vsel %vm1252, %v1193, %v1195
      %v1259 = vsel %vm1252, %v1197, %v1199
      %v1260 = vsel %vm1252, %v1199, %v1201
      %v1261 = vsel %vm1252, %v1201, %v1203
      %v1262 = vsel %vm1252, %v1205, %v1207
      %v1263 = vsel %vm1252, %v1207, %v1209
      %v1264 = vsel %vm1252, %v1209, %v1211
      %v1265 = vsel %vm1252, %v1213, %v1215
      %v1266 = vsel %vm1252, %v1215, %v1217
      %v1267 = vsel %vm1252, %v1217, %v1219
      %v1268 = vsel %vm1252, %v1221, %v1223
      %v1269 = vsel %vm1252, %v1223, %v1225
      %v1270 = vsel %vm1252, %v1225, %v1227
      %v1271 = vsel %vm1252, %v1229, %v1231
      %v1272 = vsel %vm1252, %v1231, %v1233
      %v1273 = vsel %vm1252, %v1233, %v1235
      %v1274 = vsel %vm1252, %v1237, %v1239
      %v1275 = vsel %vm1252, %v1239, %v1241
      %v1276 = vsel %vm1252, %v1241, %v1243
      %v1277 = vsel %vm1252, %v1245, %v1247
      %v1278 = vsel %vm1252, %v1247, %v1249
      %v1279 = vsel %vm1252, %v1249, %v1251
      %v1308 = vsel %vm1047, %v1142, 0
      %1310 = vmatprep.subr.bf16.mxu0 %v1254
      %1311 = vmatpush1.bf16.msra.mxu0 %v1253
      %1312 = vmatprep.subr.bf16.mxu0 %v1257
      %1313 = vmatpush1.bf16.msra.mxu0 %v1256
      %1314 = vmatprep.subr.bf16.mxu0 %v1260
      %1315 = vmatpush1.bf16.msra.mxu0 %v1259
      %1316 = vmatprep.subr.bf16.mxu0 %v1263
      %1317 = vmatpush1.bf16.msra.mxu0 %v1262
      %1318 = vmatprep.subr.bf16.mxu0 %v1266
      %1319 = vmatpush1.bf16.msra.mxu0 %v1265
      %1320 = vmatprep.subr.bf16.mxu0 %v1269
      %1321 = vmatpush1.bf16.msra.mxu0 %v1268
      %1322 = vmatprep.subr.bf16.mxu0 %v1272
      %1323 = vmatpush1.bf16.msra.mxu0 %v1271
      %1324 = vmatprep.subr.bf16.mxu0 %v1275
      %1325 = vmatpush1.bf16.msra.mxu0 %v1274
      %1326 = vmatprep.subr.bf16.mxu0 %v1278
      %1327 = vmatpush1.bf16.msra.mxu0 %v1277
      %1328 = vmatprep.subr.bf16.mxu0 0
      %1329 = vmatpush1.bf16.msra.mxu0 0
      %1330 = vmatprep.subr.bf16.mxu0 0
      %1331 = vmatpush1.bf16.msra.mxu0 0
      %1332 = vmatprep.subr.bf16.mxu0 0
      %1333 = vmatpush1.bf16.msra.mxu0 0
      %1334 = vmatprep.subr.bf16.mxu0 0
      %1335 = vmatpush1.bf16.msra.mxu0 0
      %1336 = vmatprep.subr.bf16.mxu0 0
      %1337 = vmatpush1.bf16.msra.mxu0 0
      %1338 = vmatprep.subr.bf16.mxu0 0
      %1339 = vmatpush1.bf16.msra.mxu0 0
      %1340 = vmatprep.subr.bf16.mxu0 0
      %1341 = vmatpush1.bf16.msra.mxu0 0
      %1342 = vmatprep.mubr.bf16.mxu0 %v1308
      %1343 = vmatmul.mubr.bf16.gmra.mrb[0].mxu0 %v1141
      %v1344 = vpop.f32.mrb[0].mxu0
      %v1345 = vadd.f32 %v1086, %v1344
      %v1346 = vpop.f32.mrb[0].mxu0
      %v1347 = vadd.f32 %v1088, %v1346
      %v1348 = vpop.f32.mrb[0].mxu0
      %v1349 = vadd.f32 %v1090, %v1348
      %v1350 = vpop.f32.mrb[0].mxu0
      %v1351 = vadd.f32 %v1092, %v1350
      %1352 = vdwg.mxu0
      %1353 = vmatprep.subr.bf16.mxu0 0
      %1354 = vmatpush1.bf16.msra.mxu0 %v1255
      %1355 = vmatprep.subr.bf16.mxu0 0
      %1356 = vmatpush1.bf16.msra.mxu0 %v1258
      %1357 = vmatprep.subr.bf16.mxu0 0
      %1358 = vmatpush1.bf16.msra.mxu0 %v1261
      %1359 = vmatprep.subr.bf16.mxu0 0
      %1360 = vmatpush1.bf16.msra.mxu0 %v1264
      %1361 = vmatprep.subr.bf16.mxu0 0
      %1362 = vmatpush1.bf16.msra.mxu0 %v1267
      %1363 = vmatprep.subr.bf16.mxu0 0
      %1364 = vmatpush1.bf16.msra.mxu0 %v1270
      %1365 = vmatprep.subr.bf16.mxu0 0
      %1366 = vmatpush1.bf16.msra.mxu0 %v1273
      %1367 = vmatprep.subr.bf16.mxu0 0
      %1368 = vmatpush1.bf16.msra.mxu0 %v1276
      %1369 = vmatprep.subr.bf16.mxu0 0
      %1370 = vmatpush1.bf16.msra.mxu0 %v1279
      %1371 = vmatprep.subr.bf16.mxu0 0
      %1372 = vmatpush1.bf16.msra.mxu0 0
      %1373 = vmatprep.subr.bf16.mxu0 0
      %1374 = vmatpush1.bf16.msra.mxu0 0
      %1375 = vmatprep.subr.bf16.mxu0 0
      %1376 = vmatpush1.bf16.msra.mxu0 0
      %1377 = vmatprep.subr.bf16.mxu0 0
      %1378 = vmatpush1.bf16.msra.mxu0 0
      %1379 = vmatprep.subr.bf16.mxu0 0
      %1380 = vmatpush1.bf16.msra.mxu0 0
      %1381 = vmatprep.subr.bf16.mxu0 0
      %1382 = vmatpush1.bf16.msra.mxu0 0
      %1383 = vmatprep.subr.bf16.mxu0 0
      %1384 = vmatpush1.bf16.msra.mxu0 0
      %1385 = vmatprep.mubr.bf16.mxu0 %v1308
      %1386 = vmatmul.mubr.bf16.gmra.mrb[0].mxu0 %v1141
      %v1387 = vpop.f32.mrb[0].mxu0
      %v1388 = vadd.f32 %v1129, %v1387
      %v1389 = vpop.f32.mrb[0].mxu0
      %v1390 = vpop.f32.mrb[0].mxu0
      %v1391 = vadd.f32 %v1132, %v1390
      %v1392 = vpop.f32.mrb[0].mxu0
      %1393 = vdwg.mxu0
      %s1394 = scalar_lea.vmem %s1, 32
      %v1395 = vld [vmem:[%s1394] sm:$0xff]
      %v1396 = vld [vmem:[%s1394 + $0x8] sm:$0xff]
      %v1399 = vunpack.c.l.b16 %v1395
      %v1400 = vunpack.c.h.b16 %v1395
      %v1401 = vunpack.c.l.b16 %v1396
      %v1402 = vunpack.c.h.b16 %v1396
      %v1403 = vpack.c.b16 %v1401, %v1399
      %v1404 = vpack.c.b16 %v1402, %v1400
      %1406 = vrot.lane.b32.xlu0 %v998, 127
      %v1407 = vpop.permute.xlu0 %1406
      %1408 = vrot.lane.b32.xlu0 %v999, 127
      %v1409 = vpop.permute.xlu0 %1408
      %1410 = vrot.lane.b32.xlu0 %v1000, 127
      %v1411 = vpop.permute.xlu0 %1410
      %1412 = vrot.lane.b32.xlu0 %v1002, 127
      %v1413 = vpop.permute.xlu0 %1412
      %1414 = vrot.lane.b32.xlu0 %v1003, 127
      %v1415 = vpop.permute.xlu0 %1414
      %1416 = vrot.lane.b32.xlu0 %v1004, 127
      %v1417 = vpop.permute.xlu0 %1416
      %1418 = vrot.lane.b32.xlu0 %v1006, 127
      %v1419 = vpop.permute.xlu0 %1418
      %1420 = vrot.lane.b32.xlu0 %v1007, 127
      %v1421 = vpop.permute.xlu0 %1420
      %1422 = vrot.lane.b32.xlu0 %v1008, 127
      %v1423 = vpop.permute.xlu0 %1422
      %1424 = vrot.lane.b32.xlu0 %v1010, 127
      %v1425 = vpop.permute.xlu0 %1424
      %1426 = vrot.lane.b32.xlu0 %v1011, 127
      %v1427 = vpop.permute.xlu0 %1426
      %1428 = vrot.lane.b32.xlu0 %v1012, 127
      %v1429 = vpop.permute.xlu0 %1428
      %1430 = vrot.lane.b32.xlu0 %v1014, 127
      %v1431 = vpop.permute.xlu0 %1430
      %1432 = vrot.lane.b32.xlu0 %v1015, 127
      %v1433 = vpop.permute.xlu0 %1432
      %1434 = vrot.lane.b32.xlu0 %v1016, 127
      %v1435 = vpop.permute.xlu0 %1434
      %1436 = vrot.lane.b32.xlu0 %v1018, 127
      %v1437 = vpop.permute.xlu0 %1436
      %1438 = vrot.lane.b32.xlu0 %v1019, 127
      %v1439 = vpop.permute.xlu0 %1438
      %1440 = vrot.lane.b32.xlu0 %v1020, 127
      %v1441 = vpop.permute.xlu0 %1440
      %1442 = vrot.lane.b32.xlu0 %v1022, 127
      %v1443 = vpop.permute.xlu0 %1442
      %1444 = vrot.lane.b32.xlu0 %v1023, 127
      %v1445 = vpop.permute.xlu0 %1444
      %1446 = vrot.lane.b32.xlu0 %v1024, 127
      %v1447 = vpop.permute.xlu0 %1446
      %1448 = vrot.lane.b32.xlu0 %v1026, 127
      %v1449 = vpop.permute.xlu0 %1448
      %1450 = vrot.lane.b32.xlu0 %v1027, 127
      %v1451 = vpop.permute.xlu0 %1450
      %1452 = vrot.lane.b32.xlu0 %v1028, 127
      %v1453 = vpop.permute.xlu0 %1452
      %1454 = vrot.lane.b32.xlu0 %v1030, 127
      %v1455 = vpop.permute.xlu0 %1454
      %1456 = vrot.lane.b32.xlu0 %v1031, 127
      %v1457 = vpop.permute.xlu0 %1456
      %1458 = vrot.lane.b32.xlu0 %v1032, 127
      %v1459 = vpop.permute.xlu0 %1458
      %vm1460 = vcmask 1039360
      %v1461 = vsel %vm1460, %v1407, %v1409
      %v1462 = vsel %vm1460, %v1409, %v1411
      %v1463 = vsel %vm1460, %v1413, %v1415
      %v1464 = vsel %vm1460, %v1415, %v1417
      %v1465 = vsel %vm1460, %v1419, %v1421
      %v1466 = vsel %vm1460, %v1421, %v1423
      %v1467 = vsel %vm1460, %v1425, %v1427
      %v1468 = vsel %vm1460, %v1427, %v1429
      %v1469 = vsel %vm1460, %v1431, %v1433
      %v1470 = vsel %vm1460, %v1433, %v1435
      %v1471 = vsel %vm1460, %v1437, %v1439
      %v1472 = vsel %vm1460, %v1439, %v1441
      %v1473 = vsel %vm1460, %v1443, %v1445
      %v1474 = vsel %vm1460, %v1445, %v1447
      %v1475 = vsel %vm1460, %v1449, %v1451
      %v1476 = vsel %vm1460, %v1451, %v1453
      %v1477 = vsel %vm1460, %v1455, %v1457
      %v1478 = vsel %vm1460, %v1457, %v1459
      %v1507 = vsel %vm1047, %v1404, 0
      %1509 = vmatprep.subr.bf16.mxu0 %v1462
      %1510 = vmatpush1.bf16.msra.mxu0 %v1461
      %1511 = vmatprep.subr.bf16.mxu0 %v1464
      %1512 = vmatpush1.bf16.msra.mxu0 %v1463
      %1513 = vmatprep.subr.bf16.mxu0 %v1466
      %1514 = vmatpush1.bf16.msra.mxu0 %v1465
      %1515 = vmatprep.subr.bf16.mxu0 %v1468
      %1516 = vmatpush1.bf16.msra.mxu0 %v1467
      %1517 = vmatprep.subr.bf16.mxu0 %v1470
      %1518 = vmatpush1.bf16.msra.mxu0 %v1469
      %1519 = vmatprep.subr.bf16.mxu0 %v1472
      %1520 = vmatpush1.bf16.msra.mxu0 %v1471
      %1521 = vmatprep.subr.bf16.mxu0 %v1474
      %1522 = vmatpush1.bf16.msra.mxu0 %v1473
      %1523 = vmatprep.subr.bf16.mxu0 %v1476
      %1524 = vmatpush1.bf16.msra.mxu0 %v1475
      %1525 = vmatprep.subr.bf16.mxu0 %v1478
      %1526 = vmatpush1.bf16.msra.mxu0 %v1477
      %1527 = vmatprep.subr.bf16.mxu0 0
      %1528 = vmatpush1.bf16.msra.mxu0 0
      %1529 = vmatprep.subr.bf16.mxu0 0
      %1530 = vmatpush1.bf16.msra.mxu0 0
      %1531 = vmatprep.subr.bf16.mxu0 0
      %1532 = vmatpush1.bf16.msra.mxu0 0
      %1533 = vmatprep.subr.bf16.mxu0 0
      %1534 = vmatpush1.bf16.msra.mxu0 0
      %1535 = vmatprep.subr.bf16.mxu0 0
      %1536 = vmatpush1.bf16.msra.mxu0 0
      %1537 = vmatprep.subr.bf16.mxu0 0
      %1538 = vmatpush1.bf16.msra.mxu0 0
      %1539 = vmatprep.subr.bf16.mxu0 0
      %1540 = vmatpush1.bf16.msra.mxu0 0
      %1541 = vmatprep.mubr.bf16.mxu0 %v1507
      %1542 = vmatmul.mubr.bf16.gmra.mrb[0].mxu0 %v1403
      %v1543 = vpop.f32.mrb[0].mxu0
      %v1544 = vadd.f32 0.0, %v1543
      %v1545 = vpop.f32.mrb[0].mxu0
      %v1546 = vadd.f32 0.0, %v1545
      %v1547 = vpop.f32.mrb[0].mxu0
      %v1548 = vadd.f32 0.0, %v1547
      %v1549 = vpop.f32.mrb[0].mxu0
      %v1550 = vadd.f32 0.0, %v1549
      %1551 = vdwg.mxu0
      %1552 = vmatprep.subr.bf16.mxu0 0
      %1553 = vmatpush1.bf16.msra.mxu0 %v1411
      %1554 = vmatprep.subr.bf16.mxu0 0
      %1555 = vmatpush1.bf16.msra.mxu0 %v1417
      %1556 = vmatprep.subr.bf16.mxu0 0
      %1557 = vmatpush1.bf16.msra.mxu0 %v1423
      %1558 = vmatprep.subr.bf16.mxu0 0
      %1559 = vmatpush1.bf16.msra.mxu0 %v1429
      %1560 = vmatprep.subr.bf16.mxu0 0
      %1561 = vmatpush1.bf16.msra.mxu0 %v1435
      %1562 = vmatprep.subr.bf16.mxu0 0
      %1563 = vmatpush1.bf16.msra.mxu0 %v1441
      %1564 = vmatprep.subr.bf16.mxu0 0
      %1565 = vmatpush1.bf16.msra.mxu0 %v1447
      %1566 = vmatprep.subr.bf16.mxu0 0
      %1567 = vmatpush1.bf16.msra.mxu0 %v1453
      %1568 = vmatprep.subr.bf16.mxu0 0
      %1569 = vmatpush1.bf16.msra.mxu0 %v1459
      %1570 = vmatprep.subr.bf16.mxu0 0
      %1571 = vmatpush1.bf16.msra.mxu0 0
      %1572 = vmatprep.subr.bf16.mxu0 0
      %1573 = vmatpush1.bf16.msra.mxu0 0
      %1574 = vmatprep.subr.bf16.mxu0 0
      %1575 = vmatpush1.bf16.msra.mxu0 0
      %1576 = vmatprep.subr.bf16.mxu0 0
      %1577 = vmatpush1.bf16.msra.mxu0 0
      %1578 = vmatprep.subr.bf16.mxu0 0
      %1579 = vmatpush1.bf16.msra.mxu0 0
      %1580 = vmatprep.subr.bf16.mxu0 0
      %1581 = vmatpush1.bf16.msra.mxu0 0
      %1582 = vmatprep.subr.bf16.mxu0 0
      %1583 = vmatpush1.bf16.msra.mxu0 0
      %1584 = vmatprep.mubr.bf16.mxu0 %v1507
      %1585 = vmatmul.mubr.bf16.gmra.mrb[0].mxu0 %v1403
      %v1586 = vpop.f32.mrb[0].mxu0
      %v1587 = vadd.f32 0.0, %v1586
      %v1588 = vpop.f32.mrb[0].mxu0
      %v1589 = vpop.f32.mrb[0].mxu0
      %v1590 = vadd.f32 0.0, %v1589
      %v1591 = vpop.f32.mrb[0].mxu0
      %1592 = vdwg.mxu0
      %v1593 = vadd.f32 %v1345, %v1544
      %v1594 = vadd.f32 %v1347, %v1546
      %v1595 = vadd.f32 %v1388, %v1587
      %v1596 = vadd.f32 %v1349, %v1548
      %v1597 = vadd.f32 %v1351, %v1550
      %v1598 = vadd.f32 %v1391, %v1590
      %v1599 = vld [vmem:[%s11] sm:$0xff]
      %v1600 = vld [vmem:[%s11 + $0x8] sm:$0xff]
      %1602 = vset.pattern.permute.xlu0 0
      %1603 = vperm.xlu0 %1602, %v1599
      %v1604 = vpop.permute.xlu0 %1603
      %1607 = vset.pattern.permute.xlu0 0
      %1608 = vperm.xlu0 %1607, %v1600
      %v1609 = vpop.permute.xlu0 %1608
      %v1611 = vadd.f32 %v1593, %v1604
      %v1612 = vadd.f32 %v1594, %v1604
      %v1613 = vadd.f32 %v1595, %v1604
      %v1614 = vadd.f32 %v1596, %v1609
      %v1615 = vadd.f32 %v1597, %v1609
      %v1616 = vadd.f32 %v1598, %v1609
      %v1617 = vmax.f32 %v1611, 0.0
      %v1618 = vmax.f32 %v1612, 0.0
      %v1619 = vmax.f32 %v1613, 0.0
      %v1620 = vmax.f32 %v1614, 0.0
      %v1621 = vmax.f32 %v1615, 0.0
      %v1622 = vmax.f32 %v1616, 0.0
      %v1624 = vlaneseq
      %v1625 = vshrl.u32 %v1624, 7
      %v1626 = vsub.s32 0, %v1625
      %v1627 = vrot.slane %v943, %v1626
      %v1628 = vlaneseq
      %v1629 = vshrl.u32 %v1628, 7
      %v1630 = vsub.s32 1, %v1629
      %v1631 = vrot.slane %v943, %v1630
      %v1632 = vlaneseq
      %v1633 = vshrl.u32 %v1632, 7
      %v1634 = vsub.s32 2, %v1633
      %v1635 = vrot.slane %v943, %v1634
      %v1639 = vmul.f32 %v1617, %v1627
      %v1640 = vmul.f32 %v1618, %v1631
      %v1641 = vmul.f32 %v1619, %v1635
      %v1642 = vmul.f32 %v1620, %v1627
      %v1643 = vmul.f32 %v1621, %v1631
      %v1644 = vmul.f32 %v1622, %v1635
      %v1645 = vpack.c.bf16 %v1642, %v1639
      %v1646 = vpack.c.bf16 %v1643, %v1640
      %v1647 = vpack.c.bf16 %v1644, %v1641
      %1651 = vrot.lane.b32.xlu0 %v1645, 18
      %v1652 = vpop.permute.xlu0 %1651
      %1653 = vrot.lane.b32.xlu0 %v1646, 18
      %v1654 = vpop.permute.xlu0 %1653
      %1655 = vrot.lane.b32.xlu0 %v1647, 18
      %v1656 = vpop.permute.xlu0 %1655
      %v1657 = vsel %vm963, %v1652, %v1654
      %v1658 = vsel %vm963, %v1654, %v1656
      %vm1662 = vcmask 1047696
      %1663 = vst.msk [vmem:[#allocation2 + $0x8] sm:$0xff] %vm1662, %v1652
      %1664 = vst [vmem:[#allocation2 + $0x10] sm:$0xff] %v1657
      %vm1665 = vcmask 703488
      %1666 = vst.msk [vmem:[#allocation2 + $0x18] sm:$0xff] %vm1665, %v1658
      %1667 = vst [vmem:[#allocation2 + $0x68] sm:$0xff] %v1645
      %1668 = vst [vmem:[#allocation2 + $0x70] sm:$0xff] %v1646
      %vm1669 = vcmask 556032
      %1670 = vst.msk [vmem:[#allocation2 + $0x78] sm:$0xff] %vm1669, %v1647
      %1671 = vrot.lane.b32.xlu0 %v1645, 110
      %v1672 = vpop.permute.xlu0 %1671
      %1673 = vrot.lane.b32.xlu0 %v1646, 110
      %v1674 = vpop.permute.xlu0 %1673
      %1675 = vrot.lane.b32.xlu0 %v1647, 110
      %v1676 = vpop.permute.xlu0 %1675
      %v1677 = vsel %vm984, %v1672, %v1674
      %v1678 = vsel %vm984, %v1674, %v1676
      %vm1683 = vcmask 1048432
      %1684 = vst.msk [vmem:[#allocation2 + $0xc0] sm:$0xff] %vm1683, %v1672
      %1685 = vst [vmem:[#allocation2 + $0xc8] sm:$0xff] %v1677
      %1686 = vst [vmem:[#allocation2 + $0xd0] sm:$0xff] %v1678
      %vm1687 = vcmask 408576
      %1688 = vst.msk [vmem:[#allocation2 + $0xd8] sm:$0xff] %vm1687, %v1676
      %v1689 = vld [vmem:[#allocation2] sm:$0xff]
      %v1690 = vld [vmem:[#allocation2 + $0x8] sm:$0xff]
      %v1691 = vld [vmem:[#allocation2 + $0x10] sm:$0xff]
      %v1692 = vld [vmem:[#allocation2 + $0x18] sm:$0xff]
      %v1693 = vld [vmem:[#allocation2 + $0x20] sm:$0xff]
      %v1694 = vld [vmem:[#allocation2 + $0x28] sm:$0xff]
      %v1695 = vld [vmem:[#allocation2 + $0x30] sm:$0xff]
      %v1696 = vld [vmem:[#allocation2 + $0x38] sm:$0xff]
      %v1697 = vld [vmem:[#allocation2 + $0x40] sm:$0xff]
      %v1698 = vld [vmem:[#allocation2 + $0x48] sm:$0xff]
      %v1699 = vld [vmem:[#allocation2 + $0x50] sm:$0xff]
      %v1700 = vld [vmem:[#allocation2 + $0x58] sm:$0xff]
      %v1701 = vld [vmem:[#allocation2 + $0x60] sm:$0xff]
      %v1702 = vld [vmem:[#allocation2 + $0x68] sm:$0xff]
      %v1703 = vld [vmem:[#allocation2 + $0x70] sm:$0xff]
      %v1704 = vld [vmem:[#allocation2 + $0x78] sm:$0xff]
      %v1705 = vld [vmem:[#allocation2 + $0x80] sm:$0xff]
      %v1706 = vld [vmem:[#allocation2 + $0x88] sm:$0xff]
      %v1707 = vld [vmem:[#allocation2 + $0x90] sm:$0xff]
      %v1708 = vld [vmem:[#allocation2 + $0x98] sm:$0xff]
      %v1709 = vld [vmem:[#allocation2 + $0xa0] sm:$0xff]
      %v1710 = vld [vmem:[#allocation2 + $0xa8] sm:$0xff]
      %v1711 = vld [vmem:[#allocation2 + $0xb0] sm:$0xff]
      %v1712 = vld [vmem:[#allocation2 + $0xb8] sm:$0xff]
      %v1713 = vld [vmem:[#allocation2 + $0xc0] sm:$0xff]
      %v1714 = vld [vmem:[#allocation2 + $0xc8] sm:$0xff]
      %v1715 = vld [vmem:[#allocation2 + $0xd0] sm:$0xff]
      %v1716 = vld [vmem:[#allocation2 + $0xd8] sm:$0xff]
      %v1717 = vld [vmem:[#allocation2 + $0xe0] sm:$0xff]
      %v1718 = vld [vmem:[#allocation2 + $0xe8] sm:$0xff]
      %v1719 = vld [vmem:[#allocation2 + $0xf0] sm:$0xff]
      %v1720 = vld [vmem:[#allocation2 + $0xf8] sm:$0xff]
      %v1721 = vld [vmem:[#allocation2 + $0x100] sm:$0xff]
      %v1722 = vld [vmem:[#allocation2 + $0x108] sm:$0xff]
      %v1723 = vld [vmem:[#allocation2 + $0x110] sm:$0xff]
      %v1724 = vld [vmem:[#allocation2 + $0x118] sm:$0xff]
      %v1725 = vld [vmem:[%s2] sm:$0xff]
      %v1726 = vld [vmem:[%s2 + $0x8] sm:$0xff]
      %s1727 = scalar_lea.vmem %s2, 16
      %v1728 = vld [vmem:[%s1727] sm:$0xff]
      %v1729 = vld [vmem:[%s1727 + $0x8] sm:$0xff]
      %v1732 = vunpack.c.l.b16 %v1728
      %v1733 = vunpack.c.h.b16 %v1728
      %v1734 = vunpack.c.l.b16 %v1729
      %v1735 = vunpack.c.h.b16 %v1729
      %v1736 = vpack.c.b16 %v1734, %v1732
      %v1737 = vpack.c.b16 %v1735, %v1733
      %v1740 = vsel %vm1047, %v1737, 0
      %1742 = vmatprep.subr.bf16.mxu0 %v1691
      %1743 = vmatpush1.bf16.msra.mxu0 %v1690
      %1744 = vmatprep.subr.bf16.mxu0 %v1695
      %1745 = vmatpush1.bf16.msra.mxu0 %v1694
      %1746 = vmatprep.subr.bf16.mxu0 %v1699
      %1747 = vmatpush1.bf16.msra.mxu0 %v1698
      %1748 = vmatprep.subr.bf16.mxu0 %v1703
      %1749 = vmatpush1.bf16.msra.mxu0 %v1702
      %1750 = vmatprep.subr.bf16.mxu0 %v1707
      %1751 = vmatpush1.bf16.msra.mxu0 %v1706
      %1752 = vmatprep.subr.bf16.mxu0 %v1711
      %1753 = vmatpush1.bf16.msra.mxu0 %v1710
      %1754 = vmatprep.subr.bf16.mxu0 %v1715
      %1755 = vmatpush1.bf16.msra.mxu0 %v1714
      %1756 = vmatprep.subr.bf16.mxu0 %v1719
      %1757 = vmatpush1.bf16.msra.mxu0 %v1718
      %1758 = vmatprep.subr.bf16.mxu0 %v1723
      %1759 = vmatpush1.bf16.msra.mxu0 %v1722
      %1760 = vmatprep.subr.bf16.mxu0 0
      %1761 = vmatpush1.bf16.msra.mxu0 0
      %1762 = vmatprep.subr.bf16.mxu0 0
      %1763 = vmatpush1.bf16.msra.mxu0 0
      %1764 = vmatprep.subr.bf16.mxu0 0
      %1765 = vmatpush1.bf16.msra.mxu0 0
      %1766 = vmatprep.subr.bf16.mxu0 0
      %1767 = vmatpush1.bf16.msra.mxu0 0
      %1768 = vmatprep.subr.bf16.mxu0 0
      %1769 = vmatpush1.bf16.msra.mxu0 0
      %1770 = vmatprep.subr.bf16.mxu0 0
      %1771 = vmatpush1.bf16.msra.mxu0 0
      %1772 = vmatprep.subr.bf16.mxu0 0
      %1773 = vmatpush1.bf16.msra.mxu0 0
      %1774 = vmatprep.mubr.bf16.mxu0 %v1740
      %1775 = vmatmul.mubr.bf16.gmra.mrb[0].mxu0 %v1736
      %v1776 = vpop.f32.mrb[0].mxu0
      %v1777 = vadd.f32 0.0, %v1776
      %v1778 = vpop.f32.mrb[0].mxu0
      %v1779 = vadd.f32 0.0, %v1778
      %v1780 = vpop.f32.mrb[0].mxu0
      %v1781 = vadd.f32 0.0, %v1780
      %v1782 = vpop.f32.mrb[0].mxu0
      %v1783 = vadd.f32 0.0, %v1782
      %1784 = vdwg.mxu0
      %1785 = vmatprep.subr.bf16.mxu0 0
      %1786 = vmatpush1.bf16.msra.mxu0 %v1692
      %1787 = vmatprep.subr.bf16.mxu0 0
      %1788 = vmatpush1.bf16.msra.mxu0 %v1696
      %1789 = vmatprep.subr.bf16.mxu0 0
      %1790 = vmatpush1.bf16.msra.mxu0 %v1700
      %1791 = vmatprep.subr.bf16.mxu0 0
      %1792 = vmatpush1.bf16.msra.mxu0 %v1704
      %1793 = vmatprep.subr.bf16.mxu0 0
      %1794 = vmatpush1.bf16.msra.mxu0 %v1708
      %1795 = vmatprep.subr.bf16.mxu0 0
      %1796 = vmatpush1.bf16.msra.mxu0 %v1712
      %1797 = vmatprep.subr.bf16.mxu0 0
      %1798 = vmatpush1.bf16.msra.mxu0 %v1716
      %1799 = vmatprep.subr.bf16.mxu0 0
      %1800 = vmatpush1.bf16.msra.mxu0 %v1720
      %1801 = vmatprep.subr.bf16.mxu0 0
      %1802 = vmatpush1.bf16.msra.mxu0 %v1724
      %1803 = vmatprep.subr.bf16.mxu0 0
      %1804 = vmatpush1.bf16.msra.mxu0 0
      %1805 = vmatprep.subr.bf16.mxu0 0
      %1806 = vmatpush1.bf16.msra.mxu0 0
      %1807 = vmatprep.subr.bf16.mxu0 0
      %1808 = vmatpush1.bf16.msra.mxu0 0
      %1809 = vmatprep.subr.bf16.mxu0 0
      %1810 = vmatpush1.bf16.msra.mxu0 0
      %1811 = vmatprep.subr.bf16.mxu0 0
      %1812 = vmatpush1.bf16.msra.mxu0 0
      %1813 = vmatprep.subr.bf16.mxu0 0
      %1814 = vmatpush1.bf16.msra.mxu0 0
      %1815 = vmatprep.subr.bf16.mxu0 0
      %1816 = vmatpush1.bf16.msra.mxu0 0
      %1817 = vmatprep.mubr.bf16.mxu0 %v1740
      %1818 = vmatmul.mubr.bf16.gmra.mrb[0].mxu0 %v1736
      %v1819 = vpop.f32.mrb[0].mxu0
      %v1820 = vadd.f32 0.0, %v1819
      %v1821 = vpop.f32.mrb[0].mxu0
      %v1822 = vpop.f32.mrb[0].mxu0
      %v1823 = vadd.f32 0.0, %v1822
      %v1824 = vpop.f32.mrb[0].mxu0
      %1825 = vdwg.mxu0
      %v1828 = vunpack.c.l.b16 %v1725
      %v1829 = vunpack.c.h.b16 %v1725
      %v1830 = vunpack.c.l.b16 %v1726
      %v1831 = vunpack.c.h.b16 %v1726
      %v1832 = vpack.c.b16 %v1830, %v1828
      %v1833 = vpack.c.b16 %v1831, %v1829
      %1871 = vrot.lane.b32.xlu0 %v1689, 1
      %v1872 = vpop.permute.xlu0 %1871
      %1873 = vrot.lane.b32.xlu0 %v1690, 1
      %v1874 = vpop.permute.xlu0 %1873
      %1875 = vrot.lane.b32.xlu0 %v1691, 1
      %v1876 = vpop.permute.xlu0 %1875
      %1877 = vrot.lane.b32.xlu0 %v1692, 1
      %v1878 = vpop.permute.xlu0 %1877
      %1879 = vrot.lane.b32.xlu0 %v1693, 1
      %v1880 = vpop.permute.xlu0 %1879
      %1881 = vrot.lane.b32.xlu0 %v1694, 1
      %v1882 = vpop.permute.xlu0 %1881
      %1883 = vrot.lane.b32.xlu0 %v1695, 1
      %v1884 = vpop.permute.xlu0 %1883
      %1885 = vrot.lane.b32.xlu0 %v1696, 1
      %v1886 = vpop.permute.xlu0 %1885
      %1887 = vrot.lane.b32.xlu0 %v1697, 1
      %v1888 = vpop.permute.xlu0 %1887
      %1889 = vrot.lane.b32.xlu0 %v1698, 1
      %v1890 = vpop.permute.xlu0 %1889
      %1891 = vrot.lane.b32.xlu0 %v1699, 1
      %v1892 = vpop.permute.xlu0 %1891
      %1893 = vrot.lane.b32.xlu0 %v1700, 1
      %v1894 = vpop.permute.xlu0 %1893
      %1895 = vrot.lane.b32.xlu0 %v1701, 1
      %v1896 = vpop.permute.xlu0 %1895
      %1897 = vrot.lane.b32.xlu0 %v1702, 1
      %v1898 = vpop.permute.xlu0 %1897
      %1899 = vrot.lane.b32.xlu0 %v1703, 1
      %v1900 = vpop.permute.xlu0 %1899
      %1901 = vrot.lane.b32.xlu0 %v1704, 1
      %v1902 = vpop.permute.xlu0 %1901
      %1903 = vrot.lane.b32.xlu0 %v1705, 1
      %v1904 = vpop.permute.xlu0 %1903
      %1905 = vrot.lane.b32.xlu0 %v1706, 1
      %v1906 = vpop.permute.xlu0 %1905
      %1907 = vrot.lane.b32.xlu0 %v1707, 1
      %v1908 = vpop.permute.xlu0 %1907
      %1909 = vrot.lane.b32.xlu0 %v1708, 1
      %v1910 = vpop.permute.xlu0 %1909
      %1911 = vrot.lane.b32.xlu0 %v1709, 1
      %v1912 = vpop.permute.xlu0 %1911
      %1913 = vrot.lane.b32.xlu0 %v1710, 1
      %v1914 = vpop.permute.xlu0 %1913
      %1915 = vrot.lane.b32.xlu0 %v1711, 1
      %v1916 = vpop.permute.xlu0 %1915
      %1917 = vrot.lane.b32.xlu0 %v1712, 1
      %v1918 = vpop.permute.xlu0 %1917
      %1919 = vrot.lane.b32.xlu0 %v1713, 1
      %v1920 = vpop.permute.xlu0 %1919
      %1921 = vrot.lane.b32.xlu0 %v1714, 1
      %v1922 = vpop.permute.xlu0 %1921
      %1923 = vrot.lane.b32.xlu0 %v1715, 1
      %v1924 = vpop.permute.xlu0 %1923
      %1925 = vrot.lane.b32.xlu0 %v1716, 1
      %v1926 = vpop.permute.xlu0 %1925
      %1927 = vrot.lane.b32.xlu0 %v1717, 1
      %v1928 = vpop.permute.xlu0 %1927
      %1929 = vrot.lane.b32.xlu0 %v1718, 1
      %v1930 = vpop.permute.xlu0 %1929
      %1931 = vrot.lane.b32.xlu0 %v1719, 1
      %v1932 = vpop.permute.xlu0 %1931
      %1933 = vrot.lane.b32.xlu0 %v1720, 1
      %v1934 = vpop.permute.xlu0 %1933
      %1935 = vrot.lane.b32.xlu0 %v1721, 1
      %v1936 = vpop.permute.xlu0 %1935
      %1937 = vrot.lane.b32.xlu0 %v1722, 1
      %v1938 = vpop.permute.xlu0 %1937
      %1939 = vrot.lane.b32.xlu0 %v1723, 1
      %v1940 = vpop.permute.xlu0 %1939
      %1941 = vrot.lane.b32.xlu0 %v1724, 1
      %v1942 = vpop.permute.xlu0 %1941
      %v1943 = vsel %vm1252, %v1872, %v1874
      %v1944 = vsel %vm1252, %v1874, %v1876
      %v1945 = vsel %vm1252, %v1876, %v1878
      %v1946 = vsel %vm1252, %v1880, %v1882
      %v1947 = vsel %vm1252, %v1882, %v1884
      %v1948 = vsel %vm1252, %v1884, %v1886
      %v1949 = vsel %vm1252, %v1888, %v1890
      %v1950 = vsel %vm1252, %v1890, %v1892
      %v1951 = vsel %vm1252, %v1892, %v1894
      %v1952 = vsel %vm1252, %v1896, %v1898
      %v1953 = vsel %vm1252, %v1898, %v1900
      %v1954 = vsel %vm1252, %v1900, %v1902
      %v1955 = vsel %vm1252, %v1904, %v1906
      %v1956 = vsel %vm1252, %v1906, %v1908
      %v1957 = vsel %vm1252, %v1908, %v1910
      %v1958 = vsel %vm1252, %v1912, %v1914
      %v1959 = vsel %vm1252, %v1914, %v1916
      %v1960 = vsel %vm1252, %v1916, %v1918
      %v1961 = vsel %vm1252, %v1920, %v1922
      %v1962 = vsel %vm1252, %v1922, %v1924
      %v1963 = vsel %vm1252, %v1924, %v1926
      %v1964 = vsel %vm1252, %v1928, %v1930
      %v1965 = vsel %vm1252, %v1930, %v1932
      %v1966 = vsel %vm1252, %v1932, %v1934
      %v1967 = vsel %vm1252, %v1936, %v1938
      %v1968 = vsel %vm1252, %v1938, %v1940
      %v1969 = vsel %vm1252, %v1940, %v1942
      %v1998 = vsel %vm1047, %v1833, 0
      %2000 = vmatprep.subr.bf16.mxu0 %v1944
      %2001 = vmatpush1.bf16.msra.mxu0 %v1943
      %2002 = vmatprep.subr.bf16.mxu0 %v1947
      %2003 = vmatpush1.bf16.msra.mxu0 %v1946
      %2004 = vmatprep.subr.bf16.mxu0 %v1950
      %2005 = vmatpush1.bf16.msra.mxu0 %v1949
      %2006 = vmatprep.subr.bf16.mxu0 %v1953
      %2007 = vmatpush1.bf16.msra.mxu0 %v1952
      %2008 = vmatprep.subr.bf16.mxu0 %v1956
      %2009 = vmatpush1.bf16.msra.mxu0 %v1955
      %2010 = vmatprep.subr.bf16.mxu0 %v1959
      %2011 = vmatpush1.bf16.msra.mxu0 %v1958
      %2012 = vmatprep.subr.bf16.mxu0 %v1962
      %2013 = vmatpush1.bf16.msra.mxu0 %v1961
      %2014 = vmatprep.subr.bf16.mxu0 %v1965
      %2015 = vmatpush1.bf16.msra.mxu0 %v1964
      %2016 = vmatprep.subr.bf16.mxu0 %v1968
      %2017 = vmatpush1.bf16.msra.mxu0 %v1967
      %2018 = vmatprep.subr.bf16.mxu0 0
      %2019 = vmatpush1.bf16.msra.mxu0 0
      %2020 = vmatprep.subr.bf16.mxu0 0
      %2021 = vmatpush1.bf16.msra.mxu0 0
      %2022 = vmatprep.subr.bf16.mxu0 0
      %2023 = vmatpush1.bf16.msra.mxu0 0
      %2024 = vmatprep.subr.bf16.mxu0 0
      %2025 = vmatpush1.bf16.msra.mxu0 0
      %2026 = vmatprep.subr.bf16.mxu0 0
      %2027 = vmatpush1.bf16.msra.mxu0 0
      %2028 = vmatprep.subr.bf16.mxu0 0
      %2029 = vmatpush1.bf16.msra.mxu0 0
      %2030 = vmatprep.subr.bf16.mxu0 0
      %2031 = vmatpush1.bf16.msra.mxu0 0
      %2032 = vmatprep.mubr.bf16.mxu0 %v1998
      %2033 = vmatmul.mubr.bf16.gmra.mrb[0].mxu0 %v1832
      %v2034 = vpop.f32.mrb[0].mxu0
      %v2035 = vadd.f32 %v1777, %v2034
      %v2036 = vpop.f32.mrb[0].mxu0
      %v2037 = vadd.f32 %v1779, %v2036
      %v2038 = vpop.f32.mrb[0].mxu0
      %v2039 = vadd.f32 %v1781, %v2038
      %v2040 = vpop.f32.mrb[0].mxu0
      %v2041 = vadd.f32 %v1783, %v2040
      %2042 = vdwg.mxu0
      %2043 = vmatprep.subr.bf16.mxu0 0
      %2044 = vmatpush1.bf16.msra.mxu0 %v1945
      %2045 = vmatprep.subr.bf16.mxu0 0
      %2046 = vmatpush1.bf16.msra.mxu0 %v1948
      %2047 = vmatprep.subr.bf16.mxu0 0
      %2048 = vmatpush1.bf16.msra.mxu0 %v1951
      %2049 = vmatprep.subr.bf16.mxu0 0
      %2050 = vmatpush1.bf16.msra.mxu0 %v1954
      %2051 = vmatprep.subr.bf16.mxu0 0
      %2052 = vmatpush1.bf16.msra.mxu0 %v1957
      %2053 = vmatprep.subr.bf16.mxu0 0
      %2054 = vmatpush1.bf16.msra.mxu0 %v1960
      %2055 = vmatprep.subr.bf16.mxu0 0
      %2056 = vmatpush1.bf16.msra.mxu0 %v1963
      %2057 = vmatprep.subr.bf16.mxu0 0
      %2058 = vmatpush1.bf16.msra.mxu0 %v1966
      %2059 = vmatprep.subr.bf16.mxu0 0
      %2060 = vmatpush1.bf16.msra.mxu0 %v1969
      %2061 = vmatprep.subr.bf16.mxu0 0
      %2062 = vmatpush1.bf16.msra.mxu0 0
      %2063 = vmatprep.subr.bf16.mxu0 0
      %2064 = vmatpush1.bf16.msra.mxu0 0
      %2065 = vmatprep.subr.bf16.mxu0 0
      %2066 = vmatpush1.bf16.msra.mxu0 0
      %2067 = vmatprep.subr.bf16.mxu0 0
      %2068 = vmatpush1.bf16.msra.mxu0 0
      %2069 = vmatprep.subr.bf16.mxu0 0
      %2070 = vmatpush1.bf16.msra.mxu0 0
      %2071 = vmatprep.subr.bf16.mxu0 0
      %2072 = vmatpush1.bf16.msra.mxu0 0
      %2073 = vmatprep.subr.bf16.mxu0 0
      %2074 = vmatpush1.bf16.msra.mxu0 0
      %2075 = vmatprep.mubr.bf16.mxu0 %v1998
      %2076 = vmatmul.mubr.bf16.gmra.mrb[0].mxu0 %v1832
      %v2077 = vpop.f32.mrb[0].mxu0
      %v2078 = vadd.f32 %v1820, %v2077
      %v2079 = vpop.f32.mrb[0].mxu0
      %v2080 = vpop.f32.mrb[0].mxu0
      %v2081 = vadd.f32 %v1823, %v2080
      %v2082 = vpop.f32.mrb[0].mxu0
      %2083 = vdwg.mxu0
      %s2084 = scalar_lea.vmem %s2, 32
      %v2085 = vld [vmem:[%s2084] sm:$0xff]
      %v2086 = vld [vmem:[%s2084 + $0x8] sm:$0xff]
      %v2089 = vunpack.c.l.b16 %v2085
      %v2090 = vunpack.c.h.b16 %v2085
      %v2091 = vunpack.c.l.b16 %v2086
      %v2092 = vunpack.c.h.b16 %v2086
      %v2093 = vpack.c.b16 %v2091, %v2089
      %v2094 = vpack.c.b16 %v2092, %v2090
      %2096 = vrot.lane.b32.xlu0 %v1690, 127
      %v2097 = vpop.permute.xlu0 %2096
      %2098 = vrot.lane.b32.xlu0 %v1691, 127
      %v2099 = vpop.permute.xlu0 %2098
      %2100 = vrot.lane.b32.xlu0 %v1692, 127
      %v2101 = vpop.permute.xlu0 %2100
      %2102 = vrot.lane.b32.xlu0 %v1694, 127
      %v2103 = vpop.permute.xlu0 %2102
      %2104 = vrot.lane.b32.xlu0 %v1695, 127
      %v2105 = vpop.permute.xlu0 %2104
      %2106 = vrot.lane.b32.xlu0 %v1696, 127
      %v2107 = vpop.permute.xlu0 %2106
      %2108 = vrot.lane.b32.xlu0 %v1698, 127
      %v2109 = vpop.permute.xlu0 %2108
      %2110 = vrot.lane.b32.xlu0 %v1699, 127
      %v2111 = vpop.permute.xlu0 %2110
      %2112 = vrot.lane.b32.xlu0 %v1700, 127
      %v2113 = vpop.permute.xlu0 %2112
      %2114 = vrot.lane.b32.xlu0 %v1702, 127
      %v2115 = vpop.permute.xlu0 %2114
      %2116 = vrot.lane.b32.xlu0 %v1703, 127
      %v2117 = vpop.permute.xlu0 %2116
      %2118 = vrot.lane.b32.xlu0 %v1704, 127
      %v2119 = vpop.permute.xlu0 %2118
      %2120 = vrot.lane.b32.xlu0 %v1706, 127
      %v2121 = vpop.permute.xlu0 %2120
      %2122 = vrot.lane.b32.xlu0 %v1707, 127
      %v2123 = vpop.permute.xlu0 %2122
      %2124 = vrot.lane.b32.xlu0 %v1708, 127
      %v2125 = vpop.permute.xlu0 %2124
      %2126 = vrot.lane.b32.xlu0 %v1710, 127
      %v2127 = vpop.permute.xlu0 %2126
      %2128 = vrot.lane.b32.xlu0 %v1711, 127
      %v2129 = vpop.permute.xlu0 %2128
      %2130 = vrot.lane.b32.xlu0 %v1712, 127
      %v2131 = vpop.permute.xlu0 %2130
      %2132 = vrot.lane.b32.xlu0 %v1714, 127
      %v2133 = vpop.permute.xlu0 %2132
      %2134 = vrot.lane.b32.xlu0 %v1715, 127
      %v2135 = vpop.permute.xlu0 %2134
      %2136 = vrot.lane.b32.xlu0 %v1716, 127
      %v2137 = vpop.permute.xlu0 %2136
      %2138 = vrot.lane.b32.xlu0 %v1718, 127
      %v2139 = vpop.permute.xlu0 %2138
      %2140 = vrot.lane.b32.xlu0 %v1719, 127
      %v2141 = vpop.permute.xlu0 %2140
      %2142 = vrot.lane.b32.xlu0 %v1720, 127
      %v2143 = vpop.permute.xlu0 %2142
      %2144 = vrot.lane.b32.xlu0 %v1722, 127
      %v2145 = vpop.permute.xlu0 %2144
      %2146 = vrot.lane.b32.xlu0 %v1723, 127
      %v2147 = vpop.permute.xlu0 %2146
      %2148 = vrot.lane.b32.xlu0 %v1724, 127
      %v2149 = vpop.permute.xlu0 %2148
      %v2150 = vsel %vm1460, %v2097, %v2099
      %v2151 = vsel %vm1460, %v2099, %v2101
      %v2152 = vsel %vm1460, %v2103, %v2105
      %v2153 = vsel %vm1460, %v2105, %v2107
      %v2154 = vsel %vm1460, %v2109, %v2111
      %v2155 = vsel %vm1460, %v2111, %v2113
      %v2156 = vsel %vm1460, %v2115, %v2117
      %v2157 = vsel %vm1460, %v2117, %v2119
      %v2158 = vsel %vm1460, %v2121, %v2123
      %v2159 = vsel %vm1460, %v2123, %v2125
      %v2160 = vsel %vm1460, %v2127, %v2129
      %v2161 = vsel %vm1460, %v2129, %v2131
      %v2162 = vsel %vm1460, %v2133, %v2135
      %v2163 = vsel %vm1460, %v2135, %v2137
      %v2164 = vsel %vm1460, %v2139, %v2141
      %v2165 = vsel %vm1460, %v2141, %v2143
      %v2166 = vsel %vm1460, %v2145, %v2147
      %v2167 = vsel %vm1460, %v2147, %v2149
      %v2196 = vsel %vm1047, %v2094, 0
      %2198 = vmatprep.subr.bf16.mxu0 %v2151
      %2199 = vmatpush1.bf16.msra.mxu0 %v2150
      %2200 = vmatprep.subr.bf16.mxu0 %v2153
      %2201 = vmatpush1.bf16.msra.mxu0 %v2152
      %2202 = vmatprep.subr.bf16.mxu0 %v2155
      %2203 = vmatpush1.bf16.msra.mxu0 %v2154
      %2204 = vmatprep.subr.bf16.mxu0 %v2157
      %2205 = vmatpush1.bf16.msra.mxu0 %v2156
      %2206 = vmatprep.subr.bf16.mxu0 %v2159
      %2207 = vmatpush1.bf16.msra.mxu0 %v2158
      %2208 = vmatprep.subr.bf16.mxu0 %v2161
      %2209 = vmatpush1.bf16.msra.mxu0 %v2160
      %2210 = vmatprep.subr.bf16.mxu0 %v2163
      %2211 = vmatpush1.bf16.msra.mxu0 %v2162
      %2212 = vmatprep.subr.bf16.mxu0 %v2165
      %2213 = vmatpush1.bf16.msra.mxu0 %v2164
      %2214 = vmatprep.subr.bf16.mxu0 %v2167
      %2215 = vmatpush1.bf16.msra.mxu0 %v2166
      %2216 = vmatprep.subr.bf16.mxu0 0
      %2217 = vmatpush1.bf16.msra.mxu0 0
      %2218 = vmatprep.subr.bf16.mxu0 0
      %2219 = vmatpush1.bf16.msra.mxu0 0
      %2220 = vmatprep.subr.bf16.mxu0 0
      %2221 = vmatpush1.bf16.msra.mxu0 0
      %2222 = vmatprep.subr.bf16.mxu0 0
      %2223 = vmatpush1.bf16.msra.mxu0 0
      %2224 = vmatprep.subr.bf16.mxu0 0
      %2225 = vmatpush1.bf16.msra.mxu0 0
      %2226 = vmatprep.subr.bf16.mxu0 0
      %2227 = vmatpush1.bf16.msra.mxu0 0
      %2228 = vmatprep.subr.bf16.mxu0 0
      %2229 = vmatpush1.bf16.msra.mxu0 0
      %2230 = vmatprep.mubr.bf16.mxu0 %v2196
      %2231 = vmatmul.mubr.bf16.gmra.mrb[0].mxu0 %v2093
      %v2232 = vpop.f32.mrb[0].mxu0
      %v2233 = vadd.f32 0.0, %v2232
      %v2234 = vpop.f32.mrb[0].mxu0
      %v2235 = vadd.f32 0.0, %v2234
      %v2236 = vpop.f32.mrb[0].mxu0
      %v2237 = vadd.f32 0.0, %v2236
      %v2238 = vpop.f32.mrb[0].mxu0
      %v2239 = vadd.f32 0.0, %v2238
      %2240 = vdwg.mxu0
      %2241 = vmatprep.subr.bf16.mxu0 0
      %2242 = vmatpush1.bf16.msra.mxu0 %v2101
      %2243 = vmatprep.subr.bf16.mxu0 0
      %2244 = vmatpush1.bf16.msra.mxu0 %v2107
      %2245 = vmatprep.subr.bf16.mxu0 0
      %2246 = vmatpush1.bf16.msra.mxu0 %v2113
      %2247 = vmatprep.subr.bf16.mxu0 0
      %2248 = vmatpush1.bf16.msra.mxu0 %v2119
      %2249 = vmatprep.subr.bf16.mxu0 0
      %2250 = vmatpush1.bf16.msra.mxu0 %v2125
      %2251 = vmatprep.subr.bf16.mxu0 0
      %2252 = vmatpush1.bf16.msra.mxu0 %v2131
      %2253 = vmatprep.subr.bf16.mxu0 0
      %2254 = vmatpush1.bf16.msra.mxu0 %v2137
      %2255 = vmatprep.subr.bf16.mxu0 0
      %2256 = vmatpush1.bf16.msra.mxu0 %v2143
      %2257 = vmatprep.subr.bf16.mxu0 0
      %2258 = vmatpush1.bf16.msra.mxu0 %v2149
      %2259 = vmatprep.subr.bf16.mxu0 0
      %2260 = vmatpush1.bf16.msra.mxu0 0
      %2261 = vmatprep.subr.bf16.mxu0 0
      %2262 = vmatpush1.bf16.msra.mxu0 0
      %2263 = vmatprep.subr.bf16.mxu0 0
      %2264 = vmatpush1.bf16.msra.mxu0 0
      %2265 = vmatprep.subr.bf16.mxu0 0
      %2266 = vmatpush1.bf16.msra.mxu0 0
      %2267 = vmatprep.subr.bf16.mxu0 0
      %2268 = vmatpush1.bf16.msra.mxu0 0
      %2269 = vmatprep.subr.bf16.mxu0 0
      %2270 = vmatpush1.bf16.msra.mxu0 0
      %2271 = vmatprep.subr.bf16.mxu0 0
      %2272 = vmatpush1.bf16.msra.mxu0 0
      %2273 = vmatprep.mubr.bf16.mxu0 %v2196
      %2274 = vmatmul.mubr.bf16.gmra.mrb[0].mxu0 %v2093
      %v2275 = vpop.f32.mrb[0].mxu0
      %v2276 = vadd.f32 0.0, %v2275
      %v2277 = vpop.f32.mrb[0].mxu0
      %v2278 = vpop.f32.mrb[0].mxu0
      %v2279 = vadd.f32 0.0, %v2278
      %v2280 = vpop.f32.mrb[0].mxu0
      %2281 = vdwg.mxu0
      %v2282 = vadd.f32 %v2035, %v2233
      %v2283 = vadd.f32 %v2037, %v2235
      %v2284 = vadd.f32 %v2078, %v2276
      %v2285 = vadd.f32 %v2039, %v2237
      %v2286 = vadd.f32 %v2041, %v2239
      %v2287 = vadd.f32 %v2081, %v2279
      %v2288 = vld [vmem:[%s12] sm:$0xff]
      %v2289 = vld [vmem:[%s12 + $0x8] sm:$0xff]
      %2291 = vset.pattern.permute.xlu0 0
      %2292 = vperm.xlu0 %2291, %v2288
      %v2293 = vpop.permute.xlu0 %2292
      %2296 = vset.pattern.permute.xlu0 0
      %2297 = vperm.xlu0 %2296, %v2289
      %v2298 = vpop.permute.xlu0 %2297
      %v2300 = vadd.f32 %v2282, %v2293
      %v2301 = vadd.f32 %v2283, %v2293
      %v2302 = vadd.f32 %v2284, %v2293
      %v2303 = vadd.f32 %v2285, %v2298
      %v2304 = vadd.f32 %v2286, %v2298
      %v2305 = vadd.f32 %v2287, %v2298
      %v2306 = vmax.f32 %v2300, 0.0
      %v2307 = vmax.f32 %v2301, 0.0
      %v2308 = vmax.f32 %v2302, 0.0
      %v2309 = vmax.f32 %v2303, 0.0
      %v2310 = vmax.f32 %v2304, 0.0
      %v2311 = vmax.f32 %v2305, 0.0
      %v2312 = vmul.f32 %v2306, %v1627
      %v2313 = vmul.f32 %v2307, %v1631
      %v2314 = vmul.f32 %v2308, %v1635
      %v2315 = vmul.f32 %v2309, %v1627
      %v2316 = vmul.f32 %v2310, %v1631
      %v2317 = vmul.f32 %v2311, %v1635
      %v2318 = vpack.c.bf16 %v2315, %v2312
      %v2319 = vpack.c.bf16 %v2316, %v2313
      %v2320 = vpack.c.bf16 %v2317, %v2314
      %v2321 = vld [vmem:[%s21] sm:$0xf]
      %v2322 = vld [vmem:[%s21 + $0x4] sm:$0xf]
      %v2323 = vld [vmem:[%s21 + $0x8] sm:$0xf]
      %v2324 = vld [vmem:[%s21 + $0xc] sm:$0xf]
      %v2325 = vld [vmem:[%s21 + $0x10] sm:$0xf]
      %v2326 = vld [vmem:[%s21 + $0x14] sm:$0xf]
      %v2327 = vld [vmem:[%s21 + $0x18] sm:$0xf]
      %v2328 = vld [vmem:[%s21 + $0x1c] sm:$0xf]
      %v2329 = vld [vmem:[%s21 + $0x20] sm:$0xf]
      %v2330 = vld [vmem:[%s21 + $0x24] sm:$0xf]
      %v2331 = vld [vmem:[%s21 + $0x28] sm:$0xf]
      %v2332 = vld [vmem:[%s21 + $0x2c] sm:$0xf]
      %v2333 = vld [vmem:[%s21 + $0x30] sm:$0xf]
      %v2334 = vld [vmem:[%s21 + $0x34] sm:$0xf]
      %v2335 = vld [vmem:[%s21 + $0x38] sm:$0xf]
      %v2336 = vld [vmem:[%s21 + $0x3c] sm:$0xf]
      %v2337 = vld [vmem:[%s21 + $0x40] sm:$0xf]
      %v2338 = vld [vmem:[%s21 + $0x44] sm:$0xf]
      %v2339 = vld [vmem:[%s21 + $0x48] sm:$0xf]
      %v2340 = vld [vmem:[%s21 + $0x4c] sm:$0xf]
      %v2341 = vld [vmem:[%s21 + $0x50] sm:$0xf]
      %v2342 = vld [vmem:[%s21 + $0x54] sm:$0xf]
      %v2343 = vld [vmem:[%s21 + $0x58] sm:$0xf]
      %v2344 = vld [vmem:[%s21 + $0x5c] sm:$0xf]
      %v2345 = vld [vmem:[%s21 + $0x60] sm:$0xf]
      %v2346 = vld [vmem:[%s21 + $0x64] sm:$0xf]
      %v2347 = vld [vmem:[%s21 + $0x68] sm:$0xf]
      %v2348 = vld [vmem:[%s21 + $0x6c] sm:$0xf]
      %v2349 = vld [vmem:[%s21 + $0x70] sm:$0xf]
      %v2350 = vld [vmem:[%s21 + $0x74] sm:$0xf]
      %v2351 = vld [vmem:[%s21 + $0x78] sm:$0xf]
      %v2352 = vld [vmem:[%s21 + $0x7c] sm:$0xf]
      %v2353 = vld [vmem:[%s21 + $0x80] sm:$0xf]
      %v2354 = vld [vmem:[%s21 + $0x84] sm:$0xf]
      %v2355 = vld [vmem:[%s21 + $0x88] sm:$0xf]
      %v2356 = vld [vmem:[%s21 + $0x8c] sm:$0xf]
      %v2357 = vld [vmem:[%s21 + $0x90] sm:$0xf]
      %v2358 = vld [vmem:[%s21 + $0x94] sm:$0xf]
      %v2359 = vld [vmem:[%s21 + $0x98] sm:$0xf]
      %v2360 = vld [vmem:[%s21 + $0x9c] sm:$0xf]
      %v2361 = vld [vmem:[%s21 + $0xa0] sm:$0x3]
      %v2403 = vunpack.c.l.b16 %v2321
      %v2404 = vunpack.c.l.b16 %v2322
      %v2405 = vunpack.c.l.b16 %v2323
      %v2406 = vunpack.c.l.b16 %v2324
      %v2407 = vunpack.c.l.b16 %v2325
      %v2408 = vunpack.c.l.b16 %v2326
      %v2409 = vunpack.c.l.b16 %v2327
      %v2410 = vunpack.c.l.b16 %v2328
      %v2411 = vunpack.c.l.b16 %v2329
      %v2412 = vunpack.c.l.b16 %v2330
      %v2413 = vunpack.c.l.b16 %v2331
      %v2414 = vunpack.c.l.b16 %v2332
      %v2415 = vunpack.c.l.b16 %v2333
      %v2416 = vunpack.c.l.b16 %v2334
      %v2417 = vunpack.c.l.b16 %v2335
      %v2418 = vunpack.c.l.b16 %v2336
      %v2419 = vunpack.c.l.b16 %v2337
      %v2420 = vunpack.c.l.b16 %v2338
      %v2421 = vunpack.c.l.b16 %v2339
      %v2422 = vunpack.c.l.b16 %v2340
      %v2423 = vunpack.c.l.b16 %v2341
      %v2424 = vunpack.c.l.b16 %v2342
      %v2425 = vunpack.c.l.b16 %v2343
      %v2426 = vunpack.c.l.b16 %v2344
      %v2427 = vunpack.c.l.b16 %v2345
      %v2428 = vunpack.c.l.b16 %v2346
      %v2429 = vunpack.c.l.b16 %v2347
      %v2430 = vunpack.c.l.b16 %v2348
      %v2431 = vunpack.c.l.b16 %v2349
      %v2432 = vunpack.c.l.b16 %v2350
      %v2433 = vunpack.c.l.b16 %v2351
      %v2434 = vunpack.c.l.b16 %v2352
      %v2435 = vunpack.c.l.b16 %v2353
      %v2436 = vunpack.c.l.b16 %v2354
      %v2437 = vunpack.c.l.b16 %v2355
      %v2438 = vunpack.c.l.b16 %v2356
      %v2439 = vunpack.c.l.b16 %v2357
      %v2440 = vunpack.c.l.b16 %v2358
      %v2441 = vunpack.c.l.b16 %v2359
      %v2442 = vunpack.c.l.b16 %v2360
      %v2443 = vunpack.c.l.b16 %v2361
      %v2444 = vpack.c.b16 %v2404, %v2403
      %v2445 = vpack.c.b16 %v2406, %v2405
      %v2446 = vpack.c.b16 %v2408, %v2407
      %v2447 = vpack.c.b16 %v2410, %v2409
      %v2448 = vpack.c.b16 %v2412, %v2411
      %v2449 = vpack.c.b16 %v2414, %v2413
      %v2450 = vpack.c.b16 %v2416, %v2415
      %v2451 = vpack.c.b16 %v2418, %v2417
      %v2452 = vpack.c.b16 %v2420, %v2419
      %v2453 = vpack.c.b16 %v2422, %v2421
      %v2454 = vpack.c.b16 %v2424, %v2423
      %v2455 = vpack.c.b16 %v2426, %v2425
      %v2456 = vpack.c.b16 %v2428, %v2427
      %v2457 = vpack.c.b16 %v2430, %v2429
      %v2458 = vpack.c.b16 %v2432, %v2431
      %v2459 = vpack.c.b16 %v2434, %v2433
      %v2460 = vpack.c.b16 %v2436, %v2435
      %v2461 = vpack.c.b16 %v2438, %v2437
      %v2462 = vpack.c.b16 %v2440, %v2439
      %v2463 = vpack.c.b16 %v2442, %v2441
      %v2464 = vpack.c.b16 %v2443, %v2443
      %v2486 = vsel %vm1669, %v2320, 0
      %vm2488 = vcmask 1041408
      %v2490 = vsel %vm2488, %v2464, 0
      %2492 = vmatprep.subr.bf16.mxu0 0
      %2493 = vmatpush1.bf16.msra.mxu0 %v2444
      %2494 = vmatprep.subr.bf16.mxu0 0
      %2495 = vmatpush1.bf16.msra.mxu0 %v2445
      %2496 = vmatprep.subr.bf16.mxu0 0
      %2497 = vmatpush1.bf16.msra.mxu0 %v2446
      %2498 = vmatprep.subr.bf16.mxu0 0
      %2499 = vmatpush1.bf16.msra.mxu0 %v2447
      %2500 = vmatprep.subr.bf16.mxu0 0
      %2501 = vmatpush1.bf16.msra.mxu0 %v2448
      %2502 = vmatprep.subr.bf16.mxu0 0
      %2503 = vmatpush1.bf16.msra.mxu0 %v2449
      %2504 = vmatprep.subr.bf16.mxu0 0
      %2505 = vmatpush1.bf16.msra.mxu0 %v2450
      %2506 = vmatprep.subr.bf16.mxu0 0
      %2507 = vmatpush1.bf16.msra.mxu0 %v2451
      %2508 = vmatprep.subr.bf16.mxu0 0
      %2509 = vmatpush1.bf16.msra.mxu0 %v2452
      %2510 = vmatprep.subr.bf16.mxu0 0
      %2511 = vmatpush1.bf16.msra.mxu0 %v2453
      %2512 = vmatprep.subr.bf16.mxu0 0
      %2513 = vmatpush1.bf16.msra.mxu0 %v2454
      %2514 = vmatprep.subr.bf16.mxu0 0
      %2515 = vmatpush1.bf16.msra.mxu0 %v2455
      %2516 = vmatprep.subr.bf16.mxu0 0
      %2517 = vmatpush1.bf16.msra.mxu0 %v2456
      %2518 = vmatprep.subr.bf16.mxu0 0
      %2519 = vmatpush1.bf16.msra.mxu0 %v2457
      %2520 = vmatprep.subr.bf16.mxu0 0
      %2521 = vmatpush1.bf16.msra.mxu0 %v2458
      %2522 = vmatprep.subr.bf16.mxu0 0
      %2523 = vmatpush1.bf16.msra.mxu0 %v2459
      %2524 = vmatprep.mubr.bf16.mxu0 %v2319
      %2525 = vmatmul.mubr.bf16.gmra.mrb[0].mxu0 %v2318
      %v2526 = vpop.f32.mrb[0].mxu0
      %v2527 = vadd.f32 0.0, %v2526
      %v2528 = vpop.f32.mrb[0].mxu0
      %v2529 = vpop.f32.mrb[0].mxu0
      %v2530 = vadd.f32 0.0, %v2529
      %v2531 = vpop.f32.mrb[0].mxu0
      %2532 = vdwg.mxu0
      %2533 = vmatprep.subr.bf16.mxu0 0
      %2534 = vmatpush1.bf16.msra.mxu0 %v2460
      %2535 = vmatprep.subr.bf16.mxu0 0
      %2536 = vmatpush1.bf16.msra.mxu0 %v2461
      %2537 = vmatprep.subr.bf16.mxu0 0
      %2538 = vmatpush1.bf16.msra.mxu0 %v2462
      %2539 = vmatprep.subr.bf16.mxu0 0
      %2540 = vmatpush1.bf16.msra.mxu0 %v2463
      %2541 = vmatprep.subr.bf16.mxu0 0
      %2542 = vmatpush1.bf16.msra.mxu0 %v2490
      %2543 = vmatprep.subr.bf16.mxu0 0
      %2544 = vmatpush1.bf16.msra.mxu0 0
      %2545 = vmatprep.subr.bf16.mxu0 0
      %2546 = vmatpush1.bf16.msra.mxu0 0
      %2547 = vmatprep.subr.bf16.mxu0 0
      %2548 = vmatpush1.bf16.msra.mxu0 0
      %2549 = vmatprep.subr.bf16.mxu0 0
      %2550 = vmatpush1.bf16.msra.mxu0 0
      %2551 = vmatprep.subr.bf16.mxu0 0
      %2552 = vmatpush1.bf16.msra.mxu0 0
      %2553 = vmatprep.subr.bf16.mxu0 0
      %2554 = vmatpush1.bf16.msra.mxu0 0
      %2555 = vmatprep.subr.bf16.mxu0 0
      %2556 = vmatpush1.bf16.msra.mxu0 0
      %2557 = vmatprep.subr.bf16.mxu0 0
      %2558 = vmatpush1.bf16.msra.mxu0 0
      %2559 = vmatprep.subr.bf16.mxu0 0
      %2560 = vmatpush1.bf16.msra.mxu0 0
      %2561 = vmatprep.subr.bf16.mxu0 0
      %2562 = vmatpush1.bf16.msra.mxu0 0
      %2563 = vmatprep.subr.bf16.mxu0 0
      %2564 = vmatpush1.bf16.msra.mxu0 0
      %2565 = vmatprep.mubr.bf16.mxu0 0
      %2566 = vmatmul.mubr.bf16.gmra.mrb[0].mxu0 %v2486
      %v2567 = vpop.f32.mrb[0].mxu0
      %v2568 = vadd.f32 %v2527, %v2567
      %v2569 = vpop.f32.mrb[0].mxu0
      %v2570 = vpop.f32.mrb[0].mxu0
      %v2571 = vadd.f32 %v2530, %v2570
      %v2572 = vpop.f32.mrb[0].mxu0
      %2573 = vdwg.mxu0
      %s2574 = scalar_lea.vmem %s21, 164
      %v2575 = vld [vmem:[%s2574] sm:$0xf]
      %v2576 = vld [vmem:[%s2574 + $0x4] sm:$0xf]
      %v2577 = vld [vmem:[%s2574 + $0x8] sm:$0xf]
      %v2578 = vld [vmem:[%s2574 + $0xc] sm:$0xf]
      %v2579 = vld [vmem:[%s2574 + $0x10] sm:$0xf]
      %v2580 = vld [vmem:[%s2574 + $0x14] sm:$0xf]
      %v2581 = vld [vmem:[%s2574 + $0x18] sm:$0xf]
      %v2582 = vld [vmem:[%s2574 + $0x1c] sm:$0xf]
      %v2583 = vld [vmem:[%s2574 + $0x20] sm:$0xf]
      %v2584 = vld [vmem:[%s2574 + $0x24] sm:$0xf]
      %v2585 = vld [vmem:[%s2574 + $0x28] sm:$0xf]
      %v2586 = vld [vmem:[%s2574 + $0x2c] sm:$0xf]
      %v2587 = vld [vmem:[%s2574 + $0x30] sm:$0xf]
      %v2588 = vld [vmem:[%s2574 + $0x34] sm:$0xf]
      %v2589 = vld [vmem:[%s2574 + $0x38] sm:$0xf]
      %v2590 = vld [vmem:[%s2574 + $0x3c] sm:$0xf]
      %v2591 = vld [vmem:[%s2574 + $0x40] sm:$0xf]
      %v2592 = vld [vmem:[%s2574 + $0x44] sm:$0xf]
      %v2593 = vld [vmem:[%s2574 + $0x48] sm:$0xf]
      %v2594 = vld [vmem:[%s2574 + $0x4c] sm:$0xf]
      %v2595 = vld [vmem:[%s2574 + $0x50] sm:$0xf]
      %v2596 = vld [vmem:[%s2574 + $0x54] sm:$0xf]
      %v2597 = vld [vmem:[%s2574 + $0x58] sm:$0xf]
      %v2598 = vld [vmem:[%s2574 + $0x5c] sm:$0xf]
      %v2599 = vld [vmem:[%s2574 + $0x60] sm:$0xf]
      %v2600 = vld [vmem:[%s2574 + $0x64] sm:$0xf]
      %v2601 = vld [vmem:[%s2574 + $0x68] sm:$0xf]
      %v2602 = vld [vmem:[%s2574 + $0x6c] sm:$0xf]
      %v2603 = vld [vmem:[%s2574 + $0x70] sm:$0xf]
      %v2604 = vld [vmem:[%s2574 + $0x74] sm:$0xf]
      %v2605 = vld [vmem:[%s2574 + $0x78] sm:$0xf]
      %v2606 = vld [vmem:[%s2574 + $0x7c] sm:$0xf]
      %v2607 = vld [vmem:[%s2574 + $0x80] sm:$0xf]
      %v2608 = vld [vmem:[%s2574 + $0x84] sm:$0xf]
      %v2609 = vld [vmem:[%s2574 + $0x88] sm:$0xf]
      %v2610 = vld [vmem:[%s2574 + $0x8c] sm:$0xf]
      %v2611 = vld [vmem:[%s2574 + $0x90] sm:$0xf]
      %v2612 = vld [vmem:[%s2574 + $0x94] sm:$0xf]
      %v2613 = vld [vmem:[%s2574 + $0x98] sm:$0xf]
      %v2614 = vld [vmem:[%s2574 + $0x9c] sm:$0xf]
      %v2615 = vld [vmem:[%s2574 + $0xa0] sm:$0x3]
      %v2657 = vunpack.c.l.b16 %v2575
      %v2658 = vunpack.c.l.b16 %v2576
      %v2659 = vunpack.c.l.b16 %v2577
      %v2660 = vunpack.c.l.b16 %v2578
      %v2661 = vunpack.c.l.b16 %v2579
      %v2662 = vunpack.c.l.b16 %v2580
      %v2663 = vunpack.c.l.b16 %v2581
      %v2664 = vunpack.c.l.b16 %v2582
      %v2665 = vunpack.c.l.b16 %v2583
      %v2666 = vunpack.c.l.b16 %v2584
      %v2667 = vunpack.c.l.b16 %v2585
      %v2668 = vunpack.c.l.b16 %v2586
      %v2669 = vunpack.c.l.b16 %v2587
      %v2670 = vunpack.c.l.b16 %v2588
      %v2671 = vunpack.c.l.b16 %v2589
      %v2672 = vunpack.c.l.b16 %v2590
      %v2673 = vunpack.c.l.b16 %v2591
      %v2674 = vunpack.c.l.b16 %v2592
      %v2675 = vunpack.c.l.b16 %v2593
      %v2676 = vunpack.c.l.b16 %v2594
      %v2677 = vunpack.c.l.b16 %v2595
      %v2678 = vunpack.c.l.b16 %v2596
      %v2679 = vunpack.c.l.b16 %v2597
      %v2680 = vunpack.c.l.b16 %v2598
      %v2681 = vunpack.c.l.b16 %v2599
      %v2682 = vunpack.c.l.b16 %v2600
      %v2683 = vunpack.c.l.b16 %v2601
      %v2684 = vunpack.c.l.b16 %v2602
      %v2685 = vunpack.c.l.b16 %v2603
      %v2686 = vunpack.c.l.b16 %v2604
      %v2687 = vunpack.c.l.b16 %v2605
      %v2688 = vunpack.c.l.b16 %v2606
      %v2689 = vunpack.c.l.b16 %v2607
      %v2690 = vunpack.c.l.b16 %v2608
      %v2691 = vunpack.c.l.b16 %v2609
      %v2692 = vunpack.c.l.b16 %v2610
      %v2693 = vunpack.c.l.b16 %v2611
      %v2694 = vunpack.c.l.b16 %v2612
      %v2695 = vunpack.c.l.b16 %v2613
      %v2696 = vunpack.c.l.b16 %v2614
      %v2697 = vunpack.c.l.b16 %v2615
      %v2698 = vpack.c.b16 %v2658, %v2657
      %v2699 = vpack.c.b16 %v2660, %v2659
      %v2700 = vpack.c.b16 %v2662, %v2661
      %v2701 = vpack.c.b16 %v2664, %v2663
      %v2702 = vpack.c.b16 %v2666, %v2665
      %v2703 = vpack.c.b16 %v2668, %v2667
      %v2704 = vpack.c.b16 %v2670, %v2669
      %v2705 = vpack.c.b16 %v2672, %v2671
      %v2706 = vpack.c.b16 %v2674, %v2673
      %v2707 = vpack.c.b16 %v2676, %v2675
      %v2708 = vpack.c.b16 %v2678, %v2677
      %v2709 = vpack.c.b16 %v2680, %v2679
      %v2710 = vpack.c.b16 %v2682, %v2681
      %v2711 = vpack.c.b16 %v2684, %v2683
      %v2712 = vpack.c.b16 %v2686, %v2685
      %v2713 = vpack.c.b16 %v2688, %v2687
      %v2714 = vpack.c.b16 %v2690, %v2689
      %v2715 = vpack.c.b16 %v2692, %v2691
      %v2716 = vpack.c.b16 %v2694, %v2693
      %v2717 = vpack.c.b16 %v2696, %v2695
      %v2718 = vpack.c.b16 %v2697, %v2697
      %v2740 = vsel %vm2488, %v2718, 0
      %2742 = vmatprep.subr.bf16.mxu0 0
      %2743 = vmatpush1.bf16.msra.mxu0 %v2698
      %2744 = vmatprep.subr.bf16.mxu0 0
      %2745 = vmatpush1.bf16.msra.mxu0 %v2699
      %2746 = vmatprep.subr.bf16.mxu0 0
      %2747 = vmatpush1.bf16.msra.mxu0 %v2700
      %2748 = vmatprep.subr.bf16.mxu0 0
      %2749 = vmatpush1.bf16.msra.mxu0 %v2701
      %2750 = vmatprep.subr.bf16.mxu0 0
      %2751 = vmatpush1.bf16.msra.mxu0 %v2702
      %2752 = vmatprep.subr.bf16.mxu0 0
      %2753 = vmatpush1.bf16.msra.mxu0 %v2703
      %2754 = vmatprep.subr.bf16.mxu0 0
      %2755 = vmatpush1.bf16.msra.mxu0 %v2704
      %2756 = vmatprep.subr.bf16.mxu0 0
      %2757 = vmatpush1.bf16.msra.mxu0 %v2705
      %2758 = vmatprep.subr.bf16.mxu0 0
      %2759 = vmatpush1.bf16.msra.mxu0 %v2706
      %2760 = vmatprep.subr.bf16.mxu0 0
      %2761 = vmatpush1.bf16.msra.mxu0 %v2707
      %2762 = vmatprep.subr.bf16.mxu0 0
      %2763 = vmatpush1.bf16.msra.mxu0 %v2708
      %2764 = vmatprep.subr.bf16.mxu0 0
      %2765 = vmatpush1.bf16.msra.mxu0 %v2709
      %2766 = vmatprep.subr.bf16.mxu0 0
      %2767 = vmatpush1.bf16.msra.mxu0 %v2710
      %2768 = vmatprep.subr.bf16.mxu0 0
      %2769 = vmatpush1.bf16.msra.mxu0 %v2711
      %2770 = vmatprep.subr.bf16.mxu0 0
      %2771 = vmatpush1.bf16.msra.mxu0 %v2712
      %2772 = vmatprep.subr.bf16.mxu0 0
      %2773 = vmatpush1.bf16.msra.mxu0 %v2713
      %2774 = vmatprep.mubr.bf16.mxu0 %v2319
      %2775 = vmatmul.mubr.bf16.gmra.mrb[0].mxu0 %v2318
      %v2776 = vpop.f32.mrb[0].mxu0
      %v2777 = vadd.f32 0.0, %v2776
      %v2778 = vpop.f32.mrb[0].mxu0
      %v2779 = vpop.f32.mrb[0].mxu0
      %v2780 = vadd.f32 0.0, %v2779
      %v2781 = vpop.f32.mrb[0].mxu0
      %2782 = vdwg.mxu0
      %2783 = vmatprep.subr.bf16.mxu0 0
      %2784 = vmatpush1.bf16.msra.mxu0 %v2714
      %2785 = vmatprep.subr.bf16.mxu0 0
      %2786 = vmatpush1.bf16.msra.mxu0 %v2715
      %2787 = vmatprep.subr.bf16.mxu0 0
      %2788 = vmatpush1.bf16.msra.mxu0 %v2716
      %2789 = vmatprep.subr.bf16.mxu0 0
      %2790 = vmatpush1.bf16.msra.mxu0 %v2717
      %2791 = vmatprep.subr.bf16.mxu0 0
      %2792 = vmatpush1.bf16.msra.mxu0 %v2740
      %2793 = vmatprep.subr.bf16.mxu0 0
      %2794 = vmatpush1.bf16.msra.mxu0 0
      %2795 = vmatprep.subr.bf16.mxu0 0
      %2796 = vmatpush1.bf16.msra.mxu0 0
      %2797 = vmatprep.subr.bf16.mxu0 0
      %2798 = vmatpush1.bf16.msra.mxu0 0
      %2799 = vmatprep.subr.bf16.mxu0 0
      %2800 = vmatpush1.bf16.msra.mxu0 0
      %2801 = vmatprep.subr.bf16.mxu0 0
      %2802 = vmatpush1.bf16.msra.mxu0 0
      %2803 = vmatprep.subr.bf16.mxu0 0
      %2804 = vmatpush1.bf16.msra.mxu0 0
      %2805 = vmatprep.subr.bf16.mxu0 0
      %2806 = vmatpush1.bf16.msra.mxu0 0
      %2807 = vmatprep.subr.bf16.mxu0 0
      %2808 = vmatpush1.bf16.msra.mxu0 0
      %2809 = vmatprep.subr.bf16.mxu0 0
      %2810 = vmatpush1.bf16.msra.mxu0 0
      %2811 = vmatprep.subr.bf16.mxu0 0
      %2812 = vmatpush1.bf16.msra.mxu0 0
      %2813 = vmatprep.subr.bf16.mxu0 0
      %2814 = vmatpush1.bf16.msra.mxu0 0
      %2815 = vmatprep.mubr.bf16.mxu0 0
      %2816 = vmatmul.mubr.bf16.gmra.mrb[0].mxu0 %v2486
      %v2817 = vpop.f32.mrb[0].mxu0
      %v2818 = vadd.f32 %v2777, %v2817
      %v2819 = vpop.f32.mrb[0].mxu0
      %v2820 = vpop.f32.mrb[0].mxu0
      %v2821 = vadd.f32 %v2780, %v2820
      %v2822 = vpop.f32.mrb[0].mxu0
      %2823 = vdwg.mxu0
      %v2824 = vmax.f32 %v2568, %v2818
      %v2825 = vmax.f32 %v2571, %v2821
      %s2826 = scalar_lea.vmem %s21, 328
      %v2827 = vld [vmem:[%s2826] sm:$0xf]
      %v2828 = vld [vmem:[%s2826 + $0x4] sm:$0xf]
      %v2829 = vld [vmem:[%s2826 + $0x8] sm:$0xf]
      %v2830 = vld [vmem:[%s2826 + $0xc] sm:$0xf]
      %v2831 = vld [vmem:[%s2826 + $0x10] sm:$0xf]
      %v2832 = vld [vmem:[%s2826 + $0x14] sm:$0xf]
      %v2833 = vld [vmem:[%s2826 + $0x18] sm:$0xf]
      %v2834 = vld [vmem:[%s2826 + $0x1c] sm:$0xf]
      %v2835 = vld [vmem:[%s2826 + $0x20] sm:$0xf]
      %v2836 = vld [vmem:[%s2826 + $0x24] sm:$0xf]
      %v2837 = vld [vmem:[%s2826 + $0x28] sm:$0xf]
      %v2838 = vld [vmem:[%s2826 + $0x2c] sm:$0xf]
      %v2839 = vld [vmem:[%s2826 + $0x30] sm:$0xf]
      %v2840 = vld [vmem:[%s2826 + $0x34] sm:$0xf]
      %v2841 = vld [vmem:[%s2826 + $0x38] sm:$0xf]
      %v2842 = vld [vmem:[%s2826 + $0x3c] sm:$0xf]
      %v2843 = vld [vmem:[%s2826 + $0x40] sm:$0xf]
      %v2844 = vld [vmem:[%s2826 + $0x44] sm:$0xf]
      %v2845 = vld [vmem:[%s2826 + $0x48] sm:$0xf]
      %v2846 = vld [vmem:[%s2826 + $0x4c] sm:$0xf]
      %v2847 = vld [vmem:[%s2826 + $0x50] sm:$0xf]
      %v2848 = vld [vmem:[%s2826 + $0x54] sm:$0xf]
      %v2849 = vld [vmem:[%s2826 + $0x58] sm:$0xf]
      %v2850 = vld [vmem:[%s2826 + $0x5c] sm:$0xf]
      %v2851 = vld [vmem:[%s2826 + $0x60] sm:$0xf]
      %v2852 = vld [vmem:[%s2826 + $0x64] sm:$0xf]
      %v2853 = vld [vmem:[%s2826 + $0x68] sm:$0xf]
      %v2854 = vld [vmem:[%s2826 + $0x6c] sm:$0xf]
      %v2855 = vld [vmem:[%s2826 + $0x70] sm:$0xf]
      %v2856 = vld [vmem:[%s2826 + $0x74] sm:$0xf]
      %v2857 = vld [vmem:[%s2826 + $0x78] sm:$0xf]
      %v2858 = vld [vmem:[%s2826 + $0x7c] sm:$0xf]
      %v2859 = vld [vmem:[%s2826 + $0x80] sm:$0xf]
      %v2860 = vld [vmem:[%s2826 + $0x84] sm:$0xf]
      %v2861 = vld [vmem:[%s2826 + $0x88] sm:$0xf]
      %v2862 = vld [vmem:[%s2826 + $0x8c] sm:$0xf]
      %v2863 = vld [vmem:[%s2826 + $0x90] sm:$0xf]
      %v2864 = vld [vmem:[%s2826 + $0x94] sm:$0xf]
      %v2865 = vld [vmem:[%s2826 + $0x98] sm:$0xf]
      %v2866 = vld [vmem:[%s2826 + $0x9c] sm:$0xf]
      %v2867 = vld [vmem:[%s2826 + $0xa0] sm:$0x3]
      %v2909 = vunpack.c.l.b16 %v2827
      %v2910 = vunpack.c.l.b16 %v2828
      %v2911 = vunpack.c.l.b16 %v2829
      %v2912 = vunpack.c.l.b16 %v2830
      %v2913 = vunpack.c.l.b16 %v2831
      %v2914 = vunpack.c.l.b16 %v2832
      %v2915 = vunpack.c.l.b16 %v2833
      %v2916 = vunpack.c.l.b16 %v2834
      %v2917 = vunpack.c.l.b16 %v2835
      %v2918 = vunpack.c.l.b16 %v2836
      %v2919 = vunpack.c.l.b16 %v2837
      %v2920 = vunpack.c.l.b16 %v2838
      %v2921 = vunpack.c.l.b16 %v2839
      %v2922 = vunpack.c.l.b16 %v2840
      %v2923 = vunpack.c.l.b16 %v2841
      %v2924 = vunpack.c.l.b16 %v2842
      %v2925 = vunpack.c.l.b16 %v2843
      %v2926 = vunpack.c.l.b16 %v2844
      %v2927 = vunpack.c.l.b16 %v2845
      %v2928 = vunpack.c.l.b16 %v2846
      %v2929 = vunpack.c.l.b16 %v2847
      %v2930 = vunpack.c.l.b16 %v2848
      %v2931 = vunpack.c.l.b16 %v2849
      %v2932 = vunpack.c.l.b16 %v2850
      %v2933 = vunpack.c.l.b16 %v2851
      %v2934 = vunpack.c.l.b16 %v2852
      %v2935 = vunpack.c.l.b16 %v2853
      %v2936 = vunpack.c.l.b16 %v2854
      %v2937 = vunpack.c.l.b16 %v2855
      %v2938 = vunpack.c.l.b16 %v2856
      %v2939 = vunpack.c.l.b16 %v2857
      %v2940 = vunpack.c.l.b16 %v2858
      %v2941 = vunpack.c.l.b16 %v2859
      %v2942 = vunpack.c.l.b16 %v2860
      %v2943 = vunpack.c.l.b16 %v2861
      %v2944 = vunpack.c.l.b16 %v2862
      %v2945 = vunpack.c.l.b16 %v2863
      %v2946 = vunpack.c.l.b16 %v2864
      %v2947 = vunpack.c.l.b16 %v2865
      %v2948 = vunpack.c.l.b16 %v2866
      %v2949 = vunpack.c.l.b16 %v2867
      %v2950 = vpack.c.b16 %v2910, %v2909
      %v2951 = vpack.c.b16 %v2912, %v2911
      %v2952 = vpack.c.b16 %v2914, %v2913
      %v2953 = vpack.c.b16 %v2916, %v2915
      %v2954 = vpack.c.b16 %v2918, %v2917
      %v2955 = vpack.c.b16 %v2920, %v2919
      %v2956 = vpack.c.b16 %v2922, %v2921
      %v2957 = vpack.c.b16 %v2924, %v2923
      %v2958 = vpack.c.b16 %v2926, %v2925
      %v2959 = vpack.c.b16 %v2928, %v2927
      %v2960 = vpack.c.b16 %v2930, %v2929
      %v2961 = vpack.c.b16 %v2932, %v2931
      %v2962 = vpack.c.b16 %v2934, %v2933
      %v2963 = vpack.c.b16 %v2936, %v2935
      %v2964 = vpack.c.b16 %v2938, %v2937
      %v2965 = vpack.c.b16 %v2940, %v2939
      %v2966 = vpack.c.b16 %v2942, %v2941
      %v2967 = vpack.c.b16 %v2944, %v2943
      %v2968 = vpack.c.b16 %v2946, %v2945
      %v2969 = vpack.c.b16 %v2948, %v2947
      %v2970 = vpack.c.b16 %v2949, %v2949
      %v2992 = vsel %vm2488, %v2970, 0
      %2994 = vmatprep.subr.bf16.mxu0 0
      %2995 = vmatpush1.bf16.msra.mxu0 %v2950
      %2996 = vmatprep.subr.bf16.mxu0 0
      %2997 = vmatpush1.bf16.msra.mxu0 %v2951
      %2998 = vmatprep.subr.bf16.mxu0 0
      %2999 = vmatpush1.bf16.msra.mxu0 %v2952
      %3000 = vmatprep.subr.bf16.mxu0 0
      %3001 = vmatpush1.bf16.msra.mxu0 %v2953
      %3002 = vmatprep.subr.bf16.mxu0 0
      %3003 = vmatpush1.bf16.msra.mxu0 %v2954
      %3004 = vmatprep.subr.bf16.mxu0 0
      %3005 = vmatpush1.bf16.msra.mxu0 %v2955
      %3006 = vmatprep.subr.bf16.mxu0 0
      %3007 = vmatpush1.bf16.msra.mxu0 %v2956
      %3008 = vmatprep.subr.bf16.mxu0 0
      %3009 = vmatpush1.bf16.msra.mxu0 %v2957
      %3010 = vmatprep.subr.bf16.mxu0 0
      %3011 = vmatpush1.bf16.msra.mxu0 %v2958
      %3012 = vmatprep.subr.bf16.mxu0 0
      %3013 = vmatpush1.bf16.msra.mxu0 %v2959
      %3014 = vmatprep.subr.bf16.mxu0 0
      %3015 = vmatpush1.bf16.msra.mxu0 %v2960
      %3016 = vmatprep.subr.bf16.mxu0 0
      %3017 = vmatpush1.bf16.msra.mxu0 %v2961
      %3018 = vmatprep.subr.bf16.mxu0 0
      %3019 = vmatpush1.bf16.msra.mxu0 %v2962
      %3020 = vmatprep.subr.bf16.mxu0 0
      %3021 = vmatpush1.bf16.msra.mxu0 %v2963
      %3022 = vmatprep.subr.bf16.mxu0 0
      %3023 = vmatpush1.bf16.msra.mxu0 %v2964
      %3024 = vmatprep.subr.bf16.mxu0 0
      %3025 = vmatpush1.bf16.msra.mxu0 %v2965
      %3026 = vmatprep.mubr.bf16.mxu0 %v2319
      %3027 = vmatmul.mubr.bf16.gmra.mrb[0].mxu0 %v2318
      %v3028 = vpop.f32.mrb[0].mxu0
      %v3029 = vadd.f32 0.0, %v3028
      %v3030 = vpop.f32.mrb[0].mxu0
      %v3031 = vpop.f32.mrb[0].mxu0
      %v3032 = vadd.f32 0.0, %v3031
      %v3033 = vpop.f32.mrb[0].mxu0
      %3034 = vdwg.mxu0
      %3035 = vmatprep.subr.bf16.mxu0 0
      %3036 = vmatpush1.bf16.msra.mxu0 %v2966
      %3037 = vmatprep.subr.bf16.mxu0 0
      %3038 = vmatpush1.bf16.msra.mxu0 %v2967
      %3039 = vmatprep.subr.bf16.mxu0 0
      %3040 = vmatpush1.bf16.msra.mxu0 %v2968
      %3041 = vmatprep.subr.bf16.mxu0 0
      %3042 = vmatpush1.bf16.msra.mxu0 %v2969
      %3043 = vmatprep.subr.bf16.mxu0 0
      %3044 = vmatpush1.bf16.msra.mxu0 %v2992
      %3045 = vmatprep.subr.bf16.mxu0 0
      %3046 = vmatpush1.bf16.msra.mxu0 0
      %3047 = vmatprep.subr.bf16.mxu0 0
      %3048 = vmatpush1.bf16.msra.mxu0 0
      %3049 = vmatprep.subr.bf16.mxu0 0
      %3050 = vmatpush1.bf16.msra.mxu0 0
      %3051 = vmatprep.subr.bf16.mxu0 0
      %3052 = vmatpush1.bf16.msra.mxu0 0
      %3053 = vmatprep.subr.bf16.mxu0 0
      %3054 = vmatpush1.bf16.msra.mxu0 0
      %3055 = vmatprep.subr.bf16.mxu0 0
      %3056 = vmatpush1.bf16.msra.mxu0 0
      %3057 = vmatprep.subr.bf16.mxu0 0
      %3058 = vmatpush1.bf16.msra.mxu0 0
      %3059 = vmatprep.subr.bf16.mxu0 0
      %3060 = vmatpush1.bf16.msra.mxu0 0
      %3061 = vmatprep.subr.bf16.mxu0 0
      %3062 = vmatpush1.bf16.msra.mxu0 0
      %3063 = vmatprep.subr.bf16.mxu0 0
      %3064 = vmatpush1.bf16.msra.mxu0 0
      %3065 = vmatprep.subr.bf16.mxu0 0
      %3066 = vmatpush1.bf16.msra.mxu0 0
      %3067 = vmatprep.mubr.bf16.mxu0 0
      %3068 = vmatmul.mubr.bf16.gmra.mrb[0].mxu0 %v2486
      %v3069 = vpop.f32.mrb[0].mxu0
      %v3070 = vadd.f32 %v3029, %v3069
      %v3071 = vpop.f32.mrb[0].mxu0
      %v3072 = vpop.f32.mrb[0].mxu0
      %v3073 = vadd.f32 %v3032, %v3072
      %v3074 = vpop.f32.mrb[0].mxu0
      %3075 = vdwg.mxu0
      %v3076 = vmax.f32 %v2824, %v3070
      %v3077 = vmax.f32 %v2825, %v3073
      %s3078 = scalar_lea.vmem %s21, 492
      %v3079 = vld [vmem:[%s3078] sm:$0xf]
      %v3080 = vld [vmem:[%s3078 + $0x4] sm:$0xf]
      %v3081 = vld [vmem:[%s3078 + $0x8] sm:$0xf]
      %v3082 = vld [vmem:[%s3078 + $0xc] sm:$0xf]
      %v3083 = vld [vmem:[%s3078 + $0x10] sm:$0xf]
      %v3084 = vld [vmem:[%s3078 + $0x14] sm:$0xf]
      %v3085 = vld [vmem:[%s3078 + $0x18] sm:$0xf]
      %v3086 = vld [vmem:[%s3078 + $0x1c] sm:$0xf]
      %v3087 = vld [vmem:[%s3078 + $0x20] sm:$0xf]
      %v3088 = vld [vmem:[%s3078 + $0x24] sm:$0xf]
      %v3089 = vld [vmem:[%s3078 + $0x28] sm:$0xf]
      %v3090 = vld [vmem:[%s3078 + $0x2c] sm:$0xf]
      %v3091 = vld [vmem:[%s3078 + $0x30] sm:$0xf]
      %v3092 = vld [vmem:[%s3078 + $0x34] sm:$0xf]
      %v3093 = vld [vmem:[%s3078 + $0x38] sm:$0xf]
      %v3094 = vld [vmem:[%s3078 + $0x3c] sm:$0xf]
      %v3095 = vld [vmem:[%s3078 + $0x40] sm:$0xf]
      %v3096 = vld [vmem:[%s3078 + $0x44] sm:$0xf]
      %v3097 = vld [vmem:[%s3078 + $0x48] sm:$0xf]
      %v3098 = vld [vmem:[%s3078 + $0x4c] sm:$0xf]
      %v3099 = vld [vmem:[%s3078 + $0x50] sm:$0xf]
      %v3100 = vld [vmem:[%s3078 + $0x54] sm:$0xf]
      %v3101 = vld [vmem:[%s3078 + $0x58] sm:$0xf]
      %v3102 = vld [vmem:[%s3078 + $0x5c] sm:$0xf]
      %v3103 = vld [vmem:[%s3078 + $0x60] sm:$0xf]
      %v3104 = vld [vmem:[%s3078 + $0x64] sm:$0xf]
      %v3105 = vld [vmem:[%s3078 + $0x68] sm:$0xf]
      %v3106 = vld [vmem:[%s3078 + $0x6c] sm:$0xf]
      %v3107 = vld [vmem:[%s3078 + $0x70] sm:$0xf]
      %v3108 = vld [vmem:[%s3078 + $0x74] sm:$0xf]
      %v3109 = vld [vmem:[%s3078 + $0x78] sm:$0xf]
      %v3110 = vld [vmem:[%s3078 + $0x7c] sm:$0xf]
      %v3111 = vld [vmem:[%s3078 + $0x80] sm:$0xf]
      %v3112 = vld [vmem:[%s3078 + $0x84] sm:$0xf]
      %v3113 = vld [vmem:[%s3078 + $0x88] sm:$0xf]
      %v3114 = vld [vmem:[%s3078 + $0x8c] sm:$0xf]
      %v3115 = vld [vmem:[%s3078 + $0x90] sm:$0xf]
      %v3116 = vld [vmem:[%s3078 + $0x94] sm:$0xf]
      %v3117 = vld [vmem:[%s3078 + $0x98] sm:$0xf]
      %v3118 = vld [vmem:[%s3078 + $0x9c] sm:$0xf]
      %v3119 = vld [vmem:[%s3078 + $0xa0] sm:$0x3]
      %v3161 = vunpack.c.l.b16 %v3079
      %v3162 = vunpack.c.l.b16 %v3080
      %v3163 = vunpack.c.l.b16 %v3081
      %v3164 = vunpack.c.l.b16 %v3082
      %v3165 = vunpack.c.l.b16 %v3083
      %v3166 = vunpack.c.l.b16 %v3084
      %v3167 = vunpack.c.l.b16 %v3085
      %v3168 = vunpack.c.l.b16 %v3086
      %v3169 = vunpack.c.l.b16 %v3087
      %v3170 = vunpack.c.l.b16 %v3088
      %v3171 = vunpack.c.l.b16 %v3089
      %v3172 = vunpack.c.l.b16 %v3090
      %v3173 = vunpack.c.l.b16 %v3091
      %v3174 = vunpack.c.l.b16 %v3092
      %v3175 = vunpack.c.l.b16 %v3093
      %v3176 = vunpack.c.l.b16 %v3094
      %v3177 = vunpack.c.l.b16 %v3095
      %v3178 = vunpack.c.l.b16 %v3096
      %v3179 = vunpack.c.l.b16 %v3097
      %v3180 = vunpack.c.l.b16 %v3098
      %v3181 = vunpack.c.l.b16 %v3099
      %v3182 = vunpack.c.l.b16 %v3100
      %v3183 = vunpack.c.l.b16 %v3101
      %v3184 = vunpack.c.l.b16 %v3102
      %v3185 = vunpack.c.l.b16 %v3103
      %v3186 = vunpack.c.l.b16 %v3104
      %v3187 = vunpack.c.l.b16 %v3105
      %v3188 = vunpack.c.l.b16 %v3106
      %v3189 = vunpack.c.l.b16 %v3107
      %v3190 = vunpack.c.l.b16 %v3108
      %v3191 = vunpack.c.l.b16 %v3109
      %v3192 = vunpack.c.l.b16 %v3110
      %v3193 = vunpack.c.l.b16 %v3111
      %v3194 = vunpack.c.l.b16 %v3112
      %v3195 = vunpack.c.l.b16 %v3113
      %v3196 = vunpack.c.l.b16 %v3114
      %v3197 = vunpack.c.l.b16 %v3115
      %v3198 = vunpack.c.l.b16 %v3116
      %v3199 = vunpack.c.l.b16 %v3117
      %v3200 = vunpack.c.l.b16 %v3118
      %v3201 = vunpack.c.l.b16 %v3119
      %v3202 = vpack.c.b16 %v3162, %v3161
      %v3203 = vpack.c.b16 %v3164, %v3163
      %v3204 = vpack.c.b16 %v3166, %v3165
      %v3205 = vpack.c.b16 %v3168, %v3167
      %v3206 = vpack.c.b16 %v3170, %v3169
      %v3207 = vpack.c.b16 %v3172, %v3171
      %v3208 = vpack.c.b16 %v3174, %v3173
      %v3209 = vpack.c.b16 %v3176, %v3175
      %v3210 = vpack.c.b16 %v3178, %v3177
      %v3211 = vpack.c.b16 %v3180, %v3179
      %v3212 = vpack.c.b16 %v3182, %v3181
      %v3213 = vpack.c.b16 %v3184, %v3183
      %v3214 = vpack.c.b16 %v3186, %v3185
      %v3215 = vpack.c.b16 %v3188, %v3187
      %v3216 = vpack.c.b16 %v3190, %v3189
      %v3217 = vpack.c.b16 %v3192, %v3191
      %v3218 = vpack.c.b16 %v3194, %v3193
      %v3219 = vpack.c.b16 %v3196, %v3195
      %v3220 = vpack.c.b16 %v3198, %v3197
      %v3221 = vpack.c.b16 %v3200, %v3199
      %v3222 = vpack.c.b16 %v3201, %v3201
      %v3244 = vsel %vm2488, %v3222, 0
      %3246 = vmatprep.subr.bf16.mxu0 0
      %3247 = vmatpush1.bf16.msra.mxu0 %v3202
      %3248 = vmatprep.subr.bf16.mxu0 0
      %3249 = vmatpush1.bf16.msra.mxu0 %v3203
      %3250 = vmatprep.subr.bf16.mxu0 0
      %3251 = vmatpush1.bf16.msra.mxu0 %v3204
      %3252 = vmatprep.subr.bf16.mxu0 0
      %3253 = vmatpush1.bf16.msra.mxu0 %v3205
      %3254 = vmatprep.subr.bf16.mxu0 0
      %3255 = vmatpush1.bf16.msra.mxu0 %v3206
      %3256 = vmatprep.subr.bf16.mxu0 0
      %3257 = vmatpush1.bf16.msra.mxu0 %v3207
      %3258 = vmatprep.subr.bf16.mxu0 0
      %3259 = vmatpush1.bf16.msra.mxu0 %v3208
      %3260 = vmatprep.subr.bf16.mxu0 0
      %3261 = vmatpush1.bf16.msra.mxu0 %v3209
      %3262 = vmatprep.subr.bf16.mxu0 0
      %3263 = vmatpush1.bf16.msra.mxu0 %v3210
      %3264 = vmatprep.subr.bf16.mxu0 0
      %3265 = vmatpush1.bf16.msra.mxu0 %v3211
      %3266 = vmatprep.subr.bf16.mxu0 0
      %3267 = vmatpush1.bf16.msra.mxu0 %v3212
      %3268 = vmatprep.subr.bf16.mxu0 0
      %3269 = vmatpush1.bf16.msra.mxu0 %v3213
      %3270 = vmatprep.subr.bf16.mxu0 0
      %3271 = vmatpush1.bf16.msra.mxu0 %v3214
      %3272 = vmatprep.subr.bf16.mxu0 0
      %3273 = vmatpush1.bf16.msra.mxu0 %v3215
      %3274 = vmatprep.subr.bf16.mxu0 0
      %3275 = vmatpush1.bf16.msra.mxu0 %v3216
      %3276 = vmatprep.subr.bf16.mxu0 0
      %3277 = vmatpush1.bf16.msra.mxu0 %v3217
      %3278 = vmatprep.mubr.bf16.mxu0 %v2319
      %3279 = vmatmul.mubr.bf16.gmra.mrb[0].mxu0 %v2318
      %v3280 = vpop.f32.mrb[0].mxu0
      %v3281 = vadd.f32 0.0, %v3280
      %v3282 = vpop.f32.mrb[0].mxu0
      %v3283 = vpop.f32.mrb[0].mxu0
      %v3284 = vadd.f32 0.0, %v3283
      %v3285 = vpop.f32.mrb[0].mxu0
      %3286 = vdwg.mxu0
      %3287 = vmatprep.subr.bf16.mxu0 0
      %3288 = vmatpush1.bf16.msra.mxu0 %v3218
      %3289 = vmatprep.subr.bf16.mxu0 0
      %3290 = vmatpush1.bf16.msra.mxu0 %v3219
      %3291 = vmatprep.subr.bf16.mxu0 0
      %3292 = vmatpush1.bf16.msra.mxu0 %v3220
      %3293 = vmatprep.subr.bf16.mxu0 0
      %3294 = vmatpush1.bf16.msra.mxu0 %v3221
      %3295 = vmatprep.subr.bf16.mxu0 0
      %3296 = vmatpush1.bf16.msra.mxu0 %v3244
      %3297 = vmatprep.subr.bf16.mxu0 0
      %3298 = vmatpush1.bf16.msra.mxu0 0
      %3299 = vmatprep.subr.bf16.mxu0 0
      %3300 = vmatpush1.bf16.msra.mxu0 0
      %3301 = vmatprep.subr.bf16.mxu0 0
      %3302 = vmatpush1.bf16.msra.mxu0 0
      %3303 = vmatprep.subr.bf16.mxu0 0
      %3304 = vmatpush1.bf16.msra.mxu0 0
      %3305 = vmatprep.subr.bf16.mxu0 0
      %3306 = vmatpush1.bf16.msra.mxu0 0
      %3307 = vmatprep.subr.bf16.mxu0 0
      %3308 = vmatpush1.bf16.msra.mxu0 0
      %3309 = vmatprep.subr.bf16.mxu0 0
      %3310 = vmatpush1.bf16.msra.mxu0 0
      %3311 = vmatprep.subr.bf16.mxu0 0
      %3312 = vmatpush1.bf16.msra.mxu0 0
      %3313 = vmatprep.subr.bf16.mxu0 0
      %3314 = vmatpush1.bf16.msra.mxu0 0
      %3315 = vmatprep.subr.bf16.mxu0 0
      %3316 = vmatpush1.bf16.msra.mxu0 0
      %3317 = vmatprep.subr.bf16.mxu0 0
      %3318 = vmatpush1.bf16.msra.mxu0 0
      %3319 = vmatprep.mubr.bf16.mxu0 0
      %3320 = vmatmul.mubr.bf16.gmra.mrb[0].mxu0 %v2486
      %v3321 = vpop.f32.mrb[0].mxu0
      %v3322 = vadd.f32 %v3281, %v3321
      %v3323 = vpop.f32.mrb[0].mxu0
      %v3324 = vpop.f32.mrb[0].mxu0
      %v3325 = vadd.f32 %v3284, %v3324
      %v3326 = vpop.f32.mrb[0].mxu0
      %3327 = vdwg.mxu0
      %v3328 = vmax.f32 %v3076, %v3322
      %v3329 = vmax.f32 %v3077, %v3325
      %v3330 = vpack.c.bf16 %v3329, %v3328
      %3332 = vrot.lane.b32.xlu0 %v3330, 10
      %v3333 = vpop.permute.xlu0 %3332
      %vm3335 = vcmask 900176
      %3336 = vst.msk [vmem:[#allocation3 + $0x8] sm:$0xff] %vm3335, %v3333
      %vm3337 = vcmask 818176
      %3338 = vst.msk [vmem:[#allocation3 + $0x68] sm:$0xff] %vm3337, %v3330
      %3339 = vrot.lane.b32.xlu0 %v3330, 118
      %v3340 = vpop.permute.xlu0 %3339
      %vm3342 = vcmask 1048496
      %3343 = vst.msk [vmem:[#allocation3 + $0xc0] sm:$0xff] %vm3342, %v3340
      %vm3344 = vcmask 736256
      %3345 = vst.msk [vmem:[#allocation3 + $0xc8] sm:$0xff] %vm3344, %v3340
      %v3346 = vld [vmem:[#allocation3] sm:$0xff]
      %v3347 = vld [vmem:[#allocation3 + $0x8] sm:$0xff]
      %v3348 = vld [vmem:[#allocation3 + $0x10] sm:$0xff]
      %v3349 = vld [vmem:[#allocation3 + $0x18] sm:$0xff]
      %v3350 = vld [vmem:[#allocation3 + $0x20] sm:$0xff]
      %v3351 = vld [vmem:[#allocation3 + $0x28] sm:$0xff]
      %v3352 = vld [vmem:[#allocation3 + $0x30] sm:$0xff]
      %v3353 = vld [vmem:[#allocation3 + $0x38] sm:$0xff]
      %v3354 = vld [vmem:[#allocation3 + $0x40] sm:$0xff]
      %v3355 = vld [vmem:[#allocation3 + $0x48] sm:$0xff]
      %v3356 = vld [vmem:[#allocation3 + $0x50] sm:$0xff]
      %v3357 = vld [vmem:[#allocation3 + $0x58] sm:$0xff]
      %v3358 = vld [vmem:[#allocation3 + $0x60] sm:$0xff]
      %v3359 = vld [vmem:[#allocation3 + $0x68] sm:$0xff]
      %v3360 = vld [vmem:[#allocation3 + $0x70] sm:$0xff]
      %v3361 = vld [vmem:[#allocation3 + $0x78] sm:$0xff]
      %v3362 = vld [vmem:[#allocation3 + $0x80] sm:$0xff]
      %v3363 = vld [vmem:[#allocation3 + $0x88] sm:$0xff]
      %v3364 = vld [vmem:[#allocation3 + $0x90] sm:$0xff]
      %v3365 = vld [vmem:[#allocation3 + $0x98] sm:$0xff]
      %v3366 = vld [vmem:[#allocation3 + $0xa0] sm:$0xff]
      %v3367 = vld [vmem:[#allocation3 + $0xa8] sm:$0xff]
      %v3368 = vld [vmem:[#allocation3 + $0xb0] sm:$0xff]
      %v3369 = vld [vmem:[#allocation3 + $0xb8] sm:$0xff]
      %v3370 = vld [vmem:[#allocation3 + $0xc0] sm:$0xff]
      %v3371 = vld [vmem:[#allocation3 + $0xc8] sm:$0xff]
      %v3372 = vld [vmem:[#allocation3 + $0xd0] sm:$0xff]
      %v3373 = vld [vmem:[#allocation3 + $0xd8] sm:$0xff]
      %v3374 = vld [vmem:[#allocation3 + $0xe0] sm:$0xff]
      %v3375 = vld [vmem:[#allocation3 + $0xe8] sm:$0xff]
      %v3376 = vld [vmem:[#allocation3 + $0xf0] sm:$0xff]
      %v3377 = vld [vmem:[#allocation3 + $0xf8] sm:$0xff]
      %v3378 = vld [vmem:[#allocation3 + $0x100] sm:$0xff]
      %v3379 = vld [vmem:[#allocation3 + $0x108] sm:$0xff]
      %v3380 = vld [vmem:[#allocation3 + $0x110] sm:$0xff]
      %v3381 = vld [vmem:[#allocation3 + $0x118] sm:$0xff]
      %v3382 = vld [vmem:[%s3] sm:$0xff]
      %v3383 = vld [vmem:[%s3 + $0x8] sm:$0xf]
      %v3384 = vld [vmem:[%s3 + $0xc] sm:$0xff]
      %v3385 = vld [vmem:[%s3 + $0x14] sm:$0xf]
      %v3386 = vld [vmem:[%s3 + $0x18] sm:$0xff]
      %v3387 = vld [vmem:[%s3 + $0x20] sm:$0xf]
      %v3388 = vld [vmem:[%s3 + $0x24] sm:$0xff]
      %v3389 = vld [vmem:[%s3 + $0x2c] sm:$0xf]
      %s3390 = scalar_lea.vmem %s3, 48
      %v3391 = vld [vmem:[%s3390] sm:$0xff]
      %v3392 = vld [vmem:[%s3390 + $0x8] sm:$0xf]
      %v3393 = vld [vmem:[%s3390 + $0xc] sm:$0xff]
      %v3394 = vld [vmem:[%s3390 + $0x14] sm:$0xf]
      %v3395 = vld [vmem:[%s3390 + $0x18] sm:$0xff]
      %v3396 = vld [vmem:[%s3390 + $0x20] sm:$0xf]
      %v3397 = vld [vmem:[%s3390 + $0x24] sm:$0xff]
      %v3398 = vld [vmem:[%s3390 + $0x2c] sm:$0xf]
      %v3407 = vunpack.c.l.b16 %v3391
      %v3408 = vunpack.c.h.b16 %v3391
      %v3409 = vunpack.c.l.b16 %v3392
      %v3410 = vunpack.c.l.b16 %v3393
      %v3411 = vunpack.c.h.b16 %v3393
      %v3412 = vunpack.c.l.b16 %v3394
      %v3413 = vunpack.c.l.b16 %v3395
      %v3414 = vunpack.c.h.b16 %v3395
      %v3415 = vunpack.c.l.b16 %v3396
      %v3416 = vunpack.c.l.b16 %v3397
      %v3417 = vunpack.c.h.b16 %v3397
      %v3418 = vunpack.c.l.b16 %v3398
      %v3419 = vpack.c.b16 %v3410, %v3407
      %v3420 = vpack.c.b16 %v3411, %v3408
      %v3421 = vpack.c.b16 %v3412, %v3409
      %v3422 = vpack.c.b16 %v3416, %v3413
      %v3423 = vpack.c.b16 %v3417, %v3414
      %v3424 = vpack.c.b16 %v3418, %v3415
      %vm3429 = vcmask 261120
      %v3431 = vsel %vm3429, %v3421, 0
      %v3434 = vsel %vm3429, %v3424, 0
      %3436 = vmatprep.subr.bf16.mxu0 0
      %3437 = vmatpush1.bf16.msra.mxu0 %v3347
      %3438 = vmatprep.subr.bf16.mxu0 0
      %3439 = vmatpush1.bf16.msra.mxu0 %v3349
      %3440 = vmatprep.subr.bf16.mxu0 0
      %3441 = vmatpush1.bf16.msra.mxu0 %v3351
      %3442 = vmatprep.subr.bf16.mxu0 0
      %3443 = vmatpush1.bf16.msra.mxu0 %v3353
      %3444 = vmatprep.subr.bf16.mxu0 0
      %3445 = vmatpush1.bf16.msra.mxu0 %v3355
      %3446 = vmatprep.subr.bf16.mxu0 0
      %3447 = vmatpush1.bf16.msra.mxu0 %v3357
      %3448 = vmatprep.subr.bf16.mxu0 0
      %3449 = vmatpush1.bf16.msra.mxu0 %v3359
      %3450 = vmatprep.subr.bf16.mxu0 0
      %3451 = vmatpush1.bf16.msra.mxu0 %v3361
      %3452 = vmatprep.subr.bf16.mxu0 0
      %3453 = vmatpush1.bf16.msra.mxu0 %v3363
      %3454 = vmatprep.subr.bf16.mxu0 0
      %3455 = vmatpush1.bf16.msra.mxu0 %v3365
      %3456 = vmatprep.subr.bf16.mxu0 0
      %3457 = vmatpush1.bf16.msra.mxu0 %v3367
      %3458 = vmatprep.subr.bf16.mxu0 0
      %3459 = vmatpush1.bf16.msra.mxu0 %v3369
      %3460 = vmatprep.subr.bf16.mxu0 0
      %3461 = vmatpush1.bf16.msra.mxu0 %v3371
      %3462 = vmatprep.subr.bf16.mxu0 0
      %3463 = vmatpush1.bf16.msra.mxu0 %v3373
      %3464 = vmatprep.subr.bf16.mxu0 0
      %3465 = vmatpush1.bf16.msra.mxu0 %v3375
      %3466 = vmatprep.subr.bf16.mxu0 0
      %3467 = vmatpush1.bf16.msra.mxu0 %v3377
      %3468 = vmatprep.mubr.bf16.mxu0 %v3420
      %3469 = vmatmul.mubr.bf16.gmra.mrb[0].mxu0 %v3419
      %v3470 = vpop.f32.mrb[0].mxu0
      %v3471 = vadd.f32 0.0, %v3470
      %v3472 = vpop.f32.mrb[0].mxu0
      %v3473 = vpop.f32.mrb[0].mxu0
      %v3474 = vadd.f32 0.0, %v3473
      %v3475 = vpop.f32.mrb[0].mxu0
      %3476 = vmatprep.mubr.bf16.mxu0 %v3423
      %3477 = vmatmul.mubr.bf16.gmra.mrb[0].mxu0 %v3422
      %v3478 = vpop.f32.mrb[0].mxu0
      %v3479 = vadd.f32 0.0, %v3478
      %v3480 = vpop.f32.mrb[0].mxu0
      %v3481 = vpop.f32.mrb[0].mxu0
      %v3482 = vadd.f32 0.0, %v3481
      %v3483 = vpop.f32.mrb[0].mxu0
      %3484 = vdwg.mxu0
      %3485 = vmatprep.subr.bf16.mxu0 0
      %3486 = vmatpush1.bf16.msra.mxu0 %v3379
      %3487 = vmatprep.subr.bf16.mxu0 0
      %3488 = vmatpush1.bf16.msra.mxu0 %v3381
      %3489 = vmatprep.subr.bf16.mxu0 0
      %3490 = vmatpush1.bf16.msra.mxu0 0
      %3491 = vmatprep.subr.bf16.mxu0 0
      %3492 = vmatpush1.bf16.msra.mxu0 0
      %3493 = vmatprep.subr.bf16.mxu0 0
      %3494 = vmatpush1.bf16.msra.mxu0 0
      %3495 = vmatprep.subr.bf16.mxu0 0
      %3496 = vmatpush1.bf16.msra.mxu0 0
      %3497 = vmatprep.subr.bf16.mxu0 0
      %3498 = vmatpush1.bf16.msra.mxu0 0
      %3499 = vmatprep.subr.bf16.mxu0 0
      %3500 = vmatpush1.bf16.msra.mxu0 0
      %3501 = vmatprep.subr.bf16.mxu0 0
      %3502 = vmatpush1.bf16.msra.mxu0 0
      %3503 = vmatprep.subr.bf16.mxu0 0
      %3504 = vmatpush1.bf16.msra.mxu0 0
      %3505 = vmatprep.subr.bf16.mxu0 0
      %3506 = vmatpush1.bf16.msra.mxu0 0
      %3507 = vmatprep.subr.bf16.mxu0 0
      %3508 = vmatpush1.bf16.msra.mxu0 0
      %3509 = vmatprep.subr.bf16.mxu0 0
      %3510 = vmatpush1.bf16.msra.mxu0 0
      %3511 = vmatprep.subr.bf16.mxu0 0
      %3512 = vmatpush1.bf16.msra.mxu0 0
      %3513 = vmatprep.subr.bf16.mxu0 0
      %3514 = vmatpush1.bf16.msra.mxu0 0
      %3515 = vmatprep.subr.bf16.mxu0 0
      %3516 = vmatpush1.bf16.msra.mxu0 0
      %3517 = vmatprep.mubr.bf16.mxu0 0
      %3518 = vmatmul.mubr.bf16.gmra.mrb[0].mxu0 %v3431
      %v3519 = vpop.f32.mrb[0].mxu0
      %v3520 = vadd.f32 %v3471, %v3519
      %v3521 = vpop.f32.mrb[0].mxu0
      %v3522 = vpop.f32.mrb[0].mxu0
      %v3523 = vadd.f32 %v3474, %v3522
      %v3524 = vpop.f32.mrb[0].mxu0
      %3525 = vmatprep.mubr.bf16.mxu0 0
      %3526 = vmatmul.mubr.bf16.gmra.mrb[0].mxu0 %v3434
      %v3527 = vpop.f32.mrb[0].mxu0
      %v3528 = vadd.f32 %v3479, %v3527
      %v3529 = vpop.f32.mrb[0].mxu0
      %v3530 = vpop.f32.mrb[0].mxu0
      %v3531 = vadd.f32 %v3482, %v3530
      %v3532 = vpop.f32.mrb[0].mxu0
      %3533 = vdwg.mxu0
      %v3542 = vunpack.c.l.b16 %v3382
      %v3543 = vunpack.c.h.b16 %v3382
      %v3544 = vunpack.c.l.b16 %v3383
      %v3545 = vunpack.c.l.b16 %v3384
      %v3546 = vunpack.c.h.b16 %v3384
      %v3547 = vunpack.c.l.b16 %v3385
      %v3548 = vunpack.c.l.b16 %v3386
      %v3549 = vunpack.c.h.b16 %v3386
      %v3550 = vunpack.c.l.b16 %v3387
      %v3551 = vunpack.c.l.b16 %v3388
      %v3552 = vunpack.c.h.b16 %v3388
      %v3553 = vunpack.c.l.b16 %v3389
      %v3554 = vpack.c.b16 %v3545, %v3542
      %v3555 = vpack.c.b16 %v3546, %v3543
      %v3556 = vpack.c.b16 %v3547, %v3544
      %v3557 = vpack.c.b16 %v3551, %v3548
      %v3558 = vpack.c.b16 %v3552, %v3549
      %v3559 = vpack.c.b16 %v3553, %v3550
      %3600 = vrot.lane.b32.xlu0 %v3346, 1
      %v3601 = vpop.permute.xlu0 %3600
      %3602 = vrot.lane.b32.xlu0 %v3347, 1
      %v3603 = vpop.permute.xlu0 %3602
      %3604 = vrot.lane.b32.xlu0 %v3348, 1
      %v3605 = vpop.permute.xlu0 %3604
      %3606 = vrot.lane.b32.xlu0 %v3349, 1
      %v3607 = vpop.permute.xlu0 %3606
      %3608 = vrot.lane.b32.xlu0 %v3350, 1
      %v3609 = vpop.permute.xlu0 %3608
      %3610 = vrot.lane.b32.xlu0 %v3351, 1
      %v3611 = vpop.permute.xlu0 %3610
      %3612 = vrot.lane.b32.xlu0 %v3352, 1
      %v3613 = vpop.permute.xlu0 %3612
      %3614 = vrot.lane.b32.xlu0 %v3353, 1
      %v3615 = vpop.permute.xlu0 %3614
      %3616 = vrot.lane.b32.xlu0 %v3354, 1
      %v3617 = vpop.permute.xlu0 %3616
      %3618 = vrot.lane.b32.xlu0 %v3355, 1
      %v3619 = vpop.permute.xlu0 %3618
      %3620 = vrot.lane.b32.xlu0 %v3356, 1
      %v3621 = vpop.permute.xlu0 %3620
      %3622 = vrot.lane.b32.xlu0 %v3357, 1
      %v3623 = vpop.permute.xlu0 %3622
      %3624 = vrot.lane.b32.xlu0 %v3358, 1
      %v3625 = vpop.permute.xlu0 %3624
      %3626 = vrot.lane.b32.xlu0 %v3359, 1
      %v3627 = vpop.permute.xlu0 %3626
      %3628 = vrot.lane.b32.xlu0 %v3360, 1
      %v3629 = vpop.permute.xlu0 %3628
      %3630 = vrot.lane.b32.xlu0 %v3361, 1
      %v3631 = vpop.permute.xlu0 %3630
      %3632 = vrot.lane.b32.xlu0 %v3362, 1
      %v3633 = vpop.permute.xlu0 %3632
      %3634 = vrot.lane.b32.xlu0 %v3363, 1
      %v3635 = vpop.permute.xlu0 %3634
      %3636 = vrot.lane.b32.xlu0 %v3364, 1
      %v3637 = vpop.permute.xlu0 %3636
      %3638 = vrot.lane.b32.xlu0 %v3365, 1
      %v3639 = vpop.permute.xlu0 %3638
      %3640 = vrot.lane.b32.xlu0 %v3366, 1
      %v3641 = vpop.permute.xlu0 %3640
      %3642 = vrot.lane.b32.xlu0 %v3367, 1
      %v3643 = vpop.permute.xlu0 %3642
      %3644 = vrot.lane.b32.xlu0 %v3368, 1
      %v3645 = vpop.permute.xlu0 %3644
      %3646 = vrot.lane.b32.xlu0 %v3369, 1
      %v3647 = vpop.permute.xlu0 %3646
      %3648 = vrot.lane.b32.xlu0 %v3370, 1
      %v3649 = vpop.permute.xlu0 %3648
      %3650 = vrot.lane.b32.xlu0 %v3371, 1
      %v3651 = vpop.permute.xlu0 %3650
      %3652 = vrot.lane.b32.xlu0 %v3372, 1
      %v3653 = vpop.permute.xlu0 %3652
      %3654 = vrot.lane.b32.xlu0 %v3373, 1
      %v3655 = vpop.permute.xlu0 %3654
      %3656 = vrot.lane.b32.xlu0 %v3374, 1
      %v3657 = vpop.permute.xlu0 %3656
      %3658 = vrot.lane.b32.xlu0 %v3375, 1
      %v3659 = vpop.permute.xlu0 %3658
      %3660 = vrot.lane.b32.xlu0 %v3376, 1
      %v3661 = vpop.permute.xlu0 %3660
      %3662 = vrot.lane.b32.xlu0 %v3377, 1
      %v3663 = vpop.permute.xlu0 %3662
      %3664 = vrot.lane.b32.xlu0 %v3378, 1
      %v3665 = vpop.permute.xlu0 %3664
      %3666 = vrot.lane.b32.xlu0 %v3379, 1
      %v3667 = vpop.permute.xlu0 %3666
      %3668 = vrot.lane.b32.xlu0 %v3380, 1
      %v3669 = vpop.permute.xlu0 %3668
      %3670 = vrot.lane.b32.xlu0 %v3381, 1
      %v3671 = vpop.permute.xlu0 %3670
      %v3672 = vsel %vm1252, %v3601, %v3603
      %v3673 = vsel %vm1252, %v3605, %v3607
      %v3674 = vsel %vm1252, %v3609, %v3611
      %v3675 = vsel %vm1252, %v3613, %v3615
      %v3676 = vsel %vm1252, %v3617, %v3619
      %v3677 = vsel %vm1252, %v3621, %v3623
      %v3678 = vsel %vm1252, %v3625, %v3627
      %v3679 = vsel %vm1252, %v3629, %v3631
      %v3680 = vsel %vm1252, %v3633, %v3635
      %v3681 = vsel %vm1252, %v3637, %v3639
      %v3682 = vsel %vm1252, %v3641, %v3643
      %v3683 = vsel %vm1252, %v3645, %v3647
      %v3684 = vsel %vm1252, %v3649, %v3651
      %v3685 = vsel %vm1252, %v3653, %v3655
      %v3686 = vsel %vm1252, %v3657, %v3659
      %v3687 = vsel %vm1252, %v3661, %v3663
      %v3688 = vsel %vm1252, %v3665, %v3667
      %v3689 = vsel %vm1252, %v3669, %v3671
      %v3709 = vsel %vm3429, %v3556, 0
      %v3712 = vsel %vm3429, %v3559, 0
      %3714 = vmatprep.subr.bf16.mxu0 0
      %3715 = vmatpush1.bf16.msra.mxu0 %v3672
      %3716 = vmatprep.subr.bf16.mxu0 0
      %3717 = vmatpush1.bf16.msra.mxu0 %v3673
      %3718 = vmatprep.subr.bf16.mxu0 0
      %3719 = vmatpush1.bf16.msra.mxu0 %v3674
      %3720 = vmatprep.subr.bf16.mxu0 0
      %3721 = vmatpush1.bf16.msra.mxu0 %v3675
      %3722 = vmatprep.subr.bf16.mxu0 0
      %3723 = vmatpush1.bf16.msra.mxu0 %v3676
      %3724 = vmatprep.subr.bf16.mxu0 0
      %3725 = vmatpush1.bf16.msra.mxu0 %v3677
      %3726 = vmatprep.subr.bf16.mxu0 0
      %3727 = vmatpush1.bf16.msra.mxu0 %v3678
      %3728 = vmatprep.subr.bf16.mxu0 0
      %3729 = vmatpush1.bf16.msra.mxu0 %v3679
      %3730 = vmatprep.subr.bf16.mxu0 0
      %3731 = vmatpush1.bf16.msra.mxu0 %v3680
      %3732 = vmatprep.subr.bf16.mxu0 0
      %3733 = vmatpush1.bf16.msra.mxu0 %v3681
      %3734 = vmatprep.subr.bf16.mxu0 0
      %3735 = vmatpush1.bf16.msra.mxu0 %v3682
      %3736 = vmatprep.subr.bf16.mxu0 0
      %3737 = vmatpush1.bf16.msra.mxu0 %v3683
      %3738 = vmatprep.subr.bf16.mxu0 0
      %3739 = vmatpush1.bf16.msra.mxu0 %v3684
      %3740 = vmatprep.subr.bf16.mxu0 0
      %3741 = vmatpush1.bf16.msra.mxu0 %v3685
      %3742 = vmatprep.subr.bf16.mxu0 0
      %3743 = vmatpush1.bf16.msra.mxu0 %v3686
      %3744 = vmatprep.subr.bf16.mxu0 0
      %3745 = vmatpush1.bf16.msra.mxu0 %v3687
      %3746 = vmatprep.mubr.bf16.mxu0 %v3555
      %3747 = vmatmul.mubr.bf16.gmra.mrb[0].mxu0 %v3554
      %v3748 = vpop.f32.mrb[0].mxu0
      %v3749 = vadd.f32 %v3520, %v3748
      %v3750 = vpop.f32.mrb[0].mxu0
      %v3751 = vpop.f32.mrb[0].mxu0
      %v3752 = vadd.f32 %v3523, %v3751
      %v3753 = vpop.f32.mrb[0].mxu0
      %3754 = vmatprep.mubr.bf16.mxu0 %v3558
      %3755 = vmatmul.mubr.bf16.gmra.mrb[0].mxu0 %v3557
      %v3756 = vpop.f32.mrb[0].mxu0
      %v3757 = vadd.f32 %v3528, %v3756
      %v3758 = vpop.f32.mrb[0].mxu0
      %v3759 = vpop.f32.mrb[0].mxu0
      %v3760 = vadd.f32 %v3531, %v3759
      %v3761 = vpop.f32.mrb[0].mxu0
      %3762 = vdwg.mxu0
      %3763 = vmatprep.subr.bf16.mxu0 0
      %3764 = vmatpush1.bf16.msra.mxu0 %v3688
      %3765 = vmatprep.subr.bf16.mxu0 0
      %3766 = vmatpush1.bf16.msra.mxu0 %v3689
      %3767 = vmatprep.subr.bf16.mxu0 0
      %3768 = vmatpush1.bf16.msra.mxu0 0
      %3769 = vmatprep.subr.bf16.mxu0 0
      %3770 = vmatpush1.bf16.msra.mxu0 0
      %3771 = vmatprep.subr.bf16.mxu0 0
      %3772 = vmatpush1.bf16.msra.mxu0 0
      %3773 = vmatprep.subr.bf16.mxu0 0
      %3774 = vmatpush1.bf16.msra.mxu0 0
      %3775 = vmatprep.subr.bf16.mxu0 0
      %3776 = vmatpush1.bf16.msra.mxu0 0
      %3777 = vmatprep.subr.bf16.mxu0 0
      %3778 = vmatpush1.bf16.msra.mxu0 0
      %3779 = vmatprep.subr.bf16.mxu0 0
      %3780 = vmatpush1.bf16.msra.mxu0 0
      %3781 = vmatprep.subr.bf16.mxu0 0
      %3782 = vmatpush1.bf16.msra.mxu0 0
      %3783 = vmatprep.subr.bf16.mxu0 0
      %3784 = vmatpush1.bf16.msra.mxu0 0
      %3785 = vmatprep.subr.bf16.mxu0 0
      %3786 = vmatpush1.bf16.msra.mxu0 0
      %3787 = vmatprep.subr.bf16.mxu0 0
      %3788 = vmatpush1.bf16.msra.mxu0 0
      %3789 = vmatprep.subr.bf16.mxu0 0
      %3790 = vmatpush1.bf16.msra.mxu0 0
      %3791 = vmatprep.subr.bf16.mxu0 0
      %3792 = vmatpush1.bf16.msra.mxu0 0
      %3793 = vmatprep.subr.bf16.mxu0 0
      %3794 = vmatpush1.bf16.msra.mxu0 0
      %3795 = vmatprep.mubr.bf16.mxu0 0
      %3796 = vmatmul.mubr.bf16.gmra.mrb[0].mxu0 %v3709
      %v3797 = vpop.f32.mrb[0].mxu0
      %v3798 = vadd.f32 %v3749, %v3797
      %v3799 = vpop.f32.mrb[0].mxu0
      %v3800 = vpop.f32.mrb[0].mxu0
      %v3801 = vadd.f32 %v3752, %v3800
      %v3802 = vpop.f32.mrb[0].mxu0
      %3803 = vmatprep.mubr.bf16.mxu0 0
      %3804 = vmatmul.mubr.bf16.gmra.mrb[0].mxu0 %v3712
      %v3805 = vpop.f32.mrb[0].mxu0
      %v3806 = vadd.f32 %v3757, %v3805
      %v3807 = vpop.f32.mrb[0].mxu0
      %v3808 = vpop.f32.mrb[0].mxu0
      %v3809 = vadd.f32 %v3760, %v3808
      %v3810 = vpop.f32.mrb[0].mxu0
      %3811 = vdwg.mxu0
      %s3812 = scalar_lea.vmem %s3, 96
      %v3813 = vld [vmem:[%s3812] sm:$0xff]
      %v3814 = vld [vmem:[%s3812 + $0x8] sm:$0xf]
      %v3815 = vld [vmem:[%s3812 + $0xc] sm:$0xff]
      %v3816 = vld [vmem:[%s3812 + $0x14] sm:$0xf]
      %v3817 = vld [vmem:[%s3812 + $0x18] sm:$0xff]
      %v3818 = vld [vmem:[%s3812 + $0x20] sm:$0xf]
      %v3819 = vld [vmem:[%s3812 + $0x24] sm:$0xff]
      %v3820 = vld [vmem:[%s3812 + $0x2c] sm:$0xf]
      %v3829 = vunpack.c.l.b16 %v3813
      %v3830 = vunpack.c.h.b16 %v3813
      %v3831 = vunpack.c.l.b16 %v3814
      %v3832 = vunpack.c.l.b16 %v3815
      %v3833 = vunpack.c.h.b16 %v3815
      %v3834 = vunpack.c.l.b16 %v3816
      %v3835 = vunpack.c.l.b16 %v3817
      %v3836 = vunpack.c.h.b16 %v3817
      %v3837 = vunpack.c.l.b16 %v3818
      %v3838 = vunpack.c.l.b16 %v3819
      %v3839 = vunpack.c.h.b16 %v3819
      %v3840 = vunpack.c.l.b16 %v3820
      %v3841 = vpack.c.b16 %v3832, %v3829
      %v3842 = vpack.c.b16 %v3833, %v3830
      %v3843 = vpack.c.b16 %v3834, %v3831
      %v3844 = vpack.c.b16 %v3838, %v3835
      %v3845 = vpack.c.b16 %v3839, %v3836
      %v3846 = vpack.c.b16 %v3840, %v3837
      %3851 = vrot.lane.b32.xlu0 %v3347, 127
      %v3852 = vpop.permute.xlu0 %3851
      %3853 = vrot.lane.b32.xlu0 %v3349, 127
      %v3854 = vpop.permute.xlu0 %3853
      %3855 = vrot.lane.b32.xlu0 %v3351, 127
      %v3856 = vpop.permute.xlu0 %3855
      %3857 = vrot.lane.b32.xlu0 %v3353, 127
      %v3858 = vpop.permute.xlu0 %3857
      %3859 = vrot.lane.b32.xlu0 %v3355, 127
      %v3860 = vpop.permute.xlu0 %3859
      %3861 = vrot.lane.b32.xlu0 %v3357, 127
      %v3862 = vpop.permute.xlu0 %3861
      %3863 = vrot.lane.b32.xlu0 %v3359, 127
      %v3864 = vpop.permute.xlu0 %3863
      %3865 = vrot.lane.b32.xlu0 %v3361, 127
      %v3866 = vpop.permute.xlu0 %3865
      %3867 = vrot.lane.b32.xlu0 %v3363, 127
      %v3868 = vpop.permute.xlu0 %3867
      %3869 = vrot.lane.b32.xlu0 %v3365, 127
      %v3870 = vpop.permute.xlu0 %3869
      %3871 = vrot.lane.b32.xlu0 %v3367, 127
      %v3872 = vpop.permute.xlu0 %3871
      %3873 = vrot.lane.b32.xlu0 %v3369, 127
      %v3874 = vpop.permute.xlu0 %3873
      %3875 = vrot.lane.b32.xlu0 %v3371, 127
      %v3876 = vpop.permute.xlu0 %3875
      %3877 = vrot.lane.b32.xlu0 %v3373, 127
      %v3878 = vpop.permute.xlu0 %3877
      %3879 = vrot.lane.b32.xlu0 %v3375, 127
      %v3880 = vpop.permute.xlu0 %3879
      %3881 = vrot.lane.b32.xlu0 %v3377, 127
      %v3882 = vpop.permute.xlu0 %3881
      %3883 = vrot.lane.b32.xlu0 %v3379, 127
      %v3884 = vpop.permute.xlu0 %3883
      %3885 = vrot.lane.b32.xlu0 %v3381, 127
      %v3886 = vpop.permute.xlu0 %3885
      %v3906 = vsel %vm3429, %v3843, 0
      %v3909 = vsel %vm3429, %v3846, 0
      %3911 = vmatprep.subr.bf16.mxu0 0
      %3912 = vmatpush1.bf16.msra.mxu0 %v3852
      %3913 = vmatprep.subr.bf16.mxu0 0
      %3914 = vmatpush1.bf16.msra.mxu0 %v3854
      %3915 = vmatprep.subr.bf16.mxu0 0
      %3916 = vmatpush1.bf16.msra.mxu0 %v3856
      %3917 = vmatprep.subr.bf16.mxu0 0
      %3918 = vmatpush1.bf16.msra.mxu0 %v3858
      %3919 = vmatprep.subr.bf16.mxu0 0
      %3920 = vmatpush1.bf16.msra.mxu0 %v3860
      %3921 = vmatprep.subr.bf16.mxu0 0
      %3922 = vmatpush1.bf16.msra.mxu0 %v3862
      %3923 = vmatprep.subr.bf16.mxu0 0
      %3924 = vmatpush1.bf16.msra.mxu0 %v3864
      %3925 = vmatprep.subr.bf16.mxu0 0
      %3926 = vmatpush1.bf16.msra.mxu0 %v3866
      %3927 = vmatprep.subr.bf16.mxu0 0
      %3928 = vmatpush1.bf16.msra.mxu0 %v3868
      %3929 = vmatprep.subr.bf16.mxu0 0
      %3930 = vmatpush1.bf16.msra.mxu0 %v3870
      %3931 = vmatprep.subr.bf16.mxu0 0
      %3932 = vmatpush1.bf16.msra.mxu0 %v3872
      %3933 = vmatprep.subr.bf16.mxu0 0
      %3934 = vmatpush1.bf16.msra.mxu0 %v3874
      %3935 = vmatprep.subr.bf16.mxu0 0
      %3936 = vmatpush1.bf16.msra.mxu0 %v3876
      %3937 = vmatprep.subr.bf16.mxu0 0
      %3938 = vmatpush1.bf16.msra.mxu0 %v3878
      %3939 = vmatprep.subr.bf16.mxu0 0
      %3940 = vmatpush1.bf16.msra.mxu0 %v3880
      %3941 = vmatprep.subr.bf16.mxu0 0
      %3942 = vmatpush1.bf16.msra.mxu0 %v3882
      %3943 = vmatprep.mubr.bf16.mxu0 %v3842
      %3944 = vmatmul.mubr.bf16.gmra.mrb[0].mxu0 %v3841
      %v3945 = vpop.f32.mrb[0].mxu0
      %v3946 = vadd.f32 0.0, %v3945
      %v3947 = vpop.f32.mrb[0].mxu0
      %v3948 = vpop.f32.mrb[0].mxu0
      %v3949 = vadd.f32 0.0, %v3948
      %v3950 = vpop.f32.mrb[0].mxu0
      %3951 = vmatprep.mubr.bf16.mxu0 %v3845
      %3952 = vmatmul.mubr.bf16.gmra.mrb[0].mxu0 %v3844
      %v3953 = vpop.f32.mrb[0].mxu0
      %v3954 = vadd.f32 0.0, %v3953
      %v3955 = vpop.f32.mrb[0].mxu0
      %v3956 = vpop.f32.mrb[0].mxu0
      %v3957 = vadd.f32 0.0, %v3956
      %v3958 = vpop.f32.mrb[0].mxu0
      %3959 = vdwg.mxu0
      %3960 = vmatprep.subr.bf16.mxu0 0
      %3961 = vmatpush1.bf16.msra.mxu0 %v3884
      %3962 = vmatprep.subr.bf16.mxu0 0
      %3963 = vmatpush1.bf16.msra.mxu0 %v3886
      %3964 = vmatprep.subr.bf16.mxu0 0
      %3965 = vmatpush1.bf16.msra.mxu0 0
      %3966 = vmatprep.subr.bf16.mxu0 0
      %3967 = vmatpush1.bf16.msra.mxu0 0
      %3968 = vmatprep.subr.bf16.mxu0 0
      %3969 = vmatpush1.bf16.msra.mxu0 0
      %3970 = vmatprep.subr.bf16.mxu0 0
      %3971 = vmatpush1.bf16.msra.mxu0 0
      %3972 = vmatprep.subr.bf16.mxu0 0
      %3973 = vmatpush1.bf16.msra.mxu0 0
      %3974 = vmatprep.subr.bf16.mxu0 0
      %3975 = vmatpush1.bf16.msra.mxu0 0
      %3976 = vmatprep.subr.bf16.mxu0 0
      %3977 = vmatpush1.bf16.msra.mxu0 0
      %3978 = vmatprep.subr.bf16.mxu0 0
      %3979 = vmatpush1.bf16.msra.mxu0 0
      %3980 = vmatprep.subr.bf16.mxu0 0
      %3981 = vmatpush1.bf16.msra.mxu0 0
      %3982 = vmatprep.subr.bf16.mxu0 0
      %3983 = vmatpush1.bf16.msra.mxu0 0
      %3984 = vmatprep.subr.bf16.mxu0 0
      %3985 = vmatpush1.bf16.msra.mxu0 0
      %3986 = vmatprep.subr.bf16.mxu0 0
      %3987 = vmatpush1.bf16.msra.mxu0 0
      %3988 = vmatprep.subr.bf16.mxu0 0
      %3989 = vmatpush1.bf16.msra.mxu0 0
      %3990 = vmatprep.subr.bf16.mxu0 0
      %3991 = vmatpush1.bf16.msra.mxu0 0
      %3992 = vmatprep.mubr.bf16.mxu0 0
      %3993 = vmatmul.mubr.bf16.gmra.mrb[0].mxu0 %v3906
      %v3994 = vpop.f32.mrb[0].mxu0
      %v3995 = vadd.f32 %v3946, %v3994
      %v3996 = vpop.f32.mrb[0].mxu0
      %v3997 = vpop.f32.mrb[0].mxu0
      %v3998 = vadd.f32 %v3949, %v3997
      %v3999 = vpop.f32.mrb[0].mxu0
      %4000 = vmatprep.mubr.bf16.mxu0 0
      %4001 = vmatmul.mubr.bf16.gmra.mrb[0].mxu0 %v3909
      %v4002 = vpop.f32.mrb[0].mxu0
      %v4003 = vadd.f32 %v3954, %v4002
      %v4004 = vpop.f32.mrb[0].mxu0
      %v4005 = vpop.f32.mrb[0].mxu0
      %v4006 = vadd.f32 %v3957, %v4005
      %v4007 = vpop.f32.mrb[0].mxu0
      %4008 = vdwg.mxu0
      %v4009 = vadd.f32 %v3798, %v3995
      %v4010 = vadd.f32 %v3801, %v3998
      %v4011 = vadd.f32 %v3806, %v4003
      %v4012 = vadd.f32 %v3809, %v4006
      %v4013 = vld [vmem:[%s13] sm:$0xff]
      %v4014 = vld [vmem:[%s13 + $0x8] sm:$0xff]
      %v4015 = vld [vmem:[%s13 + $0x10] sm:$0xff]
      %v4016 = vld [vmem:[%s13 + $0x18] sm:$0xff]
      %4018 = vset.pattern.permute.xlu0 0
      %4019 = vperm.xlu0 %4018, %v4013
      %v4020 = vpop.permute.xlu0 %4019
      %4023 = vset.pattern.permute.xlu0 0
      %4024 = vperm.xlu0 %4023, %v4014
      %v4025 = vpop.permute.xlu0 %4024
      %4028 = vset.pattern.permute.xlu0 0
      %4029 = vperm.xlu0 %4028, %v4015
      %v4030 = vpop.permute.xlu0 %4029
      %4033 = vset.pattern.permute.xlu0 0
      %4034 = vperm.xlu0 %4033, %v4016
      %v4035 = vpop.permute.xlu0 %4034
      %v4037 = vadd.f32 %v4009, %v4020
      %v4038 = vadd.f32 %v4010, %v4025
      %v4039 = vadd.f32 %v4011, %v4030
      %v4040 = vadd.f32 %v4012, %v4035
      %v4041 = vmax.f32 %v4037, 0.0
      %v4042 = vmax.f32 %v4038, 0.0
      %v4043 = vmax.f32 %v4039, 0.0
      %v4044 = vmax.f32 %v4040, 0.0
      %v4046 = vlaneseq
      %v4047 = vshrl.u32 %v4046, 7
      %v4048 = vsub.s32 0, %v4047
      %v4049 = vrot.slane %v944, %v4048
      %v4051 = vmul.f32 %v4041, %v4049
      %v4052 = vmul.f32 %v4042, %v4049
      %v4053 = vmul.f32 %v4043, %v4049
      %v4054 = vmul.f32 %v4044, %v4049
      %v4055 = vpack.c.bf16 %v4052, %v4051
      %v4056 = vpack.c.bf16 %v4054, %v4053
      %4059 = vrot.lane.b32.xlu0 %v4055, 10
      %v4060 = vpop.permute.xlu0 %4059
      %4061 = vrot.lane.b32.xlu0 %v4056, 10
      %v4062 = vpop.permute.xlu0 %4061
      %4065 = vst.msk [vmem:[#allocation3 + $0x8] sm:$0xff] %vm3335, %v4060
      %4066 = vst.msk [vmem:[#allocation3 + $0x18] sm:$0xff] %vm3335, %v4062
      %4067 = vst.msk [vmem:[#allocation3 + $0x68] sm:$0xff] %vm3337, %v4055
      %4068 = vst.msk [vmem:[#allocation3 + $0x78] sm:$0xff] %vm3337, %v4056
      %4069 = vrot.lane.b32.xlu0 %v4055, 118
      %v4070 = vpop.permute.xlu0 %4069
      %4071 = vrot.lane.b32.xlu0 %v4056, 118
      %v4072 = vpop.permute.xlu0 %4071
      %4075 = vst.msk [vmem:[#allocation3 + $0xc0] sm:$0xff] %vm3342, %v4070
      %4076 = vst.msk [vmem:[#allocation3 + $0xc8] sm:$0xff] %vm3344, %v4070
      %4077 = vst.msk [vmem:[#allocation3 + $0xd0] sm:$0xff] %vm3342, %v4072
      %4078 = vst.msk [vmem:[#allocation3 + $0xd8] sm:$0xff] %vm3344, %v4072
      %v4079 = vld [vmem:[#allocation3] sm:$0xff]
      %v4080 = vld [vmem:[#allocation3 + $0x8] sm:$0xff]
      %v4081 = vld [vmem:[#allocation3 + $0x10] sm:$0xff]
      %v4082 = vld [vmem:[#allocation3 + $0x18] sm:$0xff]
      %v4083 = vld [vmem:[#allocation3 + $0x20] sm:$0xff]
      %v4084 = vld [vmem:[#allocation3 + $0x28] sm:$0xff]
      %v4085 = vld [vmem:[#allocation3 + $0x30] sm:$0xff]
      %v4086 = vld [vmem:[#allocation3 + $0x38] sm:$0xff]
      %v4087 = vld [vmem:[#allocation3 + $0x40] sm:$0xff]
      %v4088 = vld [vmem:[#allocation3 + $0x48] sm:$0xff]
      %v4089 = vld [vmem:[#allocation3 + $0x50] sm:$0xff]
      %v4090 = vld [vmem:[#allocation3 + $0x58] sm:$0xff]
      %v4091 = vld [vmem:[#allocation3 + $0x60] sm:$0xff]
      %v4092 = vld [vmem:[#allocation3 + $0x68] sm:$0xff]
      %v4093 = vld [vmem:[#allocation3 + $0x70] sm:$0xff]
      %v4094 = vld [vmem:[#allocation3 + $0x78] sm:$0xff]
      %v4095 = vld [vmem:[#allocation3 + $0x80] sm:$0xff]
      %v4096 = vld [vmem:[#allocation3 + $0x88] sm:$0xff]
      %v4097 = vld [vmem:[#allocation3 + $0x90] sm:$0xff]
      %v4098 = vld [vmem:[#allocation3 + $0x98] sm:$0xff]
      %v4099 = vld [vmem:[#allocation3 + $0xa0] sm:$0xff]
      %v4100 = vld [vmem:[#allocation3 + $0xa8] sm:$0xff]
      %v4101 = vld [vmem:[#allocation3 + $0xb0] sm:$0xff]
      %v4102 = vld [vmem:[#allocation3 + $0xb8] sm:$0xff]
      %v4103 = vld [vmem:[#allocation3 + $0xc0] sm:$0xff]
      %v4104 = vld [vmem:[#allocation3 + $0xc8] sm:$0xff]
      %v4105 = vld [vmem:[#allocation3 + $0xd0] sm:$0xff]
      %v4106 = vld [vmem:[#allocation3 + $0xd8] sm:$0xff]
      %v4107 = vld [vmem:[#allocation3 + $0xe0] sm:$0xff]
      %v4108 = vld [vmem:[#allocation3 + $0xe8] sm:$0xff]
      %v4109 = vld [vmem:[#allocation3 + $0xf0] sm:$0xff]
      %v4110 = vld [vmem:[#allocation3 + $0xf8] sm:$0xff]
      %v4111 = vld [vmem:[#allocation3 + $0x100] sm:$0xff]
      %v4112 = vld [vmem:[#allocation3 + $0x108] sm:$0xff]
      %v4113 = vld [vmem:[#allocation3 + $0x110] sm:$0xff]
      %v4114 = vld [vmem:[#allocation3 + $0x118] sm:$0xff]
      %v4115 = vld [vmem:[%s4] sm:$0xff]
      %v4116 = vld [vmem:[%s4 + $0x8] sm:$0xf]
      %v4117 = vld [vmem:[%s4 + $0xc] sm:$0xff]
      %v4118 = vld [vmem:[%s4 + $0x14] sm:$0xf]
      %v4119 = vld [vmem:[%s4 + $0x18] sm:$0xff]
      %v4120 = vld [vmem:[%s4 + $0x20] sm:$0xf]
      %v4121 = vld [vmem:[%s4 + $0x24] sm:$0xff]
      %v4122 = vld [vmem:[%s4 + $0x2c] sm:$0xf]
      %s4123 = scalar_lea.vmem %s4, 48
      %v4124 = vld [vmem:[%s4123] sm:$0xff]
      %v4125 = vld [vmem:[%s4123 + $0x8] sm:$0xf]
      %v4126 = vld [vmem:[%s4123 + $0xc] sm:$0xff]
      %v4127 = vld [vmem:[%s4123 + $0x14] sm:$0xf]
      %v4128 = vld [vmem:[%s4123 + $0x18] sm:$0xff]
      %v4129 = vld [vmem:[%s4123 + $0x20] sm:$0xf]
      %v4130 = vld [vmem:[%s4123 + $0x24] sm:$0xff]
      %v4131 = vld [vmem:[%s4123 + $0x2c] sm:$0xf]
      %v4140 = vunpack.c.l.b16 %v4124
      %v4141 = vunpack.c.h.b16 %v4124
      %v4142 = vunpack.c.l.b16 %v4125
      %v4143 = vunpack.c.l.b16 %v4126
      %v4144 = vunpack.c.h.b16 %v4126
      %v4145 = vunpack.c.l.b16 %v4127
      %v4146 = vunpack.c.l.b16 %v4128
      %v4147 = vunpack.c.h.b16 %v4128
      %v4148 = vunpack.c.l.b16 %v4129
      %v4149 = vunpack.c.l.b16 %v4130
      %v4150 = vunpack.c.h.b16 %v4130
      %v4151 = vunpack.c.l.b16 %v4131
      %v4152 = vpack.c.b16 %v4143, %v4140
      %v4153 = vpack.c.b16 %v4144, %v4141
      %v4154 = vpack.c.b16 %v4145, %v4142
      %v4155 = vpack.c.b16 %v4149, %v4146
      %v4156 = vpack.c.b16 %v4150, %v4147
      %v4157 = vpack.c.b16 %v4151, %v4148
      %v4163 = vsel %vm3429, %v4154, 0
      %v4166 = vsel %vm3429, %v4157, 0
      %4168 = vmatprep.subr.bf16.mxu0 0
      %4169 = vmatpush1.bf16.msra.mxu0 %v4080
      %4170 = vmatprep.subr.bf16.mxu0 0
      %4171 = vmatpush1.bf16.msra.mxu0 %v4082
      %4172 = vmatprep.subr.bf16.mxu0 0
      %4173 = vmatpush1.bf16.msra.mxu0 %v4084
      %4174 = vmatprep.subr.bf16.mxu0 0
      %4175 = vmatpush1.bf16.msra.mxu0 %v4086
      %4176 = vmatprep.subr.bf16.mxu0 0
      %4177 = vmatpush1.bf16.msra.mxu0 %v4088
      %4178 = vmatprep.subr.bf16.mxu0 0
      %4179 = vmatpush1.bf16.msra.mxu0 %v4090
      %4180 = vmatprep.subr.bf16.mxu0 0
      %4181 = vmatpush1.bf16.msra.mxu0 %v4092
      %4182 = vmatprep.subr.bf16.mxu0 0
      %4183 = vmatpush1.bf16.msra.mxu0 %v4094
      %4184 = vmatprep.subr.bf16.mxu0 0
      %4185 = vmatpush1.bf16.msra.mxu0 %v4096
      %4186 = vmatprep.subr.bf16.mxu0 0
      %4187 = vmatpush1.bf16.msra.mxu0 %v4098
      %4188 = vmatprep.subr.bf16.mxu0 0
      %4189 = vmatpush1.bf16.msra.mxu0 %v4100
      %4190 = vmatprep.subr.bf16.mxu0 0
      %4191 = vmatpush1.bf16.msra.mxu0 %v4102
      %4192 = vmatprep.subr.bf16.mxu0 0
      %4193 = vmatpush1.bf16.msra.mxu0 %v4104
      %4194 = vmatprep.subr.bf16.mxu0 0
      %4195 = vmatpush1.bf16.msra.mxu0 %v4106
      %4196 = vmatprep.subr.bf16.mxu0 0
      %4197 = vmatpush1.bf16.msra.mxu0 %v4108
      %4198 = vmatprep.subr.bf16.mxu0 0
      %4199 = vmatpush1.bf16.msra.mxu0 %v4110
      %4200 = vmatprep.mubr.bf16.mxu0 %v4153
      %4201 = vmatmul.mubr.bf16.gmra.mrb[0].mxu0 %v4152
      %v4202 = vpop.f32.mrb[0].mxu0
      %v4203 = vadd.f32 0.0, %v4202
      %v4204 = vpop.f32.mrb[0].mxu0
      %v4205 = vpop.f32.mrb[0].mxu0
      %v4206 = vadd.f32 0.0, %v4205
      %v4207 = vpop.f32.mrb[0].mxu0
      %4208 = vmatprep.mubr.bf16.mxu0 %v4156
      %4209 = vmatmul.mubr.bf16.gmra.mrb[0].mxu0 %v4155
      %v4210 = vpop.f32.mrb[0].mxu0
      %v4211 = vadd.f32 0.0, %v4210
      %v4212 = vpop.f32.mrb[0].mxu0
      %v4213 = vpop.f32.mrb[0].mxu0
      %v4214 = vadd.f32 0.0, %v4213
      %v4215 = vpop.f32.mrb[0].mxu0
      %4216 = vdwg.mxu0
      %4217 = vmatprep.subr.bf16.mxu0 0
      %4218 = vmatpush1.bf16.msra.mxu0 %v4112
      %4219 = vmatprep.subr.bf16.mxu0 0
      %4220 = vmatpush1.bf16.msra.mxu0 %v4114
      %4221 = vmatprep.subr.bf16.mxu0 0
      %4222 = vmatpush1.bf16.msra.mxu0 0
      %4223 = vmatprep.subr.bf16.mxu0 0
      %4224 = vmatpush1.bf16.msra.mxu0 0
      %4225 = vmatprep.subr.bf16.mxu0 0
      %4226 = vmatpush1.bf16.msra.mxu0 0
      %4227 = vmatprep.subr.bf16.mxu0 0
      %4228 = vmatpush1.bf16.msra.mxu0 0
      %4229 = vmatprep.subr.bf16.mxu0 0
      %4230 = vmatpush1.bf16.msra.mxu0 0
      %4231 = vmatprep.subr.bf16.mxu0 0
      %4232 = vmatpush1.bf16.msra.mxu0 0
      %4233 = vmatprep.subr.bf16.mxu0 0
      %4234 = vmatpush1.bf16.msra.mxu0 0
      %4235 = vmatprep.subr.bf16.mxu0 0
      %4236 = vmatpush1.bf16.msra.mxu0 0
      %4237 = vmatprep.subr.bf16.mxu0 0
      %4238 = vmatpush1.bf16.msra.mxu0 0
      %4239 = vmatprep.subr.bf16.mxu0 0
      %4240 = vmatpush1.bf16.msra.mxu0 0
      %4241 = vmatprep.subr.bf16.mxu0 0
      %4242 = vmatpush1.bf16.msra.mxu0 0
      %4243 = vmatprep.subr.bf16.mxu0 0
      %4244 = vmatpush1.bf16.msra.mxu0 0
      %4245 = vmatprep.subr.bf16.mxu0 0
      %4246 = vmatpush1.bf16.msra.mxu0 0
      %4247 = vmatprep.subr.bf16.mxu0 0
      %4248 = vmatpush1.bf16.msra.mxu0 0
      %4249 = vmatprep.mubr.bf16.mxu0 0
      %4250 = vmatmul.mubr.bf16.gmra.mrb[0].mxu0 %v4163
      %v4251 = vpop.f32.mrb[0].mxu0
      %v4252 = vadd.f32 %v4203, %v4251
      %v4253 = vpop.f32.mrb[0].mxu0
      %v4254 = vpop.f32.mrb[0].mxu0
      %v4255 = vadd.f32 %v4206, %v4254
      %v4256 = vpop.f32.mrb[0].mxu0
      %4257 = vmatprep.mubr.bf16.mxu0 0
      %4258 = vmatmul.mubr.bf16.gmra.mrb[0].mxu0 %v4166
      %v4259 = vpop.f32.mrb[0].mxu0
      %v4260 = vadd.f32 %v4211, %v4259
      %v4261 = vpop.f32.mrb[0].mxu0
      %v4262 = vpop.f32.mrb[0].mxu0
      %v4263 = vadd.f32 %v4214, %v4262
      %v4264 = vpop.f32.mrb[0].mxu0
      %4265 = vdwg.mxu0
      %v4274 = vunpack.c.l.b16 %v4115
      %v4275 = vunpack.c.h.b16 %v4115
      %v4276 = vunpack.c.l.b16 %v4116
      %v4277 = vunpack.c.l.b16 %v4117
      %v4278 = vunpack.c.h.b16 %v4117
      %v4279 = vunpack.c.l.b16 %v4118
      %v4280 = vunpack.c.l.b16 %v4119
      %v4281 = vunpack.c.h.b16 %v4119
      %v4282 = vunpack.c.l.b16 %v4120
      %v4283 = vunpack.c.l.b16 %v4121
      %v4284 = vunpack.c.h.b16 %v4121
      %v4285 = vunpack.c.l.b16 %v4122
      %v4286 = vpack.c.b16 %v4277, %v4274
      %v4287 = vpack.c.b16 %v4278, %v4275
      %v4288 = vpack.c.b16 %v4279, %v4276
      %v4289 = vpack.c.b16 %v4283, %v4280
      %v4290 = vpack.c.b16 %v4284, %v4281
      %v4291 = vpack.c.b16 %v4285, %v4282
      %4332 = vrot.lane.b32.xlu0 %v4079, 1
      %v4333 = vpop.permute.xlu0 %4332
      %4334 = vrot.lane.b32.xlu0 %v4080, 1
      %v4335 = vpop.permute.xlu0 %4334
      %4336 = vrot.lane.b32.xlu0 %v4081, 1
      %v4337 = vpop.permute.xlu0 %4336
      %4338 = vrot.lane.b32.xlu0 %v4082, 1
      %v4339 = vpop.permute.xlu0 %4338
      %4340 = vrot.lane.b32.xlu0 %v4083, 1
      %v4341 = vpop.permute.xlu0 %4340
      %4342 = vrot.lane.b32.xlu0 %v4084, 1
      %v4343 = vpop.permute.xlu0 %4342
      %4344 = vrot.lane.b32.xlu0 %v4085, 1
      %v4345 = vpop.permute.xlu0 %4344
      %4346 = vrot.lane.b32.xlu0 %v4086, 1
      %v4347 = vpop.permute.xlu0 %4346
      %4348 = vrot.lane.b32.xlu0 %v4087, 1
      %v4349 = vpop.permute.xlu0 %4348
      %4350 = vrot.lane.b32.xlu0 %v4088, 1
      %v4351 = vpop.permute.xlu0 %4350
      %4352 = vrot.lane.b32.xlu0 %v4089, 1
      %v4353 = vpop.permute.xlu0 %4352
      %4354 = vrot.lane.b32.xlu0 %v4090, 1
      %v4355 = vpop.permute.xlu0 %4354
      %4356 = vrot.lane.b32.xlu0 %v4091, 1
      %v4357 = vpop.permute.xlu0 %4356
      %4358 = vrot.lane.b32.xlu0 %v4092, 1
      %v4359 = vpop.permute.xlu0 %4358
      %4360 = vrot.lane.b32.xlu0 %v4093, 1
      %v4361 = vpop.permute.xlu0 %4360
      %4362 = vrot.lane.b32.xlu0 %v4094, 1
      %v4363 = vpop.permute.xlu0 %4362
      %4364 = vrot.lane.b32.xlu0 %v4095, 1
      %v4365 = vpop.permute.xlu0 %4364
      %4366 = vrot.lane.b32.xlu0 %v4096, 1
      %v4367 = vpop.permute.xlu0 %4366
      %4368 = vrot.lane.b32.xlu0 %v4097, 1
      %v4369 = vpop.permute.xlu0 %4368
      %4370 = vrot.lane.b32.xlu0 %v4098, 1
      %v4371 = vpop.permute.xlu0 %4370
      %4372 = vrot.lane.b32.xlu0 %v4099, 1
      %v4373 = vpop.permute.xlu0 %4372
      %4374 = vrot.lane.b32.xlu0 %v4100, 1
      %v4375 = vpop.permute.xlu0 %4374
      %4376 = vrot.lane.b32.xlu0 %v4101, 1
      %v4377 = vpop.permute.xlu0 %4376
      %4378 = vrot.lane.b32.xlu0 %v4102, 1
      %v4379 = vpop.permute.xlu0 %4378
      %4380 = vrot.lane.b32.xlu0 %v4103, 1
      %v4381 = vpop.permute.xlu0 %4380
      %4382 = vrot.lane.b32.xlu0 %v4104, 1
      %v4383 = vpop.permute.xlu0 %4382
      %4384 = vrot.lane.b32.xlu0 %v4105, 1
      %v4385 = vpop.permute.xlu0 %4384
      %4386 = vrot.lane.b32.xlu0 %v4106, 1
      %v4387 = vpop.permute.xlu0 %4386
      %4388 = vrot.lane.b32.xlu0 %v4107, 1
      %v4389 = vpop.permute.xlu0 %4388
      %4390 = vrot.lane.b32.xlu0 %v4108, 1
      %v4391 = vpop.permute.xlu0 %4390
      %4392 = vrot.lane.b32.xlu0 %v4109, 1
      %v4393 = vpop.permute.xlu0 %4392
      %4394 = vrot.lane.b32.xlu0 %v4110, 1
      %v4395 = vpop.permute.xlu0 %4394
      %4396 = vrot.lane.b32.xlu0 %v4111, 1
      %v4397 = vpop.permute.xlu0 %4396
      %4398 = vrot.lane.b32.xlu0 %v4112, 1
      %v4399 = vpop.permute.xlu0 %4398
      %4400 = vrot.lane.b32.xlu0 %v4113, 1
      %v4401 = vpop.permute.xlu0 %4400
      %4402 = vrot.lane.b32.xlu0 %v4114, 1
      %v4403 = vpop.permute.xlu0 %4402
      %v4404 = vsel %vm1252, %v4333, %v4335
      %v4405 = vsel %vm1252, %v4337, %v4339
      %v4406 = vsel %vm1252, %v4341, %v4343
      %v4407 = vsel %vm1252, %v4345, %v4347
      %v4408 = vsel %vm1252, %v4349, %v4351
      %v4409 = vsel %vm1252, %v4353, %v4355
      %v4410 = vsel %vm1252, %v4357, %v4359
      %v4411 = vsel %vm1252, %v4361, %v4363
      %v4412 = vsel %vm1252, %v4365, %v4367
      %v4413 = vsel %vm1252, %v4369, %v4371
      %v4414 = vsel %vm1252, %v4373, %v4375
      %v4415 = vsel %vm1252, %v4377, %v4379
      %v4416 = vsel %vm1252, %v4381, %v4383
      %v4417 = vsel %vm1252, %v4385, %v4387
      %v4418 = vsel %vm1252, %v4389, %v4391
      %v4419 = vsel %vm1252, %v4393, %v4395
      %v4420 = vsel %vm1252, %v4397, %v4399
      %v4421 = vsel %vm1252, %v4401, %v4403
      %v4441 = vsel %vm3429, %v4288, 0
      %v4444 = vsel %vm3429, %v4291, 0
      %4446 = vmatprep.subr.bf16.mxu0 0
      %4447 = vmatpush1.bf16.msra.mxu0 %v4404
      %4448 = vmatprep.subr.bf16.mxu0 0
      %4449 = vmatpush1.bf16.msra.mxu0 %v4405
      %4450 = vmatprep.subr.bf16.mxu0 0
      %4451 = vmatpush1.bf16.msra.mxu0 %v4406
      %4452 = vmatprep.subr.bf16.mxu0 0
      %4453 = vmatpush1.bf16.msra.mxu0 %v4407
      %4454 = vmatprep.subr.bf16.mxu0 0
      %4455 = vmatpush1.bf16.msra.mxu0 %v4408
      %4456 = vmatprep.subr.bf16.mxu0 0
      %4457 = vmatpush1.bf16.msra.mxu0 %v4409
      %4458 = vmatprep.subr.bf16.mxu0 0
      %4459 = vmatpush1.bf16.msra.mxu0 %v4410
      %4460 = vmatprep.subr.bf16.mxu0 0
      %4461 = vmatpush1.bf16.msra.mxu0 %v4411
      %4462 = vmatprep.subr.bf16.mxu0 0
      %4463 = vmatpush1.bf16.msra.mxu0 %v4412
      %4464 = vmatprep.subr.bf16.mxu0 0
      %4465 = vmatpush1.bf16.msra.mxu0 %v4413
      %4466 = vmatprep.subr.bf16.mxu0 0
      %4467 = vmatpush1.bf16.msra.mxu0 %v4414
      %4468 = vmatprep.subr.bf16.mxu0 0
      %4469 = vmatpush1.bf16.msra.mxu0 %v4415
      %4470 = vmatprep.subr.bf16.mxu0 0
      %4471 = vmatpush1.bf16.msra.mxu0 %v4416
      %4472 = vmatprep.subr.bf16.mxu0 0
      %4473 = vmatpush1.bf16.msra.mxu0 %v4417
      %4474 = vmatprep.subr.bf16.mxu0 0
      %4475 = vmatpush1.bf16.msra.mxu0 %v4418
      %4476 = vmatprep.subr.bf16.mxu0 0
      %4477 = vmatpush1.bf16.msra.mxu0 %v4419
      %4478 = vmatprep.mubr.bf16.mxu0 %v4287
      %4479 = vmatmul.mubr.bf16.gmra.mrb[0].mxu0 %v4286
      %v4480 = vpop.f32.mrb[0].mxu0
      %v4481 = vadd.f32 %v4252, %v4480
      %v4482 = vpop.f32.mrb[0].mxu0
      %v4483 = vpop.f32.mrb[0].mxu0
      %v4484 = vadd.f32 %v4255, %v4483
      %v4485 = vpop.f32.mrb[0].mxu0
      %4486 = vmatprep.mubr.bf16.mxu0 %v4290
      %4487 = vmatmul.mubr.bf16.gmra.mrb[0].mxu0 %v4289
      %v4488 = vpop.f32.mrb[0].mxu0
      %v4489 = vadd.f32 %v4260, %v4488
      %v4490 = vpop.f32.mrb[0].mxu0
      %v4491 = vpop.f32.mrb[0].mxu0
      %v4492 = vadd.f32 %v4263, %v4491
      %v4493 = vpop.f32.mrb[0].mxu0
      %4494 = vdwg.mxu0
      %4495 = vmatprep.subr.bf16.mxu0 0
      %4496 = vmatpush1.bf16.msra.mxu0 %v4420
      %4497 = vmatprep.subr.bf16.mxu0 0
      %4498 = vmatpush1.bf16.msra.mxu0 %v4421
      %4499 = vmatprep.subr.bf16.mxu0 0
      %4500 = vmatpush1.bf16.msra.mxu0 0
      %4501 = vmatprep.subr.bf16.mxu0 0
      %4502 = vmatpush1.bf16.msra.mxu0 0
      %4503 = vmatprep.subr.bf16.mxu0 0
      %4504 = vmatpush1.bf16.msra.mxu0 0
      %4505 = vmatprep.subr.bf16.mxu0 0
      %4506 = vmatpush1.bf16.msra.mxu0 0
      %4507 = vmatprep.subr.bf16.mxu0 0
      %4508 = vmatpush1.bf16.msra.mxu0 0
      %4509 = vmatprep.subr.bf16.mxu0 0
      %4510 = vmatpush1.bf16.msra.mxu0 0
      %4511 = vmatprep.subr.bf16.mxu0 0
      %4512 = vmatpush1.bf16.msra.mxu0 0
      %4513 = vmatprep.subr.bf16.mxu0 0
      %4514 = vmatpush1.bf16.msra.mxu0 0
      %4515 = vmatprep.subr.bf16.mxu0 0
      %4516 = vmatpush1.bf16.msra.mxu0 0
      %4517 = vmatprep.subr.bf16.mxu0 0
      %4518 = vmatpush1.bf16.msra.mxu0 0
      %4519 = vmatprep.subr.bf16.mxu0 0
      %4520 = vmatpush1.bf16.msra.mxu0 0
      %4521 = vmatprep.subr.bf16.mxu0 0
      %4522 = vmatpush1.bf16.msra.mxu0 0
      %4523 = vmatprep.subr.bf16.mxu0 0
      %4524 = vmatpush1.bf16.msra.mxu0 0
      %4525 = vmatprep.subr.bf16.mxu0 0
      %4526 = vmatpush1.bf16.msra.mxu0 0
      %4527 = vmatprep.mubr.bf16.mxu0 0
      %4528 = vmatmul.mubr.bf16.gmra.mrb[0].mxu0 %v4441
      %v4529 = vpop.f32.mrb[0].mxu0
      %v4530 = vadd.f32 %v4481, %v4529
      %v4531 = vpop.f32.mrb[0].mxu0
      %v4532 = vpop.f32.mrb[0].mxu0
      %v4533 = vadd.f32 %v4484, %v4532
      %v4534 = vpop.f32.mrb[0].mxu0
      %4535 = vmatprep.mubr.bf16.mxu0 0
      %4536 = vmatmul.mubr.bf16.gmra.mrb[0].mxu0 %v4444
      %v4537 = vpop.f32.mrb[0].mxu0
      %v4538 = vadd.f32 %v4489, %v4537
      %v4539 = vpop.f32.mrb[0].mxu0
      %v4540 = vpop.f32.mrb[0].mxu0
      %v4541 = vadd.f32 %v4492, %v4540
      %v4542 = vpop.f32.mrb[0].mxu0
      %4543 = vdwg.mxu0
      %s4544 = scalar_lea.vmem %s4, 96
      %v4545 = vld [vmem:[%s4544] sm:$0xff]
      %v4546 = vld [vmem:[%s4544 + $0x8] sm:$0xf]
      %v4547 = vld [vmem:[%s4544 + $0xc] sm:$0xff]
      %v4548 = vld [vmem:[%s4544 + $0x14] sm:$0xf]
      %v4549 = vld [vmem:[%s4544 + $0x18] sm:$0xff]
      %v4550 = vld [vmem:[%s4544 + $0x20] sm:$0xf]
      %v4551 = vld [vmem:[%s4544 + $0x24] sm:$0xff]
      %v4552 = vld [vmem:[%s4544 + $0x2c] sm:$0xf]
      %v4561 = vunpack.c.l.b16 %v4545
      %v4562 = vunpack.c.h.b16 %v4545
      %v4563 = vunpack.c.l.b16 %v4546
      %v4564 = vunpack.c.l.b16 %v4547
      %v4565 = vunpack.c.h.b16 %v4547
      %v4566 = vunpack.c.l.b16 %v4548
      %v4567 = vunpack.c.l.b16 %v4549
      %v4568 = vunpack.c.h.b16 %v4549
      %v4569 = vunpack.c.l.b16 %v4550
      %v4570 = vunpack.c.l.b16 %v4551
      %v4571 = vunpack.c.h.b16 %v4551
      %v4572 = vunpack.c.l.b16 %v4552
      %v4573 = vpack.c.b16 %v4564, %v4561
      %v4574 = vpack.c.b16 %v4565, %v4562
      %v4575 = vpack.c.b16 %v4566, %v4563
      %v4576 = vpack.c.b16 %v4570, %v4567
      %v4577 = vpack.c.b16 %v4571, %v4568
      %v4578 = vpack.c.b16 %v4572, %v4569
      %4583 = vrot.lane.b32.xlu0 %v4080, 127
      %v4584 = vpop.permute.xlu0 %4583
      %4585 = vrot.lane.b32.xlu0 %v4082, 127
      %v4586 = vpop.permute.xlu0 %4585
      %4587 = vrot.lane.b32.xlu0 %v4084, 127
      %v4588 = vpop.permute.xlu0 %4587
      %4589 = vrot.lane.b32.xlu0 %v4086, 127
      %v4590 = vpop.permute.xlu0 %4589
      %4591 = vrot.lane.b32.xlu0 %v4088, 127
      %v4592 = vpop.permute.xlu0 %4591
      %4593 = vrot.lane.b32.xlu0 %v4090, 127
      %v4594 = vpop.permute.xlu0 %4593
      %4595 = vrot.lane.b32.xlu0 %v4092, 127
      %v4596 = vpop.permute.xlu0 %4595
      %4597 = vrot.lane.b32.xlu0 %v4094, 127
      %v4598 = vpop.permute.xlu0 %4597
      %4599 = vrot.lane.b32.xlu0 %v4096, 127
      %v4600 = vpop.permute.xlu0 %4599
      %4601 = vrot.lane.b32.xlu0 %v4098, 127
      %v4602 = vpop.permute.xlu0 %4601
      %4603 = vrot.lane.b32.xlu0 %v4100, 127
      %v4604 = vpop.permute.xlu0 %4603
      %4605 = vrot.lane.b32.xlu0 %v4102, 127
      %v4606 = vpop.permute.xlu0 %4605
      %4607 = vrot.lane.b32.xlu0 %v4104, 127
      %v4608 = vpop.permute.xlu0 %4607
      %4609 = vrot.lane.b32.xlu0 %v4106, 127
      %v4610 = vpop.permute.xlu0 %4609
      %4611 = vrot.lane.b32.xlu0 %v4108, 127
      %v4612 = vpop.permute.xlu0 %4611
      %4613 = vrot.lane.b32.xlu0 %v4110, 127
      %v4614 = vpop.permute.xlu0 %4613
      %4615 = vrot.lane.b32.xlu0 %v4112, 127
      %v4616 = vpop.permute.xlu0 %4615
      %4617 = vrot.lane.b32.xlu0 %v4114, 127
      %v4618 = vpop.permute.xlu0 %4617
      %v4638 = vsel %vm3429, %v4575, 0
      %v4641 = vsel %vm3429, %v4578, 0
      %4643 = vmatprep.subr.bf16.mxu0 0
      %4644 = vmatpush1.bf16.msra.mxu0 %v4584
      %4645 = vmatprep.subr.bf16.mxu0 0
      %4646 = vmatpush1.bf16.msra.mxu0 %v4586
      %4647 = vmatprep.subr.bf16.mxu0 0
      %4648 = vmatpush1.bf16.msra.mxu0 %v4588
      %4649 = vmatprep.subr.bf16.mxu0 0
      %4650 = vmatpush1.bf16.msra.mxu0 %v4590
      %4651 = vmatprep.subr.bf16.mxu0 0
      %4652 = vmatpush1.bf16.msra.mxu0 %v4592
      %4653 = vmatprep.subr.bf16.mxu0 0
      %4654 = vmatpush1.bf16.msra.mxu0 %v4594
      %4655 = vmatprep.subr.bf16.mxu0 0
      %4656 = vmatpush1.bf16.msra.mxu0 %v4596
      %4657 = vmatprep.subr.bf16.mxu0 0
      %4658 = vmatpush1.bf16.msra.mxu0 %v4598
      %4659 = vmatprep.subr.bf16.mxu0 0
      %4660 = vmatpush1.bf16.msra.mxu0 %v4600
      %4661 = vmatprep.subr.bf16.mxu0 0
      %4662 = vmatpush1.bf16.msra.mxu0 %v4602
      %4663 = vmatprep.subr.bf16.mxu0 0
      %4664 = vmatpush1.bf16.msra.mxu0 %v4604
      %4665 = vmatprep.subr.bf16.mxu0 0
      %4666 = vmatpush1.bf16.msra.mxu0 %v4606
      %4667 = vmatprep.subr.bf16.mxu0 0
      %4668 = vmatpush1.bf16.msra.mxu0 %v4608
      %4669 = vmatprep.subr.bf16.mxu0 0
      %4670 = vmatpush1.bf16.msra.mxu0 %v4610
      %4671 = vmatprep.subr.bf16.mxu0 0
      %4672 = vmatpush1.bf16.msra.mxu0 %v4612
      %4673 = vmatprep.subr.bf16.mxu0 0
      %4674 = vmatpush1.bf16.msra.mxu0 %v4614
      %4675 = vmatprep.mubr.bf16.mxu0 %v4574
      %4676 = vmatmul.mubr.bf16.gmra.mrb[0].mxu0 %v4573
      %v4677 = vpop.f32.mrb[0].mxu0
      %v4678 = vadd.f32 0.0, %v4677
      %v4679 = vpop.f32.mrb[0].mxu0
      %v4680 = vpop.f32.mrb[0].mxu0
      %v4681 = vadd.f32 0.0, %v4680
      %v4682 = vpop.f32.mrb[0].mxu0
      %4683 = vmatprep.mubr.bf16.mxu0 %v4577
      %4684 = vmatmul.mubr.bf16.gmra.mrb[0].mxu0 %v4576
      %v4685 = vpop.f32.mrb[0].mxu0
      %v4686 = vadd.f32 0.0, %v4685
      %v4687 = vpop.f32.mrb[0].mxu0
      %v4688 = vpop.f32.mrb[0].mxu0
      %v4689 = vadd.f32 0.0, %v4688
      %v4690 = vpop.f32.mrb[0].mxu0
      %4691 = vdwg.mxu0
      %4692 = vmatprep.subr.bf16.mxu0 0
      %4693 = vmatpush1.bf16.msra.mxu0 %v4616
      %4694 = vmatprep.subr.bf16.mxu0 0
      %4695 = vmatpush1.bf16.msra.mxu0 %v4618
      %4696 = vmatprep.subr.bf16.mxu0 0
      %4697 = vmatpush1.bf16.msra.mxu0 0
      %4698 = vmatprep.subr.bf16.mxu0 0
      %4699 = vmatpush1.bf16.msra.mxu0 0
      %4700 = vmatprep.subr.bf16.mxu0 0
      %4701 = vmatpush1.bf16.msra.mxu0 0
      %4702 = vmatprep.subr.bf16.mxu0 0
      %4703 = vmatpush1.bf16.msra.mxu0 0
      %4704 = vmatprep.subr.bf16.mxu0 0
      %4705 = vmatpush1.bf16.msra.mxu0 0
      %4706 = vmatprep.subr.bf16.mxu0 0
      %4707 = vmatpush1.bf16.msra.mxu0 0
      %4708 = vmatprep.subr.bf16.mxu0 0
      %4709 = vmatpush1.bf16.msra.mxu0 0
      %4710 = vmatprep.subr.bf16.mxu0 0
      %4711 = vmatpush1.bf16.msra.mxu0 0
      %4712 = vmatprep.subr.bf16.mxu0 0
      %4713 = vmatpush1.bf16.msra.mxu0 0
      %4714 = vmatprep.subr.bf16.mxu0 0
      %4715 = vmatpush1.bf16.msra.mxu0 0
      %4716 = vmatprep.subr.bf16.mxu0 0
      %4717 = vmatpush1.bf16.msra.mxu0 0
      %4718 = vmatprep.subr.bf16.mxu0 0
      %4719 = vmatpush1.bf16.msra.mxu0 0
      %4720 = vmatprep.subr.bf16.mxu0 0
      %4721 = vmatpush1.bf16.msra.mxu0 0
      %4722 = vmatprep.subr.bf16.mxu0 0
      %4723 = vmatpush1.bf16.msra.mxu0 0
      %4724 = vmatprep.mubr.bf16.mxu0 0
      %4725 = vmatmul.mubr.bf16.gmra.mrb[0].mxu0 %v4638
      %v4726 = vpop.f32.mrb[0].mxu0
      %v4727 = vadd.f32 %v4678, %v4726
      %v4728 = vpop.f32.mrb[0].mxu0
      %v4729 = vpop.f32.mrb[0].mxu0
      %v4730 = vadd.f32 %v4681, %v4729
      %v4731 = vpop.f32.mrb[0].mxu0
      %4732 = vmatprep.mubr.bf16.mxu0 0
      %4733 = vmatmul.mubr.bf16.gmra.mrb[0].mxu0 %v4641
      %v4734 = vpop.f32.mrb[0].mxu0
      %v4735 = vadd.f32 %v4686, %v4734
      %v4736 = vpop.f32.mrb[0].mxu0
      %v4737 = vpop.f32.mrb[0].mxu0
      %v4738 = vadd.f32 %v4689, %v4737
      %v4739 = vpop.f32.mrb[0].mxu0
      %4740 = vdwg.mxu0
      %v4741 = vadd.f32 %v4530, %v4727
      %v4742 = vadd.f32 %v4533, %v4730
      %v4743 = vadd.f32 %v4538, %v4735
      %v4744 = vadd.f32 %v4541, %v4738
      %v4745 = vld [vmem:[%s14] sm:$0xff]
      %v4746 = vld [vmem:[%s14 + $0x8] sm:$0xff]
      %v4747 = vld [vmem:[%s14 + $0x10] sm:$0xff]
      %v4748 = vld [vmem:[%s14 + $0x18] sm:$0xff]
      %4750 = vset.pattern.permute.xlu0 0
      %4751 = vperm.xlu0 %4750, %v4745
      %v4752 = vpop.permute.xlu0 %4751
      %4755 = vset.pattern.permute.xlu0 0
      %4756 = vperm.xlu0 %4755, %v4746
      %v4757 = vpop.permute.xlu0 %4756
      %4760 = vset.pattern.permute.xlu0 0
      %4761 = vperm.xlu0 %4760, %v4747
      %v4762 = vpop.permute.xlu0 %4761
      %4765 = vset.pattern.permute.xlu0 0
      %4766 = vperm.xlu0 %4765, %v4748
      %v4767 = vpop.permute.xlu0 %4766
      %v4769 = vadd.f32 %v4741, %v4752
      %v4770 = vadd.f32 %v4742, %v4757
      %v4771 = vadd.f32 %v4743, %v4762
      %v4772 = vadd.f32 %v4744, %v4767
      %v4773 = vmax.f32 %v4769, 0.0
      %v4774 = vmax.f32 %v4770, 0.0
      %v4775 = vmax.f32 %v4771, 0.0
      %v4776 = vmax.f32 %v4772, 0.0
      %v4777 = vmul.f32 %v4773, %v4049
      %v4778 = vmul.f32 %v4774, %v4049
      %v4779 = vmul.f32 %v4775, %v4049
      %v4780 = vmul.f32 %v4776, %v4049
      %v4781 = vpack.c.bf16 %v4778, %v4777
      %v4782 = vpack.c.bf16 %v4780, %v4779
      %v4783 = vld [vmem:[%s22] sm:$0xf]
      %v4784 = vld [vmem:[%s22 + $0x4] sm:$0xf]
      %v4785 = vld [vmem:[%s22 + $0x8] sm:$0xf]
      %v4786 = vld [vmem:[%s22 + $0xc] sm:$0xf]
      %v4787 = vld [vmem:[%s22 + $0x10] sm:$0xf]
      %v4788 = vld [vmem:[%s22 + $0x14] sm:$0xf]
      %v4789 = vld [vmem:[%s22 + $0x18] sm:$0xf]
      %v4790 = vld [vmem:[%s22 + $0x1c] sm:$0xf]
      %v4791 = vld [vmem:[%s22 + $0x20] sm:$0xf]
      %v4792 = vld [vmem:[%s22 + $0x24] sm:$0xf]
      %v4793 = vld [vmem:[%s22 + $0x28] sm:$0xf]
      %v4794 = vld [vmem:[%s22 + $0x2c] sm:$0xf]
      %v4795 = vld [vmem:[%s22 + $0x30] sm:$0x3]
      %v4809 = vunpack.c.l.b16 %v4783
      %v4810 = vunpack.c.l.b16 %v4784
      %v4811 = vunpack.c.l.b16 %v4785
      %v4812 = vunpack.c.l.b16 %v4786
      %v4813 = vunpack.c.l.b16 %v4787
      %v4814 = vunpack.c.l.b16 %v4788
      %v4815 = vunpack.c.l.b16 %v4789
      %v4816 = vunpack.c.l.b16 %v4790
      %v4817 = vunpack.c.l.b16 %v4791
      %v4818 = vunpack.c.l.b16 %v4792
      %v4819 = vunpack.c.l.b16 %v4793
      %v4820 = vunpack.c.l.b16 %v4794
      %v4821 = vunpack.c.l.b16 %v4795
      %v4822 = vpack.c.b16 %v4810, %v4809
      %v4823 = vpack.c.b16 %v4812, %v4811
      %v4824 = vpack.c.b16 %v4814, %v4813
      %v4825 = vpack.c.b16 %v4816, %v4815
      %v4826 = vpack.c.b16 %v4818, %v4817
      %v4827 = vpack.c.b16 %v4820, %v4819
      %v4828 = vpack.c.b16 %v4821, %v4821
      %v4836 = vsel %vm3337, %v4781, 0
      %v4839 = vsel %vm3337, %v4782, 0
      %v4842 = vsel %vm2488, %v4828, 0
      %4844 = vmatprep.subr.bf16.mxu0 0
      %4845 = vmatpush1.bf16.msra.mxu0 %v4822
      %4846 = vmatprep.subr.bf16.mxu0 0
      %4847 = vmatpush1.bf16.msra.mxu0 %v4823
      %4848 = vmatprep.subr.bf16.mxu0 0
      %4849 = vmatpush1.bf16.msra.mxu0 %v4824
      %4850 = vmatprep.subr.bf16.mxu0 0
      %4851 = vmatpush1.bf16.msra.mxu0 %v4825
      %4852 = vmatprep.subr.bf16.mxu0 0
      %4853 = vmatpush1.bf16.msra.mxu0 %v4826
      %4854 = vmatprep.subr.bf16.mxu0 0
      %4855 = vmatpush1.bf16.msra.mxu0 %v4827
      %4856 = vmatprep.subr.bf16.mxu0 0
      %4857 = vmatpush1.bf16.msra.mxu0 %v4842
      %4858 = vmatprep.subr.bf16.mxu0 0
      %4859 = vmatpush1.bf16.msra.mxu0 0
      %4860 = vmatprep.subr.bf16.mxu0 0
      %4861 = vmatpush1.bf16.msra.mxu0 0
      %4862 = vmatprep.subr.bf16.mxu0 0
      %4863 = vmatpush1.bf16.msra.mxu0 0
      %4864 = vmatprep.subr.bf16.mxu0 0
      %4865 = vmatpush1.bf16.msra.mxu0 0
      %4866 = vmatprep.subr.bf16.mxu0 0
      %4867 = vmatpush1.bf16.msra.mxu0 0
      %4868 = vmatprep.subr.bf16.mxu0 0
      %4869 = vmatpush1.bf16.msra.mxu0 0
      %4870 = vmatprep.subr.bf16.mxu0 0
      %4871 = vmatpush1.bf16.msra.mxu0 0
      %4872 = vmatprep.subr.bf16.mxu0 0
      %4873 = vmatpush1.bf16.msra.mxu0 0
      %4874 = vmatprep.subr.bf16.mxu0 0
      %4875 = vmatpush1.bf16.msra.mxu0 0
      %4876 = vmatprep.mubr.bf16.mxu0 0
      %4877 = vmatmul.mubr.bf16.gmra.mrb[0].mxu0 %v4836
      %v4878 = vpop.f32.mrb[0].mxu0
      %v4879 = vadd.f32 0.0, %v4878
      %v4880 = vpop.f32.mrb[0].mxu0
      %v4881 = vpop.f32.mrb[0].mxu0
      %v4882 = vadd.f32 0.0, %v4881
      %v4883 = vpop.f32.mrb[0].mxu0
      %4884 = vmatprep.mubr.bf16.mxu0 0
      %4885 = vmatmul.mubr.bf16.gmra.mrb[0].mxu0 %v4839
      %v4886 = vpop.f32.mrb[0].mxu0
      %v4887 = vadd.f32 0.0, %v4886
      %v4888 = vpop.f32.mrb[0].mxu0
      %v4889 = vpop.f32.mrb[0].mxu0
      %v4890 = vadd.f32 0.0, %v4889
      %v4891 = vpop.f32.mrb[0].mxu0
      %4892 = vdwg.mxu0
      %s4893 = scalar_lea.vmem %s22, 52
      %v4894 = vld [vmem:[%s4893] sm:$0xf]
      %v4895 = vld [vmem:[%s4893 + $0x4] sm:$0xf]
      %v4896 = vld [vmem:[%s4893 + $0x8] sm:$0xf]
      %v4897 = vld [vmem:[%s4893 + $0xc] sm:$0xf]
      %v4898 = vld [vmem:[%s4893 + $0x10] sm:$0xf]
      %v4899 = vld [vmem:[%s4893 + $0x14] sm:$0xf]
      %v4900 = vld [vmem:[%s4893 + $0x18] sm:$0xf]
      %v4901 = vld [vmem:[%s4893 + $0x1c] sm:$0xf]
      %v4902 = vld [vmem:[%s4893 + $0x20] sm:$0xf]
      %v4903 = vld [vmem:[%s4893 + $0x24] sm:$0xf]
      %v4904 = vld [vmem:[%s4893 + $0x28] sm:$0xf]
      %v4905 = vld [vmem:[%s4893 + $0x2c] sm:$0xf]
      %v4906 = vld [vmem:[%s4893 + $0x30] sm:$0x3]
      %v4920 = vunpack.c.l.b16 %v4894
      %v4921 = vunpack.c.l.b16 %v4895
      %v4922 = vunpack.c.l.b16 %v4896
      %v4923 = vunpack.c.l.b16 %v4897
      %v4924 = vunpack.c.l.b16 %v4898
      %v4925 = vunpack.c.l.b16 %v4899
      %v4926 = vunpack.c.l.b16 %v4900
      %v4927 = vunpack.c.l.b16 %v4901
      %v4928 = vunpack.c.l.b16 %v4902
      %v4929 = vunpack.c.l.b16 %v4903
      %v4930 = vunpack.c.l.b16 %v4904
      %v4931 = vunpack.c.l.b16 %v4905
      %v4932 = vunpack.c.l.b16 %v4906
      %v4933 = vpack.c.b16 %v4921, %v4920
      %v4934 = vpack.c.b16 %v4923, %v4922
      %v4935 = vpack.c.b16 %v4925, %v4924
      %v4936 = vpack.c.b16 %v4927, %v4926
      %v4937 = vpack.c.b16 %v4929, %v4928
      %v4938 = vpack.c.b16 %v4931, %v4930
      %v4939 = vpack.c.b16 %v4932, %v4932
      %v4947 = vsel %vm2488, %v4939, 0
      %4949 = vmatprep.subr.bf16.mxu0 0
      %4950 = vmatpush1.bf16.msra.mxu0 %v4933
      %4951 = vmatprep.subr.bf16.mxu0 0
      %4952 = vmatpush1.bf16.msra.mxu0 %v4934
      %4953 = vmatprep.subr.bf16.mxu0 0
      %4954 = vmatpush1.bf16.msra.mxu0 %v4935
      %4955 = vmatprep.subr.bf16.mxu0 0
      %4956 = vmatpush1.bf16.msra.mxu0 %v4936
      %4957 = vmatprep.subr.bf16.mxu0 0
      %4958 = vmatpush1.bf16.msra.mxu0 %v4937
      %4959 = vmatprep.subr.bf16.mxu0 0
      %4960 = vmatpush1.bf16.msra.mxu0 %v4938
      %4961 = vmatprep.subr.bf16.mxu0 0
      %4962 = vmatpush1.bf16.msra.mxu0 %v4947
      %4963 = vmatprep.subr.bf16.mxu0 0
      %4964 = vmatpush1.bf16.msra.mxu0 0
      %4965 = vmatprep.subr.bf16.mxu0 0
      %4966 = vmatpush1.bf16.msra.mxu0 0
      %4967 = vmatprep.subr.bf16.mxu0 0
      %4968 = vmatpush1.bf16.msra.mxu0 0
      %4969 = vmatprep.subr.bf16.mxu0 0
      %4970 = vmatpush1.bf16.msra.mxu0 0
      %4971 = vmatprep.subr.bf16.mxu0 0
      %4972 = vmatpush1.bf16.msra.mxu0 0
      %4973 = vmatprep.subr.bf16.mxu0 0
      %4974 = vmatpush1.bf16.msra.mxu0 0
      %4975 = vmatprep.subr.bf16.mxu0 0
      %4976 = vmatpush1.bf16.msra.mxu0 0
      %4977 = vmatprep.subr.bf16.mxu0 0
      %4978 = vmatpush1.bf16.msra.mxu0 0
      %4979 = vmatprep.subr.bf16.mxu0 0
      %4980 = vmatpush1.bf16.msra.mxu0 0
      %4981 = vmatprep.mubr.bf16.mxu0 0
      %4982 = vmatmul.mubr.bf16.gmra.mrb[0].mxu0 %v4836
      %v4983 = vpop.f32.mrb[0].mxu0
      %v4984 = vadd.f32 0.0, %v4983
      %v4985 = vpop.f32.mrb[0].mxu0
      %v4986 = vpop.f32.mrb[0].mxu0
      %v4987 = vadd.f32 0.0, %v4986
      %v4988 = vpop.f32.mrb[0].mxu0
      %4989 = vmatprep.mubr.bf16.mxu0 0
      %4990 = vmatmul.mubr.bf16.gmra.mrb[0].mxu0 %v4839
      %v4991 = vpop.f32.mrb[0].mxu0
      %v4992 = vadd.f32 0.0, %v4991
      %v4993 = vpop.f32.mrb[0].mxu0
      %v4994 = vpop.f32.mrb[0].mxu0
      %v4995 = vadd.f32 0.0, %v4994
      %v4996 = vpop.f32.mrb[0].mxu0
      %4997 = vdwg.mxu0
      %v4998 = vmax.f32 %v4879, %v4984
      %v4999 = vmax.f32 %v4882, %v4987
      %v5000 = vmax.f32 %v4887, %v4992
      %v5001 = vmax.f32 %v4890, %v4995
      %s5002 = scalar_lea.vmem %s22, 104
      %v5003 = vld [vmem:[%s5002] sm:$0xf]
      %v5004 = vld [vmem:[%s5002 + $0x4] sm:$0xf]
      %v5005 = vld [vmem:[%s5002 + $0x8] sm:$0xf]
      %v5006 = vld [vmem:[%s5002 + $0xc] sm:$0xf]
      %v5007 = vld [vmem:[%s5002 + $0x10] sm:$0xf]
      %v5008 = vld [vmem:[%s5002 + $0x14] sm:$0xf]
      %v5009 = vld [vmem:[%s5002 + $0x18] sm:$0xf]
      %v5010 = vld [vmem:[%s5002 + $0x1c] sm:$0xf]
      %v5011 = vld [vmem:[%s5002 + $0x20] sm:$0xf]
      %v5012 = vld [vmem:[%s5002 + $0x24] sm:$0xf]
      %v5013 = vld [vmem:[%s5002 + $0x28] sm:$0xf]
      %v5014 = vld [vmem:[%s5002 + $0x2c] sm:$0xf]
      %v5015 = vld [vmem:[%s5002 + $0x30] sm:$0x3]
      %v5029 = vunpack.c.l.b16 %v5003
      %v5030 = vunpack.c.l.b16 %v5004
      %v5031 = vunpack.c.l.b16 %v5005
      %v5032 = vunpack.c.l.b16 %v5006
      %v5033 = vunpack.c.l.b16 %v5007
      %v5034 = vunpack.c.l.b16 %v5008
      %v5035 = vunpack.c.l.b16 %v5009
      %v5036 = vunpack.c.l.b16 %v5010
      %v5037 = vunpack.c.l.b16 %v5011
      %v5038 = vunpack.c.l.b16 %v5012
      %v5039 = vunpack.c.l.b16 %v5013
      %v5040 = vunpack.c.l.b16 %v5014
      %v5041 = vunpack.c.l.b16 %v5015
      %v5042 = vpack.c.b16 %v5030, %v5029
      %v5043 = vpack.c.b16 %v5032, %v5031
      %v5044 = vpack.c.b16 %v5034, %v5033
      %v5045 = vpack.c.b16 %v5036, %v5035
      %v5046 = vpack.c.b16 %v5038, %v5037
      %v5047 = vpack.c.b16 %v5040, %v5039
      %v5048 = vpack.c.b16 %v5041, %v5041
      %v5056 = vsel %vm2488, %v5048, 0
      %5058 = vmatprep.subr.bf16.mxu0 0
      %5059 = vmatpush1.bf16.msra.mxu0 %v5042
      %5060 = vmatprep.subr.bf16.mxu0 0
      %5061 = vmatpush1.bf16.msra.mxu0 %v5043
      %5062 = vmatprep.subr.bf16.mxu0 0
      %5063 = vmatpush1.bf16.msra.mxu0 %v5044
      %5064 = vmatprep.subr.bf16.mxu0 0
      %5065 = vmatpush1.bf16.msra.mxu0 %v5045
      %5066 = vmatprep.subr.bf16.mxu0 0
      %5067 = vmatpush1.bf16.msra.mxu0 %v5046
      %5068 = vmatprep.subr.bf16.mxu0 0
      %5069 = vmatpush1.bf16.msra.mxu0 %v5047
      %5070 = vmatprep.subr.bf16.mxu0 0
      %5071 = vmatpush1.bf16.msra.mxu0 %v5056
      %5072 = vmatprep.subr.bf16.mxu0 0
      %5073 = vmatpush1.bf16.msra.mxu0 0
      %5074 = vmatprep.subr.bf16.mxu0 0
      %5075 = vmatpush1.bf16.msra.mxu0 0
      %5076 = vmatprep.subr.bf16.mxu0 0
      %5077 = vmatpush1.bf16.msra.mxu0 0
      %5078 = vmatprep.subr.bf16.mxu0 0
      %5079 = vmatpush1.bf16.msra.mxu0 0
      %5080 = vmatprep.subr.bf16.mxu0 0
      %5081 = vmatpush1.bf16.msra.mxu0 0
      %5082 = vmatprep.subr.bf16.mxu0 0
      %5083 = vmatpush1.bf16.msra.mxu0 0
      %5084 = vmatprep.subr.bf16.mxu0 0
      %5085 = vmatpush1.bf16.msra.mxu0 0
      %5086 = vmatprep.subr.bf16.mxu0 0
      %5087 = vmatpush1.bf16.msra.mxu0 0
      %5088 = vmatprep.subr.bf16.mxu0 0
      %5089 = vmatpush1.bf16.msra.mxu0 0
      %5090 = vmatprep.mubr.bf16.mxu0 0
      %5091 = vmatmul.mubr.bf16.gmra.mrb[0].mxu0 %v4836
      %v5092 = vpop.f32.mrb[0].mxu0
      %v5093 = vadd.f32 0.0, %v5092
      %v5094 = vpop.f32.mrb[0].mxu0
      %v5095 = vpop.f32.mrb[0].mxu0
      %v5096 = vadd.f32 0.0, %v5095
      %v5097 = vpop.f32.mrb[0].mxu0
      %5098 = vmatprep.mubr.bf16.mxu0 0
      %5099 = vmatmul.mubr.bf16.gmra.mrb[0].mxu0 %v4839
      %v5100 = vpop.f32.mrb[0].mxu0
      %v5101 = vadd.f32 0.0, %v5100
      %v5102 = vpop.f32.mrb[0].mxu0
      %v5103 = vpop.f32.mrb[0].mxu0
      %v5104 = vadd.f32 0.0, %v5103
      %v5105 = vpop.f32.mrb[0].mxu0
      %5106 = vdwg.mxu0
      %v5107 = vmax.f32 %v4998, %v5093
      %v5108 = vmax.f32 %v4999, %v5096
      %v5109 = vmax.f32 %v5000, %v5101
      %v5110 = vmax.f32 %v5001, %v5104
      %s5111 = scalar_lea.vmem %s22, 156
      %v5112 = vld [vmem:[%s5111] sm:$0xf]
      %v5113 = vld [vmem:[%s5111 + $0x4] sm:$0xf]
      %v5114 = vld [vmem:[%s5111 + $0x8] sm:$0xf]
      %v5115 = vld [vmem:[%s5111 + $0xc] sm:$0xf]
      %v5116 = vld [vmem:[%s5111 + $0x10] sm:$0xf]
      %v5117 = vld [vmem:[%s5111 + $0x14] sm:$0xf]
      %v5118 = vld [vmem:[%s5111 + $0x18] sm:$0xf]
      %v5119 = vld [vmem:[%s5111 + $0x1c] sm:$0xf]
      %v5120 = vld [vmem:[%s5111 + $0x20] sm:$0xf]
      %v5121 = vld [vmem:[%s5111 + $0x24] sm:$0xf]
      %v5122 = vld [vmem:[%s5111 + $0x28] sm:$0xf]
      %v5123 = vld [vmem:[%s5111 + $0x2c] sm:$0xf]
      %v5124 = vld [vmem:[%s5111 + $0x30] sm:$0x3]
      %v5138 = vunpack.c.l.b16 %v5112
      %v5139 = vunpack.c.l.b16 %v5113
      %v5140 = vunpack.c.l.b16 %v5114
      %v5141 = vunpack.c.l.b16 %v5115
      %v5142 = vunpack.c.l.b16 %v5116
      %v5143 = vunpack.c.l.b16 %v5117
      %v5144 = vunpack.c.l.b16 %v5118
      %v5145 = vunpack.c.l.b16 %v5119
      %v5146 = vunpack.c.l.b16 %v5120
      %v5147 = vunpack.c.l.b16 %v5121
      %v5148 = vunpack.c.l.b16 %v5122
      %v5149 = vunpack.c.l.b16 %v5123
      %v5150 = vunpack.c.l.b16 %v5124
      %v5151 = vpack.c.b16 %v5139, %v5138
      %v5152 = vpack.c.b16 %v5141, %v5140
      %v5153 = vpack.c.b16 %v5143, %v5142
      %v5154 = vpack.c.b16 %v5145, %v5144
      %v5155 = vpack.c.b16 %v5147, %v5146
      %v5156 = vpack.c.b16 %v5149, %v5148
      %v5157 = vpack.c.b16 %v5150, %v5150
      %v5165 = vsel %vm2488, %v5157, 0
      %5167 = vmatprep.subr.bf16.mxu0 0
      %5168 = vmatpush1.bf16.msra.mxu0 %v5151
      %5169 = vmatprep.subr.bf16.mxu0 0
      %5170 = vmatpush1.bf16.msra.mxu0 %v5152
      %5171 = vmatprep.subr.bf16.mxu0 0
      %5172 = vmatpush1.bf16.msra.mxu0 %v5153
      %5173 = vmatprep.subr.bf16.mxu0 0
      %5174 = vmatpush1.bf16.msra.mxu0 %v5154
      %5175 = vmatprep.subr.bf16.mxu0 0
      %5176 = vmatpush1.bf16.msra.mxu0 %v5155
      %5177 = vmatprep.subr.bf16.mxu0 0
      %5178 = vmatpush1.bf16.msra.mxu0 %v5156
      %5179 = vmatprep.subr.bf16.mxu0 0
      %5180 = vmatpush1.bf16.msra.mxu0 %v5165
      %5181 = vmatprep.subr.bf16.mxu0 0
      %5182 = vmatpush1.bf16.msra.mxu0 0
      %5183 = vmatprep.subr.bf16.mxu0 0
      %5184 = vmatpush1.bf16.msra.mxu0 0
      %5185 = vmatprep.subr.bf16.mxu0 0
      %5186 = vmatpush1.bf16.msra.mxu0 0
      %5187 = vmatprep.subr.bf16.mxu0 0
      %5188 = vmatpush1.bf16.msra.mxu0 0
      %5189 = vmatprep.subr.bf16.mxu0 0
      %5190 = vmatpush1.bf16.msra.mxu0 0
      %5191 = vmatprep.subr.bf16.mxu0 0
      %5192 = vmatpush1.bf16.msra.mxu0 0
      %5193 = vmatprep.subr.bf16.mxu0 0
      %5194 = vmatpush1.bf16.msra.mxu0 0
      %5195 = vmatprep.subr.bf16.mxu0 0
      %5196 = vmatpush1.bf16.msra.mxu0 0
      %5197 = vmatprep.subr.bf16.mxu0 0
      %5198 = vmatpush1.bf16.msra.mxu0 0
      %5199 = vmatprep.mubr.bf16.mxu0 0
      %5200 = vmatmul.mubr.bf16.gmra.mrb[0].mxu0 %v4836
      %v5201 = vpop.f32.mrb[0].mxu0
      %v5202 = vadd.f32 0.0, %v5201
      %v5203 = vpop.f32.mrb[0].mxu0
      %v5204 = vpop.f32.mrb[0].mxu0
      %v5205 = vadd.f32 0.0, %v5204
      %v5206 = vpop.f32.mrb[0].mxu0
      %5207 = vmatprep.mubr.bf16.mxu0 0
      %5208 = vmatmul.mubr.bf16.gmra.mrb[0].mxu0 %v4839
      %v5209 = vpop.f32.mrb[0].mxu0
      %v5210 = vadd.f32 0.0, %v5209
      %v5211 = vpop.f32.mrb[0].mxu0
      %v5212 = vpop.f32.mrb[0].mxu0
      %v5213 = vadd.f32 0.0, %v5212
      %v5214 = vpop.f32.mrb[0].mxu0
      %5215 = vdwg.mxu0
      %v5216 = vmax.f32 %v5107, %v5202
      %v5217 = vmax.f32 %v5108, %v5205
      %v5218 = vmax.f32 %v5109, %v5210
      %v5219 = vmax.f32 %v5110, %v5213
      %v5220 = vpack.c.bf16 %v5217, %v5216
      %v5221 = vpack.c.bf16 %v5219, %v5218
      %5224 = vrot.lane.b32.xlu0 %v5220, 6
      %v5225 = vpop.permute.xlu0 %5224
      %5226 = vrot.lane.b32.xlu0 %v5221, 6
      %v5227 = vpop.permute.xlu0 %5226
      %vm5230 = vcmask 343088
      %5231 = vst.msk [vmem:[#allocation4 + $0x8] sm:$0xff] %vm5230, %v5225
      %5232 = vst.msk [vmem:[#allocation4 + $0x18] sm:$0xff] %vm5230, %v5227
      %vm5233 = vcmask 293888
      %5234 = vst.msk [vmem:[#allocation4 + $0x48] sm:$0xff] %vm5233, %v5220
      %5235 = vst.msk [vmem:[#allocation4 + $0x58] sm:$0xff] %vm5233, %v5221
      %5236 = vrot.lane.b32.xlu0 %v5220, 122
      %v5237 = vpop.permute.xlu0 %5236
      %5238 = vrot.lane.b32.xlu0 %v5221, 122
      %v5239 = vpop.permute.xlu0 %5238
      %vm5242 = vcmask 1048528
      %5243 = vst.msk [vmem:[#allocation4 + $0x80] sm:$0xff] %vm5242, %v5237
      %vm5244 = vcmask 244736
      %5245 = vst.msk [vmem:[#allocation4 + $0x88] sm:$0xff] %vm5244, %v5237
      %5246 = vst.msk [vmem:[#allocation4 + $0x90] sm:$0xff] %vm5242, %v5239
      %5247 = vst.msk [vmem:[#allocation4 + $0x98] sm:$0xff] %vm5244, %v5239
      %v5248 = vld [vmem:[#allocation4] sm:$0xff]
      %v5249 = vld [vmem:[#allocation4 + $0x8] sm:$0xff]
      %v5250 = vld [vmem:[#allocation4 + $0x10] sm:$0xff]
      %v5251 = vld [vmem:[#allocation4 + $0x18] sm:$0xff]
      %v5252 = vld [vmem:[#allocation4 + $0x20] sm:$0xff]
      %v5253 = vld [vmem:[#allocation4 + $0x28] sm:$0xff]
      %v5254 = vld [vmem:[#allocation4 + $0x30] sm:$0xff]
      %v5255 = vld [vmem:[#allocation4 + $0x38] sm:$0xff]
      %v5256 = vld [vmem:[#allocation4 + $0x40] sm:$0xff]
      %v5257 = vld [vmem:[#allocation4 + $0x48] sm:$0xff]
      %v5258 = vld [vmem:[#allocation4 + $0x50] sm:$0xff]
      %v5259 = vld [vmem:[#allocation4 + $0x58] sm:$0xff]
      %v5260 = vld [vmem:[#allocation4 + $0x60] sm:$0xff]
      %v5261 = vld [vmem:[#allocation4 + $0x68] sm:$0xff]
      %v5262 = vld [vmem:[#allocation4 + $0x70] sm:$0xff]
      %v5263 = vld [vmem:[#allocation4 + $0x78] sm:$0xff]
      %v5264 = vld [vmem:[#allocation4 + $0x80] sm:$0xff]
      %v5265 = vld [vmem:[#allocation4 + $0x88] sm:$0xff]
      %v5266 = vld [vmem:[#allocation4 + $0x90] sm:$0xff]
      %v5267 = vld [vmem:[#allocation4 + $0x98] sm:$0xff]
      %v5268 = vld [vmem:[#allocation4 + $0xa0] sm:$0xff]
      %v5269 = vld [vmem:[#allocation4 + $0xa8] sm:$0xff]
      %v5270 = vld [vmem:[#allocation4 + $0xb0] sm:$0xff]
      %v5271 = vld [vmem:[#allocation4 + $0xb8] sm:$0xff]
      %v5272 = vld [vmem:[%s5] sm:$0xff]
      %v5273 = vld [vmem:[%s5 + $0x8] sm:$0xff]
      %v5274 = vld [vmem:[%s5 + $0x10] sm:$0xff]
      %v5275 = vld [vmem:[%s5 + $0x18] sm:$0xff]
      %v5276 = vld [vmem:[%s5 + $0x20] sm:$0xff]
      %v5277 = vld [vmem:[%s5 + $0x28] sm:$0xff]
      %v5278 = vld [vmem:[%s5 + $0x30] sm:$0xff]
      %v5279 = vld [vmem:[%s5 + $0x38] sm:$0xff]
      %s5280 = scalar_lea.vmem %s5, 64
      %v5281 = vld [vmem:[%s5280] sm:$0xff]
      %v5282 = vld [vmem:[%s5280 + $0x8] sm:$0xff]
      %v5283 = vld [vmem:[%s5280 + $0x10] sm:$0xff]
      %v5284 = vld [vmem:[%s5280 + $0x18] sm:$0xff]
      %v5285 = vld [vmem:[%s5280 + $0x20] sm:$0xff]
      %v5286 = vld [vmem:[%s5280 + $0x28] sm:$0xff]
      %v5287 = vld [vmem:[%s5280 + $0x30] sm:$0xff]
      %v5288 = vld [vmem:[%s5280 + $0x38] sm:$0xff]
      %v5297 = vunpack.c.l.b16 %v5281
      %v5298 = vunpack.c.h.b16 %v5281
      %v5299 = vunpack.c.l.b16 %v5282
      %v5300 = vunpack.c.h.b16 %v5282
      %v5301 = vunpack.c.l.b16 %v5283
      %v5302 = vunpack.c.h.b16 %v5283
      %v5303 = vunpack.c.l.b16 %v5284
      %v5304 = vunpack.c.h.b16 %v5284
      %v5305 = vunpack.c.l.b16 %v5285
      %v5306 = vunpack.c.h.b16 %v5285
      %v5307 = vunpack.c.l.b16 %v5286
      %v5308 = vunpack.c.h.b16 %v5286
      %v5309 = vunpack.c.l.b16 %v5287
      %v5310 = vunpack.c.h.b16 %v5287
      %v5311 = vunpack.c.l.b16 %v5288
      %v5312 = vunpack.c.h.b16 %v5288
      %v5313 = vpack.c.b16 %v5299, %v5297
      %v5314 = vpack.c.b16 %v5300, %v5298
      %v5315 = vpack.c.b16 %v5303, %v5301
      %v5316 = vpack.c.b16 %v5304, %v5302
      %v5317 = vpack.c.b16 %v5307, %v5305
      %v5318 = vpack.c.b16 %v5308, %v5306
      %v5319 = vpack.c.b16 %v5311, %v5309
      %v5320 = vpack.c.b16 %v5312, %v5310
      %vm5325 = vcmask 523264
      %v5327 = vsel %vm5325, %v5314, 0
      %v5330 = vsel %vm5325, %v5316, 0
      %v5333 = vsel %vm5325, %v5318, 0
      %v5336 = vsel %vm5325, %v5320, 0
      %5338 = vmatprep.subr.bf16.mxu0 0
      %5339 = vmatpush1.bf16.msra.mxu0 %v5249
      %5340 = vmatprep.subr.bf16.mxu0 0
      %5341 = vmatpush1.bf16.msra.mxu0 %v5251
      %5342 = vmatprep.subr.bf16.mxu0 0
      %5343 = vmatpush1.bf16.msra.mxu0 %v5253
      %5344 = vmatprep.subr.bf16.mxu0 0
      %5345 = vmatpush1.bf16.msra.mxu0 %v5255
      %5346 = vmatprep.subr.bf16.mxu0 0
      %5347 = vmatpush1.bf16.msra.mxu0 %v5257
      %5348 = vmatprep.subr.bf16.mxu0 0
      %5349 = vmatpush1.bf16.msra.mxu0 %v5259
      %5350 = vmatprep.subr.bf16.mxu0 0
      %5351 = vmatpush1.bf16.msra.mxu0 %v5261
      %5352 = vmatprep.subr.bf16.mxu0 0
      %5353 = vmatpush1.bf16.msra.mxu0 %v5263
      %5354 = vmatprep.subr.bf16.mxu0 0
      %5355 = vmatpush1.bf16.msra.mxu0 %v5265
      %5356 = vmatprep.subr.bf16.mxu0 0
      %5357 = vmatpush1.bf16.msra.mxu0 %v5267
      %5358 = vmatprep.subr.bf16.mxu0 0
      %5359 = vmatpush1.bf16.msra.mxu0 %v5269
      %5360 = vmatprep.subr.bf16.mxu0 0
      %5361 = vmatpush1.bf16.msra.mxu0 %v5271
      %5362 = vmatprep.subr.bf16.mxu0 0
      %5363 = vmatpush1.bf16.msra.mxu0 0
      %5364 = vmatprep.subr.bf16.mxu0 0
      %5365 = vmatpush1.bf16.msra.mxu0 0
      %5366 = vmatprep.subr.bf16.mxu0 0
      %5367 = vmatpush1.bf16.msra.mxu0 0
      %5368 = vmatprep.subr.bf16.mxu0 0
      %5369 = vmatpush1.bf16.msra.mxu0 0
      %5370 = vmatprep.mubr.bf16.mxu0 %v5327
      %5371 = vmatmul.mubr.bf16.gmra.mrb[0].mxu0 %v5313
      %v5372 = vpop.f32.mrb[0].mxu0
      %v5373 = vadd.f32 0.0, %v5372
      %v5374 = vpop.f32.mrb[0].mxu0
      %v5375 = vpop.f32.mrb[0].mxu0
      %v5376 = vadd.f32 0.0, %v5375
      %v5377 = vpop.f32.mrb[0].mxu0
      %5378 = vmatprep.mubr.bf16.mxu0 %v5330
      %5379 = vmatmul.mubr.bf16.gmra.mrb[0].mxu0 %v5315
      %v5380 = vpop.f32.mrb[0].mxu0
      %v5381 = vadd.f32 0.0, %v5380
      %v5382 = vpop.f32.mrb[0].mxu0
      %v5383 = vpop.f32.mrb[0].mxu0
      %v5384 = vadd.f32 0.0, %v5383
      %v5385 = vpop.f32.mrb[0].mxu0
      %5386 = vmatprep.mubr.bf16.mxu0 %v5333
      %5387 = vmatmul.mubr.bf16.gmra.mrb[0].mxu0 %v5317
      %v5388 = vpop.f32.mrb[0].mxu0
      %v5389 = vadd.f32 0.0, %v5388
      %v5390 = vpop.f32.mrb[0].mxu0
      %v5391 = vpop.f32.mrb[0].mxu0
      %v5392 = vadd.f32 0.0, %v5391
      %v5393 = vpop.f32.mrb[0].mxu0
      %5394 = vmatprep.mubr.bf16.mxu0 %v5336
      %5395 = vmatmul.mubr.bf16.gmra.mrb[0].mxu0 %v5319
      %v5396 = vpop.f32.mrb[0].mxu0
      %v5397 = vadd.f32 0.0, %v5396
      %v5398 = vpop.f32.mrb[0].mxu0
      %v5399 = vpop.f32.mrb[0].mxu0
      %v5400 = vadd.f32 0.0, %v5399
      %v5401 = vpop.f32.mrb[0].mxu0
      %5402 = vdwg.mxu0
      %v5411 = vunpack.c.l.b16 %v5272
      %v5412 = vunpack.c.h.b16 %v5272
      %v5413 = vunpack.c.l.b16 %v5273
      %v5414 = vunpack.c.h.b16 %v5273
      %v5415 = vunpack.c.l.b16 %v5274
      %v5416 = vunpack.c.h.b16 %v5274
      %v5417 = vunpack.c.l.b16 %v5275
      %v5418 = vunpack.c.h.b16 %v5275
      %v5419 = vunpack.c.l.b16 %v5276
      %v5420 = vunpack.c.h.b16 %v5276
      %v5421 = vunpack.c.l.b16 %v5277
      %v5422 = vunpack.c.h.b16 %v5277
      %v5423 = vunpack.c.l.b16 %v5278
      %v5424 = vunpack.c.h.b16 %v5278
      %v5425 = vunpack.c.l.b16 %v5279
      %v5426 = vunpack.c.h.b16 %v5279
      %v5427 = vpack.c.b16 %v5413, %v5411
      %v5428 = vpack.c.b16 %v5414, %v5412
      %v5429 = vpack.c.b16 %v5417, %v5415
      %v5430 = vpack.c.b16 %v5418, %v5416
      %v5431 = vpack.c.b16 %v5421, %v5419
      %v5432 = vpack.c.b16 %v5422, %v5420
      %v5433 = vpack.c.b16 %v5425, %v5423
      %v5434 = vpack.c.b16 %v5426, %v5424
      %5463 = vrot.lane.b32.xlu0 %v5248, 1
      %v5464 = vpop.permute.xlu0 %5463
      %5465 = vrot.lane.b32.xlu0 %v5249, 1
      %v5466 = vpop.permute.xlu0 %5465
      %5467 = vrot.lane.b32.xlu0 %v5250, 1
      %v5468 = vpop.permute.xlu0 %5467
      %5469 = vrot.lane.b32.xlu0 %v5251, 1
      %v5470 = vpop.permute.xlu0 %5469
      %5471 = vrot.lane.b32.xlu0 %v5252, 1
      %v5472 = vpop.permute.xlu0 %5471
      %5473 = vrot.lane.b32.xlu0 %v5253, 1
      %v5474 = vpop.permute.xlu0 %5473
      %5475 = vrot.lane.b32.xlu0 %v5254, 1
      %v5476 = vpop.permute.xlu0 %5475
      %5477 = vrot.lane.b32.xlu0 %v5255, 1
      %v5478 = vpop.permute.xlu0 %5477
      %5479 = vrot.lane.b32.xlu0 %v5256, 1
      %v5480 = vpop.permute.xlu0 %5479
      %5481 = vrot.lane.b32.xlu0 %v5257, 1
      %v5482 = vpop.permute.xlu0 %5481
      %5483 = vrot.lane.b32.xlu0 %v5258, 1
      %v5484 = vpop.permute.xlu0 %5483
      %5485 = vrot.lane.b32.xlu0 %v5259, 1
      %v5486 = vpop.permute.xlu0 %5485
      %5487 = vrot.lane.b32.xlu0 %v5260, 1
      %v5488 = vpop.permute.xlu0 %5487
      %5489 = vrot.lane.b32.xlu0 %v5261, 1
      %v5490 = vpop.permute.xlu0 %5489
      %5491 = vrot.lane.b32.xlu0 %v5262, 1
      %v5492 = vpop.permute.xlu0 %5491
      %5493 = vrot.lane.b32.xlu0 %v5263, 1
      %v5494 = vpop.permute.xlu0 %5493
      %5495 = vrot.lane.b32.xlu0 %v5264, 1
      %v5496 = vpop.permute.xlu0 %5495
      %5497 = vrot.lane.b32.xlu0 %v5265, 1
      %v5498 = vpop.permute.xlu0 %5497
      %5499 = vrot.lane.b32.xlu0 %v5266, 1
      %v5500 = vpop.permute.xlu0 %5499
      %5501 = vrot.lane.b32.xlu0 %v5267, 1
      %v5502 = vpop.permute.xlu0 %5501
      %5503 = vrot.lane.b32.xlu0 %v5268, 1
      %v5504 = vpop.permute.xlu0 %5503
      %5505 = vrot.lane.b32.xlu0 %v5269, 1
      %v5506 = vpop.permute.xlu0 %5505
      %5507 = vrot.lane.b32.xlu0 %v5270, 1
      %v5508 = vpop.permute.xlu0 %5507
      %5509 = vrot.lane.b32.xlu0 %v5271, 1
      %v5510 = vpop.permute.xlu0 %5509
      %v5511 = vsel %vm1252, %v5464, %v5466
      %v5512 = vsel %vm1252, %v5468, %v5470
      %v5513 = vsel %vm1252, %v5472, %v5474
      %v5514 = vsel %vm1252, %v5476, %v5478
      %v5515 = vsel %vm1252, %v5480, %v5482
      %v5516 = vsel %vm1252, %v5484, %v5486
      %v5517 = vsel %vm1252, %v5488, %v5490
      %v5518 = vsel %vm1252, %v5492, %v5494
      %v5519 = vsel %vm1252, %v5496, %v5498
      %v5520 = vsel %vm1252, %v5500, %v5502
      %v5521 = vsel %vm1252, %v5504, %v5506
      %v5522 = vsel %vm1252, %v5508, %v5510
      %v5536 = vsel %vm5325, %v5428, 0
      %v5539 = vsel %vm5325, %v5430, 0
      %v5542 = vsel %vm5325, %v5432, 0
      %v5545 = vsel %vm5325, %v5434, 0
      %5547 = vmatprep.subr.bf16.mxu0 0
      %5548 = vmatpush1.bf16.msra.mxu0 %v5511
      %5549 = vmatprep.subr.bf16.mxu0 0
      %5550 = vmatpush1.bf16.msra.mxu0 %v5512
      %5551 = vmatprep.subr.bf16.mxu0 0
      %5552 = vmatpush1.bf16.msra.mxu0 %v5513
      %5553 = vmatprep.subr.bf16.mxu0 0
      %5554 = vmatpush1.bf16.msra.mxu0 %v5514
      %5555 = vmatprep.subr.bf16.mxu0 0
      %5556 = vmatpush1.bf16.msra.mxu0 %v5515
      %5557 = vmatprep.subr.bf16.mxu0 0
      %5558 = vmatpush1.bf16.msra.mxu0 %v5516
      %5559 = vmatprep.subr.bf16.mxu0 0
      %5560 = vmatpush1.bf16.msra.mxu0 %v5517
      %5561 = vmatprep.subr.bf16.mxu0 0
      %5562 = vmatpush1.bf16.msra.mxu0 %v5518
      %5563 = vmatprep.subr.bf16.mxu0 0
      %5564 = vmatpush1.bf16.msra.mxu0 %v5519
      %5565 = vmatprep.subr.bf16.mxu0 0
      %5566 = vmatpush1.bf16.msra.mxu0 %v5520
      %5567 = vmatprep.subr.bf16.mxu0 0
      %5568 = vmatpush1.bf16.msra.mxu0 %v5521
      %5569 = vmatprep.subr.bf16.mxu0 0
      %5570 = vmatpush1.bf16.msra.mxu0 %v5522
      %5571 = vmatprep.subr.bf16.mxu0 0
      %5572 = vmatpush1.bf16.msra.mxu0 0
      %5573 = vmatprep.subr.bf16.mxu0 0
      %5574 = vmatpush1.bf16.msra.mxu0 0
      %5575 = vmatprep.subr.bf16.mxu0 0
      %5576 = vmatpush1.bf16.msra.mxu0 0
      %5577 = vmatprep.subr.bf16.mxu0 0
      %5578 = vmatpush1.bf16.msra.mxu0 0
      %5579 = vmatprep.mubr.bf16.mxu0 %v5536
      %5580 = vmatmul.mubr.bf16.gmra.mrb[0].mxu0 %v5427
      %v5581 = vpop.f32.mrb[0].mxu0
      %v5582 = vadd.f32 %v5373, %v5581
      %v5583 = vpop.f32.mrb[0].mxu0
      %v5584 = vpop.f32.mrb[0].mxu0
      %v5585 = vadd.f32 %v5376, %v5584
      %v5586 = vpop.f32.mrb[0].mxu0
      %5587 = vmatprep.mubr.bf16.mxu0 %v5539
      %5588 = vmatmul.mubr.bf16.gmra.mrb[0].mxu0 %v5429
      %v5589 = vpop.f32.mrb[0].mxu0
      %v5590 = vadd.f32 %v5381, %v5589
      %v5591 = vpop.f32.mrb[0].mxu0
      %v5592 = vpop.f32.mrb[0].mxu0
      %v5593 = vadd.f32 %v5384, %v5592
      %v5594 = vpop.f32.mrb[0].mxu0
      %5595 = vmatprep.mubr.bf16.mxu0 %v5542
      %5596 = vmatmul.mubr.bf16.gmra.mrb[0].mxu0 %v5431
      %v5597 = vpop.f32.mrb[0].mxu0
      %v5598 = vadd.f32 %v5389, %v5597
      %v5599 = vpop.f32.mrb[0].mxu0
      %v5600 = vpop.f32.mrb[0].mxu0
      %v5601 = vadd.f32 %v5392, %v5600
      %v5602 = vpop.f32.mrb[0].mxu0
      %5603 = vmatprep.mubr.bf16.mxu0 %v5545
      %5604 = vmatmul.mubr.bf16.gmra.mrb[0].mxu0 %v5433
      %v5605 = vpop.f32.mrb[0].mxu0
      %v5606 = vadd.f32 %v5397, %v5605
      %v5607 = vpop.f32.mrb[0].mxu0
      %v5608 = vpop.f32.mrb[0].mxu0
      %v5609 = vadd.f32 %v5400, %v5608
      %v5610 = vpop.f32.mrb[0].mxu0
      %5611 = vdwg.mxu0
      %s5612 = scalar_lea.vmem %s5, 128
      %v5613 = vld [vmem:[%s5612] sm:$0xff]
      %v5614 = vld [vmem:[%s5612 + $0x8] sm:$0xff]
      %v5615 = vld [vmem:[%s5612 + $0x10] sm:$0xff]
      %v5616 = vld [vmem:[%s5612 + $0x18] sm:$0xff]
      %v5617 = vld [vmem:[%s5612 + $0x20] sm:$0xff]
      %v5618 = vld [vmem:[%s5612 + $0x28] sm:$0xff]
      %v5619 = vld [vmem:[%s5612 + $0x30] sm:$0xff]
      %v5620 = vld [vmem:[%s5612 + $0x38] sm:$0xff]
      %v5629 = vunpack.c.l.b16 %v5613
      %v5630 = vunpack.c.h.b16 %v5613
      %v5631 = vunpack.c.l.b16 %v5614
      %v5632 = vunpack.c.h.b16 %v5614
      %v5633 = vunpack.c.l.b16 %v5615
      %v5634 = vunpack.c.h.b16 %v5615
      %v5635 = vunpack.c.l.b16 %v5616
      %v5636 = vunpack.c.h.b16 %v5616
      %v5637 = vunpack.c.l.b16 %v5617
      %v5638 = vunpack.c.h.b16 %v5617
      %v5639 = vunpack.c.l.b16 %v5618
      %v5640 = vunpack.c.h.b16 %v5618
      %v5641 = vunpack.c.l.b16 %v5619
      %v5642 = vunpack.c.h.b16 %v5619
      %v5643 = vunpack.c.l.b16 %v5620
      %v5644 = vunpack.c.h.b16 %v5620
      %v5645 = vpack.c.b16 %v5631, %v5629
      %v5646 = vpack.c.b16 %v5632, %v5630
      %v5647 = vpack.c.b16 %v5635, %v5633
      %v5648 = vpack.c.b16 %v5636, %v5634
      %v5649 = vpack.c.b16 %v5639, %v5637
      %v5650 = vpack.c.b16 %v5640, %v5638
      %v5651 = vpack.c.b16 %v5643, %v5641
      %v5652 = vpack.c.b16 %v5644, %v5642
      %5657 = vrot.lane.b32.xlu0 %v5249, 127
      %v5658 = vpop.permute.xlu0 %5657
      %5659 = vrot.lane.b32.xlu0 %v5251, 127
      %v5660 = vpop.permute.xlu0 %5659
      %5661 = vrot.lane.b32.xlu0 %v5253, 127
      %v5662 = vpop.permute.xlu0 %5661
      %5663 = vrot.lane.b32.xlu0 %v5255, 127
      %v5664 = vpop.permute.xlu0 %5663
      %5665 = vrot.lane.b32.xlu0 %v5257, 127
      %v5666 = vpop.permute.xlu0 %5665
      %5667 = vrot.lane.b32.xlu0 %v5259, 127
      %v5668 = vpop.permute.xlu0 %5667
      %5669 = vrot.lane.b32.xlu0 %v5261, 127
      %v5670 = vpop.permute.xlu0 %5669
      %5671 = vrot.lane.b32.xlu0 %v5263, 127
      %v5672 = vpop.permute.xlu0 %5671
      %5673 = vrot.lane.b32.xlu0 %v5265, 127
      %v5674 = vpop.permute.xlu0 %5673
      %5675 = vrot.lane.b32.xlu0 %v5267, 127
      %v5676 = vpop.permute.xlu0 %5675
      %5677 = vrot.lane.b32.xlu0 %v5269, 127
      %v5678 = vpop.permute.xlu0 %5677
      %5679 = vrot.lane.b32.xlu0 %v5271, 127
      %v5680 = vpop.permute.xlu0 %5679
      %v5694 = vsel %vm5325, %v5646, 0
      %v5697 = vsel %vm5325, %v5648, 0
      %v5700 = vsel %vm5325, %v5650, 0
      %v5703 = vsel %vm5325, %v5652, 0
      %5705 = vmatprep.subr.bf16.mxu0 0
      %5706 = vmatpush1.bf16.msra.mxu0 %v5658
      %5707 = vmatprep.subr.bf16.mxu0 0
      %5708 = vmatpush1.bf16.msra.mxu0 %v5660
      %5709 = vmatprep.subr.bf16.mxu0 0
      %5710 = vmatpush1.bf16.msra.mxu0 %v5662
      %5711 = vmatprep.subr.bf16.mxu0 0
      %5712 = vmatpush1.bf16.msra.mxu0 %v5664
      %5713 = vmatprep.subr.bf16.mxu0 0
      %5714 = vmatpush1.bf16.msra.mxu0 %v5666
      %5715 = vmatprep.subr.bf16.mxu0 0
      %5716 = vmatpush1.bf16.msra.mxu0 %v5668
      %5717 = vmatprep.subr.bf16.mxu0 0
      %5718 = vmatpush1.bf16.msra.mxu0 %v5670
      %5719 = vmatprep.subr.bf16.mxu0 0
      %5720 = vmatpush1.bf16.msra.mxu0 %v5672
      %5721 = vmatprep.subr.bf16.mxu0 0
      %5722 = vmatpush1.bf16.msra.mxu0 %v5674
      %5723 = vmatprep.subr.bf16.mxu0 0
      %5724 = vmatpush1.bf16.msra.mxu0 %v5676
      %5725 = vmatprep.subr.bf16.mxu0 0
      %5726 = vmatpush1.bf16.msra.mxu0 %v5678
      %5727 = vmatprep.subr.bf16.mxu0 0
      %5728 = vmatpush1.bf16.msra.mxu0 %v5680
      %5729 = vmatprep.subr.bf16.mxu0 0
      %5730 = vmatpush1.bf16.msra.mxu0 0
      %5731 = vmatprep.subr.bf16.mxu0 0
      %5732 = vmatpush1.bf16.msra.mxu0 0
      %5733 = vmatprep.subr.bf16.mxu0 0
      %5734 = vmatpush1.bf16.msra.mxu0 0
      %5735 = vmatprep.subr.bf16.mxu0 0
      %5736 = vmatpush1.bf16.msra.mxu0 0
      %5737 = vmatprep.mubr.bf16.mxu0 %v5694
      %5738 = vmatmul.mubr.bf16.gmra.mrb[0].mxu0 %v5645
      %v5739 = vpop.f32.mrb[0].mxu0
      %v5740 = vadd.f32 0.0, %v5739
      %v5741 = vpop.f32.mrb[0].mxu0
      %v5742 = vpop.f32.mrb[0].mxu0
      %v5743 = vadd.f32 0.0, %v5742
      %v5744 = vpop.f32.mrb[0].mxu0
      %5745 = vmatprep.mubr.bf16.mxu0 %v5697
      %5746 = vmatmul.mubr.bf16.gmra.mrb[0].mxu0 %v5647
      %v5747 = vpop.f32.mrb[0].mxu0
      %v5748 = vadd.f32 0.0, %v5747
      %v5749 = vpop.f32.mrb[0].mxu0
      %v5750 = vpop.f32.mrb[0].mxu0
      %v5751 = vadd.f32 0.0, %v5750
      %v5752 = vpop.f32.mrb[0].mxu0
      %5753 = vmatprep.mubr.bf16.mxu0 %v5700
      %5754 = vmatmul.mubr.bf16.gmra.mrb[0].mxu0 %v5649
      %v5755 = vpop.f32.mrb[0].mxu0
      %v5756 = vadd.f32 0.0, %v5755
      %v5757 = vpop.f32.mrb[0].mxu0
      %v5758 = vpop.f32.mrb[0].mxu0
      %v5759 = vadd.f32 0.0, %v5758
      %v5760 = vpop.f32.mrb[0].mxu0
      %5761 = vmatprep.mubr.bf16.mxu0 %v5703
      %5762 = vmatmul.mubr.bf16.gmra.mrb[0].mxu0 %v5651
      %v5763 = vpop.f32.mrb[0].mxu0
      %v5764 = vadd.f32 0.0, %v5763
      %v5765 = vpop.f32.mrb[0].mxu0
      %v5766 = vpop.f32.mrb[0].mxu0
      %v5767 = vadd.f32 0.0, %v5766
      %v5768 = vpop.f32.mrb[0].mxu0
      %5769 = vdwg.mxu0
      %v5770 = vadd.f32 %v5582, %v5740
      %v5771 = vadd.f32 %v5585, %v5743
      %v5772 = vadd.f32 %v5590, %v5748
      %v5773 = vadd.f32 %v5593, %v5751
      %v5774 = vadd.f32 %v5598, %v5756
      %v5775 = vadd.f32 %v5601, %v5759
      %v5776 = vadd.f32 %v5606, %v5764
      %v5777 = vadd.f32 %v5609, %v5767
      %v5778 = vld [vmem:[%s15] sm:$0xff]
      %v5779 = vld [vmem:[%s15 + $0x8] sm:$0xff]
      %v5780 = vld [vmem:[%s15 + $0x10] sm:$0xff]
      %v5781 = vld [vmem:[%s15 + $0x18] sm:$0xff]
      %v5782 = vld [vmem:[%s15 + $0x20] sm:$0xff]
      %v5783 = vld [vmem:[%s15 + $0x28] sm:$0xff]
      %v5784 = vld [vmem:[%s15 + $0x30] sm:$0xff]
      %v5785 = vld [vmem:[%s15 + $0x38] sm:$0xff]
      %5787 = vset.pattern.permute.xlu0 0
      %5788 = vperm.xlu0 %5787, %v5778
      %v5789 = vpop.permute.xlu0 %5788
      %5792 = vset.pattern.permute.xlu0 0
      %5793 = vperm.xlu0 %5792, %v5779
      %v5794 = vpop.permute.xlu0 %5793
      %5797 = vset.pattern.permute.xlu0 0
      %5798 = vperm.xlu0 %5797, %v5780
      %v5799 = vpop.permute.xlu0 %5798
      %5802 = vset.pattern.permute.xlu0 0
      %5803 = vperm.xlu0 %5802, %v5781
      %v5804 = vpop.permute.xlu0 %5803
      %5807 = vset.pattern.permute.xlu0 0
      %5808 = vperm.xlu0 %5807, %v5782
      %v5809 = vpop.permute.xlu0 %5808
      %5812 = vset.pattern.permute.xlu0 0
      %5813 = vperm.xlu0 %5812, %v5783
      %v5814 = vpop.permute.xlu0 %5813
      %5817 = vset.pattern.permute.xlu0 0
      %5818 = vperm.xlu0 %5817, %v5784
      %v5819 = vpop.permute.xlu0 %5818
      %5822 = vset.pattern.permute.xlu0 0
      %5823 = vperm.xlu0 %5822, %v5785
      %v5824 = vpop.permute.xlu0 %5823
      %v5826 = vadd.f32 %v5770, %v5789
      %v5827 = vadd.f32 %v5771, %v5794
      %v5828 = vadd.f32 %v5772, %v5799
      %v5829 = vadd.f32 %v5773, %v5804
      %v5830 = vadd.f32 %v5774, %v5809
      %v5831 = vadd.f32 %v5775, %v5814
      %v5832 = vadd.f32 %v5776, %v5819
      %v5833 = vadd.f32 %v5777, %v5824
      %v5834 = vmax.f32 %v5826, 0.0
      %v5835 = vmax.f32 %v5827, 0.0
      %v5836 = vmax.f32 %v5828, 0.0
      %v5837 = vmax.f32 %v5829, 0.0
      %v5838 = vmax.f32 %v5830, 0.0
      %v5839 = vmax.f32 %v5831, 0.0
      %v5840 = vmax.f32 %v5832, 0.0
      %v5841 = vmax.f32 %v5833, 0.0
      %v5843 = vlaneseq
      %v5844 = vshrl.u32 %v5843, 7
      %v5845 = vsub.s32 0, %v5844
      %v5846 = vrot.slane %v945, %v5845
      %v5848 = vmul.f32 %v5834, %v5846
      %v5849 = vmul.f32 %v5835, %v5846
      %v5850 = vmul.f32 %v5836, %v5846
      %v5851 = vmul.f32 %v5837, %v5846
      %v5852 = vmul.f32 %v5838, %v5846
      %v5853 = vmul.f32 %v5839, %v5846
      %v5854 = vmul.f32 %v5840, %v5846
      %v5855 = vmul.f32 %v5841, %v5846
      %v5856 = vpack.c.bf16 %v5849, %v5848
      %v5857 = vpack.c.bf16 %v5851, %v5850
      %v5858 = vpack.c.bf16 %v5853, %v5852
      %v5859 = vpack.c.bf16 %v5855, %v5854
      %5864 = vrot.lane.b32.xlu0 %v5856, 6
      %v5865 = vpop.permute.xlu0 %5864
      %5866 = vrot.lane.b32.xlu0 %v5857, 6
      %v5867 = vpop.permute.xlu0 %5866
      %5868 = vrot.lane.b32.xlu0 %v5858, 6
      %v5869 = vpop.permute.xlu0 %5868
      %5870 = vrot.lane.b32.xlu0 %v5859, 6
      %v5871 = vpop.permute.xlu0 %5870
      %5876 = vst.msk [vmem:[#allocation4 + $0x8] sm:$0xff] %vm5230, %v5865
      %5877 = vst.msk [vmem:[#allocation4 + $0x18] sm:$0xff] %vm5230, %v5867
      %5878 = vst.msk [vmem:[#allocation4 + $0x28] sm:$0xff] %vm5230, %v5869
      %5879 = vst.msk [vmem:[#allocation4 + $0x38] sm:$0xff] %vm5230, %v5871
      %5880 = vst.msk [vmem:[#allocation4 + $0x48] sm:$0xff] %vm5233, %v5856
      %5881 = vst.msk [vmem:[#allocation4 + $0x58] sm:$0xff] %vm5233, %v5857
      %5882 = vst.msk [vmem:[#allocation4 + $0x68] sm:$0xff] %vm5233, %v5858
      %5883 = vst.msk [vmem:[#allocation4 + $0x78] sm:$0xff] %vm5233, %v5859
      %5884 = vrot.lane.b32.xlu0 %v5856, 122
      %v5885 = vpop.permute.xlu0 %5884
      %5886 = vrot.lane.b32.xlu0 %v5857, 122
      %v5887 = vpop.permute.xlu0 %5886
      %5888 = vrot.lane.b32.xlu0 %v5858, 122
      %v5889 = vpop.permute.xlu0 %5888
      %5890 = vrot.lane.b32.xlu0 %v5859, 122
      %v5891 = vpop.permute.xlu0 %5890
      %5896 = vst.msk [vmem:[#allocation4 + $0x80] sm:$0xff] %vm5242, %v5885
      %5897 = vst.msk [vmem:[#allocation4 + $0x88] sm:$0xff] %vm5244, %v5885
      %5898 = vst.msk [vmem:[#allocation4 + $0x90] sm:$0xff] %vm5242, %v5887
      %5899 = vst.msk [vmem:[#allocation4 + $0x98] sm:$0xff] %vm5244, %v5887
      %5900 = vst.msk [vmem:[#allocation4 + $0xa0] sm:$0xff] %vm5242, %v5889
      %5901 = vst.msk [vmem:[#allocation4 + $0xa8] sm:$0xff] %vm5244, %v5889
      %5902 = vst.msk [vmem:[#allocation4 + $0xb0] sm:$0xff] %vm5242, %v5891
      %5903 = vst.msk [vmem:[#allocation4 + $0xb8] sm:$0xff] %vm5244, %v5891
      %v5904 = vld [vmem:[#allocation4] sm:$0xff]
      %v5905 = vld [vmem:[#allocation4 + $0x8] sm:$0xff]
      %v5906 = vld [vmem:[#allocation4 + $0x10] sm:$0xff]
      %v5907 = vld [vmem:[#allocation4 + $0x18] sm:$0xff]
      %v5908 = vld [vmem:[#allocation4 + $0x20] sm:$0xff]
      %v5909 = vld [vmem:[#allocation4 + $0x28] sm:$0xff]
      %v5910 = vld [vmem:[#allocation4 + $0x30] sm:$0xff]
      %v5911 = vld [vmem:[#allocation4 + $0x38] sm:$0xff]
      %v5912 = vld [vmem:[#allocation4 + $0x40] sm:$0xff]
      %v5913 = vld [vmem:[#allocation4 + $0x48] sm:$0xff]
      %v5914 = vld [vmem:[#allocation4 + $0x50] sm:$0xff]
      %v5915 = vld [vmem:[#allocation4 + $0x58] sm:$0xff]
      %v5916 = vld [vmem:[#allocation4 + $0x60] sm:$0xff]
      %v5917 = vld [vmem:[#allocation4 + $0x68] sm:$0xff]
      %v5918 = vld [vmem:[#allocation4 + $0x70] sm:$0xff]
      %v5919 = vld [vmem:[#allocation4 + $0x78] sm:$0xff]
      %v5920 = vld [vmem:[#allocation4 + $0x80] sm:$0xff]
      %v5921 = vld [vmem:[#allocation4 + $0x88] sm:$0xff]
      %v5922 = vld [vmem:[#allocation4 + $0x90] sm:$0xff]
      %v5923 = vld [vmem:[#allocation4 + $0x98] sm:$0xff]
      %v5924 = vld [vmem:[#allocation4 + $0xa0] sm:$0xff]
      %v5925 = vld [vmem:[#allocation4 + $0xa8] sm:$0xff]
      %v5926 = vld [vmem:[#allocation4 + $0xb0] sm:$0xff]
      %v5927 = vld [vmem:[#allocation4 + $0xb8] sm:$0xff]
      %v5928 = vld [vmem:[%s6] sm:$0xff]
      %v5929 = vld [vmem:[%s6 + $0x8] sm:$0xff]
      %v5930 = vld [vmem:[%s6 + $0x10] sm:$0xff]
      %v5931 = vld [vmem:[%s6 + $0x18] sm:$0xff]
      %v5932 = vld [vmem:[%s6 + $0x20] sm:$0xff]
      %v5933 = vld [vmem:[%s6 + $0x28] sm:$0xff]
      %v5934 = vld [vmem:[%s6 + $0x30] sm:$0xff]
      %v5935 = vld [vmem:[%s6 + $0x38] sm:$0xff]
      %s5936 = scalar_lea.vmem %s6, 64
      %v5937 = vld [vmem:[%s5936] sm:$0xff]
      %v5938 = vld [vmem:[%s5936 + $0x8] sm:$0xff]
      %v5939 = vld [vmem:[%s5936 + $0x10] sm:$0xff]
      %v5940 = vld [vmem:[%s5936 + $0x18] sm:$0xff]
      %v5941 = vld [vmem:[%s5936 + $0x20] sm:$0xff]
      %v5942 = vld [vmem:[%s5936 + $0x28] sm:$0xff]
      %v5943 = vld [vmem:[%s5936 + $0x30] sm:$0xff]
      %v5944 = vld [vmem:[%s5936 + $0x38] sm:$0xff]
      %v5953 = vunpack.c.l.b16 %v5937
      %v5954 = vunpack.c.h.b16 %v5937
      %v5955 = vunpack.c.l.b16 %v5938
      %v5956 = vunpack.c.h.b16 %v5938
      %v5957 = vunpack.c.l.b16 %v5939
      %v5958 = vunpack.c.h.b16 %v5939
      %v5959 = vunpack.c.l.b16 %v5940
      %v5960 = vunpack.c.h.b16 %v5940
      %v5961 = vunpack.c.l.b16 %v5941
      %v5962 = vunpack.c.h.b16 %v5941
      %v5963 = vunpack.c.l.b16 %v5942
      %v5964 = vunpack.c.h.b16 %v5942
      %v5965 = vunpack.c.l.b16 %v5943
      %v5966 = vunpack.c.h.b16 %v5943
      %v5967 = vunpack.c.l.b16 %v5944
      %v5968 = vunpack.c.h.b16 %v5944
      %v5969 = vpack.c.b16 %v5955, %v5953
      %v5970 = vpack.c.b16 %v5956, %v5954
      %v5971 = vpack.c.b16 %v5959, %v5957
      %v5972 = vpack.c.b16 %v5960, %v5958
      %v5973 = vpack.c.b16 %v5963, %v5961
      %v5974 = vpack.c.b16 %v5964, %v5962
      %v5975 = vpack.c.b16 %v5967, %v5965
      %v5976 = vpack.c.b16 %v5968, %v5966
      %v5982 = vsel %vm5325, %v5970, 0
      %v5985 = vsel %vm5325, %v5972, 0
      %v5988 = vsel %vm5325, %v5974, 0
      %v5991 = vsel %vm5325, %v5976, 0
      %5993 = vmatprep.subr.bf16.mxu0 0
      %5994 = vmatpush1.bf16.msra.mxu0 %v5905
      %5995 = vmatprep.subr.bf16.mxu0 0
      %5996 = vmatpush1.bf16.msra.mxu0 %v5907
      %5997 = vmatprep.subr.bf16.mxu0 0
      %5998 = vmatpush1.bf16.msra.mxu0 %v5909
      %5999 = vmatprep.subr.bf16.mxu0 0
      %6000 = vmatpush1.bf16.msra.mxu0 %v5911
      %6001 = vmatprep.subr.bf16.mxu0 0
      %6002 = vmatpush1.bf16.msra.mxu0 %v5913
      %6003 = vmatprep.subr.bf16.mxu0 0
      %6004 = vmatpush1.bf16.msra.mxu0 %v5915
      %6005 = vmatprep.subr.bf16.mxu0 0
      %6006 = vmatpush1.bf16.msra.mxu0 %v5917
      %6007 = vmatprep.subr.bf16.mxu0 0
      %6008 = vmatpush1.bf16.msra.mxu0 %v5919
      %6009 = vmatprep.subr.bf16.mxu0 0
      %6010 = vmatpush1.bf16.msra.mxu0 %v5921
      %6011 = vmatprep.subr.bf16.mxu0 0
      %6012 = vmatpush1.bf16.msra.mxu0 %v5923
      %6013 = vmatprep.subr.bf16.mxu0 0
      %6014 = vmatpush1.bf16.msra.mxu0 %v5925
      %6015 = vmatprep.subr.bf16.mxu0 0
      %6016 = vmatpush1.bf16.msra.mxu0 %v5927
      %6017 = vmatprep.subr.bf16.mxu0 0
      %6018 = vmatpush1.bf16.msra.mxu0 0
      %6019 = vmatprep.subr.bf16.mxu0 0
      %6020 = vmatpush1.bf16.msra.mxu0 0
      %6021 = vmatprep.subr.bf16.mxu0 0
      %6022 = vmatpush1.bf16.msra.mxu0 0
      %6023 = vmatprep.subr.bf16.mxu0 0
      %6024 = vmatpush1.bf16.msra.mxu0 0
      %6025 = vmatprep.mubr.bf16.mxu0 %v5982
      %6026 = vmatmul.mubr.bf16.gmra.mrb[0].mxu0 %v5969
      %v6027 = vpop.f32.mrb[0].mxu0
      %v6028 = vadd.f32 0.0, %v6027
      %v6029 = vpop.f32.mrb[0].mxu0
      %v6030 = vpop.f32.mrb[0].mxu0
      %v6031 = vadd.f32 0.0, %v6030
      %v6032 = vpop.f32.mrb[0].mxu0
      %6033 = vmatprep.mubr.bf16.mxu0 %v5985
      %6034 = vmatmul.mubr.bf16.gmra.mrb[0].mxu0 %v5971
      %v6035 = vpop.f32.mrb[0].mxu0
      %v6036 = vadd.f32 0.0, %v6035
      %v6037 = vpop.f32.mrb[0].mxu0
      %v6038 = vpop.f32.mrb[0].mxu0
      %v6039 = vadd.f32 0.0, %v6038
      %v6040 = vpop.f32.mrb[0].mxu0
      %6041 = vmatprep.mubr.bf16.mxu0 %v5988
      %6042 = vmatmul.mubr.bf16.gmra.mrb[0].mxu0 %v5973
      %v6043 = vpop.f32.mrb[0].mxu0
      %v6044 = vadd.f32 0.0, %v6043
      %v6045 = vpop.f32.mrb[0].mxu0
      %v6046 = vpop.f32.mrb[0].mxu0
      %v6047 = vadd.f32 0.0, %v6046
      %v6048 = vpop.f32.mrb[0].mxu0
      %6049 = vmatprep.mubr.bf16.mxu0 %v5991
      %6050 = vmatmul.mubr.bf16.gmra.mrb[0].mxu0 %v5975
      %v6051 = vpop.f32.mrb[0].mxu0
      %v6052 = vadd.f32 0.0, %v6051
      %v6053 = vpop.f32.mrb[0].mxu0
      %v6054 = vpop.f32.mrb[0].mxu0
      %v6055 = vadd.f32 0.0, %v6054
      %v6056 = vpop.f32.mrb[0].mxu0
      %6057 = vdwg.mxu0
      %v6066 = vunpack.c.l.b16 %v5928
      %v6067 = vunpack.c.h.b16 %v5928
      %v6068 = vunpack.c.l.b16 %v5929
      %v6069 = vunpack.c.h.b16 %v5929
      %v6070 = vunpack.c.l.b16 %v5930
      %v6071 = vunpack.c.h.b16 %v5930
      %v6072 = vunpack.c.l.b16 %v5931
      %v6073 = vunpack.c.h.b16 %v5931
      %v6074 = vunpack.c.l.b16 %v5932
      %v6075 = vunpack.c.h.b16 %v5932
      %v6076 = vunpack.c.l.b16 %v5933
      %v6077 = vunpack.c.h.b16 %v5933
      %v6078 = vunpack.c.l.b16 %v5934
      %v6079 = vunpack.c.h.b16 %v5934
      %v6080 = vunpack.c.l.b16 %v5935
      %v6081 = vunpack.c.h.b16 %v5935
      %v6082 = vpack.c.b16 %v6068, %v6066
      %v6083 = vpack.c.b16 %v6069, %v6067
      %v6084 = vpack.c.b16 %v6072, %v6070
      %v6085 = vpack.c.b16 %v6073, %v6071
      %v6086 = vpack.c.b16 %v6076, %v6074
      %v6087 = vpack.c.b16 %v6077, %v6075
      %v6088 = vpack.c.b16 %v6080, %v6078
      %v6089 = vpack.c.b16 %v6081, %v6079
      %6118 = vrot.lane.b32.xlu0 %v5904, 1
      %v6119 = vpop.permute.xlu0 %6118
      %6120 = vrot.lane.b32.xlu0 %v5905, 1
      %v6121 = vpop.permute.xlu0 %6120
      %6122 = vrot.lane.b32.xlu0 %v5906, 1
      %v6123 = vpop.permute.xlu0 %6122
      %6124 = vrot.lane.b32.xlu0 %v5907, 1
      %v6125 = vpop.permute.xlu0 %6124
      %6126 = vrot.lane.b32.xlu0 %v5908, 1
      %v6127 = vpop.permute.xlu0 %6126
      %6128 = vrot.lane.b32.xlu0 %v5909, 1
      %v6129 = vpop.permute.xlu0 %6128
      %6130 = vrot.lane.b32.xlu0 %v5910, 1
      %v6131 = vpop.permute.xlu0 %6130
      %6132 = vrot.lane.b32.xlu0 %v5911, 1
      %v6133 = vpop.permute.xlu0 %6132
      %6134 = vrot.lane.b32.xlu0 %v5912, 1
      %v6135 = vpop.permute.xlu0 %6134
      %6136 = vrot.lane.b32.xlu0 %v5913, 1
      %v6137 = vpop.permute.xlu0 %6136
      %6138 = vrot.lane.b32.xlu0 %v5914, 1
      %v6139 = vpop.permute.xlu0 %6138
      %6140 = vrot.lane.b32.xlu0 %v5915, 1
      %v6141 = vpop.permute.xlu0 %6140
      %6142 = vrot.lane.b32.xlu0 %v5916, 1
      %v6143 = vpop.permute.xlu0 %6142
      %6144 = vrot.lane.b32.xlu0 %v5917, 1
      %v6145 = vpop.permute.xlu0 %6144
      %6146 = vrot.lane.b32.xlu0 %v5918, 1
      %v6147 = vpop.permute.xlu0 %6146
      %6148 = vrot.lane.b32.xlu0 %v5919, 1
      %v6149 = vpop.permute.xlu0 %6148
      %6150 = vrot.lane.b32.xlu0 %v5920, 1
      %v6151 = vpop.permute.xlu0 %6150
      %6152 = vrot.lane.b32.xlu0 %v5921, 1
      %v6153 = vpop.permute.xlu0 %6152
      %6154 = vrot.lane.b32.xlu0 %v5922, 1
      %v6155 = vpop.permute.xlu0 %6154
      %6156 = vrot.lane.b32.xlu0 %v5923, 1
      %v6157 = vpop.permute.xlu0 %6156
      %6158 = vrot.lane.b32.xlu0 %v5924, 1
      %v6159 = vpop.permute.xlu0 %6158
      %6160 = vrot.lane.b32.xlu0 %v5925, 1
      %v6161 = vpop.permute.xlu0 %6160
      %6162 = vrot.lane.b32.xlu0 %v5926, 1
      %v6163 = vpop.permute.xlu0 %6162
      %6164 = vrot.lane.b32.xlu0 %v5927, 1
      %v6165 = vpop.permute.xlu0 %6164
      %v6166 = vsel %vm1252, %v6119, %v6121
      %v6167 = vsel %vm1252, %v6123, %v6125
      %v6168 = vsel %vm1252, %v6127, %v6129
      %v6169 = vsel %vm1252, %v6131, %v6133
      %v6170 = vsel %vm1252, %v6135, %v6137
      %v6171 = vsel %vm1252, %v6139, %v6141
      %v6172 = vsel %vm1252, %v6143, %v6145
      %v6173 = vsel %vm1252, %v6147, %v6149
      %v6174 = vsel %vm1252, %v6151, %v6153
      %v6175 = vsel %vm1252, %v6155, %v6157
      %v6176 = vsel %vm1252, %v6159, %v6161
      %v6177 = vsel %vm1252, %v6163, %v6165
      %v6191 = vsel %vm5325, %v6083, 0
      %v6194 = vsel %vm5325, %v6085, 0
      %v6197 = vsel %vm5325, %v6087, 0
      %v6200 = vsel %vm5325, %v6089, 0
      %6202 = vmatprep.subr.bf16.mxu0 0
      %6203 = vmatpush1.bf16.msra.mxu0 %v6166
      %6204 = vmatprep.subr.bf16.mxu0 0
      %6205 = vmatpush1.bf16.msra.mxu0 %v6167
      %6206 = vmatprep.subr.bf16.mxu0 0
      %6207 = vmatpush1.bf16.msra.mxu0 %v6168
      %6208 = vmatprep.subr.bf16.mxu0 0
      %6209 = vmatpush1.bf16.msra.mxu0 %v6169
      %6210 = vmatprep.subr.bf16.mxu0 0
      %6211 = vmatpush1.bf16.msra.mxu0 %v6170
      %6212 = vmatprep.subr.bf16.mxu0 0
      %6213 = vmatpush1.bf16.msra.mxu0 %v6171
      %6214 = vmatprep.subr.bf16.mxu0 0
      %6215 = vmatpush1.bf16.msra.mxu0 %v6172
      %6216 = vmatprep.subr.bf16.mxu0 0
      %6217 = vmatpush1.bf16.msra.mxu0 %v6173
      %6218 = vmatprep.subr.bf16.mxu0 0
      %6219 = vmatpush1.bf16.msra.mxu0 %v6174
      %6220 = vmatprep.subr.bf16.mxu0 0
      %6221 = vmatpush1.bf16.msra.mxu0 %v6175
      %6222 = vmatprep.subr.bf16.mxu0 0
      %6223 = vmatpush1.bf16.msra.mxu0 %v6176
      %6224 = vmatprep.subr.bf16.mxu0 0
      %6225 = vmatpush1.bf16.msra.mxu0 %v6177
      %6226 = vmatprep.subr.bf16.mxu0 0
      %6227 = vmatpush1.bf16.msra.mxu0 0
      %6228 = vmatprep.subr.bf16.mxu0 0
      %6229 = vmatpush1.bf16.msra.mxu0 0
      %6230 = vmatprep.subr.bf16.mxu0 0
      %6231 = vmatpush1.bf16.msra.mxu0 0
      %6232 = vmatprep.subr.bf16.mxu0 0
      %6233 = vmatpush1.bf16.msra.mxu0 0
      %6234 = vmatprep.mubr.bf16.mxu0 %v6191
      %6235 = vmatmul.mubr.bf16.gmra.mrb[0].mxu0 %v6082
      %v6236 = vpop.f32.mrb[0].mxu0
      %v6237 = vadd.f32 %v6028, %v6236
      %v6238 = vpop.f32.mrb[0].mxu0
      %v6239 = vpop.f32.mrb[0].mxu0
      %v6240 = vadd.f32 %v6031, %v6239
      %v6241 = vpop.f32.mrb[0].mxu0
      %6242 = vmatprep.mubr.bf16.mxu0 %v6194
      %6243 = vmatmul.mubr.bf16.gmra.mrb[0].mxu0 %v6084
      %v6244 = vpop.f32.mrb[0].mxu0
      %v6245 = vadd.f32 %v6036, %v6244
      %v6246 = vpop.f32.mrb[0].mxu0
      %v6247 = vpop.f32.mrb[0].mxu0
      %v6248 = vadd.f32 %v6039, %v6247
      %v6249 = vpop.f32.mrb[0].mxu0
      %6250 = vmatprep.mubr.bf16.mxu0 %v6197
      %6251 = vmatmul.mubr.bf16.gmra.mrb[0].mxu0 %v6086
      %v6252 = vpop.f32.mrb[0].mxu0
      %v6253 = vadd.f32 %v6044, %v6252
      %v6254 = vpop.f32.mrb[0].mxu0
      %v6255 = vpop.f32.mrb[0].mxu0
      %v6256 = vadd.f32 %v6047, %v6255
      %v6257 = vpop.f32.mrb[0].mxu0
      %6258 = vmatprep.mubr.bf16.mxu0 %v6200
      %6259 = vmatmul.mubr.bf16.gmra.mrb[0].mxu0 %v6088
      %v6260 = vpop.f32.mrb[0].mxu0
      %v6261 = vadd.f32 %v6052, %v6260
      %v6262 = vpop.f32.mrb[0].mxu0
      %v6263 = vpop.f32.mrb[0].mxu0
      %v6264 = vadd.f32 %v6055, %v6263
      %v6265 = vpop.f32.mrb[0].mxu0
      %6266 = vdwg.mxu0
      %s6267 = scalar_lea.vmem %s6, 128
      %v6268 = vld [vmem:[%s6267] sm:$0xff]
      %v6269 = vld [vmem:[%s6267 + $0x8] sm:$0xff]
      %v6270 = vld [vmem:[%s6267 + $0x10] sm:$0xff]
      %v6271 = vld [vmem:[%s6267 + $0x18] sm:$0xff]
      %v6272 = vld [vmem:[%s6267 + $0x20] sm:$0xff]
      %v6273 = vld [vmem:[%s6267 + $0x28] sm:$0xff]
      %v6274 = vld [vmem:[%s6267 + $0x30] sm:$0xff]
      %v6275 = vld [vmem:[%s6267 + $0x38] sm:$0xff]
      %v6284 = vunpack.c.l.b16 %v6268
      %v6285 = vunpack.c.h.b16 %v6268
      %v6286 = vunpack.c.l.b16 %v6269
      %v6287 = vunpack.c.h.b16 %v6269
      %v6288 = vunpack.c.l.b16 %v6270
      %v6289 = vunpack.c.h.b16 %v6270
      %v6290 = vunpack.c.l.b16 %v6271
      %v6291 = vunpack.c.h.b16 %v6271
      %v6292 = vunpack.c.l.b16 %v6272
      %v6293 = vunpack.c.h.b16 %v6272
      %v6294 = vunpack.c.l.b16 %v6273
      %v6295 = vunpack.c.h.b16 %v6273
      %v6296 = vunpack.c.l.b16 %v6274
      %v6297 = vunpack.c.h.b16 %v6274
      %v6298 = vunpack.c.l.b16 %v6275
      %v6299 = vunpack.c.h.b16 %v6275
      %v6300 = vpack.c.b16 %v6286, %v6284
      %v6301 = vpack.c.b16 %v6287, %v6285
      %v6302 = vpack.c.b16 %v6290, %v6288
      %v6303 = vpack.c.b16 %v6291, %v6289
      %v6304 = vpack.c.b16 %v6294, %v6292
      %v6305 = vpack.c.b16 %v6295, %v6293
      %v6306 = vpack.c.b16 %v6298, %v6296
      %v6307 = vpack.c.b16 %v6299, %v6297
      %6312 = vrot.lane.b32.xlu0 %v5905, 127
      %v6313 = vpop.permute.xlu0 %6312
      %6314 = vrot.lane.b32.xlu0 %v5907, 127
      %v6315 = vpop.permute.xlu0 %6314
      %6316 = vrot.lane.b32.xlu0 %v5909, 127
      %v6317 = vpop.permute.xlu0 %6316
      %6318 = vrot.lane.b32.xlu0 %v5911, 127
      %v6319 = vpop.permute.xlu0 %6318
      %6320 = vrot.lane.b32.xlu0 %v5913, 127
      %v6321 = vpop.permute.xlu0 %6320
      %6322 = vrot.lane.b32.xlu0 %v5915, 127
      %v6323 = vpop.permute.xlu0 %6322
      %6324 = vrot.lane.b32.xlu0 %v5917, 127
      %v6325 = vpop.permute.xlu0 %6324
      %6326 = vrot.lane.b32.xlu0 %v5919, 127
      %v6327 = vpop.permute.xlu0 %6326
      %6328 = vrot.lane.b32.xlu0 %v5921, 127
      %v6329 = vpop.permute.xlu0 %6328
      %6330 = vrot.lane.b32.xlu0 %v5923, 127
      %v6331 = vpop.permute.xlu0 %6330
      %6332 = vrot.lane.b32.xlu0 %v5925, 127
      %v6333 = vpop.permute.xlu0 %6332
      %6334 = vrot.lane.b32.xlu0 %v5927, 127
      %v6335 = vpop.permute.xlu0 %6334
      %v6349 = vsel %vm5325, %v6301, 0
      %v6352 = vsel %vm5325, %v6303, 0
      %v6355 = vsel %vm5325, %v6305, 0
      %v6358 = vsel %vm5325, %v6307, 0
      %6360 = vmatprep.subr.bf16.mxu0 0
      %6361 = vmatpush1.bf16.msra.mxu0 %v6313
      %6362 = vmatprep.subr.bf16.mxu0 0
      %6363 = vmatpush1.bf16.msra.mxu0 %v6315
      %6364 = vmatprep.subr.bf16.mxu0 0
      %6365 = vmatpush1.bf16.msra.mxu0 %v6317
      %6366 = vmatprep.subr.bf16.mxu0 0
      %6367 = vmatpush1.bf16.msra.mxu0 %v6319
      %6368 = vmatprep.subr.bf16.mxu0 0
      %6369 = vmatpush1.bf16.msra.mxu0 %v6321
      %6370 = vmatprep.subr.bf16.mxu0 0
      %6371 = vmatpush1.bf16.msra.mxu0 %v6323
      %6372 = vmatprep.subr.bf16.mxu0 0
      %6373 = vmatpush1.bf16.msra.mxu0 %v6325
      %6374 = vmatprep.subr.bf16.mxu0 0
      %6375 = vmatpush1.bf16.msra.mxu0 %v6327
      %6376 = vmatprep.subr.bf16.mxu0 0
      %6377 = vmatpush1.bf16.msra.mxu0 %v6329
      %6378 = vmatprep.subr.bf16.mxu0 0
      %6379 = vmatpush1.bf16.msra.mxu0 %v6331
      %6380 = vmatprep.subr.bf16.mxu0 0
      %6381 = vmatpush1.bf16.msra.mxu0 %v6333
      %6382 = vmatprep.subr.bf16.mxu0 0
      %6383 = vmatpush1.bf16.msra.mxu0 %v6335
      %6384 = vmatprep.subr.bf16.mxu0 0
      %6385 = vmatpush1.bf16.msra.mxu0 0
      %6386 = vmatprep.subr.bf16.mxu0 0
      %6387 = vmatpush1.bf16.msra.mxu0 0
      %6388 = vmatprep.subr.bf16.mxu0 0
      %6389 = vmatpush1.bf16.msra.mxu0 0
      %6390 = vmatprep.subr.bf16.mxu0 0
      %6391 = vmatpush1.bf16.msra.mxu0 0
      %6392 = vmatprep.mubr.bf16.mxu0 %v6349
      %6393 = vmatmul.mubr.bf16.gmra.mrb[0].mxu0 %v6300
      %v6394 = vpop.f32.mrb[0].mxu0
      %v6395 = vadd.f32 0.0, %v6394
      %v6396 = vpop.f32.mrb[0].mxu0
      %v6397 = vpop.f32.mrb[0].mxu0
      %v6398 = vadd.f32 0.0, %v6397
      %v6399 = vpop.f32.mrb[0].mxu0
      %6400 = vmatprep.mubr.bf16.mxu0 %v6352
      %6401 = vmatmul.mubr.bf16.gmra.mrb[0].mxu0 %v6302
      %v6402 = vpop.f32.mrb[0].mxu0
      %v6403 = vadd.f32 0.0, %v6402
      %v6404 = vpop.f32.mrb[0].mxu0
      %v6405 = vpop.f32.mrb[0].mxu0
      %v6406 = vadd.f32 0.0, %v6405
      %v6407 = vpop.f32.mrb[0].mxu0
      %6408 = vmatprep.mubr.bf16.mxu0 %v6355
      %6409 = vmatmul.mubr.bf16.gmra.mrb[0].mxu0 %v6304
      %v6410 = vpop.f32.mrb[0].mxu0
      %v6411 = vadd.f32 0.0, %v6410
      %v6412 = vpop.f32.mrb[0].mxu0
      %v6413 = vpop.f32.mrb[0].mxu0
      %v6414 = vadd.f32 0.0, %v6413
      %v6415 = vpop.f32.mrb[0].mxu0
      %6416 = vmatprep.mubr.bf16.mxu0 %v6358
      %6417 = vmatmul.mubr.bf16.gmra.mrb[0].mxu0 %v6306
      %v6418 = vpop.f32.mrb[0].mxu0
      %v6419 = vadd.f32 0.0, %v6418
      %v6420 = vpop.f32.mrb[0].mxu0
      %v6421 = vpop.f32.mrb[0].mxu0
      %v6422 = vadd.f32 0.0, %v6421
      %v6423 = vpop.f32.mrb[0].mxu0
      %6424 = vdwg.mxu0
      %v6425 = vadd.f32 %v6237, %v6395
      %v6426 = vadd.f32 %v6240, %v6398
      %v6427 = vadd.f32 %v6245, %v6403
      %v6428 = vadd.f32 %v6248, %v6406
      %v6429 = vadd.f32 %v6253, %v6411
      %v6430 = vadd.f32 %v6256, %v6414
      %v6431 = vadd.f32 %v6261, %v6419
      %v6432 = vadd.f32 %v6264, %v6422
      %v6433 = vld [vmem:[%s16] sm:$0xff]
      %v6434 = vld [vmem:[%s16 + $0x8] sm:$0xff]
      %v6435 = vld [vmem:[%s16 + $0x10] sm:$0xff]
      %v6436 = vld [vmem:[%s16 + $0x18] sm:$0xff]
      %v6437 = vld [vmem:[%s16 + $0x20] sm:$0xff]
      %v6438 = vld [vmem:[%s16 + $0x28] sm:$0xff]
      %v6439 = vld [vmem:[%s16 + $0x30] sm:$0xff]
      %v6440 = vld [vmem:[%s16 + $0x38] sm:$0xff]
      %6442 = vset.pattern.permute.xlu0 0
      %6443 = vperm.xlu0 %6442, %v6433
      %v6444 = vpop.permute.xlu0 %6443
      %6447 = vset.pattern.permute.xlu0 0
      %6448 = vperm.xlu0 %6447, %v6434
      %v6449 = vpop.permute.xlu0 %6448
      %6452 = vset.pattern.permute.xlu0 0
      %6453 = vperm.xlu0 %6452, %v6435
      %v6454 = vpop.permute.xlu0 %6453
      %6457 = vset.pattern.permute.xlu0 0
      %6458 = vperm.xlu0 %6457, %v6436
      %v6459 = vpop.permute.xlu0 %6458
      %6462 = vset.pattern.permute.xlu0 0
      %6463 = vperm.xlu0 %6462, %v6437
      %v6464 = vpop.permute.xlu0 %6463
      %6467 = vset.pattern.permute.xlu0 0
      %6468 = vperm.xlu0 %6467, %v6438
      %v6469 = vpop.permute.xlu0 %6468
      %6472 = vset.pattern.permute.xlu0 0
      %6473 = vperm.xlu0 %6472, %v6439
      %v6474 = vpop.permute.xlu0 %6473
      %6477 = vset.pattern.permute.xlu0 0
      %6478 = vperm.xlu0 %6477, %v6440
      %v6479 = vpop.permute.xlu0 %6478
      %v6481 = vadd.f32 %v6425, %v6444
      %v6482 = vadd.f32 %v6426, %v6449
      %v6483 = vadd.f32 %v6427, %v6454
      %v6484 = vadd.f32 %v6428, %v6459
      %v6485 = vadd.f32 %v6429, %v6464
      %v6486 = vadd.f32 %v6430, %v6469
      %v6487 = vadd.f32 %v6431, %v6474
      %v6488 = vadd.f32 %v6432, %v6479
      %v6489 = vmax.f32 %v6481, 0.0
      %v6490 = vmax.f32 %v6482, 0.0
      %v6491 = vmax.f32 %v6483, 0.0
      %v6492 = vmax.f32 %v6484, 0.0
      %v6493 = vmax.f32 %v6485, 0.0
      %v6494 = vmax.f32 %v6486, 0.0
      %v6495 = vmax.f32 %v6487, 0.0
      %v6496 = vmax.f32 %v6488, 0.0
      %v6497 = vpack.c.bf16 %v6490, %v6489
      %v6498 = vpack.c.bf16 %v6492, %v6491
      %v6499 = vpack.c.bf16 %v6494, %v6493
      %v6500 = vpack.c.bf16 %v6496, %v6495
      %v6501 = vld [vmem:[%s23] sm:$0xf]
      %v6502 = vld [vmem:[%s23 + $0x4] sm:$0xf]
      %v6503 = vld [vmem:[%s23 + $0x8] sm:$0xf]
      %v6504 = vld [vmem:[%s23 + $0xc] sm:$0xf]
      %v6505 = vld [vmem:[%s23 + $0x10] sm:$0x3]
      %v6511 = vunpack.c.l.b16 %v6501
      %v6512 = vunpack.c.l.b16 %v6502
      %v6513 = vunpack.c.l.b16 %v6503
      %v6514 = vunpack.c.l.b16 %v6504
      %v6515 = vunpack.c.l.b16 %v6505
      %v6516 = vpack.c.b16 %v6512, %v6511
      %v6517 = vpack.c.b16 %v6514, %v6513
      %v6518 = vpack.c.b16 %v6515, %v6515
      %v6522 = vsel %vm5233, %v6497, 0
      %v6525 = vsel %vm5233, %v6498, 0
      %v6528 = vsel %vm5233, %v6499, 0
      %v6531 = vsel %vm5233, %v6500, 0
      %v6534 = vsel %vm2488, %v6518, 0
      %6536 = vmatprep.subr.bf16.mxu0 0
      %6537 = vmatpush1.bf16.msra.mxu0 %v6516
      %6538 = vmatprep.subr.bf16.mxu0 0
      %6539 = vmatpush1.bf16.msra.mxu0 %v6517
      %6540 = vmatprep.subr.bf16.mxu0 0
      %6541 = vmatpush1.bf16.msra.mxu0 %v6534
      %6542 = vmatprep.subr.bf16.mxu0 0
      %6543 = vmatpush1.bf16.msra.mxu0 0
      %6544 = vmatprep.subr.bf16.mxu0 0
      %6545 = vmatpush1.bf16.msra.mxu0 0
      %6546 = vmatprep.subr.bf16.mxu0 0
      %6547 = vmatpush1.bf16.msra.mxu0 0
      %6548 = vmatprep.subr.bf16.mxu0 0
      %6549 = vmatpush1.bf16.msra.mxu0 0
      %6550 = vmatprep.subr.bf16.mxu0 0
      %6551 = vmatpush1.bf16.msra.mxu0 0
      %6552 = vmatprep.subr.bf16.mxu0 0
      %6553 = vmatpush1.bf16.msra.mxu0 0
      %6554 = vmatprep.subr.bf16.mxu0 0
      %6555 = vmatpush1.bf16.msra.mxu0 0
      %6556 = vmatprep.subr.bf16.mxu0 0
      %6557 = vmatpush1.bf16.msra.mxu0 0
      %6558 = vmatprep.subr.bf16.mxu0 0
      %6559 = vmatpush1.bf16.msra.mxu0 0
      %6560 = vmatprep.subr.bf16.mxu0 0
      %6561 = vmatpush1.bf16.msra.mxu0 0
      %6562 = vmatprep.subr.bf16.mxu0 0
      %6563 = vmatpush1.bf16.msra.mxu0 0
      %6564 = vmatprep.subr.bf16.mxu0 0
      %6565 = vmatpush1.bf16.msra.mxu0 0
      %6566 = vmatprep.subr.bf16.mxu0 0
      %6567 = vmatpush1.bf16.msra.mxu0 0
      %6568 = vmatprep.mubr.bf16.mxu0 0
      %6569 = vmatmul.mubr.bf16.gmra.mrb[0].mxu0 %v6522
      %v6570 = vpop.f32.mrb[0].mxu0
      %v6571 = vadd.f32 0.0, %v6570
      %v6572 = vpop.f32.mrb[0].mxu0
      %v6573 = vpop.f32.mrb[0].mxu0
      %v6574 = vadd.f32 0.0, %v6573
      %v6575 = vpop.f32.mrb[0].mxu0
      %6576 = vmatprep.mubr.bf16.mxu0 0
      %6577 = vmatmul.mubr.bf16.gmra.mrb[0].mxu0 %v6525
      %v6578 = vpop.f32.mrb[0].mxu0
      %v6579 = vadd.f32 0.0, %v6578
      %v6580 = vpop.f32.mrb[0].mxu0
      %v6581 = vpop.f32.mrb[0].mxu0
      %v6582 = vadd.f32 0.0, %v6581
      %v6583 = vpop.f32.mrb[0].mxu0
      %6584 = vmatprep.mubr.bf16.mxu0 0
      %6585 = vmatmul.mubr.bf16.gmra.mrb[0].mxu0 %v6528
      %v6586 = vpop.f32.mrb[0].mxu0
      %v6587 = vadd.f32 0.0, %v6586
      %v6588 = vpop.f32.mrb[0].mxu0
      %v6589 = vpop.f32.mrb[0].mxu0
      %v6590 = vadd.f32 0.0, %v6589
      %v6591 = vpop.f32.mrb[0].mxu0
      %6592 = vmatprep.mubr.bf16.mxu0 0
      %6593 = vmatmul.mubr.bf16.gmra.mrb[0].mxu0 %v6531
      %v6594 = vpop.f32.mrb[0].mxu0
      %v6595 = vadd.f32 0.0, %v6594
      %v6596 = vpop.f32.mrb[0].mxu0
      %v6597 = vpop.f32.mrb[0].mxu0
      %v6598 = vadd.f32 0.0, %v6597
      %v6599 = vpop.f32.mrb[0].mxu0
      %6600 = vdwg.mxu0
      %v6601 = vpack.c.bf16 %v6574, %v6571
      %v6602 = vpack.c.bf16 %v6582, %v6579
      %v6603 = vpack.c.bf16 %v6590, %v6587
      %v6604 = vpack.c.bf16 %v6598, %v6595
      %6609 = vrot.lane.b32.xlu0 %v6601, 10
      %v6610 = vpop.permute.xlu0 %6609
      %6611 = vrot.lane.b32.xlu0 %v6602, 10
      %v6612 = vpop.permute.xlu0 %6611
      %6613 = vrot.lane.b32.xlu0 %v6603, 10
      %v6614 = vpop.permute.xlu0 %6613
      %6615 = vrot.lane.b32.xlu0 %v6604, 10
      %v6616 = vpop.permute.xlu0 %6615
      %6621 = vst.msk [vmem:[#allocation3 + $0x8] sm:$0xff] %vm3335, %v6610
      %6622 = vst.msk [vmem:[#allocation3 + $0x18] sm:$0xff] %vm3335, %v6612
      %6623 = vst.msk [vmem:[#allocation3 + $0x28] sm:$0xff] %vm3335, %v6614
      %6624 = vst.msk [vmem:[#allocation3 + $0x38] sm:$0xff] %vm3335, %v6616
      %6625 = vst.msk [vmem:[#allocation3 + $0x68] sm:$0xff] %vm3337, %v6601
      %6626 = vst.msk [vmem:[#allocation3 + $0x78] sm:$0xff] %vm3337, %v6602
      %6627 = vst.msk [vmem:[#allocation3 + $0x88] sm:$0xff] %vm3337, %v6603
      %6628 = vst.msk [vmem:[#allocation3 + $0x98] sm:$0xff] %vm3337, %v6604
      %6629 = vrot.lane.b32.xlu0 %v6601, 118
      %v6630 = vpop.permute.xlu0 %6629
      %6631 = vrot.lane.b32.xlu0 %v6602, 118
      %v6632 = vpop.permute.xlu0 %6631
      %6633 = vrot.lane.b32.xlu0 %v6603, 118
      %v6634 = vpop.permute.xlu0 %6633
      %6635 = vrot.lane.b32.xlu0 %v6604, 118
      %v6636 = vpop.permute.xlu0 %6635
      %6641 = vst.msk [vmem:[#allocation3 + $0xc0] sm:$0xff] %vm3342, %v6630
      %6642 = vst.msk [vmem:[#allocation3 + $0xc8] sm:$0xff] %vm3344, %v6630
      %6643 = vst.msk [vmem:[#allocation3 + $0xd0] sm:$0xff] %vm3342, %v6632
      %6644 = vst.msk [vmem:[#allocation3 + $0xd8] sm:$0xff] %vm3344, %v6632
      %6645 = vst.msk [vmem:[#allocation3 + $0xe0] sm:$0xff] %vm3342, %v6634
      %6646 = vst.msk [vmem:[#allocation3 + $0xe8] sm:$0xff] %vm3344, %v6634
      %6647 = vst.msk [vmem:[#allocation3 + $0xf0] sm:$0xff] %vm3342, %v6636
      %6648 = vst.msk [vmem:[#allocation3 + $0xf8] sm:$0xff] %vm3344, %v6636
      %6651 = vrot.lane.b32.xlu0 %v4781, 10
      %v6652 = vpop.permute.xlu0 %6651
      %6653 = vrot.lane.b32.xlu0 %v4782, 10
      %v6654 = vpop.permute.xlu0 %6653
      %6657 = vst.msk [vmem:[#allocation3 + $0x48] sm:$0xff] %vm3335, %v6652
      %6658 = vst.msk [vmem:[#allocation3 + $0x58] sm:$0xff] %vm3335, %v6654
      %6659 = vst.msk [vmem:[#allocation3 + $0xa8] sm:$0xff] %vm3337, %v4781
      %6660 = vst.msk [vmem:[#allocation3 + $0xb8] sm:$0xff] %vm3337, %v4782
      %6661 = vrot.lane.b32.xlu0 %v4781, 118
      %v6662 = vpop.permute.xlu0 %6661
      %6663 = vrot.lane.b32.xlu0 %v4782, 118
      %v6664 = vpop.permute.xlu0 %6663
      %6667 = vst.msk [vmem:[#allocation3 + $0x100] sm:$0xff] %vm3342, %v6662
      %6668 = vst.msk [vmem:[#allocation3 + $0x108] sm:$0xff] %vm3344, %v6662
      %6669 = vst.msk [vmem:[#allocation3 + $0x110] sm:$0xff] %vm3342, %v6664
      %6670 = vst.msk [vmem:[#allocation3 + $0x118] sm:$0xff] %vm3344, %v6664
      %v6671 = vld [vmem:[#allocation3] sm:$0xff]
      %v6672 = vld [vmem:[#allocation3 + $0x8] sm:$0xff]
      %v6673 = vld [vmem:[#allocation3 + $0x10] sm:$0xff]
      %v6674 = vld [vmem:[#allocation3 + $0x18] sm:$0xff]
      %v6675 = vld [vmem:[#allocation3 + $0x20] sm:$0xff]
      %v6676 = vld [vmem:[#allocation3 + $0x28] sm:$0xff]
      %v6677 = vld [vmem:[#allocation3 + $0x30] sm:$0xff]
      %v6678 = vld [vmem:[#allocation3 + $0x38] sm:$0xff]
      %v6679 = vld [vmem:[#allocation3 + $0x40] sm:$0xff]
      %v6680 = vld [vmem:[#allocation3 + $0x48] sm:$0xff]
      %v6681 = vld [vmem:[#allocation3 + $0x50] sm:$0xff]
      %v6682 = vld [vmem:[#allocation3 + $0x58] sm:$0xff]
      %v6683 = vld [vmem:[#allocation3 + $0x60] sm:$0xff]
      %v6684 = vld [vmem:[#allocation3 + $0x68] sm:$0xff]
      %v6685 = vld [vmem:[#allocation3 + $0x70] sm:$0xff]
      %v6686 = vld [vmem:[#allocation3 + $0x78] sm:$0xff]
      %v6687 = vld [vmem:[#allocation3 + $0x80] sm:$0xff]
      %v6688 = vld [vmem:[#allocation3 + $0x88] sm:$0xff]
      %v6689 = vld [vmem:[#allocation3 + $0x90] sm:$0xff]
      %v6690 = vld [vmem:[#allocation3 + $0x98] sm:$0xff]
      %v6691 = vld [vmem:[#allocation3 + $0xa0] sm:$0xff]
      %v6692 = vld [vmem:[#allocation3 + $0xa8] sm:$0xff]
      %v6693 = vld [vmem:[#allocation3 + $0xb0] sm:$0xff]
      %v6694 = vld [vmem:[#allocation3 + $0xb8] sm:$0xff]
      %v6695 = vld [vmem:[#allocation3 + $0xc0] sm:$0xff]
      %v6696 = vld [vmem:[#allocation3 + $0xc8] sm:$0xff]
      %v6697 = vld [vmem:[#allocation3 + $0xd0] sm:$0xff]
      %v6698 = vld [vmem:[#allocation3 + $0xd8] sm:$0xff]
      %v6699 = vld [vmem:[#allocation3 + $0xe0] sm:$0xff]
      %v6700 = vld [vmem:[#allocation3 + $0xe8] sm:$0xff]
      %v6701 = vld [vmem:[#allocation3 + $0xf0] sm:$0xff]
      %v6702 = vld [vmem:[#allocation3 + $0xf8] sm:$0xff]
      %v6703 = vld [vmem:[#allocation3 + $0x100] sm:$0xff]
      %v6704 = vld [vmem:[#allocation3 + $0x108] sm:$0xff]
      %v6705 = vld [vmem:[#allocation3 + $0x110] sm:$0xff]
      %v6706 = vld [vmem:[#allocation3 + $0x118] sm:$0xff]
      %v6707 = vld [vmem:[%s7] sm:$0xff]
      %v6708 = vld [vmem:[%s7 + $0x8] sm:$0xf]
      %v6709 = vld [vmem:[%s7 + $0xc] sm:$0xff]
      %v6710 = vld [vmem:[%s7 + $0x14] sm:$0xf]
      %v6711 = vld [vmem:[%s7 + $0x18] sm:$0xff]
      %v6712 = vld [vmem:[%s7 + $0x20] sm:$0xf]
      %v6713 = vld [vmem:[%s7 + $0x24] sm:$0xff]
      %v6714 = vld [vmem:[%s7 + $0x2c] sm:$0xf]
      %s6715 = scalar_lea.vmem %s7, 48
      %v6716 = vld [vmem:[%s6715] sm:$0xff]
      %v6717 = vld [vmem:[%s6715 + $0x8] sm:$0xf]
      %v6718 = vld [vmem:[%s6715 + $0xc] sm:$0xff]
      %v6719 = vld [vmem:[%s6715 + $0x14] sm:$0xf]
      %v6720 = vld [vmem:[%s6715 + $0x18] sm:$0xff]
      %v6721 = vld [vmem:[%s6715 + $0x20] sm:$0xf]
      %v6722 = vld [vmem:[%s6715 + $0x24] sm:$0xff]
      %v6723 = vld [vmem:[%s6715 + $0x2c] sm:$0xf]
      %v6732 = vunpack.c.l.b16 %v6716
      %v6733 = vunpack.c.h.b16 %v6716
      %v6734 = vunpack.c.l.b16 %v6717
      %v6735 = vunpack.c.l.b16 %v6718
      %v6736 = vunpack.c.h.b16 %v6718
      %v6737 = vunpack.c.l.b16 %v6719
      %v6738 = vunpack.c.l.b16 %v6720
      %v6739 = vunpack.c.h.b16 %v6720
      %v6740 = vunpack.c.l.b16 %v6721
      %v6741 = vunpack.c.l.b16 %v6722
      %v6742 = vunpack.c.h.b16 %v6722
      %v6743 = vunpack.c.l.b16 %v6723
      %v6744 = vpack.c.b16 %v6735, %v6732
      %v6745 = vpack.c.b16 %v6736, %v6733
      %v6746 = vpack.c.b16 %v6737, %v6734
      %v6747 = vpack.c.b16 %v6741, %v6738
      %v6748 = vpack.c.b16 %v6742, %v6739
      %v6749 = vpack.c.b16 %v6743, %v6740
      %v6755 = vsel %vm3429, %v6746, 0
      %v6758 = vsel %vm3429, %v6749, 0
      %6760 = vmatprep.subr.bf16.mxu0 0
      %6761 = vmatpush1.bf16.msra.mxu0 %v6672
      %6762 = vmatprep.subr.bf16.mxu0 0
      %6763 = vmatpush1.bf16.msra.mxu0 %v6674
      %6764 = vmatprep.subr.bf16.mxu0 0
      %6765 = vmatpush1.bf16.msra.mxu0 %v6676
      %6766 = vmatprep.subr.bf16.mxu0 0
      %6767 = vmatpush1.bf16.msra.mxu0 %v6678
      %6768 = vmatprep.subr.bf16.mxu0 0
      %6769 = vmatpush1.bf16.msra.mxu0 %v6680
      %6770 = vmatprep.subr.bf16.mxu0 0
      %6771 = vmatpush1.bf16.msra.mxu0 %v6682
      %6772 = vmatprep.subr.bf16.mxu0 0
      %6773 = vmatpush1.bf16.msra.mxu0 %v6684
      %6774 = vmatprep.subr.bf16.mxu0 0
      %6775 = vmatpush1.bf16.msra.mxu0 %v6686
      %6776 = vmatprep.subr.bf16.mxu0 0
      %6777 = vmatpush1.bf16.msra.mxu0 %v6688
      %6778 = vmatprep.subr.bf16.mxu0 0
      %6779 = vmatpush1.bf16.msra.mxu0 %v6690
      %6780 = vmatprep.subr.bf16.mxu0 0
      %6781 = vmatpush1.bf16.msra.mxu0 %v6692
      %6782 = vmatprep.subr.bf16.mxu0 0
      %6783 = vmatpush1.bf16.msra.mxu0 %v6694
      %6784 = vmatprep.subr.bf16.mxu0 0
      %6785 = vmatpush1.bf16.msra.mxu0 %v6696
      %6786 = vmatprep.subr.bf16.mxu0 0
      %6787 = vmatpush1.bf16.msra.mxu0 %v6698
      %6788 = vmatprep.subr.bf16.mxu0 0
      %6789 = vmatpush1.bf16.msra.mxu0 %v6700
      %6790 = vmatprep.subr.bf16.mxu0 0
      %6791 = vmatpush1.bf16.msra.mxu0 %v6702
      %6792 = vmatprep.mubr.bf16.mxu0 %v6745
      %6793 = vmatmul.mubr.bf16.gmra.mrb[0].mxu0 %v6744
      %v6794 = vpop.f32.mrb[0].mxu0
      %v6795 = vadd.f32 0.0, %v6794
      %v6796 = vpop.f32.mrb[0].mxu0
      %v6797 = vpop.f32.mrb[0].mxu0
      %v6798 = vadd.f32 0.0, %v6797
      %v6799 = vpop.f32.mrb[0].mxu0
      %6800 = vmatprep.mubr.bf16.mxu0 %v6748
      %6801 = vmatmul.mubr.bf16.gmra.mrb[0].mxu0 %v6747
      %v6802 = vpop.f32.mrb[0].mxu0
      %v6803 = vadd.f32 0.0, %v6802
      %v6804 = vpop.f32.mrb[0].mxu0
      %v6805 = vpop.f32.mrb[0].mxu0
      %v6806 = vadd.f32 0.0, %v6805
      %v6807 = vpop.f32.mrb[0].mxu0
      %6808 = vdwg.mxu0
      %6809 = vmatprep.subr.bf16.mxu0 0
      %6810 = vmatpush1.bf16.msra.mxu0 %v6704
      %6811 = vmatprep.subr.bf16.mxu0 0
      %6812 = vmatpush1.bf16.msra.mxu0 %v6706
      %6813 = vmatprep.subr.bf16.mxu0 0
      %6814 = vmatpush1.bf16.msra.mxu0 0
      %6815 = vmatprep.subr.bf16.mxu0 0
      %6816 = vmatpush1.bf16.msra.mxu0 0
      %6817 = vmatprep.subr.bf16.mxu0 0
      %6818 = vmatpush1.bf16.msra.mxu0 0
      %6819 = vmatprep.subr.bf16.mxu0 0
      %6820 = vmatpush1.bf16.msra.mxu0 0
      %6821 = vmatprep.subr.bf16.mxu0 0
      %6822 = vmatpush1.bf16.msra.mxu0 0
      %6823 = vmatprep.subr.bf16.mxu0 0
      %6824 = vmatpush1.bf16.msra.mxu0 0
      %6825 = vmatprep.subr.bf16.mxu0 0
      %6826 = vmatpush1.bf16.msra.mxu0 0
      %6827 = vmatprep.subr.bf16.mxu0 0
      %6828 = vmatpush1.bf16.msra.mxu0 0
      %6829 = vmatprep.subr.bf16.mxu0 0
      %6830 = vmatpush1.bf16.msra.mxu0 0
      %6831 = vmatprep.subr.bf16.mxu0 0
      %6832 = vmatpush1.bf16.msra.mxu0 0
      %6833 = vmatprep.subr.bf16.mxu0 0
      %6834 = vmatpush1.bf16.msra.mxu0 0
      %6835 = vmatprep.subr.bf16.mxu0 0
      %6836 = vmatpush1.bf16.msra.mxu0 0
      %6837 = vmatprep.subr.bf16.mxu0 0
      %6838 = vmatpush1.bf16.msra.mxu0 0
      %6839 = vmatprep.subr.bf16.mxu0 0
      %6840 = vmatpush1.bf16.msra.mxu0 0
      %6841 = vmatprep.mubr.bf16.mxu0 0
      %6842 = vmatmul.mubr.bf16.gmra.mrb[0].mxu0 %v6755
      %v6843 = vpop.f32.mrb[0].mxu0
      %v6844 = vadd.f32 %v6795, %v6843
      %v6845 = vpop.f32.mrb[0].mxu0
      %v6846 = vpop.f32.mrb[0].mxu0
      %v6847 = vadd.f32 %v6798, %v6846
      %v6848 = vpop.f32.mrb[0].mxu0
      %6849 = vmatprep.mubr.bf16.mxu0 0
      %6850 = vmatmul.mubr.bf16.gmra.mrb[0].mxu0 %v6758
      %v6851 = vpop.f32.mrb[0].mxu0
      %v6852 = vadd.f32 %v6803, %v6851
      %v6853 = vpop.f32.mrb[0].mxu0
      %v6854 = vpop.f32.mrb[0].mxu0
      %v6855 = vadd.f32 %v6806, %v6854
      %v6856 = vpop.f32.mrb[0].mxu0
      %6857 = vdwg.mxu0
      %v6866 = vunpack.c.l.b16 %v6707
      %v6867 = vunpack.c.h.b16 %v6707
      %v6868 = vunpack.c.l.b16 %v6708
      %v6869 = vunpack.c.l.b16 %v6709
      %v6870 = vunpack.c.h.b16 %v6709
      %v6871 = vunpack.c.l.b16 %v6710
      %v6872 = vunpack.c.l.b16 %v6711
      %v6873 = vunpack.c.h.b16 %v6711
      %v6874 = vunpack.c.l.b16 %v6712
      %v6875 = vunpack.c.l.b16 %v6713
      %v6876 = vunpack.c.h.b16 %v6713
      %v6877 = vunpack.c.l.b16 %v6714
      %v6878 = vpack.c.b16 %v6869, %v6866
      %v6879 = vpack.c.b16 %v6870, %v6867
      %v6880 = vpack.c.b16 %v6871, %v6868
      %v6881 = vpack.c.b16 %v6875, %v6872
      %v6882 = vpack.c.b16 %v6876, %v6873
      %v6883 = vpack.c.b16 %v6877, %v6874
      %6924 = vrot.lane.b32.xlu0 %v6671, 1
      %v6925 = vpop.permute.xlu0 %6924
      %6926 = vrot.lane.b32.xlu0 %v6672, 1
      %v6927 = vpop.permute.xlu0 %6926
      %6928 = vrot.lane.b32.xlu0 %v6673, 1
      %v6929 = vpop.permute.xlu0 %6928
      %6930 = vrot.lane.b32.xlu0 %v6674, 1
      %v6931 = vpop.permute.xlu0 %6930
      %6932 = vrot.lane.b32.xlu0 %v6675, 1
      %v6933 = vpop.permute.xlu0 %6932
      %6934 = vrot.lane.b32.xlu0 %v6676, 1
      %v6935 = vpop.permute.xlu0 %6934
      %6936 = vrot.lane.b32.xlu0 %v6677, 1
      %v6937 = vpop.permute.xlu0 %6936
      %6938 = vrot.lane.b32.xlu0 %v6678, 1
      %v6939 = vpop.permute.xlu0 %6938
      %6940 = vrot.lane.b32.xlu0 %v6679, 1
      %v6941 = vpop.permute.xlu0 %6940
      %6942 = vrot.lane.b32.xlu0 %v6680, 1
      %v6943 = vpop.permute.xlu0 %6942
      %6944 = vrot.lane.b32.xlu0 %v6681, 1
      %v6945 = vpop.permute.xlu0 %6944
      %6946 = vrot.lane.b32.xlu0 %v6682, 1
      %v6947 = vpop.permute.xlu0 %6946
      %6948 = vrot.lane.b32.xlu0 %v6683, 1
      %v6949 = vpop.permute.xlu0 %6948
      %6950 = vrot.lane.b32.xlu0 %v6684, 1
      %v6951 = vpop.permute.xlu0 %6950
      %6952 = vrot.lane.b32.xlu0 %v6685, 1
      %v6953 = vpop.permute.xlu0 %6952
      %6954 = vrot.lane.b32.xlu0 %v6686, 1
      %v6955 = vpop.permute.xlu0 %6954
      %6956 = vrot.lane.b32.xlu0 %v6687, 1
      %v6957 = vpop.permute.xlu0 %6956
      %6958 = vrot.lane.b32.xlu0 %v6688, 1
      %v6959 = vpop.permute.xlu0 %6958
      %6960 = vrot.lane.b32.xlu0 %v6689, 1
      %v6961 = vpop.permute.xlu0 %6960
      %6962 = vrot.lane.b32.xlu0 %v6690, 1
      %v6963 = vpop.permute.xlu0 %6962
      %6964 = vrot.lane.b32.xlu0 %v6691, 1
      %v6965 = vpop.permute.xlu0 %6964
      %6966 = vrot.lane.b32.xlu0 %v6692, 1
      %v6967 = vpop.permute.xlu0 %6966
      %6968 = vrot.lane.b32.xlu0 %v6693, 1
      %v6969 = vpop.permute.xlu0 %6968
      %6970 = vrot.lane.b32.xlu0 %v6694, 1
      %v6971 = vpop.permute.xlu0 %6970
      %6972 = vrot.lane.b32.xlu0 %v6695, 1
      %v6973 = vpop.permute.xlu0 %6972
      %6974 = vrot.lane.b32.xlu0 %v6696, 1
      %v6975 = vpop.permute.xlu0 %6974
      %6976 = vrot.lane.b32.xlu0 %v6697, 1
      %v6977 = vpop.permute.xlu0 %6976
      %6978 = vrot.lane.b32.xlu0 %v6698, 1
      %v6979 = vpop.permute.xlu0 %6978
      %6980 = vrot.lane.b32.xlu0 %v6699, 1
      %v6981 = vpop.permute.xlu0 %6980
      %6982 = vrot.lane.b32.xlu0 %v6700, 1
      %v6983 = vpop.permute.xlu0 %6982
      %6984 = vrot.lane.b32.xlu0 %v6701, 1
      %v6985 = vpop.permute.xlu0 %6984
      %6986 = vrot.lane.b32.xlu0 %v6702, 1
      %v6987 = vpop.permute.xlu0 %6986
      %6988 = vrot.lane.b32.xlu0 %v6703, 1
      %v6989 = vpop.permute.xlu0 %6988
      %6990 = vrot.lane.b32.xlu0 %v6704, 1
      %v6991 = vpop.permute.xlu0 %6990
      %6992 = vrot.lane.b32.xlu0 %v6705, 1
      %v6993 = vpop.permute.xlu0 %6992
      %6994 = vrot.lane.b32.xlu0 %v6706, 1
      %v6995 = vpop.permute.xlu0 %6994
      %v6996 = vsel %vm1252, %v6925, %v6927
      %v6997 = vsel %vm1252, %v6929, %v6931
      %v6998 = vsel %vm1252, %v6933, %v6935
      %v6999 = vsel %vm1252, %v6937, %v6939
      %v7000 = vsel %vm1252, %v6941, %v6943
      %v7001 = vsel %vm1252, %v6945, %v6947
      %v7002 = vsel %vm1252, %v6949, %v6951
      %v7003 = vsel %vm1252, %v6953, %v6955
      %v7004 = vsel %vm1252, %v6957, %v6959
      %v7005 = vsel %vm1252, %v6961, %v6963
      %v7006 = vsel %vm1252, %v6965, %v6967
      %v7007 = vsel %vm1252, %v6969, %v6971
      %v7008 = vsel %vm1252, %v6973, %v6975
      %v7009 = vsel %vm1252, %v6977, %v6979
      %v7010 = vsel %vm1252, %v6981, %v6983
      %v7011 = vsel %vm1252, %v6985, %v6987
      %v7012 = vsel %vm1252, %v6989, %v6991
      %v7013 = vsel %vm1252, %v6993, %v6995
      %v7033 = vsel %vm3429, %v6880, 0
      %v7036 = vsel %vm3429, %v6883, 0
      %7038 = vmatprep.subr.bf16.mxu0 0
      %7039 = vmatpush1.bf16.msra.mxu0 %v6996
      %7040 = vmatprep.subr.bf16.mxu0 0
      %7041 = vmatpush1.bf16.msra.mxu0 %v6997
      %7042 = vmatprep.subr.bf16.mxu0 0
      %7043 = vmatpush1.bf16.msra.mxu0 %v6998
      %7044 = vmatprep.subr.bf16.mxu0 0
      %7045 = vmatpush1.bf16.msra.mxu0 %v6999
      %7046 = vmatprep.subr.bf16.mxu0 0
      %7047 = vmatpush1.bf16.msra.mxu0 %v7000
      %7048 = vmatprep.subr.bf16.mxu0 0
      %7049 = vmatpush1.bf16.msra.mxu0 %v7001
      %7050 = vmatprep.subr.bf16.mxu0 0
      %7051 = vmatpush1.bf16.msra.mxu0 %v7002
      %7052 = vmatprep.subr.bf16.mxu0 0
      %7053 = vmatpush1.bf16.msra.mxu0 %v7003
      %7054 = vmatprep.subr.bf16.mxu0 0
      %7055 = vmatpush1.bf16.msra.mxu0 %v7004
      %7056 = vmatprep.subr.bf16.mxu0 0
      %7057 = vmatpush1.bf16.msra.mxu0 %v7005
      %7058 = vmatprep.subr.bf16.mxu0 0
      %7059 = vmatpush1.bf16.msra.mxu0 %v7006
      %7060 = vmatprep.subr.bf16.mxu0 0
      %7061 = vmatpush1.bf16.msra.mxu0 %v7007
      %7062 = vmatprep.subr.bf16.mxu0 0
      %7063 = vmatpush1.bf16.msra.mxu0 %v7008
      %7064 = vmatprep.subr.bf16.mxu0 0
      %7065 = vmatpush1.bf16.msra.mxu0 %v7009
      %7066 = vmatprep.subr.bf16.mxu0 0
      %7067 = vmatpush1.bf16.msra.mxu0 %v7010
      %7068 = vmatprep.subr.bf16.mxu0 0
      %7069 = vmatpush1.bf16.msra.mxu0 %v7011
      %7070 = vmatprep.mubr.bf16.mxu0 %v6879
      %7071 = vmatmul.mubr.bf16.gmra.mrb[0].mxu0 %v6878
      %v7072 = vpop.f32.mrb[0].mxu0
      %v7073 = vadd.f32 %v6844, %v7072
      %v7074 = vpop.f32.mrb[0].mxu0
      %v7075 = vpop.f32.mrb[0].mxu0
      %v7076 = vadd.f32 %v6847, %v7075
      %v7077 = vpop.f32.mrb[0].mxu0
      %7078 = vmatprep.mubr.bf16.mxu0 %v6882
      %7079 = vmatmul.mubr.bf16.gmra.mrb[0].mxu0 %v6881
      %v7080 = vpop.f32.mrb[0].mxu0
      %v7081 = vadd.f32 %v6852, %v7080
      %v7082 = vpop.f32.mrb[0].mxu0
      %v7083 = vpop.f32.mrb[0].mxu0
      %v7084 = vadd.f32 %v6855, %v7083
      %v7085 = vpop.f32.mrb[0].mxu0
      %7086 = vdwg.mxu0
      %7087 = vmatprep.subr.bf16.mxu0 0
      %7088 = vmatpush1.bf16.msra.mxu0 %v7012
      %7089 = vmatprep.subr.bf16.mxu0 0
      %7090 = vmatpush1.bf16.msra.mxu0 %v7013
      %7091 = vmatprep.subr.bf16.mxu0 0
      %7092 = vmatpush1.bf16.msra.mxu0 0
      %7093 = vmatprep.subr.bf16.mxu0 0
      %7094 = vmatpush1.bf16.msra.mxu0 0
      %7095 = vmatprep.subr.bf16.mxu0 0
      %7096 = vmatpush1.bf16.msra.mxu0 0
      %7097 = vmatprep.subr.bf16.mxu0 0
      %7098 = vmatpush1.bf16.msra.mxu0 0
      %7099 = vmatprep.subr.bf16.mxu0 0
      %7100 = vmatpush1.bf16.msra.mxu0 0
      %7101 = vmatprep.subr.bf16.mxu0 0
      %7102 = vmatpush1.bf16.msra.mxu0 0
      %7103 = vmatprep.subr.bf16.mxu0 0
      %7104 = vmatpush1.bf16.msra.mxu0 0
      %7105 = vmatprep.subr.bf16.mxu0 0
      %7106 = vmatpush1.bf16.msra.mxu0 0
      %7107 = vmatprep.subr.bf16.mxu0 0
      %7108 = vmatpush1.bf16.msra.mxu0 0
      %7109 = vmatprep.subr.bf16.mxu0 0
      %7110 = vmatpush1.bf16.msra.mxu0 0
      %7111 = vmatprep.subr.bf16.mxu0 0
      %7112 = vmatpush1.bf16.msra.mxu0 0
      %7113 = vmatprep.subr.bf16.mxu0 0
      %7114 = vmatpush1.bf16.msra.mxu0 0
      %7115 = vmatprep.subr.bf16.mxu0 0
      %7116 = vmatpush1.bf16.msra.mxu0 0
      %7117 = vmatprep.subr.bf16.mxu0 0
      %7118 = vmatpush1.bf16.msra.mxu0 0
      %7119 = vmatprep.mubr.bf16.mxu0 0
      %7120 = vmatmul.mubr.bf16.gmra.mrb[0].mxu0 %v7033
      %v7121 = vpop.f32.mrb[0].mxu0
      %v7122 = vadd.f32 %v7073, %v7121
      %v7123 = vpop.f32.mrb[0].mxu0
      %v7124 = vpop.f32.mrb[0].mxu0
      %v7125 = vadd.f32 %v7076, %v7124
      %v7126 = vpop.f32.mrb[0].mxu0
      %7127 = vmatprep.mubr.bf16.mxu0 0
      %7128 = vmatmul.mubr.bf16.gmra.mrb[0].mxu0 %v7036
      %v7129 = vpop.f32.mrb[0].mxu0
      %v7130 = vadd.f32 %v7081, %v7129
      %v7131 = vpop.f32.mrb[0].mxu0
      %v7132 = vpop.f32.mrb[0].mxu0
      %v7133 = vadd.f32 %v7084, %v7132
      %v7134 = vpop.f32.mrb[0].mxu0
      %7135 = vdwg.mxu0
      %s7136 = scalar_lea.vmem %s7, 96
      %v7137 = vld [vmem:[%s7136] sm:$0xff]
      %v7138 = vld [vmem:[%s7136 + $0x8] sm:$0xf]
      %v7139 = vld [vmem:[%s7136 + $0xc] sm:$0xff]
      %v7140 = vld [vmem:[%s7136 + $0x14] sm:$0xf]
      %v7141 = vld [vmem:[%s7136 + $0x18] sm:$0xff]
      %v7142 = vld [vmem:[%s7136 + $0x20] sm:$0xf]
      %v7143 = vld [vmem:[%s7136 + $0x24] sm:$0xff]
      %v7144 = vld [vmem:[%s7136 + $0x2c] sm:$0xf]
      %v7153 = vunpack.c.l.b16 %v7137
      %v7154 = vunpack.c.h.b16 %v7137
      %v7155 = vunpack.c.l.b16 %v7138
      %v7156 = vunpack.c.l.b16 %v7139
      %v7157 = vunpack.c.h.b16 %v7139
      %v7158 = vunpack.c.l.b16 %v7140
      %v7159 = vunpack.c.l.b16 %v7141
      %v7160 = vunpack.c.h.b16 %v7141
      %v7161 = vunpack.c.l.b16 %v7142
      %v7162 = vunpack.c.l.b16 %v7143
      %v7163 = vunpack.c.h.b16 %v7143
      %v7164 = vunpack.c.l.b16 %v7144
      %v7165 = vpack.c.b16 %v7156, %v7153
      %v7166 = vpack.c.b16 %v7157, %v7154
      %v7167 = vpack.c.b16 %v7158, %v7155
      %v7168 = vpack.c.b16 %v7162, %v7159
      %v7169 = vpack.c.b16 %v7163, %v7160
      %v7170 = vpack.c.b16 %v7164, %v7161
      %7175 = vrot.lane.b32.xlu0 %v6672, 127
      %v7176 = vpop.permute.xlu0 %7175
      %7177 = vrot.lane.b32.xlu0 %v6674, 127
      %v7178 = vpop.permute.xlu0 %7177
      %7179 = vrot.lane.b32.xlu0 %v6676, 127
      %v7180 = vpop.permute.xlu0 %7179
      %7181 = vrot.lane.b32.xlu0 %v6678, 127
      %v7182 = vpop.permute.xlu0 %7181
      %7183 = vrot.lane.b32.xlu0 %v6680, 127
      %v7184 = vpop.permute.xlu0 %7183
      %7185 = vrot.lane.b32.xlu0 %v6682, 127
      %v7186 = vpop.permute.xlu0 %7185
      %7187 = vrot.lane.b32.xlu0 %v6684, 127
      %v7188 = vpop.permute.xlu0 %7187
      %7189 = vrot.lane.b32.xlu0 %v6686, 127
      %v7190 = vpop.permute.xlu0 %7189
      %7191 = vrot.lane.b32.xlu0 %v6688, 127
      %v7192 = vpop.permute.xlu0 %7191
      %7193 = vrot.lane.b32.xlu0 %v6690, 127
      %v7194 = vpop.permute.xlu0 %7193
      %7195 = vrot.lane.b32.xlu0 %v6692, 127
      %v7196 = vpop.permute.xlu0 %7195
      %7197 = vrot.lane.b32.xlu0 %v6694, 127
      %v7198 = vpop.permute.xlu0 %7197
      %7199 = vrot.lane.b32.xlu0 %v6696, 127
      %v7200 = vpop.permute.xlu0 %7199
      %7201 = vrot.lane.b32.xlu0 %v6698, 127
      %v7202 = vpop.permute.xlu0 %7201
      %7203 = vrot.lane.b32.xlu0 %v6700, 127
      %v7204 = vpop.permute.xlu0 %7203
      %7205 = vrot.lane.b32.xlu0 %v6702, 127
      %v7206 = vpop.permute.xlu0 %7205
      %7207 = vrot.lane.b32.xlu0 %v6704, 127
      %v7208 = vpop.permute.xlu0 %7207
      %7209 = vrot.lane.b32.xlu0 %v6706, 127
      %v7210 = vpop.permute.xlu0 %7209
      %v7230 = vsel %vm3429, %v7167, 0
      %v7233 = vsel %vm3429, %v7170, 0
      %7235 = vmatprep.subr.bf16.mxu0 0
      %7236 = vmatpush1.bf16.msra.mxu0 %v7176
      %7237 = vmatprep.subr.bf16.mxu0 0
      %7238 = vmatpush1.bf16.msra.mxu0 %v7178
      %7239 = vmatprep.subr.bf16.mxu0 0
      %7240 = vmatpush1.bf16.msra.mxu0 %v7180
      %7241 = vmatprep.subr.bf16.mxu0 0
      %7242 = vmatpush1.bf16.msra.mxu0 %v7182
      %7243 = vmatprep.subr.bf16.mxu0 0
      %7244 = vmatpush1.bf16.msra.mxu0 %v7184
      %7245 = vmatprep.subr.bf16.mxu0 0
      %7246 = vmatpush1.bf16.msra.mxu0 %v7186
      %7247 = vmatprep.subr.bf16.mxu0 0
      %7248 = vmatpush1.bf16.msra.mxu0 %v7188
      %7249 = vmatprep.subr.bf16.mxu0 0
      %7250 = vmatpush1.bf16.msra.mxu0 %v7190
      %7251 = vmatprep.subr.bf16.mxu0 0
      %7252 = vmatpush1.bf16.msra.mxu0 %v7192
      %7253 = vmatprep.subr.bf16.mxu0 0
      %7254 = vmatpush1.bf16.msra.mxu0 %v7194
      %7255 = vmatprep.subr.bf16.mxu0 0
      %7256 = vmatpush1.bf16.msra.mxu0 %v7196
      %7257 = vmatprep.subr.bf16.mxu0 0
      %7258 = vmatpush1.bf16.msra.mxu0 %v7198
      %7259 = vmatprep.subr.bf16.mxu0 0
      %7260 = vmatpush1.bf16.msra.mxu0 %v7200
      %7261 = vmatprep.subr.bf16.mxu0 0
      %7262 = vmatpush1.bf16.msra.mxu0 %v7202
      %7263 = vmatprep.subr.bf16.mxu0 0
      %7264 = vmatpush1.bf16.msra.mxu0 %v7204
      %7265 = vmatprep.subr.bf16.mxu0 0
      %7266 = vmatpush1.bf16.msra.mxu0 %v7206
      %7267 = vmatprep.mubr.bf16.mxu0 %v7166
      %7268 = vmatmul.mubr.bf16.gmra.mrb[0].mxu0 %v7165
      %v7269 = vpop.f32.mrb[0].mxu0
      %v7270 = vadd.f32 0.0, %v7269
      %v7271 = vpop.f32.mrb[0].mxu0
      %v7272 = vpop.f32.mrb[0].mxu0
      %v7273 = vadd.f32 0.0, %v7272
      %v7274 = vpop.f32.mrb[0].mxu0
      %7275 = vmatprep.mubr.bf16.mxu0 %v7169
      %7276 = vmatmul.mubr.bf16.gmra.mrb[0].mxu0 %v7168
      %v7277 = vpop.f32.mrb[0].mxu0
      %v7278 = vadd.f32 0.0, %v7277
      %v7279 = vpop.f32.mrb[0].mxu0
      %v7280 = vpop.f32.mrb[0].mxu0
      %v7281 = vadd.f32 0.0, %v7280
      %v7282 = vpop.f32.mrb[0].mxu0
      %7283 = vdwg.mxu0
      %7284 = vmatprep.subr.bf16.mxu0 0
      %7285 = vmatpush1.bf16.msra.mxu0 %v7208
      %7286 = vmatprep.subr.bf16.mxu0 0
      %7287 = vmatpush1.bf16.msra.mxu0 %v7210
      %7288 = vmatprep.subr.bf16.mxu0 0
      %7289 = vmatpush1.bf16.msra.mxu0 0
      %7290 = vmatprep.subr.bf16.mxu0 0
      %7291 = vmatpush1.bf16.msra.mxu0 0
      %7292 = vmatprep.subr.bf16.mxu0 0
      %7293 = vmatpush1.bf16.msra.mxu0 0
      %7294 = vmatprep.subr.bf16.mxu0 0
      %7295 = vmatpush1.bf16.msra.mxu0 0
      %7296 = vmatprep.subr.bf16.mxu0 0
      %7297 = vmatpush1.bf16.msra.mxu0 0
      %7298 = vmatprep.subr.bf16.mxu0 0
      %7299 = vmatpush1.bf16.msra.mxu0 0
      %7300 = vmatprep.subr.bf16.mxu0 0
      %7301 = vmatpush1.bf16.msra.mxu0 0
      %7302 = vmatprep.subr.bf16.mxu0 0
      %7303 = vmatpush1.bf16.msra.mxu0 0
      %7304 = vmatprep.subr.bf16.mxu0 0
      %7305 = vmatpush1.bf16.msra.mxu0 0
      %7306 = vmatprep.subr.bf16.mxu0 0
      %7307 = vmatpush1.bf16.msra.mxu0 0
      %7308 = vmatprep.subr.bf16.mxu0 0
      %7309 = vmatpush1.bf16.msra.mxu0 0
      %7310 = vmatprep.subr.bf16.mxu0 0
      %7311 = vmatpush1.bf16.msra.mxu0 0
      %7312 = vmatprep.subr.bf16.mxu0 0
      %7313 = vmatpush1.bf16.msra.mxu0 0
      %7314 = vmatprep.subr.bf16.mxu0 0
      %7315 = vmatpush1.bf16.msra.mxu0 0
      %7316 = vmatprep.mubr.bf16.mxu0 0
      %7317 = vmatmul.mubr.bf16.gmra.mrb[0].mxu0 %v7230
      %v7318 = vpop.f32.mrb[0].mxu0
      %v7319 = vadd.f32 %v7270, %v7318
      %v7320 = vpop.f32.mrb[0].mxu0
      %v7321 = vpop.f32.mrb[0].mxu0
      %v7322 = vadd.f32 %v7273, %v7321
      %v7323 = vpop.f32.mrb[0].mxu0
      %7324 = vmatprep.mubr.bf16.mxu0 0
      %7325 = vmatmul.mubr.bf16.gmra.mrb[0].mxu0 %v7233
      %v7326 = vpop.f32.mrb[0].mxu0
      %v7327 = vadd.f32 %v7278, %v7326
      %v7328 = vpop.f32.mrb[0].mxu0
      %v7329 = vpop.f32.mrb[0].mxu0
      %v7330 = vadd.f32 %v7281, %v7329
      %v7331 = vpop.f32.mrb[0].mxu0
      %7332 = vdwg.mxu0
      %v7333 = vadd.f32 %v7122, %v7319
      %v7334 = vadd.f32 %v7125, %v7322
      %v7335 = vadd.f32 %v7130, %v7327
      %v7336 = vadd.f32 %v7133, %v7330
      %v7337 = vld [vmem:[%s17] sm:$0xff]
      %v7338 = vld [vmem:[%s17 + $0x8] sm:$0xff]
      %v7339 = vld [vmem:[%s17 + $0x10] sm:$0xff]
      %v7340 = vld [vmem:[%s17 + $0x18] sm:$0xff]
      %7342 = vset.pattern.permute.xlu0 0
      %7343 = vperm.xlu0 %7342, %v7337
      %v7344 = vpop.permute.xlu0 %7343
      %7347 = vset.pattern.permute.xlu0 0
      %7348 = vperm.xlu0 %7347, %v7338
      %v7349 = vpop.permute.xlu0 %7348
      %7352 = vset.pattern.permute.xlu0 0
      %7353 = vperm.xlu0 %7352, %v7339
      %v7354 = vpop.permute.xlu0 %7353
      %7357 = vset.pattern.permute.xlu0 0
      %7358 = vperm.xlu0 %7357, %v7340
      %v7359 = vpop.permute.xlu0 %7358
      %v7361 = vadd.f32 %v7333, %v7344
      %v7362 = vadd.f32 %v7334, %v7349
      %v7363 = vadd.f32 %v7335, %v7354
      %v7364 = vadd.f32 %v7336, %v7359
      %v7365 = vmax.f32 %v7361, 0.0
      %v7366 = vmax.f32 %v7362, 0.0
      %v7367 = vmax.f32 %v7363, 0.0
      %v7368 = vmax.f32 %v7364, 0.0
      %v7369 = vmul.f32 %v7365, %v4049
      %v7370 = vmul.f32 %v7366, %v4049
      %v7371 = vmul.f32 %v7367, %v4049
      %v7372 = vmul.f32 %v7368, %v4049
      %v7373 = vpack.c.bf16 %v7370, %v7369
      %v7374 = vpack.c.bf16 %v7372, %v7371
      %7377 = vrot.lane.b32.xlu0 %v7373, 10
      %v7378 = vpop.permute.xlu0 %7377
      %7379 = vrot.lane.b32.xlu0 %v7374, 10
      %v7380 = vpop.permute.xlu0 %7379
      %7383 = vst.msk [vmem:[#allocation3 + $0x8] sm:$0xff] %vm3335, %v7378
      %7384 = vst.msk [vmem:[#allocation3 + $0x18] sm:$0xff] %vm3335, %v7380
      %7385 = vst.msk [vmem:[#allocation3 + $0x68] sm:$0xff] %vm3337, %v7373
      %7386 = vst.msk [vmem:[#allocation3 + $0x78] sm:$0xff] %vm3337, %v7374
      %7387 = vrot.lane.b32.xlu0 %v7373, 118
      %v7388 = vpop.permute.xlu0 %7387
      %7389 = vrot.lane.b32.xlu0 %v7374, 118
      %v7390 = vpop.permute.xlu0 %7389
      %7393 = vst.msk [vmem:[#allocation3 + $0xc0] sm:$0xff] %vm3342, %v7388
      %7394 = vst.msk [vmem:[#allocation3 + $0xc8] sm:$0xff] %vm3344, %v7388
      %7395 = vst.msk [vmem:[#allocation3 + $0xd0] sm:$0xff] %vm3342, %v7390
      %7396 = vst.msk [vmem:[#allocation3 + $0xd8] sm:$0xff] %vm3344, %v7390
      %v7397 = vld [vmem:[#allocation3] sm:$0xff]
      %v7398 = vld [vmem:[#allocation3 + $0x8] sm:$0xff]
      %v7399 = vld [vmem:[#allocation3 + $0x10] sm:$0xff]
      %v7400 = vld [vmem:[#allocation3 + $0x18] sm:$0xff]
      %v7401 = vld [vmem:[#allocation3 + $0x20] sm:$0xff]
      %v7402 = vld [vmem:[#allocation3 + $0x28] sm:$0xff]
      %v7403 = vld [vmem:[#allocation3 + $0x30] sm:$0xff]
      %v7404 = vld [vmem:[#allocation3 + $0x38] sm:$0xff]
      %v7405 = vld [vmem:[#allocation3 + $0x40] sm:$0xff]
      %v7406 = vld [vmem:[#allocation3 + $0x48] sm:$0xff]
      %v7407 = vld [vmem:[#allocation3 + $0x50] sm:$0xff]
      %v7408 = vld [vmem:[#allocation3 + $0x58] sm:$0xff]
      %v7409 = vld [vmem:[#allocation3 + $0x60] sm:$0xff]
      %v7410 = vld [vmem:[#allocation3 + $0x68] sm:$0xff]
      %v7411 = vld [vmem:[#allocation3 + $0x70] sm:$0xff]
      %v7412 = vld [vmem:[#allocation3 + $0x78] sm:$0xff]
      %v7413 = vld [vmem:[#allocation3 + $0x80] sm:$0xff]
      %v7414 = vld [vmem:[#allocation3 + $0x88] sm:$0xff]
      %v7415 = vld [vmem:[#allocation3 + $0x90] sm:$0xff]
      %v7416 = vld [vmem:[#allocation3 + $0x98] sm:$0xff]
      %v7417 = vld [vmem:[#allocation3 + $0xa0] sm:$0xff]
      %v7418 = vld [vmem:[#allocation3 + $0xa8] sm:$0xff]
      %v7419 = vld [vmem:[#allocation3 + $0xb0] sm:$0xff]
      %v7420 = vld [vmem:[#allocation3 + $0xb8] sm:$0xff]
      %v7421 = vld [vmem:[#allocation3 + $0xc0] sm:$0xff]
      %v7422 = vld [vmem:[#allocation3 + $0xc8] sm:$0xff]
      %v7423 = vld [vmem:[#allocation3 + $0xd0] sm:$0xff]
      %v7424 = vld [vmem:[#allocation3 + $0xd8] sm:$0xff]
      %v7425 = vld [vmem:[#allocation3 + $0xe0] sm:$0xff]
      %v7426 = vld [vmem:[#allocation3 + $0xe8] sm:$0xff]
      %v7427 = vld [vmem:[#allocation3 + $0xf0] sm:$0xff]
      %v7428 = vld [vmem:[#allocation3 + $0xf8] sm:$0xff]
      %v7429 = vld [vmem:[#allocation3 + $0x100] sm:$0xff]
      %v7430 = vld [vmem:[#allocation3 + $0x108] sm:$0xff]
      %v7431 = vld [vmem:[#allocation3 + $0x110] sm:$0xff]
      %v7432 = vld [vmem:[#allocation3 + $0x118] sm:$0xff]
      %v7433 = vld [vmem:[%s8] sm:$0xff]
      %v7434 = vld [vmem:[%s8 + $0x8] sm:$0xf]
      %v7435 = vld [vmem:[%s8 + $0xc] sm:$0xff]
      %v7436 = vld [vmem:[%s8 + $0x14] sm:$0xf]
      %v7437 = vld [vmem:[%s8 + $0x18] sm:$0xff]
      %v7438 = vld [vmem:[%s8 + $0x20] sm:$0xf]
      %v7439 = vld [vmem:[%s8 + $0x24] sm:$0xff]
      %v7440 = vld [vmem:[%s8 + $0x2c] sm:$0xf]
      %s7441 = scalar_lea.vmem %s8, 48
      %v7442 = vld [vmem:[%s7441] sm:$0xff]
      %v7443 = vld [vmem:[%s7441 + $0x8] sm:$0xf]
      %v7444 = vld [vmem:[%s7441 + $0xc] sm:$0xff]
      %v7445 = vld [vmem:[%s7441 + $0x14] sm:$0xf]
      %v7446 = vld [vmem:[%s7441 + $0x18] sm:$0xff]
      %v7447 = vld [vmem:[%s7441 + $0x20] sm:$0xf]
      %v7448 = vld [vmem:[%s7441 + $0x24] sm:$0xff]
      %v7449 = vld [vmem:[%s7441 + $0x2c] sm:$0xf]
      %v7458 = vunpack.c.l.b16 %v7442
      %v7459 = vunpack.c.h.b16 %v7442
      %v7460 = vunpack.c.l.b16 %v7443
      %v7461 = vunpack.c.l.b16 %v7444
      %v7462 = vunpack.c.h.b16 %v7444
      %v7463 = vunpack.c.l.b16 %v7445
      %v7464 = vunpack.c.l.b16 %v7446
      %v7465 = vunpack.c.h.b16 %v7446
      %v7466 = vunpack.c.l.b16 %v7447
      %v7467 = vunpack.c.l.b16 %v7448
      %v7468 = vunpack.c.h.b16 %v7448
      %v7469 = vunpack.c.l.b16 %v7449
      %v7470 = vpack.c.b16 %v7461, %v7458
      %v7471 = vpack.c.b16 %v7462, %v7459
      %v7472 = vpack.c.b16 %v7463, %v7460
      %v7473 = vpack.c.b16 %v7467, %v7464
      %v7474 = vpack.c.b16 %v7468, %v7465
      %v7475 = vpack.c.b16 %v7469, %v7466
      %v7481 = vsel %vm3429, %v7472, 0
      %v7484 = vsel %vm3429, %v7475, 0
      %7486 = vmatprep.subr.bf16.mxu0 0
      %7487 = vmatpush1.bf16.msra.mxu0 %v7398
      %7488 = vmatprep.subr.bf16.mxu0 0
      %7489 = vmatpush1.bf16.msra.mxu0 %v7400
      %7490 = vmatprep.subr.bf16.mxu0 0
      %7491 = vmatpush1.bf16.msra.mxu0 %v7402
      %7492 = vmatprep.subr.bf16.mxu0 0
      %7493 = vmatpush1.bf16.msra.mxu0 %v7404
      %7494 = vmatprep.subr.bf16.mxu0 0
      %7495 = vmatpush1.bf16.msra.mxu0 %v7406
      %7496 = vmatprep.subr.bf16.mxu0 0
      %7497 = vmatpush1.bf16.msra.mxu0 %v7408
      %7498 = vmatprep.subr.bf16.mxu0 0
      %7499 = vmatpush1.bf16.msra.mxu0 %v7410
      %7500 = vmatprep.subr.bf16.mxu0 0
      %7501 = vmatpush1.bf16.msra.mxu0 %v7412
      %7502 = vmatprep.subr.bf16.mxu0 0
      %7503 = vmatpush1.bf16.msra.mxu0 %v7414
      %7504 = vmatprep.subr.bf16.mxu0 0
      %7505 = vmatpush1.bf16.msra.mxu0 %v7416
      %7506 = vmatprep.subr.bf16.mxu0 0
      %7507 = vmatpush1.bf16.msra.mxu0 %v7418
      %7508 = vmatprep.subr.bf16.mxu0 0
      %7509 = vmatpush1.bf16.msra.mxu0 %v7420
      %7510 = vmatprep.subr.bf16.mxu0 0
      %7511 = vmatpush1.bf16.msra.mxu0 %v7422
      %7512 = vmatprep.subr.bf16.mxu0 0
      %7513 = vmatpush1.bf16.msra.mxu0 %v7424
      %7514 = vmatprep.subr.bf16.mxu0 0
      %7515 = vmatpush1.bf16.msra.mxu0 %v7426
      %7516 = vmatprep.subr.bf16.mxu0 0
      %7517 = vmatpush1.bf16.msra.mxu0 %v7428
      %7518 = vmatprep.mubr.bf16.mxu0 %v7471
      %7519 = vmatmul.mubr.bf16.gmra.mrb[0].mxu0 %v7470
      %v7520 = vpop.f32.mrb[0].mxu0
      %v7521 = vadd.f32 0.0, %v7520
      %v7522 = vpop.f32.mrb[0].mxu0
      %v7523 = vpop.f32.mrb[0].mxu0
      %v7524 = vadd.f32 0.0, %v7523
      %v7525 = vpop.f32.mrb[0].mxu0
      %7526 = vmatprep.mubr.bf16.mxu0 %v7474
      %7527 = vmatmul.mubr.bf16.gmra.mrb[0].mxu0 %v7473
      %v7528 = vpop.f32.mrb[0].mxu0
      %v7529 = vadd.f32 0.0, %v7528
      %v7530 = vpop.f32.mrb[0].mxu0
      %v7531 = vpop.f32.mrb[0].mxu0
      %v7532 = vadd.f32 0.0, %v7531
      %v7533 = vpop.f32.mrb[0].mxu0
      %7534 = vdwg.mxu0
      %7535 = vmatprep.subr.bf16.mxu0 0
      %7536 = vmatpush1.bf16.msra.mxu0 %v7430
      %7537 = vmatprep.subr.bf16.mxu0 0
      %7538 = vmatpush1.bf16.msra.mxu0 %v7432
      %7539 = vmatprep.subr.bf16.mxu0 0
      %7540 = vmatpush1.bf16.msra.mxu0 0
      %7541 = vmatprep.subr.bf16.mxu0 0
      %7542 = vmatpush1.bf16.msra.mxu0 0
      %7543 = vmatprep.subr.bf16.mxu0 0
      %7544 = vmatpush1.bf16.msra.mxu0 0
      %7545 = vmatprep.subr.bf16.mxu0 0
      %7546 = vmatpush1.bf16.msra.mxu0 0
      %7547 = vmatprep.subr.bf16.mxu0 0
      %7548 = vmatpush1.bf16.msra.mxu0 0
      %7549 = vmatprep.subr.bf16.mxu0 0
      %7550 = vmatpush1.bf16.msra.mxu0 0
      %7551 = vmatprep.subr.bf16.mxu0 0
      %7552 = vmatpush1.bf16.msra.mxu0 0
      %7553 = vmatprep.subr.bf16.mxu0 0
      %7554 = vmatpush1.bf16.msra.mxu0 0
      %7555 = vmatprep.subr.bf16.mxu0 0
      %7556 = vmatpush1.bf16.msra.mxu0 0
      %7557 = vmatprep.subr.bf16.mxu0 0
      %7558 = vmatpush1.bf16.msra.mxu0 0
      %7559 = vmatprep.subr.bf16.mxu0 0
      %7560 = vmatpush1.bf16.msra.mxu0 0
      %7561 = vmatprep.subr.bf16.mxu0 0
      %7562 = vmatpush1.bf16.msra.mxu0 0
      %7563 = vmatprep.subr.bf16.mxu0 0
      %7564 = vmatpush1.bf16.msra.mxu0 0
      %7565 = vmatprep.subr.bf16.mxu0 0
      %7566 = vmatpush1.bf16.msra.mxu0 0
      %7567 = vmatprep.mubr.bf16.mxu0 0
      %7568 = vmatmul.mubr.bf16.gmra.mrb[0].mxu0 %v7481
      %v7569 = vpop.f32.mrb[0].mxu0
      %v7570 = vadd.f32 %v7521, %v7569
      %v7571 = vpop.f32.mrb[0].mxu0
      %v7572 = vpop.f32.mrb[0].mxu0
      %v7573 = vadd.f32 %v7524, %v7572
      %v7574 = vpop.f32.mrb[0].mxu0
      %7575 = vmatprep.mubr.bf16.mxu0 0
      %7576 = vmatmul.mubr.bf16.gmra.mrb[0].mxu0 %v7484
      %v7577 = vpop.f32.mrb[0].mxu0
      %v7578 = vadd.f32 %v7529, %v7577
      %v7579 = vpop.f32.mrb[0].mxu0
      %v7580 = vpop.f32.mrb[0].mxu0
      %v7581 = vadd.f32 %v7532, %v7580
      %v7582 = vpop.f32.mrb[0].mxu0
      %7583 = vdwg.mxu0
      %v7592 = vunpack.c.l.b16 %v7433
      %v7593 = vunpack.c.h.b16 %v7433
      %v7594 = vunpack.c.l.b16 %v7434
      %v7595 = vunpack.c.l.b16 %v7435
      %v7596 = vunpack.c.h.b16 %v7435
      %v7597 = vunpack.c.l.b16 %v7436
      %v7598 = vunpack.c.l.b16 %v7437
      %v7599 = vunpack.c.h.b16 %v7437
      %v7600 = vunpack.c.l.b16 %v7438
      %v7601 = vunpack.c.l.b16 %v7439
      %v7602 = vunpack.c.h.b16 %v7439
      %v7603 = vunpack.c.l.b16 %v7440
      %v7604 = vpack.c.b16 %v7595, %v7592
      %v7605 = vpack.c.b16 %v7596, %v7593
      %v7606 = vpack.c.b16 %v7597, %v7594
      %v7607 = vpack.c.b16 %v7601, %v7598
      %v7608 = vpack.c.b16 %v7602, %v7599
      %v7609 = vpack.c.b16 %v7603, %v7600
      %7650 = vrot.lane.b32.xlu0 %v7397, 1
      %v7651 = vpop.permute.xlu0 %7650
      %7652 = vrot.lane.b32.xlu0 %v7398, 1
      %v7653 = vpop.permute.xlu0 %7652
      %7654 = vrot.lane.b32.xlu0 %v7399, 1
      %v7655 = vpop.permute.xlu0 %7654
      %7656 = vrot.lane.b32.xlu0 %v7400, 1
      %v7657 = vpop.permute.xlu0 %7656
      %7658 = vrot.lane.b32.xlu0 %v7401, 1
      %v7659 = vpop.permute.xlu0 %7658
      %7660 = vrot.lane.b32.xlu0 %v7402, 1
      %v7661 = vpop.permute.xlu0 %7660
      %7662 = vrot.lane.b32.xlu0 %v7403, 1
      %v7663 = vpop.permute.xlu0 %7662
      %7664 = vrot.lane.b32.xlu0 %v7404, 1
      %v7665 = vpop.permute.xlu0 %7664
      %7666 = vrot.lane.b32.xlu0 %v7405, 1
      %v7667 = vpop.permute.xlu0 %7666
      %7668 = vrot.lane.b32.xlu0 %v7406, 1
      %v7669 = vpop.permute.xlu0 %7668
      %7670 = vrot.lane.b32.xlu0 %v7407, 1
      %v7671 = vpop.permute.xlu0 %7670
      %7672 = vrot.lane.b32.xlu0 %v7408, 1
      %v7673 = vpop.permute.xlu0 %7672
      %7674 = vrot.lane.b32.xlu0 %v7409, 1
      %v7675 = vpop.permute.xlu0 %7674
      %7676 = vrot.lane.b32.xlu0 %v7410, 1
      %v7677 = vpop.permute.xlu0 %7676
      %7678 = vrot.lane.b32.xlu0 %v7411, 1
      %v7679 = vpop.permute.xlu0 %7678
      %7680 = vrot.lane.b32.xlu0 %v7412, 1
      %v7681 = vpop.permute.xlu0 %7680
      %7682 = vrot.lane.b32.xlu0 %v7413, 1
      %v7683 = vpop.permute.xlu0 %7682
      %7684 = vrot.lane.b32.xlu0 %v7414, 1
      %v7685 = vpop.permute.xlu0 %7684
      %7686 = vrot.lane.b32.xlu0 %v7415, 1
      %v7687 = vpop.permute.xlu0 %7686
      %7688 = vrot.lane.b32.xlu0 %v7416, 1
      %v7689 = vpop.permute.xlu0 %7688
      %7690 = vrot.lane.b32.xlu0 %v7417, 1
      %v7691 = vpop.permute.xlu0 %7690
      %7692 = vrot.lane.b32.xlu0 %v7418, 1
      %v7693 = vpop.permute.xlu0 %7692
      %7694 = vrot.lane.b32.xlu0 %v7419, 1
      %v7695 = vpop.permute.xlu0 %7694
      %7696 = vrot.lane.b32.xlu0 %v7420, 1
      %v7697 = vpop.permute.xlu0 %7696
      %7698 = vrot.lane.b32.xlu0 %v7421, 1
      %v7699 = vpop.permute.xlu0 %7698
      %7700 = vrot.lane.b32.xlu0 %v7422, 1
      %v7701 = vpop.permute.xlu0 %7700
      %7702 = vrot.lane.b32.xlu0 %v7423, 1
      %v7703 = vpop.permute.xlu0 %7702
      %7704 = vrot.lane.b32.xlu0 %v7424, 1
      %v7705 = vpop.permute.xlu0 %7704
      %7706 = vrot.lane.b32.xlu0 %v7425, 1
      %v7707 = vpop.permute.xlu0 %7706
      %7708 = vrot.lane.b32.xlu0 %v7426, 1
      %v7709 = vpop.permute.xlu0 %7708
      %7710 = vrot.lane.b32.xlu0 %v7427, 1
      %v7711 = vpop.permute.xlu0 %7710
      %7712 = vrot.lane.b32.xlu0 %v7428, 1
      %v7713 = vpop.permute.xlu0 %7712
      %7714 = vrot.lane.b32.xlu0 %v7429, 1
      %v7715 = vpop.permute.xlu0 %7714
      %7716 = vrot.lane.b32.xlu0 %v7430, 1
      %v7717 = vpop.permute.xlu0 %7716
      %7718 = vrot.lane.b32.xlu0 %v7431, 1
      %v7719 = vpop.permute.xlu0 %7718
      %7720 = vrot.lane.b32.xlu0 %v7432, 1
      %v7721 = vpop.permute.xlu0 %7720
      %v7722 = vsel %vm1252, %v7651, %v7653
      %v7723 = vsel %vm1252, %v7655, %v7657
      %v7724 = vsel %vm1252, %v7659, %v7661
      %v7725 = vsel %vm1252, %v7663, %v7665
      %v7726 = vsel %vm1252, %v7667, %v7669
      %v7727 = vsel %vm1252, %v7671, %v7673
      %v7728 = vsel %vm1252, %v7675, %v7677
      %v7729 = vsel %vm1252, %v7679, %v7681
      %v7730 = vsel %vm1252, %v7683, %v7685
      %v7731 = vsel %vm1252, %v7687, %v7689
      %v7732 = vsel %vm1252, %v7691, %v7693
      %v7733 = vsel %vm1252, %v7695, %v7697
      %v7734 = vsel %vm1252, %v7699, %v7701
      %v7735 = vsel %vm1252, %v7703, %v7705
      %v7736 = vsel %vm1252, %v7707, %v7709
      %v7737 = vsel %vm1252, %v7711, %v7713
      %v7738 = vsel %vm1252, %v7715, %v7717
      %v7739 = vsel %vm1252, %v7719, %v7721
      %v7759 = vsel %vm3429, %v7606, 0
      %v7762 = vsel %vm3429, %v7609, 0
      %7764 = vmatprep.subr.bf16.mxu0 0
      %7765 = vmatpush1.bf16.msra.mxu0 %v7722
      %7766 = vmatprep.subr.bf16.mxu0 0
      %7767 = vmatpush1.bf16.msra.mxu0 %v7723
      %7768 = vmatprep.subr.bf16.mxu0 0
      %7769 = vmatpush1.bf16.msra.mxu0 %v7724
      %7770 = vmatprep.subr.bf16.mxu0 0
      %7771 = vmatpush1.bf16.msra.mxu0 %v7725
      %7772 = vmatprep.subr.bf16.mxu0 0
      %7773 = vmatpush1.bf16.msra.mxu0 %v7726
      %7774 = vmatprep.subr.bf16.mxu0 0
      %7775 = vmatpush1.bf16.msra.mxu0 %v7727
      %7776 = vmatprep.subr.bf16.mxu0 0
      %7777 = vmatpush1.bf16.msra.mxu0 %v7728
      %7778 = vmatprep.subr.bf16.mxu0 0
      %7779 = vmatpush1.bf16.msra.mxu0 %v7729
      %7780 = vmatprep.subr.bf16.mxu0 0
      %7781 = vmatpush1.bf16.msra.mxu0 %v7730
      %7782 = vmatprep.subr.bf16.mxu0 0
      %7783 = vmatpush1.bf16.msra.mxu0 %v7731
      %7784 = vmatprep.subr.bf16.mxu0 0
      %7785 = vmatpush1.bf16.msra.mxu0 %v7732
      %7786 = vmatprep.subr.bf16.mxu0 0
      %7787 = vmatpush1.bf16.msra.mxu0 %v7733
      %7788 = vmatprep.subr.bf16.mxu0 0
      %7789 = vmatpush1.bf16.msra.mxu0 %v7734
      %7790 = vmatprep.subr.bf16.mxu0 0
      %7791 = vmatpush1.bf16.msra.mxu0 %v7735
      %7792 = vmatprep.subr.bf16.mxu0 0
      %7793 = vmatpush1.bf16.msra.mxu0 %v7736
      %7794 = vmatprep.subr.bf16.mxu0 0
      %7795 = vmatpush1.bf16.msra.mxu0 %v7737
      %7796 = vmatprep.mubr.bf16.mxu0 %v7605
      %7797 = vmatmul.mubr.bf16.gmra.mrb[0].mxu0 %v7604
      %v7798 = vpop.f32.mrb[0].mxu0
      %v7799 = vadd.f32 %v7570, %v7798
      %v7800 = vpop.f32.mrb[0].mxu0
      %v7801 = vpop.f32.mrb[0].mxu0
      %v7802 = vadd.f32 %v7573, %v7801
      %v7803 = vpop.f32.mrb[0].mxu0
      %7804 = vmatprep.mubr.bf16.mxu0 %v7608
      %7805 = vmatmul.mubr.bf16.gmra.mrb[0].mxu0 %v7607
      %v7806 = vpop.f32.mrb[0].mxu0
      %v7807 = vadd.f32 %v7578, %v7806
      %v7808 = vpop.f32.mrb[0].mxu0
      %v7809 = vpop.f32.mrb[0].mxu0
      %v7810 = vadd.f32 %v7581, %v7809
      %v7811 = vpop.f32.mrb[0].mxu0
      %7812 = vdwg.mxu0
      %7813 = vmatprep.subr.bf16.mxu0 0
      %7814 = vmatpush1.bf16.msra.mxu0 %v7738
      %7815 = vmatprep.subr.bf16.mxu0 0
      %7816 = vmatpush1.bf16.msra.mxu0 %v7739
      %7817 = vmatprep.subr.bf16.mxu0 0
      %7818 = vmatpush1.bf16.msra.mxu0 0
      %7819 = vmatprep.subr.bf16.mxu0 0
      %7820 = vmatpush1.bf16.msra.mxu0 0
      %7821 = vmatprep.subr.bf16.mxu0 0
      %7822 = vmatpush1.bf16.msra.mxu0 0
      %7823 = vmatprep.subr.bf16.mxu0 0
      %7824 = vmatpush1.bf16.msra.mxu0 0
      %7825 = vmatprep.subr.bf16.mxu0 0
      %7826 = vmatpush1.bf16.msra.mxu0 0
      %7827 = vmatprep.subr.bf16.mxu0 0
      %7828 = vmatpush1.bf16.msra.mxu0 0
      %7829 = vmatprep.subr.bf16.mxu0 0
      %7830 = vmatpush1.bf16.msra.mxu0 0
      %7831 = vmatprep.subr.bf16.mxu0 0
      %7832 = vmatpush1.bf16.msra.mxu0 0
      %7833 = vmatprep.subr.bf16.mxu0 0
      %7834 = vmatpush1.bf16.msra.mxu0 0
      %7835 = vmatprep.subr.bf16.mxu0 0
      %7836 = vmatpush1.bf16.msra.mxu0 0
      %7837 = vmatprep.subr.bf16.mxu0 0
      %7838 = vmatpush1.bf16.msra.mxu0 0
      %7839 = vmatprep.subr.bf16.mxu0 0
      %7840 = vmatpush1.bf16.msra.mxu0 0
      %7841 = vmatprep.subr.bf16.mxu0 0
      %7842 = vmatpush1.bf16.msra.mxu0 0
      %7843 = vmatprep.subr.bf16.mxu0 0
      %7844 = vmatpush1.bf16.msra.mxu0 0
      %7845 = vmatprep.mubr.bf16.mxu0 0
      %7846 = vmatmul.mubr.bf16.gmra.mrb[0].mxu0 %v7759
      %v7847 = vpop.f32.mrb[0].mxu0
      %v7848 = vadd.f32 %v7799, %v7847
      %v7849 = vpop.f32.mrb[0].mxu0
      %v7850 = vpop.f32.mrb[0].mxu0
      %v7851 = vadd.f32 %v7802, %v7850
      %v7852 = vpop.f32.mrb[0].mxu0
      %7853 = vmatprep.mubr.bf16.mxu0 0
      %7854 = vmatmul.mubr.bf16.gmra.mrb[0].mxu0 %v7762
      %v7855 = vpop.f32.mrb[0].mxu0
      %v7856 = vadd.f32 %v7807, %v7855
      %v7857 = vpop.f32.mrb[0].mxu0
      %v7858 = vpop.f32.mrb[0].mxu0
      %v7859 = vadd.f32 %v7810, %v7858
      %v7860 = vpop.f32.mrb[0].mxu0
      %7861 = vdwg.mxu0
      %s7862 = scalar_lea.vmem %s8, 96
      %v7863 = vld [vmem:[%s7862] sm:$0xff]
      %v7864 = vld [vmem:[%s7862 + $0x8] sm:$0xf]
      %v7865 = vld [vmem:[%s7862 + $0xc] sm:$0xff]
      %v7866 = vld [vmem:[%s7862 + $0x14] sm:$0xf]
      %v7867 = vld [vmem:[%s7862 + $0x18] sm:$0xff]
      %v7868 = vld [vmem:[%s7862 + $0x20] sm:$0xf]
      %v7869 = vld [vmem:[%s7862 + $0x24] sm:$0xff]
      %v7870 = vld [vmem:[%s7862 + $0x2c] sm:$0xf]
      %v7879 = vunpack.c.l.b16 %v7863
      %v7880 = vunpack.c.h.b16 %v7863
      %v7881 = vunpack.c.l.b16 %v7864
      %v7882 = vunpack.c.l.b16 %v7865
      %v7883 = vunpack.c.h.b16 %v7865
      %v7884 = vunpack.c.l.b16 %v7866
      %v7885 = vunpack.c.l.b16 %v7867
      %v7886 = vunpack.c.h.b16 %v7867
      %v7887 = vunpack.c.l.b16 %v7868
      %v7888 = vunpack.c.l.b16 %v7869
      %v7889 = vunpack.c.h.b16 %v7869
      %v7890 = vunpack.c.l.b16 %v7870
      %v7891 = vpack.c.b16 %v7882, %v7879
      %v7892 = vpack.c.b16 %v7883, %v7880
      %v7893 = vpack.c.b16 %v7884, %v7881
      %v7894 = vpack.c.b16 %v7888, %v7885
      %v7895 = vpack.c.b16 %v7889, %v7886
      %v7896 = vpack.c.b16 %v7890, %v7887
      %7901 = vrot.lane.b32.xlu0 %v7398, 127
      %v7902 = vpop.permute.xlu0 %7901
      %7903 = vrot.lane.b32.xlu0 %v7400, 127
      %v7904 = vpop.permute.xlu0 %7903
      %7905 = vrot.lane.b32.xlu0 %v7402, 127
      %v7906 = vpop.permute.xlu0 %7905
      %7907 = vrot.lane.b32.xlu0 %v7404, 127
      %v7908 = vpop.permute.xlu0 %7907
      %7909 = vrot.lane.b32.xlu0 %v7406, 127
      %v7910 = vpop.permute.xlu0 %7909
      %7911 = vrot.lane.b32.xlu0 %v7408, 127
      %v7912 = vpop.permute.xlu0 %7911
      %7913 = vrot.lane.b32.xlu0 %v7410, 127
      %v7914 = vpop.permute.xlu0 %7913
      %7915 = vrot.lane.b32.xlu0 %v7412, 127
      %v7916 = vpop.permute.xlu0 %7915
      %7917 = vrot.lane.b32.xlu0 %v7414, 127
      %v7918 = vpop.permute.xlu0 %7917
      %7919 = vrot.lane.b32.xlu0 %v7416, 127
      %v7920 = vpop.permute.xlu0 %7919
      %7921 = vrot.lane.b32.xlu0 %v7418, 127
      %v7922 = vpop.permute.xlu0 %7921
      %7923 = vrot.lane.b32.xlu0 %v7420, 127
      %v7924 = vpop.permute.xlu0 %7923
      %7925 = vrot.lane.b32.xlu0 %v7422, 127
      %v7926 = vpop.permute.xlu0 %7925
      %7927 = vrot.lane.b32.xlu0 %v7424, 127
      %v7928 = vpop.permute.xlu0 %7927
      %7929 = vrot.lane.b32.xlu0 %v7426, 127
      %v7930 = vpop.permute.xlu0 %7929
      %7931 = vrot.lane.b32.xlu0 %v7428, 127
      %v7932 = vpop.permute.xlu0 %7931
      %7933 = vrot.lane.b32.xlu0 %v7430, 127
      %v7934 = vpop.permute.xlu0 %7933
      %7935 = vrot.lane.b32.xlu0 %v7432, 127
      %v7936 = vpop.permute.xlu0 %7935
      %v7956 = vsel %vm3429, %v7893, 0
      %v7959 = vsel %vm3429, %v7896, 0
      %7961 = vmatprep.subr.bf16.mxu0 0
      %7962 = vmatpush1.bf16.msra.mxu0 %v7902
      %7963 = vmatprep.subr.bf16.mxu0 0
      %7964 = vmatpush1.bf16.msra.mxu0 %v7904
      %7965 = vmatprep.subr.bf16.mxu0 0
      %7966 = vmatpush1.bf16.msra.mxu0 %v7906
      %7967 = vmatprep.subr.bf16.mxu0 0
      %7968 = vmatpush1.bf16.msra.mxu0 %v7908
      %7969 = vmatprep.subr.bf16.mxu0 0
      %7970 = vmatpush1.bf16.msra.mxu0 %v7910
      %7971 = vmatprep.subr.bf16.mxu0 0
      %7972 = vmatpush1.bf16.msra.mxu0 %v7912
      %7973 = vmatprep.subr.bf16.mxu0 0
      %7974 = vmatpush1.bf16.msra.mxu0 %v7914
      %7975 = vmatprep.subr.bf16.mxu0 0
      %7976 = vmatpush1.bf16.msra.mxu0 %v7916
      %7977 = vmatprep.subr.bf16.mxu0 0
      %7978 = vmatpush1.bf16.msra.mxu0 %v7918
      %7979 = vmatprep.subr.bf16.mxu0 0
      %7980 = vmatpush1.bf16.msra.mxu0 %v7920
      %7981 = vmatprep.subr.bf16.mxu0 0
      %7982 = vmatpush1.bf16.msra.mxu0 %v7922
      %7983 = vmatprep.subr.bf16.mxu0 0
      %7984 = vmatpush1.bf16.msra.mxu0 %v7924
      %7985 = vmatprep.subr.bf16.mxu0 0
      %7986 = vmatpush1.bf16.msra.mxu0 %v7926
      %7987 = vmatprep.subr.bf16.mxu0 0
      %7988 = vmatpush1.bf16.msra.mxu0 %v7928
      %7989 = vmatprep.subr.bf16.mxu0 0
      %7990 = vmatpush1.bf16.msra.mxu0 %v7930
      %7991 = vmatprep.subr.bf16.mxu0 0
      %7992 = vmatpush1.bf16.msra.mxu0 %v7932
      %7993 = vmatprep.mubr.bf16.mxu0 %v7892
      %7994 = vmatmul.mubr.bf16.gmra.mrb[0].mxu0 %v7891
      %v7995 = vpop.f32.mrb[0].mxu0
      %v7996 = vadd.f32 0.0, %v7995
      %v7997 = vpop.f32.mrb[0].mxu0
      %v7998 = vpop.f32.mrb[0].mxu0
      %v7999 = vadd.f32 0.0, %v7998
      %v8000 = vpop.f32.mrb[0].mxu0
      %8001 = vmatprep.mubr.bf16.mxu0 %v7895
      %8002 = vmatmul.mubr.bf16.gmra.mrb[0].mxu0 %v7894
      %v8003 = vpop.f32.mrb[0].mxu0
      %v8004 = vadd.f32 0.0, %v8003
      %v8005 = vpop.f32.mrb[0].mxu0
      %v8006 = vpop.f32.mrb[0].mxu0
      %v8007 = vadd.f32 0.0, %v8006
      %v8008 = vpop.f32.mrb[0].mxu0
      %8009 = vdwg.mxu0
      %8010 = vmatprep.subr.bf16.mxu0 0
      %8011 = vmatpush1.bf16.msra.mxu0 %v7934
      %8012 = vmatprep.subr.bf16.mxu0 0
      %8013 = vmatpush1.bf16.msra.mxu0 %v7936
      %8014 = vmatprep.subr.bf16.mxu0 0
      %8015 = vmatpush1.bf16.msra.mxu0 0
      %8016 = vmatprep.subr.bf16.mxu0 0
      %8017 = vmatpush1.bf16.msra.mxu0 0
      %8018 = vmatprep.subr.bf16.mxu0 0
      %8019 = vmatpush1.bf16.msra.mxu0 0
      %8020 = vmatprep.subr.bf16.mxu0 0
      %8021 = vmatpush1.bf16.msra.mxu0 0
      %8022 = vmatprep.subr.bf16.mxu0 0
      %8023 = vmatpush1.bf16.msra.mxu0 0
      %8024 = vmatprep.subr.bf16.mxu0 0
      %8025 = vmatpush1.bf16.msra.mxu0 0
      %8026 = vmatprep.subr.bf16.mxu0 0
      %8027 = vmatpush1.bf16.msra.mxu0 0
      %8028 = vmatprep.subr.bf16.mxu0 0
      %8029 = vmatpush1.bf16.msra.mxu0 0
      %8030 = vmatprep.subr.bf16.mxu0 0
      %8031 = vmatpush1.bf16.msra.mxu0 0
      %8032 = vmatprep.subr.bf16.mxu0 0
      %8033 = vmatpush1.bf16.msra.mxu0 0
      %8034 = vmatprep.subr.bf16.mxu0 0
      %8035 = vmatpush1.bf16.msra.mxu0 0
      %8036 = vmatprep.subr.bf16.mxu0 0
      %8037 = vmatpush1.bf16.msra.mxu0 0
      %8038 = vmatprep.subr.bf16.mxu0 0
      %8039 = vmatpush1.bf16.msra.mxu0 0
      %8040 = vmatprep.subr.bf16.mxu0 0
      %8041 = vmatpush1.bf16.msra.mxu0 0
      %8042 = vmatprep.mubr.bf16.mxu0 0
      %8043 = vmatmul.mubr.bf16.gmra.mrb[0].mxu0 %v7956
      %v8044 = vpop.f32.mrb[0].mxu0
      %v8045 = vadd.f32 %v7996, %v8044
      %v8046 = vpop.f32.mrb[0].mxu0
      %v8047 = vpop.f32.mrb[0].mxu0
      %v8048 = vadd.f32 %v7999, %v8047
      %v8049 = vpop.f32.mrb[0].mxu0
      %8050 = vmatprep.mubr.bf16.mxu0 0
      %8051 = vmatmul.mubr.bf16.gmra.mrb[0].mxu0 %v7959
      %v8052 = vpop.f32.mrb[0].mxu0
      %v8053 = vadd.f32 %v8004, %v8052
      %v8054 = vpop.f32.mrb[0].mxu0
      %v8055 = vpop.f32.mrb[0].mxu0
      %v8056 = vadd.f32 %v8007, %v8055
      %v8057 = vpop.f32.mrb[0].mxu0
      %8058 = vdwg.mxu0
      %v8059 = vadd.f32 %v7848, %v8045
      %v8060 = vadd.f32 %v7851, %v8048
      %v8061 = vadd.f32 %v7856, %v8053
      %v8062 = vadd.f32 %v7859, %v8056
      %v8063 = vld [vmem:[%s18] sm:$0xff]
      %v8064 = vld [vmem:[%s18 + $0x8] sm:$0xff]
      %v8065 = vld [vmem:[%s18 + $0x10] sm:$0xff]
      %v8066 = vld [vmem:[%s18 + $0x18] sm:$0xff]
      %8068 = vset.pattern.permute.xlu0 0
      %8069 = vperm.xlu0 %8068, %v8063
      %v8070 = vpop.permute.xlu0 %8069
      %8073 = vset.pattern.permute.xlu0 0
      %8074 = vperm.xlu0 %8073, %v8064
      %v8075 = vpop.permute.xlu0 %8074
      %8078 = vset.pattern.permute.xlu0 0
      %8079 = vperm.xlu0 %8078, %v8065
      %v8080 = vpop.permute.xlu0 %8079
      %8083 = vset.pattern.permute.xlu0 0
      %8084 = vperm.xlu0 %8083, %v8066
      %v8085 = vpop.permute.xlu0 %8084
      %v8087 = vadd.f32 %v8059, %v8070
      %v8088 = vadd.f32 %v8060, %v8075
      %v8089 = vadd.f32 %v8061, %v8080
      %v8090 = vadd.f32 %v8062, %v8085
      %v8091 = vmax.f32 %v8087, 0.0
      %v8092 = vmax.f32 %v8088, 0.0
      %v8093 = vmax.f32 %v8089, 0.0
      %v8094 = vmax.f32 %v8090, 0.0
      %v8095 = vpack.c.bf16 %v8092, %v8091
      %v8096 = vpack.c.bf16 %v8094, %v8093
      %v8097 = vld [vmem:[%s24] sm:$0xff]
      %v8098 = vld [vmem:[%s24 + $0x8] sm:$0xf]
      %v8099 = vld [vmem:[%s24 + $0xc] sm:$0xff]
      %v8100 = vld [vmem:[%s24 + $0x14] sm:$0xf]
      %v8101 = vld [vmem:[%s24 + $0x18] sm:$0xff]
      %v8102 = vld [vmem:[%s24 + $0x20] sm:$0xf]
      %v8103 = vld [vmem:[%s24 + $0x24] sm:$0xff]
      %v8104 = vld [vmem:[%s24 + $0x2c] sm:$0xf]
      %v8105 = vld [vmem:[%s24 + $0x30] sm:$0xff]
      %v8106 = vld [vmem:[%s24 + $0x38] sm:$0xf]
      %v8107 = vld [vmem:[%s24 + $0x3c] sm:$0xff]
      %v8108 = vld [vmem:[%s24 + $0x44] sm:$0xf]
      %v8109 = vld [vmem:[%s24 + $0x48] sm:$0xff]
      %v8110 = vld [vmem:[%s24 + $0x50] sm:$0xf]
      %v8111 = vld [vmem:[%s24 + $0x54] sm:$0xff]
      %v8112 = vld [vmem:[%s24 + $0x5c] sm:$0xf]
      %v8113 = vld [vmem:[%s24 + $0x60] sm:$0xff]
      %v8114 = vld [vmem:[%s24 + $0x68] sm:$0xf]
      %v8115 = vld [vmem:[%s24 + $0x6c] sm:$0xff]
      %v8116 = vld [vmem:[%s24 + $0x74] sm:$0xf]
      %v8117 = vld [vmem:[%s24 + $0x78] sm:$0xff]
      %v8118 = vld [vmem:[%s24 + $0x80] sm:$0xf]
      %v8119 = vld [vmem:[%s24 + $0x84] sm:$0xff]
      %v8120 = vld [vmem:[%s24 + $0x8c] sm:$0xf]
      %v8121 = vld [vmem:[%s24 + $0x90] sm:$0x33]
      %v8122 = vld [vmem:[%s24 + $0x98] sm:$0x3]
      %v8149 = vunpack.c.l.b16 %v8097
      %v8150 = vunpack.c.h.b16 %v8097
      %v8151 = vunpack.c.l.b16 %v8098
      %v8152 = vunpack.c.l.b16 %v8099
      %v8153 = vunpack.c.h.b16 %v8099
      %v8154 = vunpack.c.l.b16 %v8100
      %v8155 = vunpack.c.l.b16 %v8101
      %v8156 = vunpack.c.h.b16 %v8101
      %v8157 = vunpack.c.l.b16 %v8102
      %v8158 = vunpack.c.l.b16 %v8103
      %v8159 = vunpack.c.h.b16 %v8103
      %v8160 = vunpack.c.l.b16 %v8104
      %v8161 = vunpack.c.l.b16 %v8105
      %v8162 = vunpack.c.h.b16 %v8105
      %v8163 = vunpack.c.l.b16 %v8106
      %v8164 = vunpack.c.l.b16 %v8107
      %v8165 = vunpack.c.h.b16 %v8107
      %v8166 = vunpack.c.l.b16 %v8108
      %v8167 = vunpack.c.l.b16 %v8109
      %v8168 = vunpack.c.h.b16 %v8109
      %v8169 = vunpack.c.l.b16 %v8110
      %v8170 = vunpack.c.l.b16 %v8111
      %v8171 = vunpack.c.h.b16 %v8111
      %v8172 = vunpack.c.l.b16 %v8112
      %v8173 = vunpack.c.l.b16 %v8113
      %v8174 = vunpack.c.h.b16 %v8113
      %v8175 = vunpack.c.l.b16 %v8114
      %v8176 = vunpack.c.l.b16 %v8115
      %v8177 = vunpack.c.h.b16 %v8115
      %v8178 = vunpack.c.l.b16 %v8116
      %v8179 = vunpack.c.l.b16 %v8117
      %v8180 = vunpack.c.h.b16 %v8117
      %v8181 = vunpack.c.l.b16 %v8118
      %v8182 = vunpack.c.l.b16 %v8119
      %v8183 = vunpack.c.h.b16 %v8119
      %v8184 = vunpack.c.l.b16 %v8120
      %v8185 = vunpack.c.l.b16 %v8121
      %v8186 = vunpack.c.h.b16 %v8121
      %v8187 = vunpack.c.l.b16 %v8122
      %v8188 = vpack.c.b16 %v8152, %v8149
      %v8189 = vpack.c.b16 %v8153, %v8150
      %v8190 = vpack.c.b16 %v8154, %v8151
      %v8191 = vpack.c.b16 %v8158, %v8155
      %v8192 = vpack.c.b16 %v8159, %v8156
      %v8193 = vpack.c.b16 %v8160, %v8157
      %v8194 = vpack.c.b16 %v8164, %v8161
      %v8195 = vpack.c.b16 %v8165, %v8162
      %v8196 = vpack.c.b16 %v8166, %v8163
      %v8197 = vpack.c.b16 %v8170, %v8167
      %v8198 = vpack.c.b16 %v8171, %v8168
      %v8199 = vpack.c.b16 %v8172, %v8169
      %v8200 = vpack.c.b16 %v8176, %v8173
      %v8201 = vpack.c.b16 %v8177, %v8174
      %v8202 = vpack.c.b16 %v8178, %v8175
      %v8203 = vpack.c.b16 %v8182, %v8179
      %v8204 = vpack.c.b16 %v8183, %v8180
      %v8205 = vpack.c.b16 %v8184, %v8181
      %v8206 = vpack.c.b16 %v8185, %v8185
      %v8207 = vpack.c.b16 %v8186, %v8186
      %v8208 = vpack.c.b16 %v8187, %v8187
      %v8228 = vsel %vm3337, %v8095, 0
      %v8231 = vsel %vm3337, %v8096, 0
      %v8234 = vsel %vm2488, %v8206, 0
      %v8237 = vsel %vm2488, %v8207, 0
      %v8240 = vsel %vm2488, %v8208, 0
      %8242 = vmatprep.subr.bf16.mxu0 %v8189
      %8243 = vmatpush1.bf16.msra.mxu0 %v8188
      %8244 = vmatprep.subr.bf16.mxu0 %v8192
      %8245 = vmatpush1.bf16.msra.mxu0 %v8191
      %8246 = vmatprep.subr.bf16.mxu0 %v8195
      %8247 = vmatpush1.bf16.msra.mxu0 %v8194
      %8248 = vmatprep.subr.bf16.mxu0 %v8198
      %8249 = vmatpush1.bf16.msra.mxu0 %v8197
      %8250 = vmatprep.subr.bf16.mxu0 %v8201
      %8251 = vmatpush1.bf16.msra.mxu0 %v8200
      %8252 = vmatprep.subr.bf16.mxu0 %v8204
      %8253 = vmatpush1.bf16.msra.mxu0 %v8203
      %8254 = vmatprep.subr.bf16.mxu0 %v8237
      %8255 = vmatpush1.bf16.msra.mxu0 %v8234
      %8256 = vmatprep.subr.bf16.mxu0 0
      %8257 = vmatpush1.bf16.msra.mxu0 0
      %8258 = vmatprep.subr.bf16.mxu0 0
      %8259 = vmatpush1.bf16.msra.mxu0 0
      %8260 = vmatprep.subr.bf16.mxu0 0
      %8261 = vmatpush1.bf16.msra.mxu0 0
      %8262 = vmatprep.subr.bf16.mxu0 0
      %8263 = vmatpush1.bf16.msra.mxu0 0
      %8264 = vmatprep.subr.bf16.mxu0 0
      %8265 = vmatpush1.bf16.msra.mxu0 0
      %8266 = vmatprep.subr.bf16.mxu0 0
      %8267 = vmatpush1.bf16.msra.mxu0 0
      %8268 = vmatprep.subr.bf16.mxu0 0
      %8269 = vmatpush1.bf16.msra.mxu0 0
      %8270 = vmatprep.subr.bf16.mxu0 0
      %8271 = vmatpush1.bf16.msra.mxu0 0
      %8272 = vmatprep.subr.bf16.mxu0 0
      %8273 = vmatpush1.bf16.msra.mxu0 0
      %8274 = vmatprep.mubr.bf16.mxu0 0
      %8275 = vmatmul.mubr.bf16.gmra.mrb[0].mxu0 %v8228
      %v8276 = vpop.f32.mrb[0].mxu0
      %v8277 = vadd.f32 0.0, %v8276
      %v8278 = vpop.f32.mrb[0].mxu0
      %v8279 = vadd.f32 0.0, %v8278
      %v8280 = vpop.f32.mrb[0].mxu0
      %v8281 = vadd.f32 0.0, %v8280
      %v8282 = vpop.f32.mrb[0].mxu0
      %v8283 = vadd.f32 0.0, %v8282
      %8284 = vmatprep.mubr.bf16.mxu0 0
      %8285 = vmatmul.mubr.bf16.gmra.mrb[0].mxu0 %v8231
      %v8286 = vpop.f32.mrb[0].mxu0
      %v8287 = vadd.f32 0.0, %v8286
      %v8288 = vpop.f32.mrb[0].mxu0
      %v8289 = vadd.f32 0.0, %v8288
      %v8290 = vpop.f32.mrb[0].mxu0
      %v8291 = vadd.f32 0.0, %v8290
      %v8292 = vpop.f32.mrb[0].mxu0
      %v8293 = vadd.f32 0.0, %v8292
      %8294 = vdwg.mxu0
      %8295 = vmatprep.subr.bf16.mxu0 0
      %8296 = vmatpush1.bf16.msra.mxu0 %v8190
      %8297 = vmatprep.subr.bf16.mxu0 0
      %8298 = vmatpush1.bf16.msra.mxu0 %v8193
      %8299 = vmatprep.subr.bf16.mxu0 0
      %8300 = vmatpush1.bf16.msra.mxu0 %v8196
      %8301 = vmatprep.subr.bf16.mxu0 0
      %8302 = vmatpush1.bf16.msra.mxu0 %v8199
      %8303 = vmatprep.subr.bf16.mxu0 0
      %8304 = vmatpush1.bf16.msra.mxu0 %v8202
      %8305 = vmatprep.subr.bf16.mxu0 0
      %8306 = vmatpush1.bf16.msra.mxu0 %v8205
      %8307 = vmatprep.subr.bf16.mxu0 0
      %8308 = vmatpush1.bf16.msra.mxu0 %v8240
      %8309 = vmatprep.subr.bf16.mxu0 0
      %8310 = vmatpush1.bf16.msra.mxu0 0
      %8311 = vmatprep.subr.bf16.mxu0 0
      %8312 = vmatpush1.bf16.msra.mxu0 0
      %8313 = vmatprep.subr.bf16.mxu0 0
      %8314 = vmatpush1.bf16.msra.mxu0 0
      %8315 = vmatprep.subr.bf16.mxu0 0
      %8316 = vmatpush1.bf16.msra.mxu0 0
      %8317 = vmatprep.subr.bf16.mxu0 0
      %8318 = vmatpush1.bf16.msra.mxu0 0
      %8319 = vmatprep.subr.bf16.mxu0 0
      %8320 = vmatpush1.bf16.msra.mxu0 0
      %8321 = vmatprep.subr.bf16.mxu0 0
      %8322 = vmatpush1.bf16.msra.mxu0 0
      %8323 = vmatprep.subr.bf16.mxu0 0
      %8324 = vmatpush1.bf16.msra.mxu0 0
      %8325 = vmatprep.subr.bf16.mxu0 0
      %8326 = vmatpush1.bf16.msra.mxu0 0
      %8327 = vmatprep.mubr.bf16.mxu0 0
      %8328 = vmatmul.mubr.bf16.gmra.mrb[0].mxu0 %v8228
      %v8329 = vpop.f32.mrb[0].mxu0
      %v8330 = vadd.f32 0.0, %v8329
      %v8331 = vpop.f32.mrb[0].mxu0
      %v8332 = vpop.f32.mrb[0].mxu0
      %v8333 = vadd.f32 0.0, %v8332
      %v8334 = vpop.f32.mrb[0].mxu0
      %8335 = vmatprep.mubr.bf16.mxu0 0
      %8336 = vmatmul.mubr.bf16.gmra.mrb[0].mxu0 %v8231
      %v8337 = vpop.f32.mrb[0].mxu0
      %v8338 = vadd.f32 0.0, %v8337
      %v8339 = vpop.f32.mrb[0].mxu0
      %v8340 = vpop.f32.mrb[0].mxu0
      %v8341 = vadd.f32 0.0, %v8340
      %v8342 = vpop.f32.mrb[0].mxu0
      %8343 = vdwg.mxu0
      %v8344 = vpack.c.bf16 %v8281, %v8277
      %v8345 = vpack.c.bf16 %v8283, %v8279
      %v8346 = vpack.c.bf16 %v8333, %v8330
      %v8347 = vpack.c.bf16 %v8291, %v8287
      %v8348 = vpack.c.bf16 %v8293, %v8289
      %v8349 = vpack.c.bf16 %v8341, %v8338
      %8356 = vrot.lane.b32.xlu0 %v8344, 18
      %v8357 = vpop.permute.xlu0 %8356
      %8358 = vrot.lane.b32.xlu0 %v8345, 18
      %v8359 = vpop.permute.xlu0 %8358
      %8360 = vrot.lane.b32.xlu0 %v8346, 18
      %v8361 = vpop.permute.xlu0 %8360
      %8362 = vrot.lane.b32.xlu0 %v8347, 18
      %v8363 = vpop.permute.xlu0 %8362
      %8364 = vrot.lane.b32.xlu0 %v8348, 18
      %v8365 = vpop.permute.xlu0 %8364
      %8366 = vrot.lane.b32.xlu0 %v8349, 18
      %v8367 = vpop.permute.xlu0 %8366
      %v8368 = vsel %vm963, %v8357, %v8359
      %v8369 = vsel %vm963, %v8359, %v8361
      %v8370 = vsel %vm963, %v8363, %v8365
      %v8371 = vsel %vm963, %v8365, %v8367
      %8378 = vst.msk [vmem:[#allocation2 + $0x8] sm:$0xff] %vm1662, %v8357
      %8379 = vst [vmem:[#allocation2 + $0x10] sm:$0xff] %v8368
      %8380 = vst.msk [vmem:[#allocation2 + $0x18] sm:$0xff] %vm1665, %v8369
      %8381 = vst.msk [vmem:[#allocation2 + $0x28] sm:$0xff] %vm1662, %v8363
      %8382 = vst [vmem:[#allocation2 + $0x30] sm:$0xff] %v8370
      %8383 = vst.msk [vmem:[#allocation2 + $0x38] sm:$0xff] %vm1665, %v8371
      %8384 = vst [vmem:[#allocation2 + $0x68] sm:$0xff] %v8344
      %8385 = vst [vmem:[#allocation2 + $0x70] sm:$0xff] %v8345
      %8386 = vst.msk [vmem:[#allocation2 + $0x78] sm:$0xff] %vm1669, %v8346
      %8387 = vst [vmem:[#allocation2 + $0x88] sm:$0xff] %v8347
      %8388 = vst [vmem:[#allocation2 + $0x90] sm:$0xff] %v8348
      %8389 = vst.msk [vmem:[#allocation2 + $0x98] sm:$0xff] %vm1669, %v8349
      %8390 = vrot.lane.b32.xlu0 %v8344, 110
      %v8391 = vpop.permute.xlu0 %8390
      %8392 = vrot.lane.b32.xlu0 %v8345, 110
      %v8393 = vpop.permute.xlu0 %8392
      %8394 = vrot.lane.b32.xlu0 %v8346, 110
      %v8395 = vpop.permute.xlu0 %8394
      %8396 = vrot.lane.b32.xlu0 %v8347, 110
      %v8397 = vpop.permute.xlu0 %8396
      %8398 = vrot.lane.b32.xlu0 %v8348, 110
      %v8399 = vpop.permute.xlu0 %8398
      %8400 = vrot.lane.b32.xlu0 %v8349, 110
      %v8401 = vpop.permute.xlu0 %8400
      %v8402 = vsel %vm984, %v8391, %v8393
      %v8403 = vsel %vm984, %v8393, %v8395
      %v8404 = vsel %vm984, %v8397, %v8399
      %v8405 = vsel %vm984, %v8399, %v8401
      %8414 = vst.msk [vmem:[#allocation2 + $0xc0] sm:$0xff] %vm1683, %v8391
      %8415 = vst [vmem:[#allocation2 + $0xc8] sm:$0xff] %v8402
      %8416 = vst [vmem:[#allocation2 + $0xd0] sm:$0xff] %v8403
      %8417 = vst.msk [vmem:[#allocation2 + $0xd8] sm:$0xff] %vm1687, %v8395
      %8418 = vst.msk [vmem:[#allocation2 + $0xe0] sm:$0xff] %vm1683, %v8397
      %8419 = vst [vmem:[#allocation2 + $0xe8] sm:$0xff] %v8404
      %8420 = vst [vmem:[#allocation2 + $0xf0] sm:$0xff] %v8405
      %8421 = vst.msk [vmem:[#allocation2 + $0xf8] sm:$0xff] %vm1687, %v8401
      %8425 = vrot.lane.b32.xlu0 %v2318, 18
      %v8426 = vpop.permute.xlu0 %8425
      %8427 = vrot.lane.b32.xlu0 %v2319, 18
      %v8428 = vpop.permute.xlu0 %8427
      %8429 = vrot.lane.b32.xlu0 %v2320, 18
      %v8430 = vpop.permute.xlu0 %8429
      %v8431 = vsel %vm963, %v8426, %v8428
      %v8432 = vsel %vm963, %v8428, %v8430
      %8436 = vst.msk [vmem:[#allocation2 + $0x48] sm:$0xff] %vm1662, %v8426
      %8437 = vst [vmem:[#allocation2 + $0x50] sm:$0xff] %v8431
      %8438 = vst.msk [vmem:[#allocation2 + $0x58] sm:$0xff] %vm1665, %v8432
      %8439 = vst [vmem:[#allocation2 + $0xa8] sm:$0xff] %v2318
      %8440 = vst [vmem:[#allocation2 + $0xb0] sm:$0xff] %v2319
      %8441 = vst.msk [vmem:[#allocation2 + $0xb8] sm:$0xff] %vm1669, %v2320
      %8442 = vrot.lane.b32.xlu0 %v2318, 110
      %v8443 = vpop.permute.xlu0 %8442
      %8444 = vrot.lane.b32.xlu0 %v2319, 110
      %v8445 = vpop.permute.xlu0 %8444
      %8446 = vrot.lane.b32.xlu0 %v2320, 110
      %v8447 = vpop.permute.xlu0 %8446
      %v8448 = vsel %vm984, %v8443, %v8445
      %v8449 = vsel %vm984, %v8445, %v8447
      %8454 = vst.msk [vmem:[#allocation2 + $0x100] sm:$0xff] %vm1683, %v8443
      %8455 = vst [vmem:[#allocation2 + $0x108] sm:$0xff] %v8448
      %8456 = vst [vmem:[#allocation2 + $0x110] sm:$0xff] %v8449
      %8457 = vst.msk [vmem:[#allocation2 + $0x118] sm:$0xff] %vm1687, %v8447
      %v8458 = vld [vmem:[#allocation2] sm:$0xff]
      %v8459 = vld [vmem:[#allocation2 + $0x8] sm:$0xff]
      %v8460 = vld [vmem:[#allocation2 + $0x10] sm:$0xff]
      %v8461 = vld [vmem:[#allocation2 + $0x18] sm:$0xff]
      %v8462 = vld [vmem:[#allocation2 + $0x20] sm:$0xff]
      %v8463 = vld [vmem:[#allocation2 + $0x28] sm:$0xff]
      %v8464 = vld [vmem:[#allocation2 + $0x30] sm:$0xff]
      %v8465 = vld [vmem:[#allocation2 + $0x38] sm:$0xff]
      %v8466 = vld [vmem:[#allocation2 + $0x40] sm:$0xff]
      %v8467 = vld [vmem:[#allocation2 + $0x48] sm:$0xff]
      %v8468 = vld [vmem:[#allocation2 + $0x50] sm:$0xff]
      %v8469 = vld [vmem:[#allocation2 + $0x58] sm:$0xff]
      %v8470 = vld [vmem:[#allocation2 + $0x60] sm:$0xff]
      %v8471 = vld [vmem:[#allocation2 + $0x68] sm:$0xff]
      %v8472 = vld [vmem:[#allocation2 + $0x70] sm:$0xff]
      %v8473 = vld [vmem:[#allocation2 + $0x78] sm:$0xff]
      %v8474 = vld [vmem:[#allocation2 + $0x80] sm:$0xff]
      %v8475 = vld [vmem:[#allocation2 + $0x88] sm:$0xff]
      %v8476 = vld [vmem:[#allocation2 + $0x90] sm:$0xff]
      %v8477 = vld [vmem:[#allocation2 + $0x98] sm:$0xff]
      %v8478 = vld [vmem:[#allocation2 + $0xa0] sm:$0xff]
      %v8479 = vld [vmem:[#allocation2 + $0xa8] sm:$0xff]
      %v8480 = vld [vmem:[#allocation2 + $0xb0] sm:$0xff]
      %v8481 = vld [vmem:[#allocation2 + $0xb8] sm:$0xff]
      %v8482 = vld [vmem:[#allocation2 + $0xc0] sm:$0xff]
      %v8483 = vld [vmem:[#allocation2 + $0xc8] sm:$0xff]
      %v8484 = vld [vmem:[#allocation2 + $0xd0] sm:$0xff]
      %v8485 = vld [vmem:[#allocation2 + $0xd8] sm:$0xff]
      %v8486 = vld [vmem:[#allocation2 + $0xe0] sm:$0xff]
      %v8487 = vld [vmem:[#allocation2 + $0xe8] sm:$0xff]
      %v8488 = vld [vmem:[#allocation2 + $0xf0] sm:$0xff]
      %v8489 = vld [vmem:[#allocation2 + $0xf8] sm:$0xff]
      %v8490 = vld [vmem:[#allocation2 + $0x100] sm:$0xff]
      %v8491 = vld [vmem:[#allocation2 + $0x108] sm:$0xff]
      %v8492 = vld [vmem:[#allocation2 + $0x110] sm:$0xff]
      %v8493 = vld [vmem:[#allocation2 + $0x118] sm:$0xff]
      %v8494 = vld [vmem:[%s9] sm:$0xff]
      %v8495 = vld [vmem:[%s9 + $0x8] sm:$0xff]
      %s8496 = scalar_lea.vmem %s9, 16
      %v8497 = vld [vmem:[%s8496] sm:$0xff]
      %v8498 = vld [vmem:[%s8496 + $0x8] sm:$0xff]
      %v8501 = vunpack.c.l.b16 %v8497
      %v8502 = vunpack.c.h.b16 %v8497
      %v8503 = vunpack.c.l.b16 %v8498
      %v8504 = vunpack.c.h.b16 %v8498
      %v8505 = vpack.c.b16 %v8503, %v8501
      %v8506 = vpack.c.b16 %v8504, %v8502
      %v8509 = vsel %vm1047, %v8506, 0
      %8511 = vmatprep.subr.bf16.mxu0 %v8460
      %8512 = vmatpush1.bf16.msra.mxu0 %v8459
      %8513 = vmatprep.subr.bf16.mxu0 %v8464
      %8514 = vmatpush1.bf16.msra.mxu0 %v8463
      %8515 = vmatprep.subr.bf16.mxu0 %v8468
      %8516 = vmatpush1.bf16.msra.mxu0 %v8467
      %8517 = vmatprep.subr.bf16.mxu0 %v8472
      %8518 = vmatpush1.bf16.msra.mxu0 %v8471
      %8519 = vmatprep.subr.bf16.mxu0 %v8476
      %8520 = vmatpush1.bf16.msra.mxu0 %v8475
      %8521 = vmatprep.subr.bf16.mxu0 %v8480
      %8522 = vmatpush1.bf16.msra.mxu0 %v8479
      %8523 = vmatprep.subr.bf16.mxu0 %v8484
      %8524 = vmatpush1.bf16.msra.mxu0 %v8483
      %8525 = vmatprep.subr.bf16.mxu0 %v8488
      %8526 = vmatpush1.bf16.msra.mxu0 %v8487
      %8527 = vmatprep.subr.bf16.mxu0 %v8492
      %8528 = vmatpush1.bf16.msra.mxu0 %v8491
      %8529 = vmatprep.subr.bf16.mxu0 0
      %8530 = vmatpush1.bf16.msra.mxu0 0
      %8531 = vmatprep.subr.bf16.mxu0 0
      %8532 = vmatpush1.bf16.msra.mxu0 0
      %8533 = vmatprep.subr.bf16.mxu0 0
      %8534 = vmatpush1.bf16.msra.mxu0 0
      %8535 = vmatprep.subr.bf16.mxu0 0
      %8536 = vmatpush1.bf16.msra.mxu0 0
      %8537 = vmatprep.subr.bf16.mxu0 0
      %8538 = vmatpush1.bf16.msra.mxu0 0
      %8539 = vmatprep.subr.bf16.mxu0 0
      %8540 = vmatpush1.bf16.msra.mxu0 0
      %8541 = vmatprep.subr.bf16.mxu0 0
      %8542 = vmatpush1.bf16.msra.mxu0 0
      %8543 = vmatprep.mubr.bf16.mxu0 %v8509
      %8544 = vmatmul.mubr.bf16.gmra.mrb[0].mxu0 %v8505
      %v8545 = vpop.f32.mrb[0].mxu0
      %v8546 = vadd.f32 0.0, %v8545
      %v8547 = vpop.f32.mrb[0].mxu0
      %v8548 = vadd.f32 0.0, %v8547
      %v8549 = vpop.f32.mrb[0].mxu0
      %v8550 = vadd.f32 0.0, %v8549
      %v8551 = vpop.f32.mrb[0].mxu0
      %v8552 = vadd.f32 0.0, %v8551
      %8553 = vdwg.mxu0
      %8554 = vmatprep.subr.bf16.mxu0 0
      %8555 = vmatpush1.bf16.msra.mxu0 %v8461
      %8556 = vmatprep.subr.bf16.mxu0 0
      %8557 = vmatpush1.bf16.msra.mxu0 %v8465
      %8558 = vmatprep.subr.bf16.mxu0 0
      %8559 = vmatpush1.bf16.msra.mxu0 %v8469
      %8560 = vmatprep.subr.bf16.mxu0 0
      %8561 = vmatpush1.bf16.msra.mxu0 %v8473
      %8562 = vmatprep.subr.bf16.mxu0 0
      %8563 = vmatpush1.bf16.msra.mxu0 %v8477
      %8564 = vmatprep.subr.bf16.mxu0 0
      %8565 = vmatpush1.bf16.msra.mxu0 %v8481
      %8566 = vmatprep.subr.bf16.mxu0 0
      %8567 = vmatpush1.bf16.msra.mxu0 %v8485
      %8568 = vmatprep.subr.bf16.mxu0 0
      %8569 = vmatpush1.bf16.msra.mxu0 %v8489
      %8570 = vmatprep.subr.bf16.mxu0 0
      %8571 = vmatpush1.bf16.msra.mxu0 %v8493
      %8572 = vmatprep.subr.bf16.mxu0 0
      %8573 = vmatpush1.bf16.msra.mxu0 0
      %8574 = vmatprep.subr.bf16.mxu0 0
      %8575 = vmatpush1.bf16.msra.mxu0 0
      %8576 = vmatprep.subr.bf16.mxu0 0
      %8577 = vmatpush1.bf16.msra.mxu0 0
      %8578 = vmatprep.subr.bf16.mxu0 0
      %8579 = vmatpush1.bf16.msra.mxu0 0
      %8580 = vmatprep.subr.bf16.mxu0 0
      %8581 = vmatpush1.bf16.msra.mxu0 0
      %8582 = vmatprep.subr.bf16.mxu0 0
      %8583 = vmatpush1.bf16.msra.mxu0 0
      %8584 = vmatprep.subr.bf16.mxu0 0
      %8585 = vmatpush1.bf16.msra.mxu0 0
      %8586 = vmatprep.mubr.bf16.mxu0 %v8509
      %8587 = vmatmul.mubr.bf16.gmra.mrb[0].mxu0 %v8505
      %v8588 = vpop.f32.mrb[0].mxu0
      %v8589 = vadd.f32 0.0, %v8588
      %v8590 = vpop.f32.mrb[0].mxu0
      %v8591 = vpop.f32.mrb[0].mxu0
      %v8592 = vadd.f32 0.0, %v8591
      %v8593 = vpop.f32.mrb[0].mxu0
      %8594 = vdwg.mxu0
      %v8597 = vunpack.c.l.b16 %v8494
      %v8598 = vunpack.c.h.b16 %v8494
      %v8599 = vunpack.c.l.b16 %v8495
      %v8600 = vunpack.c.h.b16 %v8495
      %v8601 = vpack.c.b16 %v8599, %v8597
      %v8602 = vpack.c.b16 %v8600, %v8598
      %8640 = vrot.lane.b32.xlu0 %v8458, 1
      %v8641 = vpop.permute.xlu0 %8640
      %8642 = vrot.lane.b32.xlu0 %v8459, 1
      %v8643 = vpop.permute.xlu0 %8642
      %8644 = vrot.lane.b32.xlu0 %v8460, 1
      %v8645 = vpop.permute.xlu0 %8644
      %8646 = vrot.lane.b32.xlu0 %v8461, 1
      %v8647 = vpop.permute.xlu0 %8646
      %8648 = vrot.lane.b32.xlu0 %v8462, 1
      %v8649 = vpop.permute.xlu0 %8648
      %8650 = vrot.lane.b32.xlu0 %v8463, 1
      %v8651 = vpop.permute.xlu0 %8650
      %8652 = vrot.lane.b32.xlu0 %v8464, 1
      %v8653 = vpop.permute.xlu0 %8652
      %8654 = vrot.lane.b32.xlu0 %v8465, 1
      %v8655 = vpop.permute.xlu0 %8654
      %8656 = vrot.lane.b32.xlu0 %v8466, 1
      %v8657 = vpop.permute.xlu0 %8656
      %8658 = vrot.lane.b32.xlu0 %v8467, 1
      %v8659 = vpop.permute.xlu0 %8658
      %8660 = vrot.lane.b32.xlu0 %v8468, 1
      %v8661 = vpop.permute.xlu0 %8660
      %8662 = vrot.lane.b32.xlu0 %v8469, 1
      %v8663 = vpop.permute.xlu0 %8662
      %8664 = vrot.lane.b32.xlu0 %v8470, 1
      %v8665 = vpop.permute.xlu0 %8664
      %8666 = vrot.lane.b32.xlu0 %v8471, 1
      %v8667 = vpop.permute.xlu0 %8666
      %8668 = vrot.lane.b32.xlu0 %v8472, 1
      %v8669 = vpop.permute.xlu0 %8668
      %8670 = vrot.lane.b32.xlu0 %v8473, 1
      %v8671 = vpop.permute.xlu0 %8670
      %8672 = vrot.lane.b32.xlu0 %v8474, 1
      %v8673 = vpop.permute.xlu0 %8672
      %8674 = vrot.lane.b32.xlu0 %v8475, 1
      %v8675 = vpop.permute.xlu0 %8674
      %8676 = vrot.lane.b32.xlu0 %v8476, 1
      %v8677 = vpop.permute.xlu0 %8676
      %8678 = vrot.lane.b32.xlu0 %v8477, 1
      %v8679 = vpop.permute.xlu0 %8678
      %8680 = vrot.lane.b32.xlu0 %v8478, 1
      %v8681 = vpop.permute.xlu0 %8680
      %8682 = vrot.lane.b32.xlu0 %v8479, 1
      %v8683 = vpop.permute.xlu0 %8682
      %8684 = vrot.lane.b32.xlu0 %v8480, 1
      %v8685 = vpop.permute.xlu0 %8684
      %8686 = vrot.lane.b32.xlu0 %v8481, 1
      %v8687 = vpop.permute.xlu0 %8686
      %8688 = vrot.lane.b32.xlu0 %v8482, 1
      %v8689 = vpop.permute.xlu0 %8688
      %8690 = vrot.lane.b32.xlu0 %v8483, 1
      %v8691 = vpop.permute.xlu0 %8690
      %8692 = vrot.lane.b32.xlu0 %v8484, 1
      %v8693 = vpop.permute.xlu0 %8692
      %8694 = vrot.lane.b32.xlu0 %v8485, 1
      %v8695 = vpop.permute.xlu0 %8694
      %8696 = vrot.lane.b32.xlu0 %v8486, 1
      %v8697 = vpop.permute.xlu0 %8696
      %8698 = vrot.lane.b32.xlu0 %v8487, 1
      %v8699 = vpop.permute.xlu0 %8698
      %8700 = vrot.lane.b32.xlu0 %v8488, 1
      %v8701 = vpop.permute.xlu0 %8700
      %8702 = vrot.lane.b32.xlu0 %v8489, 1
      %v8703 = vpop.permute.xlu0 %8702
      %8704 = vrot.lane.b32.xlu0 %v8490, 1
      %v8705 = vpop.permute.xlu0 %8704
      %8706 = vrot.lane.b32.xlu0 %v8491, 1
      %v8707 = vpop.permute.xlu0 %8706
      %8708 = vrot.lane.b32.xlu0 %v8492, 1
      %v8709 = vpop.permute.xlu0 %8708
      %8710 = vrot.lane.b32.xlu0 %v8493, 1
      %v8711 = vpop.permute.xlu0 %8710
      %v8712 = vsel %vm1252, %v8641, %v8643
      %v8713 = vsel %vm1252, %v8643, %v8645
      %v8714 = vsel %vm1252, %v8645, %v8647
      %v8715 = vsel %vm1252, %v8649, %v8651
      %v8716 = vsel %vm1252, %v8651, %v8653
      %v8717 = vsel %vm1252, %v8653, %v8655
      %v8718 = vsel %vm1252, %v8657, %v8659
      %v8719 = vsel %vm1252, %v8659, %v8661
      %v8720 = vsel %vm1252, %v8661, %v8663
      %v8721 = vsel %vm1252, %v8665, %v8667
      %v8722 = vsel %vm1252, %v8667, %v8669
      %v8723 = vsel %vm1252, %v8669, %v8671
      %v8724 = vsel %vm1252, %v8673, %v8675
      %v8725 = vsel %vm1252, %v8675, %v8677
      %v8726 = vsel %vm1252, %v8677, %v8679
      %v8727 = vsel %vm1252, %v8681, %v8683
      %v8728 = vsel %vm1252, %v8683, %v8685
      %v8729 = vsel %vm1252, %v8685, %v8687
      %v8730 = vsel %vm1252, %v8689, %v8691
      %v8731 = vsel %vm1252, %v8691, %v8693
      %v8732 = vsel %vm1252, %v8693, %v8695
      %v8733 = vsel %vm1252, %v8697, %v8699
      %v8734 = vsel %vm1252, %v8699, %v8701
      %v8735 = vsel %vm1252, %v8701, %v8703
      %v8736 = vsel %vm1252, %v8705, %v8707
      %v8737 = vsel %vm1252, %v8707, %v8709
      %v8738 = vsel %vm1252, %v8709, %v8711
      %v8767 = vsel %vm1047, %v8602, 0
      %8769 = vmatprep.subr.bf16.mxu0 %v8713
      %8770 = vmatpush1.bf16.msra.mxu0 %v8712
      %8771 = vmatprep.subr.bf16.mxu0 %v8716
      %8772 = vmatpush1.bf16.msra.mxu0 %v8715
      %8773 = vmatprep.subr.bf16.mxu0 %v8719
      %8774 = vmatpush1.bf16.msra.mxu0 %v8718
      %8775 = vmatprep.subr.bf16.mxu0 %v8722
      %8776 = vmatpush1.bf16.msra.mxu0 %v8721
      %8777 = vmatprep.subr.bf16.mxu0 %v8725
      %8778 = vmatpush1.bf16.msra.mxu0 %v8724
      %8779 = vmatprep.subr.bf16.mxu0 %v8728
      %8780 = vmatpush1.bf16.msra.mxu0 %v8727
      %8781 = vmatprep.subr.bf16.mxu0 %v8731
      %8782 = vmatpush1.bf16.msra.mxu0 %v8730
      %8783 = vmatprep.subr.bf16.mxu0 %v8734
      %8784 = vmatpush1.bf16.msra.mxu0 %v8733
      %8785 = vmatprep.subr.bf16.mxu0 %v8737
      %8786 = vmatpush1.bf16.msra.mxu0 %v8736
      %8787 = vmatprep.subr.bf16.mxu0 0
      %8788 = vmatpush1.bf16.msra.mxu0 0
      %8789 = vmatprep.subr.bf16.mxu0 0
      %8790 = vmatpush1.bf16.msra.mxu0 0
      %8791 = vmatprep.subr.bf16.mxu0 0
      %8792 = vmatpush1.bf16.msra.mxu0 0
      %8793 = vmatprep.subr.bf16.mxu0 0
      %8794 = vmatpush1.bf16.msra.mxu0 0
      %8795 = vmatprep.subr.bf16.mxu0 0
      %8796 = vmatpush1.bf16.msra.mxu0 0
      %8797 = vmatprep.subr.bf16.mxu0 0
      %8798 = vmatpush1.bf16.msra.mxu0 0
      %8799 = vmatprep.subr.bf16.mxu0 0
      %8800 = vmatpush1.bf16.msra.mxu0 0
      %8801 = vmatprep.mubr.bf16.mxu0 %v8767
      %8802 = vmatmul.mubr.bf16.gmra.mrb[0].mxu0 %v8601
      %v8803 = vpop.f32.mrb[0].mxu0
      %v8804 = vadd.f32 %v8546, %v8803
      %v8805 = vpop.f32.mrb[0].mxu0
      %v8806 = vadd.f32 %v8548, %v8805
      %v8807 = vpop.f32.mrb[0].mxu0
      %v8808 = vadd.f32 %v8550, %v8807
      %v8809 = vpop.f32.mrb[0].mxu0
      %v8810 = vadd.f32 %v8552, %v8809
      %8811 = vdwg.mxu0
      %8812 = vmatprep.subr.bf16.mxu0 0
      %8813 = vmatpush1.bf16.msra.mxu0 %v8714
      %8814 = vmatprep.subr.bf16.mxu0 0
      %8815 = vmatpush1.bf16.msra.mxu0 %v8717
      %8816 = vmatprep.subr.bf16.mxu0 0
      %8817 = vmatpush1.bf16.msra.mxu0 %v8720
      %8818 = vmatprep.subr.bf16.mxu0 0
      %8819 = vmatpush1.bf16.msra.mxu0 %v8723
      %8820 = vmatprep.subr.bf16.mxu0 0
      %8821 = vmatpush1.bf16.msra.mxu0 %v8726
      %8822 = vmatprep.subr.bf16.mxu0 0
      %8823 = vmatpush1.bf16.msra.mxu0 %v8729
      %8824 = vmatprep.subr.bf16.mxu0 0
      %8825 = vmatpush1.bf16.msra.mxu0 %v8732
      %8826 = vmatprep.subr.bf16.mxu0 0
      %8827 = vmatpush1.bf16.msra.mxu0 %v8735
      %8828 = vmatprep.subr.bf16.mxu0 0
      %8829 = vmatpush1.bf16.msra.mxu0 %v8738
      %8830 = vmatprep.subr.bf16.mxu0 0
      %8831 = vmatpush1.bf16.msra.mxu0 0
      %8832 = vmatprep.subr.bf16.mxu0 0
      %8833 = vmatpush1.bf16.msra.mxu0 0
      %8834 = vmatprep.subr.bf16.mxu0 0
      %8835 = vmatpush1.bf16.msra.mxu0 0
      %8836 = vmatprep.subr.bf16.mxu0 0
      %8837 = vmatpush1.bf16.msra.mxu0 0
      %8838 = vmatprep.subr.bf16.mxu0 0
      %8839 = vmatpush1.bf16.msra.mxu0 0
      %8840 = vmatprep.subr.bf16.mxu0 0
      %8841 = vmatpush1.bf16.msra.mxu0 0
      %8842 = vmatprep.subr.bf16.mxu0 0
      %8843 = vmatpush1.bf16.msra.mxu0 0
      %8844 = vmatprep.mubr.bf16.mxu0 %v8767
      %8845 = vmatmul.mubr.bf16.gmra.mrb[0].mxu0 %v8601
      %v8846 = vpop.f32.mrb[0].mxu0
      %v8847 = vadd.f32 %v8589, %v8846
      %v8848 = vpop.f32.mrb[0].mxu0
      %v8849 = vpop.f32.mrb[0].mxu0
      %v8850 = vadd.f32 %v8592, %v8849
      %v8851 = vpop.f32.mrb[0].mxu0
      %8852 = vdwg.mxu0
      %s8853 = scalar_lea.vmem %s9, 32
      %v8854 = vld [vmem:[%s8853] sm:$0xff]
      %v8855 = vld [vmem:[%s8853 + $0x8] sm:$0xff]
      %v8858 = vunpack.c.l.b16 %v8854
      %v8859 = vunpack.c.h.b16 %v8854
      %v8860 = vunpack.c.l.b16 %v8855
      %v8861 = vunpack.c.h.b16 %v8855
      %v8862 = vpack.c.b16 %v8860, %v8858
      %v8863 = vpack.c.b16 %v8861, %v8859
      %8865 = vrot.lane.b32.xlu0 %v8459, 127
      %v8866 = vpop.permute.xlu0 %8865
      %8867 = vrot.lane.b32.xlu0 %v8460, 127
      %v8868 = vpop.permute.xlu0 %8867
      %8869 = vrot.lane.b32.xlu0 %v8461, 127
      %v8870 = vpop.permute.xlu0 %8869
      %8871 = vrot.lane.b32.xlu0 %v8463, 127
      %v8872 = vpop.permute.xlu0 %8871
      %8873 = vrot.lane.b32.xlu0 %v8464, 127
      %v8874 = vpop.permute.xlu0 %8873
      %8875 = vrot.lane.b32.xlu0 %v8465, 127
      %v8876 = vpop.permute.xlu0 %8875
      %8877 = vrot.lane.b32.xlu0 %v8467, 127
      %v8878 = vpop.permute.xlu0 %8877
      %8879 = vrot.lane.b32.xlu0 %v8468, 127
      %v8880 = vpop.permute.xlu0 %8879
      %8881 = vrot.lane.b32.xlu0 %v8469, 127
      %v8882 = vpop.permute.xlu0 %8881
      %8883 = vrot.lane.b32.xlu0 %v8471, 127
      %v8884 = vpop.permute.xlu0 %8883
      %8885 = vrot.lane.b32.xlu0 %v8472, 127
      %v8886 = vpop.permute.xlu0 %8885
      %8887 = vrot.lane.b32.xlu0 %v8473, 127
      %v8888 = vpop.permute.xlu0 %8887
      %8889 = vrot.lane.b32.xlu0 %v8475, 127
      %v8890 = vpop.permute.xlu0 %8889
      %8891 = vrot.lane.b32.xlu0 %v8476, 127
      %v8892 = vpop.permute.xlu0 %8891
      %8893 = vrot.lane.b32.xlu0 %v8477, 127
      %v8894 = vpop.permute.xlu0 %8893
      %8895 = vrot.lane.b32.xlu0 %v8479, 127
      %v8896 = vpop.permute.xlu0 %8895
      %8897 = vrot.lane.b32.xlu0 %v8480, 127
      %v8898 = vpop.permute.xlu0 %8897
      %8899 = vrot.lane.b32.xlu0 %v8481, 127
      %v8900 = vpop.permute.xlu0 %8899
      %8901 = vrot.lane.b32.xlu0 %v8483, 127
      %v8902 = vpop.permute.xlu0 %8901
      %8903 = vrot.lane.b32.xlu0 %v8484, 127
      %v8904 = vpop.permute.xlu0 %8903
      %8905 = vrot.lane.b32.xlu0 %v8485, 127
      %v8906 = vpop.permute.xlu0 %8905
      %8907 = vrot.lane.b32.xlu0 %v8487, 127
      %v8908 = vpop.permute.xlu0 %8907
      %8909 = vrot.lane.b32.xlu0 %v8488, 127
      %v8910 = vpop.permute.xlu0 %8909
      %8911 = vrot.lane.b32.xlu0 %v8489, 127
      %v8912 = vpop.permute.xlu0 %8911
      %8913 = vrot.lane.b32.xlu0 %v8491, 127
      %v8914 = vpop.permute.xlu0 %8913
      %8915 = vrot.lane.b32.xlu0 %v8492, 127
      %v8916 = vpop.permute.xlu0 %8915
      %8917 = vrot.lane.b32.xlu0 %v8493, 127
      %v8918 = vpop.permute.xlu0 %8917
      %v8919 = vsel %vm1460, %v8866, %v8868
      %v8920 = vsel %vm1460, %v8868, %v8870
      %v8921 = vsel %vm1460, %v8872, %v8874
      %v8922 = vsel %vm1460, %v8874, %v8876
      %v8923 = vsel %vm1460, %v8878, %v8880
      %v8924 = vsel %vm1460, %v8880, %v8882
      %v8925 = vsel %vm1460, %v8884, %v8886
      %v8926 = vsel %vm1460, %v8886, %v8888
      %v8927 = vsel %vm1460, %v8890, %v8892
      %v8928 = vsel %vm1460, %v8892, %v8894
      %v8929 = vsel %vm1460, %v8896, %v8898
      %v8930 = vsel %vm1460, %v8898, %v8900
      %v8931 = vsel %vm1460, %v8902, %v8904
      %v8932 = vsel %vm1460, %v8904, %v8906
      %v8933 = vsel %vm1460, %v8908, %v8910
      %v8934 = vsel %vm1460, %v8910, %v8912
      %v8935 = vsel %vm1460, %v8914, %v8916
      %v8936 = vsel %vm1460, %v8916, %v8918
      %v8965 = vsel %vm1047, %v8863, 0
      %8967 = vmatprep.subr.bf16.mxu0 %v8920
      %8968 = vmatpush1.bf16.msra.mxu0 %v8919
      %8969 = vmatprep.subr.bf16.mxu0 %v8922
      %8970 = vmatpush1.bf16.msra.mxu0 %v8921
      %8971 = vmatprep.subr.bf16.mxu0 %v8924
      %8972 = vmatpush1.bf16.msra.mxu0 %v8923
      %8973 = vmatprep.subr.bf16.mxu0 %v8926
      %8974 = vmatpush1.bf16.msra.mxu0 %v8925
      %8975 = vmatprep.subr.bf16.mxu0 %v8928
      %8976 = vmatpush1.bf16.msra.mxu0 %v8927
      %8977 = vmatprep.subr.bf16.mxu0 %v8930
      %8978 = vmatpush1.bf16.msra.mxu0 %v8929
      %8979 = vmatprep.subr.bf16.mxu0 %v8932
      %8980 = vmatpush1.bf16.msra.mxu0 %v8931
      %8981 = vmatprep.subr.bf16.mxu0 %v8934
      %8982 = vmatpush1.bf16.msra.mxu0 %v8933
      %8983 = vmatprep.subr.bf16.mxu0 %v8936
      %8984 = vmatpush1.bf16.msra.mxu0 %v8935
      %8985 = vmatprep.subr.bf16.mxu0 0
      %8986 = vmatpush1.bf16.msra.mxu0 0
      %8987 = vmatprep.subr.bf16.mxu0 0
      %8988 = vmatpush1.bf16.msra.mxu0 0
      %8989 = vmatprep.subr.bf16.mxu0 0
      %8990 = vmatpush1.bf16.msra.mxu0 0
      %8991 = vmatprep.subr.bf16.mxu0 0
      %8992 = vmatpush1.bf16.msra.mxu0 0
      %8993 = vmatprep.subr.bf16.mxu0 0
      %8994 = vmatpush1.bf16.msra.mxu0 0
      %8995 = vmatprep.subr.bf16.mxu0 0
      %8996 = vmatpush1.bf16.msra.mxu0 0
      %8997 = vmatprep.subr.bf16.mxu0 0
      %8998 = vmatpush1.bf16.msra.mxu0 0
      %8999 = vmatprep.mubr.bf16.mxu0 %v8965
      %9000 = vmatmul.mubr.bf16.gmra.mrb[0].mxu0 %v8862
      %v9001 = vpop.f32.mrb[0].mxu0
      %v9002 = vadd.f32 0.0, %v9001
      %v9003 = vpop.f32.mrb[0].mxu0
      %v9004 = vadd.f32 0.0, %v9003
      %v9005 = vpop.f32.mrb[0].mxu0
      %v9006 = vadd.f32 0.0, %v9005
      %v9007 = vpop.f32.mrb[0].mxu0
      %v9008 = vadd.f32 0.0, %v9007
      %9009 = vdwg.mxu0
      %9010 = vmatprep.subr.bf16.mxu0 0
      %9011 = vmatpush1.bf16.msra.mxu0 %v8870
      %9012 = vmatprep.subr.bf16.mxu0 0
      %9013 = vmatpush1.bf16.msra.mxu0 %v8876
      %9014 = vmatprep.subr.bf16.mxu0 0
      %9015 = vmatpush1.bf16.msra.mxu0 %v8882
      %9016 = vmatprep.subr.bf16.mxu0 0
      %9017 = vmatpush1.bf16.msra.mxu0 %v8888
      %9018 = vmatprep.subr.bf16.mxu0 0
      %9019 = vmatpush1.bf16.msra.mxu0 %v8894
      %9020 = vmatprep.subr.bf16.mxu0 0
      %9021 = vmatpush1.bf16.msra.mxu0 %v8900
      %9022 = vmatprep.subr.bf16.mxu0 0
      %9023 = vmatpush1.bf16.msra.mxu0 %v8906
      %9024 = vmatprep.subr.bf16.mxu0 0
      %9025 = vmatpush1.bf16.msra.mxu0 %v8912
      %9026 = vmatprep.subr.bf16.mxu0 0
      %9027 = vmatpush1.bf16.msra.mxu0 %v8918
      %9028 = vmatprep.subr.bf16.mxu0 0
      %9029 = vmatpush1.bf16.msra.mxu0 0
      %9030 = vmatprep.subr.bf16.mxu0 0
      %9031 = vmatpush1.bf16.msra.mxu0 0
      %9032 = vmatprep.subr.bf16.mxu0 0
      %9033 = vmatpush1.bf16.msra.mxu0 0
      %9034 = vmatprep.subr.bf16.mxu0 0
      %9035 = vmatpush1.bf16.msra.mxu0 0
      %9036 = vmatprep.subr.bf16.mxu0 0
      %9037 = vmatpush1.bf16.msra.mxu0 0
      %9038 = vmatprep.subr.bf16.mxu0 0
      %9039 = vmatpush1.bf16.msra.mxu0 0
      %9040 = vmatprep.subr.bf16.mxu0 0
      %9041 = vmatpush1.bf16.msra.mxu0 0
      %9042 = vmatprep.mubr.bf16.mxu0 %v8965
      %9043 = vmatmul.mubr.bf16.gmra.mrb[0].mxu0 %v8862
      %v9044 = vpop.f32.mrb[0].mxu0
      %v9045 = vadd.f32 0.0, %v9044
      %v9046 = vpop.f32.mrb[0].mxu0
      %v9047 = vpop.f32.mrb[0].mxu0
      %v9048 = vadd.f32 0.0, %v9047
      %v9049 = vpop.f32.mrb[0].mxu0
      %9050 = vdwg.mxu0
      %v9051 = vadd.f32 %v8804, %v9002
      %v9052 = vadd.f32 %v8806, %v9004
      %v9053 = vadd.f32 %v8847, %v9045
      %v9054 = vadd.f32 %v8808, %v9006
      %v9055 = vadd.f32 %v8810, %v9008
      %v9056 = vadd.f32 %v8850, %v9048
      %v9057 = vld [vmem:[%s19] sm:$0xff]
      %v9058 = vld [vmem:[%s19 + $0x8] sm:$0xff]
      %9060 = vset.pattern.permute.xlu0 0
      %9061 = vperm.xlu0 %9060, %v9057
      %v9062 = vpop.permute.xlu0 %9061
      %9065 = vset.pattern.permute.xlu0 0
      %9066 = vperm.xlu0 %9065, %v9058
      %v9067 = vpop.permute.xlu0 %9066
      %v9069 = vadd.f32 %v9051, %v9062
      %v9070 = vadd.f32 %v9052, %v9062
      %v9071 = vadd.f32 %v9053, %v9062
      %v9072 = vadd.f32 %v9054, %v9067
      %v9073 = vadd.f32 %v9055, %v9067
      %v9074 = vadd.f32 %v9056, %v9067
      %v9075 = vmax.f32 %v9069, 0.0
      %v9076 = vmax.f32 %v9070, 0.0
      %v9077 = vmax.f32 %v9071, 0.0
      %v9078 = vmax.f32 %v9072, 0.0
      %v9079 = vmax.f32 %v9073, 0.0
      %v9080 = vmax.f32 %v9074, 0.0
      %v9081 = vmul.f32 %v9075, %v1627
      %v9082 = vmul.f32 %v9076, %v1631
      %v9083 = vmul.f32 %v9077, %v1635
      %v9084 = vmul.f32 %v9078, %v1627
      %v9085 = vmul.f32 %v9079, %v1631
      %v9086 = vmul.f32 %v9080, %v1635
      %v9087 = vpack.c.bf16 %v9084, %v9081
      %v9088 = vpack.c.bf16 %v9085, %v9082
      %v9089 = vpack.c.bf16 %v9086, %v9083
      %9093 = vrot.lane.b32.xlu0 %v9087, 18
      %v9094 = vpop.permute.xlu0 %9093
      %9095 = vrot.lane.b32.xlu0 %v9088, 18
      %v9096 = vpop.permute.xlu0 %9095
      %9097 = vrot.lane.b32.xlu0 %v9089, 18
      %v9098 = vpop.permute.xlu0 %9097
      %v9099 = vsel %vm963, %v9094, %v9096
      %v9100 = vsel %vm963, %v9096, %v9098
      %9104 = vst.msk [vmem:[#allocation2 + $0x8] sm:$0xff] %vm1662, %v9094
      %9105 = vst [vmem:[#allocation2 + $0x10] sm:$0xff] %v9099
      %9106 = vst.msk [vmem:[#allocation2 + $0x18] sm:$0xff] %vm1665, %v9100
      %9107 = vst [vmem:[#allocation2 + $0x68] sm:$0xff] %v9087
      %9108 = vst [vmem:[#allocation2 + $0x70] sm:$0xff] %v9088
      %9109 = vst.msk [vmem:[#allocation2 + $0x78] sm:$0xff] %vm1669, %v9089
      %9110 = vrot.lane.b32.xlu0 %v9087, 110
      %v9111 = vpop.permute.xlu0 %9110
      %9112 = vrot.lane.b32.xlu0 %v9088, 110
      %v9113 = vpop.permute.xlu0 %9112
      %9114 = vrot.lane.b32.xlu0 %v9089, 110
      %v9115 = vpop.permute.xlu0 %9114
      %v9116 = vsel %vm984, %v9111, %v9113
      %v9117 = vsel %vm984, %v9113, %v9115
      %9122 = vst.msk [vmem:[#allocation2 + $0xc0] sm:$0xff] %vm1683, %v9111
      %9123 = vst [vmem:[#allocation2 + $0xc8] sm:$0xff] %v9116
      %9124 = vst [vmem:[#allocation2 + $0xd0] sm:$0xff] %v9117
      %9125 = vst.msk [vmem:[#allocation2 + $0xd8] sm:$0xff] %vm1687, %v9115
      %v9126 = vld [vmem:[#allocation2] sm:$0xff]
      %v9127 = vld [vmem:[#allocation2 + $0x8] sm:$0xff]
      %v9128 = vld [vmem:[#allocation2 + $0x10] sm:$0xff]
      %v9129 = vld [vmem:[#allocation2 + $0x18] sm:$0xff]
      %v9130 = vld [vmem:[#allocation2 + $0x20] sm:$0xff]
      %v9131 = vld [vmem:[#allocation2 + $0x28] sm:$0xff]
      %v9132 = vld [vmem:[#allocation2 + $0x30] sm:$0xff]
      %v9133 = vld [vmem:[#allocation2 + $0x38] sm:$0xff]
      %v9134 = vld [vmem:[#allocation2 + $0x40] sm:$0xff]
      %v9135 = vld [vmem:[#allocation2 + $0x48] sm:$0xff]
      %v9136 = vld [vmem:[#allocation2 + $0x50] sm:$0xff]
      %v9137 = vld [vmem:[#allocation2 + $0x58] sm:$0xff]
      %v9138 = vld [vmem:[#allocation2 + $0x60] sm:$0xff]
      %v9139 = vld [vmem:[#allocation2 + $0x68] sm:$0xff]
      %v9140 = vld [vmem:[#allocation2 + $0x70] sm:$0xff]
      %v9141 = vld [vmem:[#allocation2 + $0x78] sm:$0xff]
      %v9142 = vld [vmem:[#allocation2 + $0x80] sm:$0xff]
      %v9143 = vld [vmem:[#allocation2 + $0x88] sm:$0xff]
      %v9144 = vld [vmem:[#allocation2 + $0x90] sm:$0xff]
      %v9145 = vld [vmem:[#allocation2 + $0x98] sm:$0xff]
      %v9146 = vld [vmem:[#allocation2 + $0xa0] sm:$0xff]
      %v9147 = vld [vmem:[#allocation2 + $0xa8] sm:$0xff]
      %v9148 = vld [vmem:[#allocation2 + $0xb0] sm:$0xff]
      %v9149 = vld [vmem:[#allocation2 + $0xb8] sm:$0xff]
      %v9150 = vld [vmem:[#allocation2 + $0xc0] sm:$0xff]
      %v9151 = vld [vmem:[#allocation2 + $0xc8] sm:$0xff]
      %v9152 = vld [vmem:[#allocation2 + $0xd0] sm:$0xff]
      %v9153 = vld [vmem:[#allocation2 + $0xd8] sm:$0xff]
      %v9154 = vld [vmem:[#allocation2 + $0xe0] sm:$0xff]
      %v9155 = vld [vmem:[#allocation2 + $0xe8] sm:$0xff]
      %v9156 = vld [vmem:[#allocation2 + $0xf0] sm:$0xff]
      %v9157 = vld [vmem:[#allocation2 + $0xf8] sm:$0xff]
      %v9158 = vld [vmem:[#allocation2 + $0x100] sm:$0xff]
      %v9159 = vld [vmem:[#allocation2 + $0x108] sm:$0xff]
      %v9160 = vld [vmem:[#allocation2 + $0x110] sm:$0xff]
      %v9161 = vld [vmem:[#allocation2 + $0x118] sm:$0xff]
      %v9162 = vld [vmem:[%s10] sm:$0xff]
      %v9163 = vld [vmem:[%s10 + $0x8] sm:$0xff]
      %s9164 = scalar_lea.vmem %s10, 16
      %v9165 = vld [vmem:[%s9164] sm:$0xff]
      %v9166 = vld [vmem:[%s9164 + $0x8] sm:$0xff]
      %v9169 = vunpack.c.l.b16 %v9165
      %v9170 = vunpack.c.h.b16 %v9165
      %v9171 = vunpack.c.l.b16 %v9166
      %v9172 = vunpack.c.h.b16 %v9166
      %v9173 = vpack.c.b16 %v9171, %v9169
      %v9174 = vpack.c.b16 %v9172, %v9170
      %v9177 = vsel %vm1047, %v9174, 0
      %9179 = vmatprep.subr.bf16.mxu0 %v9128
      %9180 = vmatpush1.bf16.msra.mxu0 %v9127
      %9181 = vmatprep.subr.bf16.mxu0 %v9132
      %9182 = vmatpush1.bf16.msra.mxu0 %v9131
      %9183 = vmatprep.subr.bf16.mxu0 %v9136
      %9184 = vmatpush1.bf16.msra.mxu0 %v9135
      %9185 = vmatprep.subr.bf16.mxu0 %v9140
      %9186 = vmatpush1.bf16.msra.mxu0 %v9139
      %9187 = vmatprep.subr.bf16.mxu0 %v9144
      %9188 = vmatpush1.bf16.msra.mxu0 %v9143
      %9189 = vmatprep.subr.bf16.mxu0 %v9148
      %9190 = vmatpush1.bf16.msra.mxu0 %v9147
      %9191 = vmatprep.subr.bf16.mxu0 %v9152
      %9192 = vmatpush1.bf16.msra.mxu0 %v9151
      %9193 = vmatprep.subr.bf16.mxu0 %v9156
      %9194 = vmatpush1.bf16.msra.mxu0 %v9155
      %9195 = vmatprep.subr.bf16.mxu0 %v9160
      %9196 = vmatpush1.bf16.msra.mxu0 %v9159
      %9197 = vmatprep.subr.bf16.mxu0 0
      %9198 = vmatpush1.bf16.msra.mxu0 0
      %9199 = vmatprep.subr.bf16.mxu0 0
      %9200 = vmatpush1.bf16.msra.mxu0 0
      %9201 = vmatprep.subr.bf16.mxu0 0
      %9202 = vmatpush1.bf16.msra.mxu0 0
      %9203 = vmatprep.subr.bf16.mxu0 0
      %9204 = vmatpush1.bf16.msra.mxu0 0
      %9205 = vmatprep.subr.bf16.mxu0 0
      %9206 = vmatpush1.bf16.msra.mxu0 0
      %9207 = vmatprep.subr.bf16.mxu0 0
      %9208 = vmatpush1.bf16.msra.mxu0 0
      %9209 = vmatprep.subr.bf16.mxu0 0
      %9210 = vmatpush1.bf16.msra.mxu0 0
      %9211 = vmatprep.mubr.bf16.mxu0 %v9177
      %9212 = vmatmul.mubr.bf16.gmra.mrb[0].mxu0 %v9173
      %v9213 = vpop.f32.mrb[0].mxu0
      %v9214 = vadd.f32 0.0, %v9213
      %v9215 = vpop.f32.mrb[0].mxu0
      %v9216 = vadd.f32 0.0, %v9215
      %v9217 = vpop.f32.mrb[0].mxu0
      %v9218 = vadd.f32 0.0, %v9217
      %v9219 = vpop.f32.mrb[0].mxu0
      %v9220 = vadd.f32 0.0, %v9219
      %9221 = vdwg.mxu0
      %9222 = vmatprep.subr.bf16.mxu0 0
      %9223 = vmatpush1.bf16.msra.mxu0 %v9129
      %9224 = vmatprep.subr.bf16.mxu0 0
      %9225 = vmatpush1.bf16.msra.mxu0 %v9133
      %9226 = vmatprep.subr.bf16.mxu0 0
      %9227 = vmatpush1.bf16.msra.mxu0 %v9137
      %9228 = vmatprep.subr.bf16.mxu0 0
      %9229 = vmatpush1.bf16.msra.mxu0 %v9141
      %9230 = vmatprep.subr.bf16.mxu0 0
      %9231 = vmatpush1.bf16.msra.mxu0 %v9145
      %9232 = vmatprep.subr.bf16.mxu0 0
      %9233 = vmatpush1.bf16.msra.mxu0 %v9149
      %9234 = vmatprep.subr.bf16.mxu0 0
      %9235 = vmatpush1.bf16.msra.mxu0 %v9153
      %9236 = vmatprep.subr.bf16.mxu0 0
      %9237 = vmatpush1.bf16.msra.mxu0 %v9157
      %9238 = vmatprep.subr.bf16.mxu0 0
      %9239 = vmatpush1.bf16.msra.mxu0 %v9161
      %9240 = vmatprep.subr.bf16.mxu0 0
      %9241 = vmatpush1.bf16.msra.mxu0 0
      %9242 = vmatprep.subr.bf16.mxu0 0
      %9243 = vmatpush1.bf16.msra.mxu0 0
      %9244 = vmatprep.subr.bf16.mxu0 0
      %9245 = vmatpush1.bf16.msra.mxu0 0
      %9246 = vmatprep.subr.bf16.mxu0 0
      %9247 = vmatpush1.bf16.msra.mxu0 0
      %9248 = vmatprep.subr.bf16.mxu0 0
      %9249 = vmatpush1.bf16.msra.mxu0 0
      %9250 = vmatprep.subr.bf16.mxu0 0
      %9251 = vmatpush1.bf16.msra.mxu0 0
      %9252 = vmatprep.subr.bf16.mxu0 0
      %9253 = vmatpush1.bf16.msra.mxu0 0
      %9254 = vmatprep.mubr.bf16.mxu0 %v9177
      %9255 = vmatmul.mubr.bf16.gmra.mrb[0].mxu0 %v9173
      %v9256 = vpop.f32.mrb[0].mxu0
      %v9257 = vadd.f32 0.0, %v9256
      %v9258 = vpop.f32.mrb[0].mxu0
      %v9259 = vpop.f32.mrb[0].mxu0
      %v9260 = vadd.f32 0.0, %v9259
      %v9261 = vpop.f32.mrb[0].mxu0
      %9262 = vdwg.mxu0
      %v9265 = vunpack.c.l.b16 %v9162
      %v9266 = vunpack.c.h.b16 %v9162
      %v9267 = vunpack.c.l.b16 %v9163
      %v9268 = vunpack.c.h.b16 %v9163
      %v9269 = vpack.c.b16 %v9267, %v9265
      %v9270 = vpack.c.b16 %v9268, %v9266
      %9308 = vrot.lane.b32.xlu0 %v9126, 1
      %v9309 = vpop.permute.xlu0 %9308
      %9310 = vrot.lane.b32.xlu0 %v9127, 1
      %v9311 = vpop.permute.xlu0 %9310
      %9312 = vrot.lane.b32.xlu0 %v9128, 1
      %v9313 = vpop.permute.xlu0 %9312
      %9314 = vrot.lane.b32.xlu0 %v9129, 1
      %v9315 = vpop.permute.xlu0 %9314
      %9316 = vrot.lane.b32.xlu0 %v9130, 1
      %v9317 = vpop.permute.xlu0 %9316
      %9318 = vrot.lane.b32.xlu0 %v9131, 1
      %v9319 = vpop.permute.xlu0 %9318
      %9320 = vrot.lane.b32.xlu0 %v9132, 1
      %v9321 = vpop.permute.xlu0 %9320
      %9322 = vrot.lane.b32.xlu0 %v9133, 1
      %v9323 = vpop.permute.xlu0 %9322
      %9324 = vrot.lane.b32.xlu0 %v9134, 1
      %v9325 = vpop.permute.xlu0 %9324
      %9326 = vrot.lane.b32.xlu0 %v9135, 1
      %v9327 = vpop.permute.xlu0 %9326
      %9328 = vrot.lane.b32.xlu0 %v9136, 1
      %v9329 = vpop.permute.xlu0 %9328
      %9330 = vrot.lane.b32.xlu0 %v9137, 1
      %v9331 = vpop.permute.xlu0 %9330
      %9332 = vrot.lane.b32.xlu0 %v9138, 1
      %v9333 = vpop.permute.xlu0 %9332
      %9334 = vrot.lane.b32.xlu0 %v9139, 1
      %v9335 = vpop.permute.xlu0 %9334
      %9336 = vrot.lane.b32.xlu0 %v9140, 1
      %v9337 = vpop.permute.xlu0 %9336
      %9338 = vrot.lane.b32.xlu0 %v9141, 1
      %v9339 = vpop.permute.xlu0 %9338
      %9340 = vrot.lane.b32.xlu0 %v9142, 1
      %v9341 = vpop.permute.xlu0 %9340
      %9342 = vrot.lane.b32.xlu0 %v9143, 1
      %v9343 = vpop.permute.xlu0 %9342
      %9344 = vrot.lane.b32.xlu0 %v9144, 1
      %v9345 = vpop.permute.xlu0 %9344
      %9346 = vrot.lane.b32.xlu0 %v9145, 1
      %v9347 = vpop.permute.xlu0 %9346
      %9348 = vrot.lane.b32.xlu0 %v9146, 1
      %v9349 = vpop.permute.xlu0 %9348
      %9350 = vrot.lane.b32.xlu0 %v9147, 1
      %v9351 = vpop.permute.xlu0 %9350
      %9352 = vrot.lane.b32.xlu0 %v9148, 1
      %v9353 = vpop.permute.xlu0 %9352
      %9354 = vrot.lane.b32.xlu0 %v9149, 1
      %v9355 = vpop.permute.xlu0 %9354
      %9356 = vrot.lane.b32.xlu0 %v9150, 1
      %v9357 = vpop.permute.xlu0 %9356
      %9358 = vrot.lane.b32.xlu0 %v9151, 1
      %v9359 = vpop.permute.xlu0 %9358
      %9360 = vrot.lane.b32.xlu0 %v9152, 1
      %v9361 = vpop.permute.xlu0 %9360
      %9362 = vrot.lane.b32.xlu0 %v9153, 1
      %v9363 = vpop.permute.xlu0 %9362
      %9364 = vrot.lane.b32.xlu0 %v9154, 1
      %v9365 = vpop.permute.xlu0 %9364
      %9366 = vrot.lane.b32.xlu0 %v9155, 1
      %v9367 = vpop.permute.xlu0 %9366
      %9368 = vrot.lane.b32.xlu0 %v9156, 1
      %v9369 = vpop.permute.xlu0 %9368
      %9370 = vrot.lane.b32.xlu0 %v9157, 1
      %v9371 = vpop.permute.xlu0 %9370
      %9372 = vrot.lane.b32.xlu0 %v9158, 1
      %v9373 = vpop.permute.xlu0 %9372
      %9374 = vrot.lane.b32.xlu0 %v9159, 1
      %v9375 = vpop.permute.xlu0 %9374
      %9376 = vrot.lane.b32.xlu0 %v9160, 1
      %v9377 = vpop.permute.xlu0 %9376
      %9378 = vrot.lane.b32.xlu0 %v9161, 1
      %v9379 = vpop.permute.xlu0 %9378
      %v9380 = vsel %vm1252, %v9309, %v9311
      %v9381 = vsel %vm1252, %v9311, %v9313
      %v9382 = vsel %vm1252, %v9313, %v9315
      %v9383 = vsel %vm1252, %v9317, %v9319
      %v9384 = vsel %vm1252, %v9319, %v9321
      %v9385 = vsel %vm1252, %v9321, %v9323
      %v9386 = vsel %vm1252, %v9325, %v9327
      %v9387 = vsel %vm1252, %v9327, %v9329
      %v9388 = vsel %vm1252, %v9329, %v9331
      %v9389 = vsel %vm1252, %v9333, %v9335
      %v9390 = vsel %vm1252, %v9335, %v9337
      %v9391 = vsel %vm1252, %v9337, %v9339
      %v9392 = vsel %vm1252, %v9341, %v9343
      %v9393 = vsel %vm1252, %v9343, %v9345
      %v9394 = vsel %vm1252, %v9345, %v9347
      %v9395 = vsel %vm1252, %v9349, %v9351
      %v9396 = vsel %vm1252, %v9351, %v9353
      %v9397 = vsel %vm1252, %v9353, %v9355
      %v9398 = vsel %vm1252, %v9357, %v9359
      %v9399 = vsel %vm1252, %v9359, %v9361
      %v9400 = vsel %vm1252, %v9361, %v9363
      %v9401 = vsel %vm1252, %v9365, %v9367
      %v9402 = vsel %vm1252, %v9367, %v9369
      %v9403 = vsel %vm1252, %v9369, %v9371
      %v9404 = vsel %vm1252, %v9373, %v9375
      %v9405 = vsel %vm1252, %v9375, %v9377
      %v9406 = vsel %vm1252, %v9377, %v9379
      %v9435 = vsel %vm1047, %v9270, 0
      %9437 = vmatprep.subr.bf16.mxu0 %v9381
      %9438 = vmatpush1.bf16.msra.mxu0 %v9380
      %9439 = vmatprep.subr.bf16.mxu0 %v9384
      %9440 = vmatpush1.bf16.msra.mxu0 %v9383
      %9441 = vmatprep.subr.bf16.mxu0 %v9387
      %9442 = vmatpush1.bf16.msra.mxu0 %v9386
      %9443 = vmatprep.subr.bf16.mxu0 %v9390
      %9444 = vmatpush1.bf16.msra.mxu0 %v9389
      %9445 = vmatprep.subr.bf16.mxu0 %v9393
      %9446 = vmatpush1.bf16.msra.mxu0 %v9392
      %9447 = vmatprep.subr.bf16.mxu0 %v9396
      %9448 = vmatpush1.bf16.msra.mxu0 %v9395
      %9449 = vmatprep.subr.bf16.mxu0 %v9399
      %9450 = vmatpush1.bf16.msra.mxu0 %v9398
      %9451 = vmatprep.subr.bf16.mxu0 %v9402
      %9452 = vmatpush1.bf16.msra.mxu0 %v9401
      %9453 = vmatprep.subr.bf16.mxu0 %v9405
      %9454 = vmatpush1.bf16.msra.mxu0 %v9404
      %9455 = vmatprep.subr.bf16.mxu0 0
      %9456 = vmatpush1.bf16.msra.mxu0 0
      %9457 = vmatprep.subr.bf16.mxu0 0
      %9458 = vmatpush1.bf16.msra.mxu0 0
      %9459 = vmatprep.subr.bf16.mxu0 0
      %9460 = vmatpush1.bf16.msra.mxu0 0
      %9461 = vmatprep.subr.bf16.mxu0 0
      %9462 = vmatpush1.bf16.msra.mxu0 0
      %9463 = vmatprep.subr.bf16.mxu0 0
      %9464 = vmatpush1.bf16.msra.mxu0 0
      %9465 = vmatprep.subr.bf16.mxu0 0
      %9466 = vmatpush1.bf16.msra.mxu0 0
      %9467 = vmatprep.subr.bf16.mxu0 0
      %9468 = vmatpush1.bf16.msra.mxu0 0
      %9469 = vmatprep.mubr.bf16.mxu0 %v9435
      %9470 = vmatmul.mubr.bf16.gmra.mrb[0].mxu0 %v9269
      %v9471 = vpop.f32.mrb[0].mxu0
      %v9472 = vadd.f32 %v9214, %v9471
      %v9473 = vpop.f32.mrb[0].mxu0
      %v9474 = vadd.f32 %v9216, %v9473
      %v9475 = vpop.f32.mrb[0].mxu0
      %v9476 = vadd.f32 %v9218, %v9475
      %v9477 = vpop.f32.mrb[0].mxu0
      %v9478 = vadd.f32 %v9220, %v9477
      %9479 = vdwg.mxu0
      %9480 = vmatprep.subr.bf16.mxu0 0
      %9481 = vmatpush1.bf16.msra.mxu0 %v9382
      %9482 = vmatprep.subr.bf16.mxu0 0
      %9483 = vmatpush1.bf16.msra.mxu0 %v9385
      %9484 = vmatprep.subr.bf16.mxu0 0
      %9485 = vmatpush1.bf16.msra.mxu0 %v9388
      %9486 = vmatprep.subr.bf16.mxu0 0
      %9487 = vmatpush1.bf16.msra.mxu0 %v9391
      %9488 = vmatprep.subr.bf16.mxu0 0
      %9489 = vmatpush1.bf16.msra.mxu0 %v9394
      %9490 = vmatprep.subr.bf16.mxu0 0
      %9491 = vmatpush1.bf16.msra.mxu0 %v9397
      %9492 = vmatprep.subr.bf16.mxu0 0
      %9493 = vmatpush1.bf16.msra.mxu0 %v9400
      %9494 = vmatprep.subr.bf16.mxu0 0
      %9495 = vmatpush1.bf16.msra.mxu0 %v9403
      %9496 = vmatprep.subr.bf16.mxu0 0
      %9497 = vmatpush1.bf16.msra.mxu0 %v9406
      %9498 = vmatprep.subr.bf16.mxu0 0
      %9499 = vmatpush1.bf16.msra.mxu0 0
      %9500 = vmatprep.subr.bf16.mxu0 0
      %9501 = vmatpush1.bf16.msra.mxu0 0
      %9502 = vmatprep.subr.bf16.mxu0 0
      %9503 = vmatpush1.bf16.msra.mxu0 0
      %9504 = vmatprep.subr.bf16.mxu0 0
      %9505 = vmatpush1.bf16.msra.mxu0 0
      %9506 = vmatprep.subr.bf16.mxu0 0
      %9507 = vmatpush1.bf16.msra.mxu0 0
      %9508 = vmatprep.subr.bf16.mxu0 0
      %9509 = vmatpush1.bf16.msra.mxu0 0
      %9510 = vmatprep.subr.bf16.mxu0 0
      %9511 = vmatpush1.bf16.msra.mxu0 0
      %9512 = vmatprep.mubr.bf16.mxu0 %v9435
      %9513 = vmatmul.mubr.bf16.gmra.mrb[0].mxu0 %v9269
      %v9514 = vpop.f32.mrb[0].mxu0
      %v9515 = vadd.f32 %v9257, %v9514
      %v9516 = vpop.f32.mrb[0].mxu0
      %v9517 = vpop.f32.mrb[0].mxu0
      %v9518 = vadd.f32 %v9260, %v9517
      %v9519 = vpop.f32.mrb[0].mxu0
      %9520 = vdwg.mxu0
      %s9521 = scalar_lea.vmem %s10, 32
      %v9522 = vld [vmem:[%s9521] sm:$0xff]
      %v9523 = vld [vmem:[%s9521 + $0x8] sm:$0xff]
      %v9526 = vunpack.c.l.b16 %v9522
      %v9527 = vunpack.c.h.b16 %v9522
      %v9528 = vunpack.c.l.b16 %v9523
      %v9529 = vunpack.c.h.b16 %v9523
      %v9530 = vpack.c.b16 %v9528, %v9526
      %v9531 = vpack.c.b16 %v9529, %v9527
      %9533 = vrot.lane.b32.xlu0 %v9127, 127
      %v9534 = vpop.permute.xlu0 %9533
      %9535 = vrot.lane.b32.xlu0 %v9128, 127
      %v9536 = vpop.permute.xlu0 %9535
      %9537 = vrot.lane.b32.xlu0 %v9129, 127
      %v9538 = vpop.permute.xlu0 %9537
      %9539 = vrot.lane.b32.xlu0 %v9131, 127
      %v9540 = vpop.permute.xlu0 %9539
      %9541 = vrot.lane.b32.xlu0 %v9132, 127
      %v9542 = vpop.permute.xlu0 %9541
      %9543 = vrot.lane.b32.xlu0 %v9133, 127
      %v9544 = vpop.permute.xlu0 %9543
      %9545 = vrot.lane.b32.xlu0 %v9135, 127
      %v9546 = vpop.permute.xlu0 %9545
      %9547 = vrot.lane.b32.xlu0 %v9136, 127
      %v9548 = vpop.permute.xlu0 %9547
      %9549 = vrot.lane.b32.xlu0 %v9137, 127
      %v9550 = vpop.permute.xlu0 %9549
      %9551 = vrot.lane.b32.xlu0 %v9139, 127
      %v9552 = vpop.permute.xlu0 %9551
      %9553 = vrot.lane.b32.xlu0 %v9140, 127
      %v9554 = vpop.permute.xlu0 %9553
      %9555 = vrot.lane.b32.xlu0 %v9141, 127
      %v9556 = vpop.permute.xlu0 %9555
      %9557 = vrot.lane.b32.xlu0 %v9143, 127
      %v9558 = vpop.permute.xlu0 %9557
      %9559 = vrot.lane.b32.xlu0 %v9144, 127
      %v9560 = vpop.permute.xlu0 %9559
      %9561 = vrot.lane.b32.xlu0 %v9145, 127
      %v9562 = vpop.permute.xlu0 %9561
      %9563 = vrot.lane.b32.xlu0 %v9147, 127
      %v9564 = vpop.permute.xlu0 %9563
      %9565 = vrot.lane.b32.xlu0 %v9148, 127
      %v9566 = vpop.permute.xlu0 %9565
      %9567 = vrot.lane.b32.xlu0 %v9149, 127
      %v9568 = vpop.permute.xlu0 %9567
      %9569 = vrot.lane.b32.xlu0 %v9151, 127
      %v9570 = vpop.permute.xlu0 %9569
      %9571 = vrot.lane.b32.xlu0 %v9152, 127
      %v9572 = vpop.permute.xlu0 %9571
      %9573 = vrot.lane.b32.xlu0 %v9153, 127
      %v9574 = vpop.permute.xlu0 %9573
      %9575 = vrot.lane.b32.xlu0 %v9155, 127
      %v9576 = vpop.permute.xlu0 %9575
      %9577 = vrot.lane.b32.xlu0 %v9156, 127
      %v9578 = vpop.permute.xlu0 %9577
      %9579 = vrot.lane.b32.xlu0 %v9157, 127
      %v9580 = vpop.permute.xlu0 %9579
      %9581 = vrot.lane.b32.xlu0 %v9159, 127
      %v9582 = vpop.permute.xlu0 %9581
      %9583 = vrot.lane.b32.xlu0 %v9160, 127
      %v9584 = vpop.permute.xlu0 %9583
      %9585 = vrot.lane.b32.xlu0 %v9161, 127
      %v9586 = vpop.permute.xlu0 %9585
      %v9587 = vsel %vm1460, %v9534, %v9536
      %v9588 = vsel %vm1460, %v9536, %v9538
      %v9589 = vsel %vm1460, %v9540, %v9542
      %v9590 = vsel %vm1460, %v9542, %v9544
      %v9591 = vsel %vm1460, %v9546, %v9548
      %v9592 = vsel %vm1460, %v9548, %v9550
      %v9593 = vsel %vm1460, %v9552, %v9554
      %v9594 = vsel %vm1460, %v9554, %v9556
      %v9595 = vsel %vm1460, %v9558, %v9560
      %v9596 = vsel %vm1460, %v9560, %v9562
      %v9597 = vsel %vm1460, %v9564, %v9566
      %v9598 = vsel %vm1460, %v9566, %v9568
      %v9599 = vsel %vm1460, %v9570, %v9572
      %v9600 = vsel %vm1460, %v9572, %v9574
      %v9601 = vsel %vm1460, %v9576, %v9578
      %v9602 = vsel %vm1460, %v9578, %v9580
      %v9603 = vsel %vm1460, %v9582, %v9584
      %v9604 = vsel %vm1460, %v9584, %v9586
      %v9633 = vsel %vm1047, %v9531, 0
      %9635 = vmatprep.subr.bf16.mxu0 %v9588
      %9636 = vmatpush1.bf16.msra.mxu0 %v9587
      %9637 = vmatprep.subr.bf16.mxu0 %v9590
      %9638 = vmatpush1.bf16.msra.mxu0 %v9589
      %9639 = vmatprep.subr.bf16.mxu0 %v9592
      %9640 = vmatpush1.bf16.msra.mxu0 %v9591
      %9641 = vmatprep.subr.bf16.mxu0 %v9594
      %9642 = vmatpush1.bf16.msra.mxu0 %v9593
      %9643 = vmatprep.subr.bf16.mxu0 %v9596
      %9644 = vmatpush1.bf16.msra.mxu0 %v9595
      %9645 = vmatprep.subr.bf16.mxu0 %v9598
      %9646 = vmatpush1.bf16.msra.mxu0 %v9597
      %9647 = vmatprep.subr.bf16.mxu0 %v9600
      %9648 = vmatpush1.bf16.msra.mxu0 %v9599
      %9649 = vmatprep.subr.bf16.mxu0 %v9602
      %9650 = vmatpush1.bf16.msra.mxu0 %v9601
      %9651 = vmatprep.subr.bf16.mxu0 %v9604
      %9652 = vmatpush1.bf16.msra.mxu0 %v9603
      %9653 = vmatprep.subr.bf16.mxu0 0
      %9654 = vmatpush1.bf16.msra.mxu0 0
      %9655 = vmatprep.subr.bf16.mxu0 0
      %9656 = vmatpush1.bf16.msra.mxu0 0
      %9657 = vmatprep.subr.bf16.mxu0 0
      %9658 = vmatpush1.bf16.msra.mxu0 0
      %9659 = vmatprep.subr.bf16.mxu0 0
      %9660 = vmatpush1.bf16.msra.mxu0 0
      %9661 = vmatprep.subr.bf16.mxu0 0
      %9662 = vmatpush1.bf16.msra.mxu0 0
      %9663 = vmatprep.subr.bf16.mxu0 0
      %9664 = vmatpush1.bf16.msra.mxu0 0
      %9665 = vmatprep.subr.bf16.mxu0 0
      %9666 = vmatpush1.bf16.msra.mxu0 0
      %9667 = vmatprep.mubr.bf16.mxu0 %v9633
      %9668 = vmatmul.mubr.bf16.gmra.mrb[0].mxu0 %v9530
      %v9669 = vpop.f32.mrb[0].mxu0
      %v9670 = vadd.f32 0.0, %v9669
      %v9671 = vpop.f32.mrb[0].mxu0
      %v9672 = vadd.f32 0.0, %v9671
      %v9673 = vpop.f32.mrb[0].mxu0
      %v9674 = vadd.f32 0.0, %v9673
      %v9675 = vpop.f32.mrb[0].mxu0
      %v9676 = vadd.f32 0.0, %v9675
      %9677 = vdwg.mxu0
      %9678 = vmatprep.subr.bf16.mxu0 0
      %9679 = vmatpush1.bf16.msra.mxu0 %v9538
      %9680 = vmatprep.subr.bf16.mxu0 0
      %9681 = vmatpush1.bf16.msra.mxu0 %v9544
      %9682 = vmatprep.subr.bf16.mxu0 0
      %9683 = vmatpush1.bf16.msra.mxu0 %v9550
      %9684 = vmatprep.subr.bf16.mxu0 0
      %9685 = vmatpush1.bf16.msra.mxu0 %v9556
      %9686 = vmatprep.subr.bf16.mxu0 0
      %9687 = vmatpush1.bf16.msra.mxu0 %v9562
      %9688 = vmatprep.subr.bf16.mxu0 0
      %9689 = vmatpush1.bf16.msra.mxu0 %v9568
      %9690 = vmatprep.subr.bf16.mxu0 0
      %9691 = vmatpush1.bf16.msra.mxu0 %v9574
      %9692 = vmatprep.subr.bf16.mxu0 0
      %9693 = vmatpush1.bf16.msra.mxu0 %v9580
      %9694 = vmatprep.subr.bf16.mxu0 0
      %9695 = vmatpush1.bf16.msra.mxu0 %v9586
      %9696 = vmatprep.subr.bf16.mxu0 0
      %9697 = vmatpush1.bf16.msra.mxu0 0
      %9698 = vmatprep.subr.bf16.mxu0 0
      %9699 = vmatpush1.bf16.msra.mxu0 0
      %9700 = vmatprep.subr.bf16.mxu0 0
      %9701 = vmatpush1.bf16.msra.mxu0 0
      %9702 = vmatprep.subr.bf16.mxu0 0
      %9703 = vmatpush1.bf16.msra.mxu0 0
      %9704 = vmatprep.subr.bf16.mxu0 0
      %9705 = vmatpush1.bf16.msra.mxu0 0
      %9706 = vmatprep.subr.bf16.mxu0 0
      %9707 = vmatpush1.bf16.msra.mxu0 0
      %9708 = vmatprep.subr.bf16.mxu0 0
      %9709 = vmatpush1.bf16.msra.mxu0 0
      %9710 = vmatprep.mubr.bf16.mxu0 %v9633
      %9711 = vmatmul.mubr.bf16.gmra.mrb[0].mxu0 %v9530
      %v9712 = vpop.f32.mrb[0].mxu0
      %v9713 = vadd.f32 0.0, %v9712
      %v9714 = vpop.f32.mrb[0].mxu0
      %v9715 = vpop.f32.mrb[0].mxu0
      %v9716 = vadd.f32 0.0, %v9715
      %v9717 = vpop.f32.mrb[0].mxu0
      %9718 = vdwg.mxu0
      %v9719 = vadd.f32 %v9472, %v9670
      %v9720 = vadd.f32 %v9474, %v9672
      %v9721 = vadd.f32 %v9515, %v9713
      %v9722 = vadd.f32 %v9476, %v9674
      %v9723 = vadd.f32 %v9478, %v9676
      %v9724 = vadd.f32 %v9518, %v9716
      %v9725 = vld [vmem:[%s20] sm:$0xff]
      %v9726 = vld [vmem:[%s20 + $0x8] sm:$0xff]
      %9728 = vset.pattern.permute.xlu0 0
      %9729 = vperm.xlu0 %9728, %v9725
      %v9730 = vpop.permute.xlu0 %9729
      %9733 = vset.pattern.permute.xlu0 0
      %9734 = vperm.xlu0 %9733, %v9726
      %v9735 = vpop.permute.xlu0 %9734
      %v9737 = vadd.f32 %v9719, %v9730
      %v9738 = vadd.f32 %v9720, %v9730
      %v9739 = vadd.f32 %v9721, %v9730
      %v9740 = vadd.f32 %v9722, %v9735
      %v9741 = vadd.f32 %v9723, %v9735
      %v9742 = vadd.f32 %v9724, %v9735
      %v9743 = vmax.f32 %v9737, 0.0
      %v9744 = vmax.f32 %v9738, 0.0
      %v9745 = vmax.f32 %v9739, 0.0
      %v9746 = vmax.f32 %v9740, 0.0
      %v9747 = vmax.f32 %v9741, 0.0
      %v9748 = vmax.f32 %v9742, 0.0
      %9749 = vst [vmem:[%s845] sm:$0xff] %v9743
      %9750 = vst [vmem:[%s845 + $0x8] sm:$0xff] %v9744
      %9751 = vst.msk [vmem:[%s845 + $0x10] sm:$0xff] %vm1669, %v9745
      %9752 = vst [vmem:[%s845 + $0x18] sm:$0xff] %v9746
      %9753 = vst [vmem:[%s845 + $0x20] sm:$0xff] %v9747
      %9754 = vst.msk [vmem:[%s845 + $0x28] sm:$0xff] %vm1669, %v9748
      %p9755 = scmp.lt.s32.totalorder %s39, 1
      %s9756 = scalar_select %p9755, %s39, 1
      %s9757 = smul.addr %s9756, 6
      %s9758 = smul.addr %s9757, 8
      %s9759 = scalar_lea.vmem %s28, %s9758
      // Predicated region
      $region133: #{unet_headless.1} parent=131 // pred_check
        %p9760 = pneg %p650
      $region134: #{unet_headless.1} parent=131 // pred_check_branch
        %9762 = sbr.rel (%p9760) target = $region136
      $region135: #{unet_headless.1} parent=131 // pred_region
        _
      $region136: #{unet_headless.1} parent=131 // pred_fallthru
        _
    $region132: #{unet_headless.1} parent=5 // pred_fallthru
      _
    %p9763 = scmp.le.s32.totalorder 2, %s34
    // Predicated region
    $region137: #{unet_headless.1} parent=5 // pred_check
      %p9764 = pneg %p9763
    $region138: #{unet_headless.1} parent=5 // pred_check_branch
      %9766 = sbr.rel (%p9764) target = $region140
    $region139: #{unet_headless.1} parent=5 // pred_region
      %s9767 = ssub.s32 %s34, 2
      // Predicated region
      $region141: #{unet_headless.1} parent=139 // pred_check
        %p9768 = pneg %p656
      $region142: #{unet_headless.1} parent=139 // pred_check_branch
        %9770 = sbr.rel (%p9768) target = $region144
      $region143: #{unet_headless.1} parent=139 // pred_region
        %p9771 = scmp.lt.s32.totalorder %s40, 1
        %s9772 = scalar_select %p9771, %s40, 1
        %s9773 = smul.addr %s9772, 6
        %s9774 = smul.addr %s9773, 8
        %s9775 = scalar_lea.vmem %s28, %s9774
      $region144: #{unet_headless.1} parent=139 // pred_fallthru
        _
    $region140: #{unet_headless.1} parent=5 // pred_fallthru
      _
  $region6: #{unet_headless.1} parent=0 // loop_footer
    %s38 = sadd.s32 1, %s34
  $region7: #{unet_headless.1} parent=0 // loop_footer_branch
    %33 = sbr.rel target = $region3
  $region8: #{unet_headless.1} parent=0 // loop_exit
    _

</llo_original>
